<compile_context>
chip_gen: v6e
topology: v6e:2x2x1
jax: 0.10.0
libtpu: 0.0.40
codegen_flags: <defaults>
</compile_context>

<pallas_src>
import numpy as np
import jax
import jax.numpy as jnp
from jax.experimental import pallas as pl
from jax.experimental.pallas import tpu as pltpu

HIDDEN_SIZE = 64   # hidden_size ctor arg (kept small; PyTorch default is 512)
NUM_INPUTS = 4     # num_inputs ctor arg (input channels)

# Geometry after the space-to-depth rewrites (input spatial size 84x84 is
# fixed by Flatten -> Linear(32*7*7, hidden) in the PyTorch module):
#   conv1: 8x8 s4 on (84,84,4)  == 2x2 s1 on a 21x21x64 slab  -> valid 20x20x32
#   conv2: 4x4 s2 on (20,20,32) == 2x2 s1 on a 10x10x128 slab -> valid 9x9x64
#   conv3: 3x3 s1               -> evaluated on the same 10x10 grid -> valid 7x7x32
_W1, _N1, _PAD1 = 21, 21 * 21, 1 * 21 + 1   # slab width, rows, slice headroom
_W2, _N2, _PAD2 = 10, 10 * 10, 1 * 10 + 1
_PAD3 = 2 * 10 + 2                          # conv3 reads up to +22 rows of conv2's slab


# ----------------------------- Pallas kernels ------------------------------ #

def _shift_accumulate(x_ref, w_ref, b_ref, out_ref, *, width, kh, kw, n_out):
    """Stride-1 valid conv over a row-major flattened (H*W, Cin) slab.

    out_ref[:n_out] = relu(b + sum_{ki,kj} x_ref[ki*width+kj : +n_out] @ w_ref[ki*kw+kj])
    Rows >= n_out of out_ref are zeroed.  Rows whose 2-D position falls outside
    the valid output window hold don't-care (finite) values; callers crop them.
    """
    out_ref[...] = jnp.zeros(out_ref.shape, out_ref.dtype)
    for ki in range(kh):
        for kj in range(kw):
            d = ki * width + kj
            out_ref[pl.ds(0, n_out), :] += jnp.dot(
                x_ref[pl.ds(d, n_out), :], w_ref[ki * kw + kj],
                preferred_element_type=jnp.float32)
    out_ref[pl.ds(0, n_out), :] = jnp.maximum(
        out_ref[pl.ds(0, n_out), :] + b_ref[...], 0.0)


def _conv1_kernel(x_ref, w_ref, b_ref, o_ref):
    # x_ref: (463, 64)  w_ref: (4, 64, 32)  o_ref: (441, 32)
    _shift_accumulate(x_ref, w_ref, b_ref, o_ref,
                      width=_W1, kh=2, kw=2, n_out=_N1)


def _conv23_kernel(x_ref, w2_ref, b2_ref, w3_ref, b3_ref, o_ref, h2_ref):
    # conv2 writes into a VMEM scratch (never leaves the chip); conv3 writes
    # the output block.  x_ref: (111,128)  h2_ref: (122,64)  o_ref: (100,32)
    _shift_accumulate(x_ref, w2_ref, b2_ref, h2_ref,
                      width=_W2, kh=2, kw=2, n_out=_N2)
    _shift_accumulate(h2_ref, w3_ref, b3_ref, o_ref,
                      width=_W2, kh=3, kw=3, n_out=_N2)


def _fc_critic_kernel(h_ref, wf_ref, bf_ref, wc_ref, bc_ref, feat_ref, val_ref):
    feat = jnp.dot(h_ref[...], wf_ref[...], preferred_element_type=jnp.float32)
    feat = jnp.maximum(feat + bf_ref[...], 0.0)
    feat_ref[...] = feat
    val_ref[...] = (jnp.dot(feat, wc_ref[...], preferred_element_type=jnp.float32)
                    + bc_ref[...])


# --------------------------- pallas_call wrappers --------------------------- #

def _conv1_call(x1p, w1, b1):
    B, P, C = x1p.shape                      # (B, 463, 64)
    kk, _, cout = w1.shape                   # (4, 64, 32)
    return pl.pallas_call(
        _conv1_kernel,
        grid=(B,),
        in_specs=[
            pl.BlockSpec((None, P, C), lambda b: (b, 0, 0)),
            pl.BlockSpec((kk, C, cout), lambda b: (0, 0, 0)),
            pl.BlockSpec((1, cout), lambda b: (0, 0)),
        ],
        out_specs=pl.BlockSpec((None, _N1, cout), lambda b: (b, 0, 0)),
        out_shape=jax.ShapeDtypeStruct((B, _N1, cout), jnp.float32),
        compiler_params=pltpu.CompilerParams(dimension_semantics=("parallel",)),
    )(x1p, w1, b1)


def _conv23_call(x2p, w2, b2, w3, b3):
    B, P, C = x2p.shape                      # (B, 111, 128)
    return pl.pallas_call(
        _conv23_kernel,
        grid=(B,),
        in_specs=[
            pl.BlockSpec((None, P, C), lambda b: (b, 0, 0)),
            pl.BlockSpec((4, 128, 64), lambda b: (0, 0, 0)),
            pl.BlockSpec((1, 64), lambda b: (0, 0)),
            pl.BlockSpec((9, 64, 32), lambda b: (0, 0, 0)),
            pl.BlockSpec((1, 32), lambda b: (0, 0)),
        ],
        out_specs=pl.BlockSpec((None, _N2, 32), lambda b: (b, 0, 0)),
        out_shape=jax.ShapeDtypeStruct((B, _N2, 32), jnp.float32),
        scratch_shapes=[pltpu.VMEM((_N2 + _PAD3, 64), jnp.float32)],
        compiler_params=pltpu.CompilerParams(dimension_semantics=("parallel",)),
    )(x2p, w2, b2, w3, b3)


def _fc_critic_call(h, wf, bf, wc, bc):
    B, K = h.shape
    N = wf.shape[1]
    tb = min(128, ((B + 7) // 8) * 8)        # M tile: batch-size robust
    Bp = -(-B // tb) * tb
    if Bp != B:
        h = jnp.pad(h, ((0, Bp - B), (0, 0)))
    feat, value = pl.pallas_call(
        _fc_critic_kernel,
        grid=(Bp // tb,),
        in_specs=[
            pl.BlockSpec((tb, K), lambda i: (i, 0)),
            pl.BlockSpec((K, N), lambda i: (0, 0)),
            pl.BlockSpec((1, N), lambda i: (0, 0)),
            pl.BlockSpec((N, 1), lambda i: (0, 0)),
            pl.BlockSpec((1, 1), lambda i: (0, 0)),
        ],
        out_specs=(
            pl.BlockSpec((tb, N), lambda i: (i, 0)),
            pl.BlockSpec((tb, 1), lambda i: (i, 0)),
        ),
        out_shape=(
            jax.ShapeDtypeStruct((Bp, N), jnp.float32),
            jax.ShapeDtypeStruct((Bp, 1), jnp.float32),
        ),
        compiler_params=pltpu.CompilerParams(dimension_semantics=("parallel",)),
    )(h, wf, bf, wc, bc)
    return feat[:B], value[:B]


# --------------------------- XLA-side layout glue --------------------------- #

def _space_to_depth(x, block):
    """(B, H, W, C) -> (B, H/b, W/b, b*b*C); pure permutation (no expansion)."""
    if block == 1:
        return x
    B, H, W, C = x.shape
    x = x.reshape(B, H // block, block, W // block, block, C)
    x = jnp.transpose(x, (0, 1, 3, 2, 4, 5))
    return x.reshape(B, H // block, W // block, block * block * C)


def _flatten_pad(x, pad_rows):
    """(B, H, W, C) -> (B, H*W + pad_rows, C); zero rows give the shifted
    slices uniform length (they only contribute to cropped output rows)."""
    B, H, W, C = x.shape
    return jnp.pad(x.reshape(B, H * W, C), ((0, 0), (0, pad_rows), (0, 0)))


def _s2d_weight(w_hwio, block):
    """(kh,kw,Cin,Cout) -> ((kh/b)*(kw/b), b*b*Cin, Cout), matching _space_to_depth."""
    kh, kw, cin, cout = w_hwio.shape
    ph, pw = kh // block, kw // block
    w = w_hwio.reshape(ph, block, pw, block, cin, cout)
    w = jnp.transpose(w, (0, 2, 1, 3, 4, 5))
    return w.reshape(ph * pw, block * block * cin, cout)


def prepare_kernel_params(params):
    """One-time re-layout of the params for the Pallas kernels.
    The module's 1/255 input scaling is folded into the conv1 weights."""
    return {
        "w1": _s2d_weight(params["conv1_w"], 4) * (1.0 / 255.0),
        "b1": params["conv1_b"].reshape(1, -1),
        "w2": _s2d_weight(params["conv2_w"], 2),
        "b2": params["conv2_b"].reshape(1, -1),
        "w3": _s2d_weight(params["conv3_w"], 1),
        "b3": params["conv3_b"].reshape(1, -1),
        "wf": params["fc_w"],
        "bf": params["fc_b"].reshape(1, -1),
        "wc": params["critic_w"],
        "bc": params["critic_b"].reshape(1, -1),
    }


# ----------------------------- parameters --------------------------------- #

def orthogonal_init(key, shape, gain=1.0):
    """PyTorch-style orthogonal_ on the (shape[0], prod(rest)) flattening."""
    rows = shape[0]
    cols = int(np.prod(shape[1:]))
    big, small = max(rows, cols), min(rows, cols)
    a = jax.random.normal(key, (big, small), dtype=jnp.float32)
    q, r = jnp.linalg.qr(a)
    q = q * jnp.sign(jnp.diagonal(r))
    if rows < cols:
        q = q.T
    return (gain * q).reshape(shape).astype(jnp.float32)


def init_cnnbase_params(key, num_inputs, hidden_size):
    gain_relu = float(np.sqrt(2.0))
    keys = jax.random.split(key, 5)

    def conv_w(k, cout, cin, ksz, gain):
        # PyTorch conv weight is OIHW; orthogonalize over (Cout, Cin*kh*kw),
        # then store as HWIO.
        w_oihw = orthogonal_init(k, (cout, cin, ksz, ksz), gain)
        return jnp.transpose(w_oihw, (2, 3, 1, 0))

    return {
        "conv1_w": conv_w(keys[0], 32, num_inputs, 8, gain_relu),
        "conv1_b": jnp.zeros((32,), jnp.float32),
        "conv2_w": conv_w(keys[1], 64, 32, 4, gain_relu),
        "conv2_b": jnp.zeros((64,), jnp.float32),
        "conv3_w": conv_w(keys[2], 32, 64, 3, gain_relu),
        "conv3_b": jnp.zeros((32,), jnp.float32),
        # NOTE: flatten order here is HWC (vs PyTorch's CHW); since the fc
        # weight is initialized in-script, the forward semantics are identical.
        "fc_w": orthogonal_init(keys[3], (hidden_size, 32 * 7 * 7), gain_relu).T,
        "fc_b": jnp.zeros((hidden_size,), jnp.float32),
        "critic_w": orthogonal_init(keys[4], (1, hidden_size), 1.0).T,
        "critic_b": jnp.zeros((1,), jnp.float32),
    }


# ----------------------------- forward pass -------------------------------- #

@jax.jit
def cnnbase_forward(kparams, inputs_nchw, rnn_hxs, masks):
    # inputs_nchw: (B, num_inputs, 84, 84) like the PyTorch module (NCHW).
    B = inputs_nchw.shape[0]
    x = jnp.transpose(inputs_nchw, (0, 2, 3, 1))               # NCHW -> NHWC

    # conv1 (8x8 s4) as a stride-1 shift-and-accumulate conv; /255 is folded
    # into the weights.
    x1 = _flatten_pad(_space_to_depth(x, 4), _PAD1)            # (B, 463, 64)
    h1 = _conv1_call(x1, kparams["w1"], kparams["b1"])         # (B, 441, 32) on 21x21
    h1 = h1.reshape(B, _W1, _W1, 32)[:, :20, :20, :]           # crop -> (B,20,20,32)

    # conv2 (4x4 s2) + conv3 (3x3 s1) fused; conv2 output stays in VMEM.
    x2 = _flatten_pad(_space_to_depth(h1, 2), _PAD2)           # (B, 111, 128)
    h3 = _conv23_call(x2, kparams["w2"], kparams["b2"],
                      kparams["w3"], kparams["b3"])            # (B, 100, 32) on 10x10
    h3 = h3.reshape(B, _W2, _W2, 32)[:, :7, :7, :]             # (B, 7, 7, 32)
    # NOTE: flatten order is HWC (vs PyTorch's CHW); fc weights are init'd
    # in-script so forward semantics are identical.
    h3 = h3.reshape(B, 7 * 7 * 32)                             # (B, 1568)

    # fc + ReLU + critic_linear fused in one call.
    feat, value = _fc_critic_call(h3, kparams["wf"], kparams["bf"],
                                  kparams["wc"], kparams["bc"])
    # recurrent=False -> GRU branch is never taken; rnn_hxs passes through.
    return value, feat, rnn_hxs


# ----------------------------- pure-JAX reference -------------------------- #

def reference_forward(params, inputs_nchw, rnn_hxs, masks):
    x = jnp.transpose(inputs_nchw, (0, 2, 3, 1)) / 255.0
    dn = ("NHWC", "HWIO", "NHWC")
    hp = jax.lax.Precision.HIGHEST
    h = jax.lax.conv_general_dilated(x, params["conv1_w"], (4, 4), "VALID",
                                     dimension_numbers=dn, precision=hp)
    h = jax.nn.relu(h + params["conv1_b"])
    h = jax.lax.conv_general_dilated(h, params["conv2_w"], (2, 2), "VALID",
                                     dimension_numbers=dn, precision=hp)
    h = jax.nn.relu(h + params["conv2_b"])
    h = jax.lax.conv_general_dilated(h, params["conv3_w"], (1, 1), "VALID",
                                     dimension_numbers=dn, precision=hp)
    h = jax.nn.relu(h + params["conv3_b"])
    h = h.reshape(h.shape[0], -1)
    feat = jax.nn.relu(jnp.dot(h, params["fc_w"], precision=hp) + params["fc_b"])
    value = jnp.dot(feat, params["critic_w"], precision=hp) + params["critic_b"]
    return value, feat, rnn_hxs


# ----------------------------------- main ----------------------------------- #

if __name__ == "__main__":
    key = jax.random.PRNGKey(0)
    pkey, xkey = jax.random.split(key)
    params = init_cnnbase_params(pkey, NUM_INPUTS, HIDDEN_SIZE)
    kparams = prepare_kernel_params(params)     # weight re-layout + /255 fold, once

    B = 2
    # Spatial size is forced to 84x84 by Flatten -> Linear(32*7*7, hidden).
    inputs = jax.random.uniform(xkey, (B, NUM_INPUTS, 84, 84),
                                dtype=jnp.float32, minval=0.0, maxval=255.0)
    rnn_hxs = jnp.zeros((B, 1), jnp.float32)     # recurrent_hidden_state_size == 1
    masks = jnp.ones((B, 1), jnp.float32)

    value, feat, hxs = cnnbase_forward(kparams, inputs, rnn_hxs, masks)
    jax.block_until_ready((value, feat, hxs))

    v_ref, f_ref, _ = reference_forward(params, inputs, rnn_hxs, masks)
    assert value.shape == (B, 1) and feat.shape == (B, HIDDEN_SIZE)
    assert hxs.shape == rnn_hxs.shape
    np.testing.assert_allclose(np.asarray(value), np.asarray(v_ref), rtol=2e-3, atol=2e-3)
    np.testing.assert_allclose(np.asarray(feat), np.asarray(f_ref), rtol=2e-3, atol=2e-3)

    print("KERNEL_OK")
</pallas_src>

<mosaic_0001>
module attributes {stable_mosaic.version = 11 : i64} {
  func.func @_conv1_kernel(%arg0: i32, %arg1: memref<1x463x64xf32, #tpu.memory_space<vmem>>, %arg2: memref<4x64x32xf32, #tpu.memory_space<vmem>>, %arg3: memref<1x32xf32, #tpu.memory_space<vmem>>, %arg4: memref<1x441x32xf32, #tpu.memory_space<vmem>>) attributes {dimension_semantics = [#tpu.dimension_semantics<parallel>], iteration_bounds = array<i64: 2>, scalar_prefetch = 0 : i64, scratch_operands = 0 : i64, tpu.core_type = #tpu.core_type<tc>, window_params = [{transform_indices = @transform_0, window_bounds = array<i64: 1, 463, 64>}, {pipeline_mode = #tpu.pipeline_mode<synchronous>, transform_indices = @transform_1, window_bounds = array<i64: 4, 64, 32>}, {pipeline_mode = #tpu.pipeline_mode<synchronous>, transform_indices = @transform_2, window_bounds = array<i64: 1, 32>}, {transform_indices = @transform_3, window_bounds = array<i64: 1, 441, 32>}]} {
    %cst = arith.constant 0.000000e+00 : f32
    %0 = vector.broadcast %cst : f32 to vector<441x32xf32>
    %c0 = arith.constant 0 : index
    %c0_0 = arith.constant 0 : index
    %c0_1 = arith.constant 0 : index
    %1 = vector.load %arg4[%c0, %c0_0, %c0_1] : memref<1x441x32xf32, #tpu.memory_space<vmem>>, vector<1x441x32xf32>
    %2 = vector.shape_cast %1 : vector<1x441x32xf32> to vector<441x32xf32>
    %3 = vector.shape_cast %0 : vector<441x32xf32> to vector<1x441x32xf32>
    tpu.vector_store %arg4[%c0, %c0_0, %c0_1], %3 {strides = array<i32>} : memref<1x441x32xf32, #tpu.memory_space<vmem>>, vector<1x441x32xf32>,
    %c0_2 = arith.constant 0 : index
    %c0_3 = arith.constant 0 : index
    %c0_4 = arith.constant 0 : index
    %4 = vector.load %arg4[%c0_2, %c0_3, %c0_4] : memref<1x441x32xf32, #tpu.memory_space<vmem>>, vector<1x441x32xf32>
    %5 = vector.shape_cast %4 : vector<1x441x32xf32> to vector<441x32xf32>
    %c0_5 = arith.constant 0 : index
    %c0_6 = arith.constant 0 : index
    %c0_7 = arith.constant 0 : index
    %6 = vector.load %arg1[%c0_5, %c0_6, %c0_7] : memref<1x463x64xf32, #tpu.memory_space<vmem>>, vector<1x441x64xf32>
    %7 = vector.shape_cast %6 : vector<1x441x64xf32> to vector<441x64xf32>
    %c0_8 = arith.constant 0 : index
    %c0_9 = arith.constant 0 : index
    %c0_10 = arith.constant 0 : index
    %8 = vector.load %arg2[%c0_8, %c0_9, %c0_10] : memref<4x64x32xf32, #tpu.memory_space<vmem>>, vector<1x64x32xf32>
    %9 = vector.shape_cast %8 : vector<1x64x32xf32> to vector<64x32xf32>
    %cst_11 = arith.constant dense<0.000000e+00> : vector<441x32xf32>
    %10 = tpu.matmul %7, %9, %cst_11 {dimension_numbers = #tpu.dot_dimension_numbers<[1], [0], [0], [1], [0, 0, 1, 1], [], []>} : vector<441x64xf32>, vector<64x32xf32>, vector<441x32xf32> -> vector<441x32xf32>
    %11 = arith.addf %5, %10 : vector<441x32xf32>
    %c0_12 = arith.constant 0 : index
    %c0_13 = arith.constant 0 : index
    %c0_14 = arith.constant 0 : index
    %12 = vector.load %arg4[%c0_12, %c0_13, %c0_14] : memref<1x441x32xf32, #tpu.memory_space<vmem>>, vector<1x441x32xf32>
    %13 = vector.shape_cast %12 : vector<1x441x32xf32> to vector<441x32xf32>
    %14 = vector.shape_cast %11 : vector<441x32xf32> to vector<1x441x32xf32>
    tpu.vector_store %arg4[%c0_12, %c0_13, %c0_14], %14 {strides = array<i32>} : memref<1x441x32xf32, #tpu.memory_space<vmem>>, vector<1x441x32xf32>,
    %c0_15 = arith.constant 0 : index
    %c0_16 = arith.constant 0 : index
    %c0_17 = arith.constant 0 : index
    %15 = vector.load %arg4[%c0_15, %c0_16, %c0_17] : memref<1x441x32xf32, #tpu.memory_space<vmem>>, vector<1x441x32xf32>
    %16 = vector.shape_cast %15 : vector<1x441x32xf32> to vector<441x32xf32>
    %c0_18 = arith.constant 0 : index
    %c1 = arith.constant 1 : index
    %c0_19 = arith.constant 0 : index
    %17 = vector.load %arg1[%c0_18, %c1, %c0_19] : memref<1x463x64xf32, #tpu.memory_space<vmem>>, vector<1x441x64xf32>
    %18 = vector.shape_cast %17 : vector<1x441x64xf32> to vector<441x64xf32>
    %c1_20 = arith.constant 1 : index
    %c0_21 = arith.constant 0 : index
    %c0_22 = arith.constant 0 : index
    %19 = vector.load %arg2[%c1_20, %c0_21, %c0_22] : memref<4x64x32xf32, #tpu.memory_space<vmem>>, vector<1x64x32xf32>
    %20 = vector.shape_cast %19 : vector<1x64x32xf32> to vector<64x32xf32>
    %cst_23 = arith.constant dense<0.000000e+00> : vector<441x32xf32>
    %21 = tpu.matmul %18, %20, %cst_23 {dimension_numbers = #tpu.dot_dimension_numbers<[1], [0], [0], [1], [0, 0, 1, 1], [], []>} : vector<441x64xf32>, vector<64x32xf32>, vector<441x32xf32> -> vector<441x32xf32>
    %22 = arith.addf %16, %21 : vector<441x32xf32>
    %c0_24 = arith.constant 0 : index
    %c0_25 = arith.constant 0 : index
    %c0_26 = arith.constant 0 : index
    %23 = vector.load %arg4[%c0_24, %c0_25, %c0_26] : memref<1x441x32xf32, #tpu.memory_space<vmem>>, vector<1x441x32xf32>
    %24 = vector.shape_cast %23 : vector<1x441x32xf32> to vector<441x32xf32>
    %25 = vector.shape_cast %22 : vector<441x32xf32> to vector<1x441x32xf32>
    tpu.vector_store %arg4[%c0_24, %c0_25, %c0_26], %25 {strides = array<i32>} : memref<1x441x32xf32, #tpu.memory_space<vmem>>, vector<1x441x32xf32>,
    %c0_27 = arith.constant 0 : index
    %c0_28 = arith.constant 0 : index
    %c0_29 = arith.constant 0 : index
    %26 = vector.load %arg4[%c0_27, %c0_28, %c0_29] : memref<1x441x32xf32, #tpu.memory_space<vmem>>, vector<1x441x32xf32>
    %27 = vector.shape_cast %26 : vector<1x441x32xf32> to vector<441x32xf32>
    %c0_30 = arith.constant 0 : index
    %c21 = arith.constant 21 : index
    %c0_31 = arith.constant 0 : index
    %28 = vector.load %arg1[%c0_30, %c21, %c0_31] : memref<1x463x64xf32, #tpu.memory_space<vmem>>, vector<1x441x64xf32>
    %29 = vector.shape_cast %28 : vector<1x441x64xf32> to vector<441x64xf32>
    %c2 = arith.constant 2 : index
    %c0_32 = arith.constant 0 : index
    %c0_33 = arith.constant 0 : index
    %30 = vector.load %arg2[%c2, %c0_32, %c0_33] : memref<4x64x32xf32, #tpu.memory_space<vmem>>, vector<1x64x32xf32>
    %31 = vector.shape_cast %30 : vector<1x64x32xf32> to vector<64x32xf32>
    %cst_34 = arith.constant dense<0.000000e+00> : vector<441x32xf32>
    %32 = tpu.matmul %29, %31, %cst_34 {dimension_numbers = #tpu.dot_dimension_numbers<[1], [0], [0], [1], [0, 0, 1, 1], [], []>} : vector<441x64xf32>, vector<64x32xf32>, vector<441x32xf32> -> vector<441x32xf32>
    %33 = arith.addf %27, %32 : vector<441x32xf32>
    %c0_35 = arith.constant 0 : index
    %c0_36 = arith.constant 0 : index
    %c0_37 = arith.constant 0 : index
    %34 = vector.load %arg4[%c0_35, %c0_36, %c0_37] : memref<1x441x32xf32, #tpu.memory_space<vmem>>, vector<1x441x32xf32>
    %35 = vector.shape_cast %34 : vector<1x441x32xf32> to vector<441x32xf32>
    %36 = vector.shape_cast %33 : vector<441x32xf32> to vector<1x441x32xf32>
    tpu.vector_store %arg4[%c0_35, %c0_36, %c0_37], %36 {strides = array<i32>} : memref<1x441x32xf32, #tpu.memory_space<vmem>>, vector<1x441x32xf32>,
    %c0_38 = arith.constant 0 : index
    %c0_39 = arith.constant 0 : index
    %c0_40 = arith.constant 0 : index
    %37 = vector.load %arg4[%c0_38, %c0_39, %c0_40] : memref<1x441x32xf32, #tpu.memory_space<vmem>>, vector<1x441x32xf32>
    %38 = vector.shape_cast %37 : vector<1x441x32xf32> to vector<441x32xf32>
    %c0_41 = arith.constant 0 : index
    %c22 = arith.constant 22 : index
    %c0_42 = arith.constant 0 : index
    %39 = vector.load %arg1[%c0_41, %c22, %c0_42] : memref<1x463x64xf32, #tpu.memory_space<vmem>>, vector<1x441x64xf32>
    %40 = vector.shape_cast %39 : vector<1x441x64xf32> to vector<441x64xf32>
    %c3 = arith.constant 3 : index
    %c0_43 = arith.constant 0 : index
    %c0_44 = arith.constant 0 : index
    %41 = vector.load %arg2[%c3, %c0_43, %c0_44] : memref<4x64x32xf32, #tpu.memory_space<vmem>>, vector<1x64x32xf32>
    %42 = vector.shape_cast %41 : vector<1x64x32xf32> to vector<64x32xf32>
    %cst_45 = arith.constant dense<0.000000e+00> : vector<441x32xf32>
    %43 = tpu.matmul %40, %42, %cst_45 {dimension_numbers = #tpu.dot_dimension_numbers<[1], [0], [0], [1], [0, 0, 1, 1], [], []>} : vector<441x64xf32>, vector<64x32xf32>, vector<441x32xf32> -> vector<441x32xf32>
    %44 = arith.addf %38, %43 : vector<441x32xf32>
    %c0_46 = arith.constant 0 : index
    %c0_47 = arith.constant 0 : index
    %c0_48 = arith.constant 0 : index
    %45 = vector.load %arg4[%c0_46, %c0_47, %c0_48] : memref<1x441x32xf32, #tpu.memory_space<vmem>>, vector<1x441x32xf32>
    %46 = vector.shape_cast %45 : vector<1x441x32xf32> to vector<441x32xf32>
    %47 = vector.shape_cast %44 : vector<441x32xf32> to vector<1x441x32xf32>
    tpu.vector_store %arg4[%c0_46, %c0_47, %c0_48], %47 {strides = array<i32>} : memref<1x441x32xf32, #tpu.memory_space<vmem>>, vector<1x441x32xf32>,
    %c0_49 = arith.constant 0 : index
    %c0_50 = arith.constant 0 : index
    %c0_51 = arith.constant 0 : index
    %48 = vector.load %arg4[%c0_49, %c0_50, %c0_51] : memref<1x441x32xf32, #tpu.memory_space<vmem>>, vector<1x441x32xf32>
    %49 = vector.shape_cast %48 : vector<1x441x32xf32> to vector<441x32xf32>
    %c0_52 = arith.constant 0 : index
    %c0_53 = arith.constant 0 : index
    %50 = vector.load %arg3[%c0_52, %c0_53] : memref<1x32xf32, #tpu.memory_space<vmem>>, vector<1x32xf32>
    %51 = vector.broadcast %50 : vector<1x32xf32> to vector<441x32xf32>
    %52 = arith.addf %49, %51 : vector<441x32xf32>
    %cst_54 = arith.constant 0.000000e+00 : f32
    %53 = vector.broadcast %cst_54 : f32 to vector<441x32xf32>
    %54 = arith.maximumf %52, %53 : vector<441x32xf32>
    %c0_55 = arith.constant 0 : index
    %c0_56 = arith.constant 0 : index
    %c0_57 = arith.constant 0 : index
    %55 = vector.load %arg4[%c0_55, %c0_56, %c0_57] : memref<1x441x32xf32, #tpu.memory_space<vmem>>, vector<1x441x32xf32>
    %56 = vector.shape_cast %55 : vector<1x441x32xf32> to vector<441x32xf32>
    %57 = vector.shape_cast %54 : vector<441x32xf32> to vector<1x441x32xf32>
    tpu.vector_store %arg4[%c0_55, %c0_56, %c0_57], %57 {strides = array<i32>} : memref<1x441x32xf32, #tpu.memory_space<vmem>>, vector<1x441x32xf32>,
    return
  }
  func.func @transform_0(%arg0: i32) -> (i32, i32, i32) {
    %c0_i32 = arith.constant 0 : i32
    %c0_i32_0 = arith.constant 0 : i32
    %c0_i32_1 = arith.constant 0 : i32
    return %arg0, %c0_i32, %c0_i32_0 : i32, i32, i32
  }
  func.func @transform_1(%arg0: i32) -> (i32, i32, i32) {
    %c0_i32 = arith.constant 0 : i32
    %c0_i32_0 = arith.constant 0 : i32
    %c0_i32_1 = arith.constant 0 : i32
    %c0_i32_2 = arith.constant 0 : i32
    return %c0_i32, %c0_i32_0, %c0_i32_1 : i32, i32, i32
  }
  func.func @transform_2(%arg0: i32) -> (i32, i32) {
    %c0_i32 = arith.constant 0 : i32
    %c0_i32_0 = arith.constant 0 : i32
    %c0_i32_1 = arith.constant 0 : i32
    return %c0_i32, %c0_i32_0 : i32, i32
  }
  func.func @transform_3(%arg0: i32) -> (i32, i32, i32) {
    %c0_i32 = arith.constant 0 : i32
    %c0_i32_0 = arith.constant 0 : i32
    %c0_i32_1 = arith.constant 0 : i32
    return %arg0, %c0_i32, %c0_i32_0 : i32, i32, i32
  }
}

module attributes {stable_mosaic.version = 11 : i64} {
  func.func @_conv23_kernel(%arg0: i32, %arg1: memref<1x111x128xf32, #tpu.memory_space<vmem>>, %arg2: memref<4x128x64xf32, #tpu.memory_space<vmem>>, %arg3: memref<1x64xf32, #tpu.memory_space<vmem>>, %arg4: memref<9x64x32xf32, #tpu.memory_space<vmem>>, %arg5: memref<1x32xf32, #tpu.memory_space<vmem>>, %arg6: memref<1x100x32xf32, #tpu.memory_space<vmem>>, %arg7: memref<122x64xf32, #tpu.memory_space<vmem>>) attributes {dimension_semantics = [#tpu.dimension_semantics<parallel>], iteration_bounds = array<i64: 2>, scalar_prefetch = 0 : i64, scratch_operands = 1 : i64, tpu.core_type = #tpu.core_type<tc>, window_params = [{transform_indices = @transform_0, window_bounds = array<i64: 1, 111, 128>}, {pipeline_mode = #tpu.pipeline_mode<synchronous>, transform_indices = @transform_1, window_bounds = array<i64: 4, 128, 64>}, {pipeline_mode = #tpu.pipeline_mode<synchronous>, transform_indices = @transform_2, window_bounds = array<i64: 1, 64>}, {pipeline_mode = #tpu.pipeline_mode<synchronous>, transform_indices = @transform_3, window_bounds = array<i64: 9, 64, 32>}, {pipeline_mode = #tpu.pipeline_mode<synchronous>, transform_indices = @transform_4, window_bounds = array<i64: 1, 32>}, {transform_indices = @transform_5, window_bounds = array<i64: 1, 100, 32>}]} {
    %cst = arith.constant 0.000000e+00 : f32
    %0 = vector.broadcast %cst : f32 to vector<122x64xf32>
    %c0 = arith.constant 0 : index
    %c0_0 = arith.constant 0 : index
    %1 = vector.load %arg7[%c0, %c0_0] : memref<122x64xf32, #tpu.memory_space<vmem>>, vector<122x64xf32>
    tpu.vector_store %arg7[%c0, %c0_0], %0 {strides = array<i32>} : memref<122x64xf32, #tpu.memory_space<vmem>>, vector<122x64xf32>,
    %c0_1 = arith.constant 0 : index
    %c0_2 = arith.constant 0 : index
    %2 = vector.load %arg7[%c0_1, %c0_2] : memref<122x64xf32, #tpu.memory_space<vmem>>, vector<100x64xf32>
    %c0_3 = arith.constant 0 : index
    %c0_4 = arith.constant 0 : index
    %c0_5 = arith.constant 0 : index
    %3 = vector.load %arg1[%c0_3, %c0_4, %c0_5] : memref<1x111x128xf32, #tpu.memory_space<vmem>>, vector<1x100x128xf32>
    %4 = vector.shape_cast %3 : vector<1x100x128xf32> to vector<100x128xf32>
    %c0_6 = arith.constant 0 : index
    %c0_7 = arith.constant 0 : index
    %c0_8 = arith.constant 0 : index
    %5 = vector.load %arg2[%c0_6, %c0_7, %c0_8] : memref<4x128x64xf32, #tpu.memory_space<vmem>>, vector<1x128x64xf32>
    %6 = vector.shape_cast %5 : vector<1x128x64xf32> to vector<128x64xf32>
    %cst_9 = arith.constant dense<0.000000e+00> : vector<100x64xf32>
    %7 = tpu.matmul %4, %6, %cst_9 {dimension_numbers = #tpu.dot_dimension_numbers<[1], [0], [0], [1], [0, 0, 1, 1], [], []>} : vector<100x128xf32>, vector<128x64xf32>, vector<100x64xf32> -> vector<100x64xf32>
    %8 = arith.addf %2, %7 : vector<100x64xf32>
    %c0_10 = arith.constant 0 : index
    %c0_11 = arith.constant 0 : index
    %9 = vector.load %arg7[%c0_10, %c0_11] : memref<122x64xf32, #tpu.memory_space<vmem>>, vector<100x64xf32>
    tpu.vector_store %arg7[%c0_10, %c0_11], %8 {strides = array<i32>} : memref<122x64xf32, #tpu.memory_space<vmem>>, vector<100x64xf32>,
    %c0_12 = arith.constant 0 : index
    %c0_13 = arith.constant 0 : index
    %10 = vector.load %arg7[%c0_12, %c0_13] : memref<122x64xf32, #tpu.memory_space<vmem>>, vector<100x64xf32>
    %c0_14 = arith.constant 0 : index
    %c1 = arith.constant 1 : index
    %c0_15 = arith.constant 0 : index
    %11 = vector.load %arg1[%c0_14, %c1, %c0_15] : memref<1x111x128xf32, #tpu.memory_space<vmem>>, vector<1x100x128xf32>
    %12 = vector.shape_cast %11 : vector<1x100x128xf32> to vector<100x128xf32>
    %c1_16 = arith.constant 1 : index
    %c0_17 = arith.constant 0 : index
    %c0_18 = arith.constant 0 : index
    %13 = vector.load %arg2[%c1_16, %c0_17, %c0_18] : memref<4x128x64xf32, #tpu.memory_space<vmem>>, vector<1x128x64xf32>
    %14 = vector.shape_cast %13 : vector<1x128x64xf32> to vector<128x64xf32>
    %cst_19 = arith.constant dense<0.000000e+00> : vector<100x64xf32>
    %15 = tpu.matmul %12, %14, %cst_19 {dimension_numbers = #tpu.dot_dimension_numbers<[1], [0], [0], [1], [0, 0, 1, 1], [], []>} : vector<100x128xf32>, vector<128x64xf32>, vector<100x64xf32> -> vector<100x64xf32>
    %16 = arith.addf %10, %15 : vector<100x64xf32>
    %c0_20 = arith.constant 0 : index
    %c0_21 = arith.constant 0 : index
    %17 = vector.load %arg7[%c0_20, %c0_21] : memref<122x64xf32, #tpu.memory_space<vmem>>, vector<100x64xf32>
    tpu.vector_store %arg7[%c0_20, %c0_21], %16 {strides = array<i32>} : memref<122x64xf32, #tpu.memory_space<vmem>>, vector<100x64xf32>,
    %c0_22 = arith.constant 0 : index
    %c0_23 = arith.constant 0 : index
    %18 = vector.load %arg7[%c0_22, %c0_23] : memref<122x64xf32, #tpu.memory_space<vmem>>, vector<100x64xf32>
    %c0_24 = arith.constant 0 : index
    %c10 = arith.constant 10 : index
    %c0_25 = arith.constant 0 : index
    %19 = vector.load %arg1[%c0_24, %c10, %c0_25] : memref<1x111x128xf32, #tpu.memory_space<vmem>>, vector<1x100x128xf32>
    %20 = vector.shape_cast %19 : vector<1x100x128xf32> to vector<100x128xf32>
    %c2 = arith.constant 2 : index
    %c0_26 = arith.constant 0 : index
    %c0_27 = arith.constant 0 : index
    %21 = vector.load %arg2[%c2, %c0_26, %c0_27] : memref<4x128x64xf32, #tpu.memory_space<vmem>>, vector<1x128x64xf32>
    %22 = vector.shape_cast %21 : vector<1x128x64xf32> to vector<128x64xf32>
    %cst_28 = arith.constant dense<0.000000e+00> : vector<100x64xf32>
    %23 = tpu.matmul %20, %22, %cst_28 {dimension_numbers = #tpu.dot_dimension_numbers<[1], [0], [0], [1], [0, 0, 1, 1], [], []>} : vector<100x128xf32>, vector<128x64xf32>, vector<100x64xf32> -> vector<100x64xf32>
    %24 = arith.addf %18, %23 : vector<100x64xf32>
    %c0_29 = arith.constant 0 : index
    %c0_30 = arith.constant 0 : index
    %25 = vector.load %arg7[%c0_29, %c0_30] : memref<122x64xf32, #tpu.memory_space<vmem>>, vector<100x64xf32>
    tpu.vector_store %arg7[%c0_29, %c0_30], %24 {strides = array<i32>} : memref<122x64xf32, #tpu.memory_space<vmem>>, vector<100x64xf32>,
    %c0_31 = arith.constant 0 : index
    %c0_32 = arith.constant 0 : index
    %26 = vector.load %arg7[%c0_31, %c0_32] : memref<122x64xf32, #tpu.memory_space<vmem>>, vector<100x64xf32>
    %c0_33 = arith.constant 0 : index
    %c11 = arith.constant 11 : index
    %c0_34 = arith.constant 0 : index
    %27 = vector.load %arg1[%c0_33, %c11, %c0_34] : memref<1x111x128xf32, #tpu.memory_space<vmem>>, vector<1x100x128xf32>
    %28 = vector.shape_cast %27 : vector<1x100x128xf32> to vector<100x128xf32>
    %c3 = arith.constant 3 : index
    %c0_35 = arith.constant 0 : index
    %c0_36 = arith.constant 0 : index
    %29 = vector.load %arg2[%c3, %c0_35, %c0_36] : memref<4x128x64xf32, #tpu.memory_space<vmem>>, vector<1x128x64xf32>
    %30 = vector.shape_cast %29 : vector<1x128x64xf32> to vector<128x64xf32>
    %cst_37 = arith.constant dense<0.000000e+00> : vector<100x64xf32>
    %31 = tpu.matmul %28, %30, %cst_37 {dimension_numbers = #tpu.dot_dimension_numbers<[1], [0], [0], [1], [0, 0, 1, 1], [], []>} : vector<100x128xf32>, vector<128x64xf32>, vector<100x64xf32> -> vector<100x64xf32>
    %32 = arith.addf %26, %31 : vector<100x64xf32>
    %c0_38 = arith.constant 0 : index
    %c0_39 = arith.constant 0 : index
    %33 = vector.load %arg7[%c0_38, %c0_39] : memref<122x64xf32, #tpu.memory_space<vmem>>, vector<100x64xf32>
    tpu.vector_store %arg7[%c0_38, %c0_39], %32 {strides = array<i32>} : memref<122x64xf32, #tpu.memory_space<vmem>>, vector<100x64xf32>,
    %c0_40 = arith.constant 0 : index
    %c0_41 = arith.constant 0 : index
    %34 = vector.load %arg7[%c0_40, %c0_41] : memref<122x64xf32, #tpu.memory_space<vmem>>, vector<100x64xf32>
    %c0_42 = arith.constant 0 : index
    %c0_43 = arith.constant 0 : index
    %35 = vector.load %arg3[%c0_42, %c0_43] : memref<1x64xf32, #tpu.memory_space<vmem>>, vector<1x64xf32>
    %36 = vector.broadcast %35 : vector<1x64xf32> to vector<100x64xf32>
    %37 = arith.addf %34, %36 : vector<100x64xf32>
    %cst_44 = arith.constant 0.000000e+00 : f32
    %38 = vector.broadcast %cst_44 : f32 to vector<100x64xf32>
    %39 = arith.maximumf %37, %38 : vector<100x64xf32>
    %c0_45 = arith.constant 0 : index
    %c0_46 = arith.constant 0 : index
    %40 = vector.load %arg7[%c0_45, %c0_46] : memref<122x64xf32, #tpu.memory_space<vmem>>, vector<100x64xf32>
    tpu.vector_store %arg7[%c0_45, %c0_46], %39 {strides = array<i32>} : memref<122x64xf32, #tpu.memory_space<vmem>>, vector<100x64xf32>,
    %cst_47 = arith.constant 0.000000e+00 : f32
    %41 = vector.broadcast %cst_47 : f32 to vector<100x32xf32>
    %c0_48 = arith.constant 0 : index
    %c0_49 = arith.constant 0 : index
    %c0_50 = arith.constant 0 : index
    %42 = vector.load %arg6[%c0_48, %c0_49, %c0_50] : memref<1x100x32xf32, #tpu.memory_space<vmem>>, vector<1x100x32xf32>
    %43 = vector.shape_cast %42 : vector<1x100x32xf32> to vector<100x32xf32>
    %44 = vector.shape_cast %41 : vector<100x32xf32> to vector<1x100x32xf32>
    tpu.vector_store %arg6[%c0_48, %c0_49, %c0_50], %44 {strides = array<i32>} : memref<1x100x32xf32, #tpu.memory_space<vmem>>, vector<1x100x32xf32>,
    %c0_51 = arith.constant 0 : index
    %c0_52 = arith.constant 0 : index
    %c0_53 = arith.constant 0 : index
    %45 = vector.load %arg6[%c0_51, %c0_52, %c0_53] : memref<1x100x32xf32, #tpu.memory_space<vmem>>, vector<1x100x32xf32>
    %46 = vector.shape_cast %45 : vector<1x100x32xf32> to vector<100x32xf32>
    %c0_54 = arith.constant 0 : index
    %c0_55 = arith.constant 0 : index
    %47 = vector.load %arg7[%c0_54, %c0_55] : memref<122x64xf32, #tpu.memory_space<vmem>>, vector<100x64xf32>
    %c0_56 = arith.constant 0 : index
    %c0_57 = arith.constant 0 : index
    %c0_58 = arith.constant 0 : index
    %48 = vector.load %arg4[%c0_56, %c0_57, %c0_58] : memref<9x64x32xf32, #tpu.memory_space<vmem>>, vector<1x64x32xf32>
    %49 = vector.shape_cast %48 : vector<1x64x32xf32> to vector<64x32xf32>
    %cst_59 = arith.constant dense<0.000000e+00> : vector<100x32xf32>
    %50 = tpu.matmul %47, %49, %cst_59 {dimension_numbers = #tpu.dot_dimension_numbers<[1], [0], [0], [1], [0, 0, 1, 1], [], []>} : vector<100x64xf32>, vector<64x32xf32>, vector<100x32xf32> -> vector<100x32xf32>
    %51 = arith.addf %46, %50 : vector<100x32xf32>
    %c0_60 = arith.constant 0 : index
    %c0_61 = arith.constant 0 : index
    %c0_62 = arith.constant 0 : index
    %52 = vector.load %arg6[%c0_60, %c0_61, %c0_62] : memref<1x100x32xf32, #tpu.memory_space<vmem>>, vector<1x100x32xf32>
    %53 = vector.shape_cast %52 : vector<1x100x32xf32> to vector<100x32xf32>
    %54 = vector.shape_cast %51 : vector<100x32xf32> to vector<1x100x32xf32>
    tpu.vector_store %arg6[%c0_60, %c0_61, %c0_62], %54 {strides = array<i32>} : memref<1x100x32xf32, #tpu.memory_space<vmem>>, vector<1x100x32xf32>,
    %c0_63 = arith.constant 0 : index
    %c0_64 = arith.constant 0 : index
    %c0_65 = arith.constant 0 : index
    %55 = vector.load %arg6[%c0_63, %c0_64, %c0_65] : memref<1x100x32xf32, #tpu.memory_space<vmem>>, vector<1x100x32xf32>
    %56 = vector.shape_cast %55 : vector<1x100x32xf32> to vector<100x32xf32>
    %c1_66 = arith.constant 1 : index
    %c0_67 = arith.constant 0 : index
    %57 = vector.load %arg7[%c1_66, %c0_67] : memref<122x64xf32, #tpu.memory_space<vmem>>, vector<100x64xf32>
    %c1_68 = arith.constant 1 : index
    %c0_69 = arith.constant 0 : index
    %c0_70 = arith.constant 0 : index
    %58 = vector.load %arg4[%c1_68, %c0_69, %c0_70] : memref<9x64x32xf32, #tpu.memory_space<vmem>>, vector<1x64x32xf32>
    %59 = vector.shape_cast %58 : vector<1x64x32xf32> to vector<64x32xf32>
    %cst_71 = arith.constant dense<0.000000e+00> : vector<100x32xf32>
    %60 = tpu.matmul %57, %59, %cst_71 {dimension_numbers = #tpu.dot_dimension_numbers<[1], [0], [0], [1], [0, 0, 1, 1], [], []>} : vector<100x64xf32>, vector<64x32xf32>, vector<100x32xf32> -> vector<100x32xf32>
    %61 = arith.addf %56, %60 : vector<100x32xf32>
    %c0_72 = arith.constant 0 : index
    %c0_73 = arith.constant 0 : index
    %c0_74 = arith.constant 0 : index
    %62 = vector.load %arg6[%c0_72, %c0_73, %c0_74] : memref<1x100x32xf32, #tpu.memory_space<vmem>>, vector<1x100x32xf32>
    %63 = vector.shape_cast %62 : vector<1x100x32xf32> to vector<100x32xf32>
    %64 = vector.shape_cast %61 : vector<100x32xf32> to vector<1x100x32xf32>
    tpu.vector_store %arg6[%c0_72, %c0_73, %c0_74], %64 {strides = array<i32>} : memref<1x100x32xf32, #tpu.memory_space<vmem>>, vector<1x100x32xf32>,
    %c0_75 = arith.constant 0 : index
    %c0_76 = arith.constant 0 : index
    %c0_77 = arith.constant 0 : index
    %65 = vector.load %arg6[%c0_75, %c0_76, %c0_77] : memref<1x100x32xf32, #tpu.memory_space<vmem>>, vector<1x100x32xf32>
    %66 = vector.shape_cast %65 : vector<1x100x32xf32> to vector<100x32xf32>
    %c2_78 = arith.constant 2 : index
    %c0_79 = arith.constant 0 : index
    %67 = vector.load %arg7[%c2_78, %c0_79] : memref<122x64xf32, #tpu.memory_space<vmem>>, vector<100x64xf32>
    %c2_80 = arith.constant 2 : index
    %c0_81 = arith.constant 0 : index
    %c0_82 = arith.constant 0 : index
    %68 = vector.load %arg4[%c2_80, %c0_81, %c0_82] : memref<9x64x32xf32, #tpu.memory_space<vmem>>, vector<1x64x32xf32>
    %69 = vector.shape_cast %68 : vector<1x64x32xf32> to vector<64x32xf32>
    %cst_83 = arith.constant dense<0.000000e+00> : vector<100x32xf32>
    %70 = tpu.matmul %67, %69, %cst_83 {dimension_numbers = #tpu.dot_dimension_numbers<[1], [0], [0], [1], [0, 0, 1, 1], [], []>} : vector<100x64xf32>, vector<64x32xf32>, vector<100x32xf32> -> vector<100x32xf32>
    %71 = arith.addf %66, %70 : vector<100x32xf32>
    %c0_84 = arith.constant 0 : index
    %c0_85 = arith.constant 0 : index
    %c0_86 = arith.constant 0 : index
    %72 = vector.load %arg6[%c0_84, %c0_85, %c0_86] : memref<1x100x32xf32, #tpu.memory_space<vmem>>, vector<1x100x32xf32>
    %73 = vector.shape_cast %72 : vector<1x100x32xf32> to vector<100x32xf32>
    %74 = vector.shape_cast %71 : vector<100x32xf32> to vector<1x100x32xf32>
    tpu.vector_store %arg6[%c0_84, %c0_85, %c0_86], %74 {strides = array<i32>} : memref<1x100x32xf32, #tpu.memory_space<vmem>>, vector<1x100x32xf32>,
    %c0_87 = arith.constant 0 : index
    %c0_88 = arith.constant 0 : index
    %c0_89 = arith.constant 0 : index
    %75 = vector.load %arg6[%c0_87, %c0_88, %c0_89] : memref<1x100x32xf32, #tpu.memory_space<vmem>>, vector<1x100x32xf32>
    %76 = vector.shape_cast %75 : vector<1x100x32xf32> to vector<100x32xf32>
    %c10_90 = arith.constant 10 : index
    %c0_91 = arith.constant 0 : index
    %77 = vector.load %arg7[%c10_90, %c0_91] : memref<122x64xf32, #tpu.memory_space<vmem>>, vector<100x64xf32>
    %c3_92 = arith.constant 3 : index
    %c0_93 = arith.constant 0 : index
    %c0_94 = arith.constant 0 : index
    %78 = vector.load %arg4[%c3_92, %c0_93, %c0_94] : memref<9x64x32xf32, #tpu.memory_space<vmem>>, vector<1x64x32xf32>
    %79 = vector.shape_cast %78 : vector<1x64x32xf32> to vector<64x32xf32>
    %cst_95 = arith.constant dense<0.000000e+00> : vector<100x32xf32>
    %80 = tpu.matmul %77, %79, %cst_95 {dimension_numbers = #tpu.dot_dimension_numbers<[1], [0], [0], [1], [0, 0, 1, 1], [], []>} : vector<100x64xf32>, vector<64x32xf32>, vector<100x32xf32> -> vector<100x32xf32>
    %81 = arith.addf %76, %80 : vector<100x32xf32>
    %c0_96 = arith.constant 0 : index
    %c0_97 = arith.constant 0 : index
    %c0_98 = arith.constant 0 : index
    %82 = vector.load %arg6[%c0_96, %c0_97, %c0_98] : memref<1x100x32xf32, #tpu.memory_space<vmem>>, vector<1x100x32xf32>
    %83 = vector.shape_cast %82 : vector<1x100x32xf32> to vector<100x32xf32>
    %84 = vector.shape_cast %81 : vector<100x32xf32> to vector<1x100x32xf32>
    tpu.vector_store %arg6[%c0_96, %c0_97, %c0_98], %84 {strides = array<i32>} : memref<1x100x32xf32, #tpu.memory_space<vmem>>, vector<1x100x32xf32>,
    %c0_99 = arith.constant 0 : index
    %c0_100 = arith.constant 0 : index
    %c0_101 = arith.constant 0 : index
    %85 = vector.load %arg6[%c0_99, %c0_100, %c0_101] : memref<1x100x32xf32, #tpu.memory_space<vmem>>, vector<1x100x32xf32>
    %86 = vector.shape_cast %85 : vector<1x100x32xf32> to vector<100x32xf32>
    %c11_102 = arith.constant 11 : index
    %c0_103 = arith.constant 0 : index
    %87 = vector.load %arg7[%c11_102, %c0_103] : memref<122x64xf32, #tpu.memory_space<vmem>>, vector<100x64xf32>
    %c4 = arith.constant 4 : index
    %c0_104 = arith.constant 0 : index
    %c0_105 = arith.constant 0 : index
    %88 = vector.load %arg4[%c4, %c0_104, %c0_105] : memref<9x64x32xf32, #tpu.memory_space<vmem>>, vector<1x64x32xf32>
    %89 = vector.shape_cast %88 : vector<1x64x32xf32> to vector<64x32xf32>
    %cst_106 = arith.constant dense<0.000000e+00> : vector<100x32xf32>
    %90 = tpu.matmul %87, %89, %cst_106 {dimension_numbers = #tpu.dot_dimension_numbers<[1], [0], [0], [1], [0, 0, 1, 1], [], []>} : vector<100x64xf32>, vector<64x32xf32>, vector<100x32xf32> -> vector<100x32xf32>
    %91 = arith.addf %86, %90 : vector<100x32xf32>
    %c0_107 = arith.constant 0 : index
    %c0_108 = arith.constant 0 : index
    %c0_109 = arith.constant 0 : index
    %92 = vector.load %arg6[%c0_107, %c0_108, %c0_109] : memref<1x100x32xf32, #tpu.memory_space<vmem>>, vector<1x100x32xf32>
    %93 = vector.shape_cast %92 : vector<1x100x32xf32> to vector<100x32xf32>
    %94 = vector.shape_cast %91 : vector<100x32xf32> to vector<1x100x32xf32>
    tpu.vector_store %arg6[%c0_107, %c0_108, %c0_109], %94 {strides = array<i32>} : memref<1x100x32xf32, #tpu.memory_space<vmem>>, vector<1x100x32xf32>,
    %c0_110 = arith.constant 0 : index
    %c0_111 = arith.constant 0 : index
    %c0_112 = arith.constant 0 : index
    %95 = vector.load %arg6[%c0_110, %c0_111, %c0_112] : memref<1x100x32xf32, #tpu.memory_space<vmem>>, vector<1x100x32xf32>
    %96 = vector.shape_cast %95 : vector<1x100x32xf32> to vector<100x32xf32>
    %c12 = arith.constant 12 : index
    %c0_113 = arith.constant 0 : index
    %97 = vector.load %arg7[%c12, %c0_113] : memref<122x64xf32, #tpu.memory_space<vmem>>, vector<100x64xf32>
    %c5 = arith.constant 5 : index
    %c0_114 = arith.constant 0 : index
    %c0_115 = arith.constant 0 : index
    %98 = vector.load %arg4[%c5, %c0_114, %c0_115] : memref<9x64x32xf32, #tpu.memory_space<vmem>>, vector<1x64x32xf32>
    %99 = vector.shape_cast %98 : vector<1x64x32xf32> to vector<64x32xf32>
    %cst_116 = arith.constant dense<0.000000e+00> : vector<100x32xf32>
    %100 = tpu.matmul %97, %99, %cst_116 {dimension_numbers = #tpu.dot_dimension_numbers<[1], [0], [0], [1], [0, 0, 1, 1], [], []>} : vector<100x64xf32>, vector<64x32xf32>, vector<100x32xf32> -> vector<100x32xf32>
    %101 = arith.addf %96, %100 : vector<100x32xf32>
    %c0_117 = arith.constant 0 : index
    %c0_118 = arith.constant 0 : index
    %c0_119 = arith.constant 0 : index
    %102 = vector.load %arg6[%c0_117, %c0_118, %c0_119] : memref<1x100x32xf32, #tpu.memory_space<vmem>>, vector<1x100x32xf32>
    %103 = vector.shape_cast %102 : vector<1x100x32xf32> to vector<100x32xf32>
    %104 = vector.shape_cast %101 : vector<100x32xf32> to vector<1x100x32xf32>
    tpu.vector_store %arg6[%c0_117, %c0_118, %c0_119], %104 {strides = array<i32>} : memref<1x100x32xf32, #tpu.memory_space<vmem>>, vector<1x100x32xf32>,
    %c0_120 = arith.constant 0 : index
    %c0_121 = arith.constant 0 : index
    %c0_122 = arith.constant 0 : index
    %105 = vector.load %arg6[%c0_120, %c0_121, %c0_122] : memref<1x100x32xf32, #tpu.memory_space<vmem>>, vector<1x100x32xf32>
    %106 = vector.shape_cast %105 : vector<1x100x32xf32> to vector<100x32xf32>
    %c20 = arith.constant 20 : index
    %c0_123 = arith.constant 0 : index
    %107 = vector.load %arg7[%c20, %c0_123] : memref<122x64xf32, #tpu.memory_space<vmem>>, vector<100x64xf32>
    %c6 = arith.constant 6 : index
    %c0_124 = arith.constant 0 : index
    %c0_125 = arith.constant 0 : index
    %108 = vector.load %arg4[%c6, %c0_124, %c0_125] : memref<9x64x32xf32, #tpu.memory_space<vmem>>, vector<1x64x32xf32>
    %109 = vector.shape_cast %108 : vector<1x64x32xf32> to vector<64x32xf32>
    %cst_126 = arith.constant dense<0.000000e+00> : vector<100x32xf32>
    %110 = tpu.matmul %107, %109, %cst_126 {dimension_numbers = #tpu.dot_dimension_numbers<[1], [0], [0], [1], [0, 0, 1, 1], [], []>} : vector<100x64xf32>, vector<64x32xf32>, vector<100x32xf32> -> vector<100x32xf32>
    %111 = arith.addf %106, %110 : vector<100x32xf32>
    %c0_127 = arith.constant 0 : index
    %c0_128 = arith.constant 0 : index
    %c0_129 = arith.constant 0 : index
    %112 = vector.load %arg6[%c0_127, %c0_128, %c0_129] : memref<1x100x32xf32, #tpu.memory_space<vmem>>, vector<1x100x32xf32>
    %113 = vector.shape_cast %112 : vector<1x100x32xf32> to vector<100x32xf32>
    %114 = vector.shape_cast %111 : vector<100x32xf32> to vector<1x100x32xf32>
    tpu.vector_store %arg6[%c0_127, %c0_128, %c0_129], %114 {strides = array<i32>} : memref<1x100x32xf32, #tpu.memory_space<vmem>>, vector<1x100x32xf32>,
    %c0_130 = arith.constant 0 : index
    %c0_131 = arith.constant 0 : index
    %c0_132 = arith.constant 0 : index
    %115 = vector.load %arg6[%c0_130, %c0_131, %c0_132] : memref<1x100x32xf32, #tpu.memory_space<vmem>>, vector<1x100x32xf32>
    %116 = vector.shape_cast %115 : vector<1x100x32xf32> to vector<100x32xf32>
    %c21 = arith.constant 21 : index
    %c0_133 = arith.constant 0 : index
    %117 = vector.load %arg7[%c21, %c0_133] : memref<122x64xf32, #tpu.memory_space<vmem>>, vector<100x64xf32>
    %c7 = arith.constant 7 : index
    %c0_134 = arith.constant 0 : index
    %c0_135 = arith.constant 0 : index
    %118 = vector.load %arg4[%c7, %c0_134, %c0_135] : memref<9x64x32xf32, #tpu.memory_space<vmem>>, vector<1x64x32xf32>
    %119 = vector.shape_cast %118 : vector<1x64x32xf32> to vector<64x32xf32>
    %cst_136 = arith.constant dense<0.000000e+00> : vector<100x32xf32>
    %120 = tpu.matmul %117, %119, %cst_136 {dimension_numbers = #tpu.dot_dimension_numbers<[1], [0], [0], [1], [0, 0, 1, 1], [], []>} : vector<100x64xf32>, vector<64x32xf32>, vector<100x32xf32> -> vector<100x32xf32>
    %121 = arith.addf %116, %120 : vector<100x32xf32>
    %c0_137 = arith.constant 0 : index
    %c0_138 = arith.constant 0 : index
    %c0_139 = arith.constant 0 : index
    %122 = vector.load %arg6[%c0_137, %c0_138, %c0_139] : memref<1x100x32xf32, #tpu.memory_space<vmem>>, vector<1x100x32xf32>
    %123 = vector.shape_cast %122 : vector<1x100x32xf32> to vector<100x32xf32>
    %124 = vector.shape_cast %121 : vector<100x32xf32> to vector<1x100x32xf32>
    tpu.vector_store %arg6[%c0_137, %c0_138, %c0_139], %124 {strides = array<i32>} : memref<1x100x32xf32, #tpu.memory_space<vmem>>, vector<1x100x32xf32>,
    %c0_140 = arith.constant 0 : index
    %c0_141 = arith.constant 0 : index
    %c0_142 = arith.constant 0 : index
    %125 = vector.load %arg6[%c0_140, %c0_141, %c0_142] : memref<1x100x32xf32, #tpu.memory_space<vmem>>, vector<1x100x32xf32>
    %126 = vector.shape_cast %125 : vector<1x100x32xf32> to vector<100x32xf32>
    %c22 = arith.constant 22 : index
    %c0_143 = arith.constant 0 : index
    %127 = vector.load %arg7[%c22, %c0_143] : memref<122x64xf32, #tpu.memory_space<vmem>>, vector<100x64xf32>
    %c8 = arith.constant 8 : index
    %c0_144 = arith.constant 0 : index
    %c0_145 = arith.constant 0 : index
    %128 = vector.load %arg4[%c8, %c0_144, %c0_145] : memref<9x64x32xf32, #tpu.memory_space<vmem>>, vector<1x64x32xf32>
    %129 = vector.shape_cast %128 : vector<1x64x32xf32> to vector<64x32xf32>
    %cst_146 = arith.constant dense<0.000000e+00> : vector<100x32xf32>
    %130 = tpu.matmul %127, %129, %cst_146 {dimension_numbers = #tpu.dot_dimension_numbers<[1], [0], [0], [1], [0, 0, 1, 1], [], []>} : vector<100x64xf32>, vector<64x32xf32>, vector<100x32xf32> -> vector<100x32xf32>
    %131 = arith.addf %126, %130 : vector<100x32xf32>
    %c0_147 = arith.constant 0 : index
    %c0_148 = arith.constant 0 : index
    %c0_149 = arith.constant 0 : index
    %132 = vector.load %arg6[%c0_147, %c0_148, %c0_149] : memref<1x100x32xf32, #tpu.memory_space<vmem>>, vector<1x100x32xf32>
    %133 = vector.shape_cast %132 : vector<1x100x32xf32> to vector<100x32xf32>
    %134 = vector.shape_cast %131 : vector<100x32xf32> to vector<1x100x32xf32>
    tpu.vector_store %arg6[%c0_147, %c0_148, %c0_149], %134 {strides = array<i32>} : memref<1x100x32xf32, #tpu.memory_space<vmem>>, vector<1x100x32xf32>,
    %c0_150 = arith.constant 0 : index
    %c0_151 = arith.constant 0 : index
    %c0_152 = arith.constant 0 : index
    %135 = vector.load %arg6[%c0_150, %c0_151, %c0_152] : memref<1x100x32xf32, #tpu.memory_space<vmem>>, vector<1x100x32xf32>
    %136 = vector.shape_cast %135 : vector<1x100x32xf32> to vector<100x32xf32>
    %c0_153 = arith.constant 0 : index
    %c0_154 = arith.constant 0 : index
    %137 = vector.load %arg5[%c0_153, %c0_154] : memref<1x32xf32, #tpu.memory_space<vmem>>, vector<1x32xf32>
    %138 = vector.broadcast %137 : vector<1x32xf32> to vector<100x32xf32>
    %139 = arith.addf %136, %138 : vector<100x32xf32>
    %cst_155 = arith.constant 0.000000e+00 : f32
    %140 = vector.broadcast %cst_155 : f32 to vector<100x32xf32>
    %141 = arith.maximumf %139, %140 : vector<100x32xf32>
    %c0_156 = arith.constant 0 : index
    %c0_157 = arith.constant 0 : index
    %c0_158 = arith.constant 0 : index
    %142 = vector.load %arg6[%c0_156, %c0_157, %c0_158] : memref<1x100x32xf32, #tpu.memory_space<vmem>>, vector<1x100x32xf32>
    %143 = vector.shape_cast %142 : vector<1x100x32xf32> to vector<100x32xf32>
    %144 = vector.shape_cast %141 : vector<100x32xf32> to vector<1x100x32xf32>
    tpu.vector_store %arg6[%c0_156, %c0_157, %c0_158], %144 {strides = array<i32>} : memref<1x100x32xf32, #tpu.memory_space<vmem>>, vector<1x100x32xf32>,
    return
  }
  func.func @transform_0(%arg0: i32) -> (i32, i32, i32) {
    %c0_i32 = arith.constant 0 : i32
    %c0_i32_0 = arith.constant 0 : i32
    %c0_i32_1 = arith.constant 0 : i32
    return %arg0, %c0_i32, %c0_i32_0 : i32, i32, i32
  }
  func.func @transform_1(%arg0: i32) -> (i32, i32, i32) {
    %c0_i32 = arith.constant 0 : i32
    %c0_i32_0 = arith.constant 0 : i32
    %c0_i32_1 = arith.constant 0 : i32
    %c0_i32_2 = arith.constant 0 : i32
    return %c0_i32, %c0_i32_0, %c0_i32_1 : i32, i32, i32
  }
  func.func @transform_2(%arg0: i32) -> (i32, i32) {
    %c0_i32 = arith.constant 0 : i32
    %c0_i32_0 = arith.constant 0 : i32
    %c0_i32_1 = arith.constant 0 : i32
    return %c0_i32, %c0_i32_0 : i32, i32
  }
  func.func @transform_3(%arg0: i32) -> (i32, i32, i32) {
    %c0_i32 = arith.constant 0 : i32
    %c0_i32_0 = arith.constant 0 : i32
    %c0_i32_1 = arith.constant 0 : i32
    %c0_i32_2 = arith.constant 0 : i32
    return %c0_i32, %c0_i32_0, %c0_i32_1 : i32, i32, i32
  }
  func.func @transform_4(%arg0: i32) -> (i32, i32) {
    %c0_i32 = arith.constant 0 : i32
    %c0_i32_0 = arith.constant 0 : i32
    %c0_i32_1 = arith.constant 0 : i32
    return %c0_i32, %c0_i32_0 : i32, i32
  }
  func.func @transform_5(%arg0: i32) -> (i32, i32, i32) {
    %c0_i32 = arith.constant 0 : i32
    %c0_i32_0 = arith.constant 0 : i32
    %c0_i32_1 = arith.constant 0 : i32
    return %arg0, %c0_i32, %c0_i32_0 : i32, i32, i32
  }
}

module attributes {stable_mosaic.version = 11 : i64} {
  func.func @_fc_critic_kernel(%arg0: i32, %arg1: memref<8x1568xf32, #tpu.memory_space<vmem>>, %arg2: memref<1568x64xf32, #tpu.memory_space<vmem>>, %arg3: memref<1x64xf32, #tpu.memory_space<vmem>>, %arg4: memref<64x1xf32, #tpu.memory_space<vmem>>, %arg5: memref<1x1xf32, #tpu.memory_space<vmem>>, %arg6: memref<8x64xf32, #tpu.memory_space<vmem>>, %arg7: memref<8x1xf32, #tpu.memory_space<vmem>>) attributes {dimension_semantics = [#tpu.dimension_semantics<parallel>], iteration_bounds = array<i64: 1>, scalar_prefetch = 0 : i64, scratch_operands = 0 : i64, tpu.core_type = #tpu.core_type<tc>, window_params = [{transform_indices = @transform_0, window_bounds = array<i64: 8, 1568>}, {pipeline_mode = #tpu.pipeline_mode<synchronous>, transform_indices = @transform_1, window_bounds = array<i64: 1568, 64>}, {pipeline_mode = #tpu.pipeline_mode<synchronous>, transform_indices = @transform_2, window_bounds = array<i64: 1, 64>}, {pipeline_mode = #tpu.pipeline_mode<synchronous>, transform_indices = @transform_3, window_bounds = array<i64: 64, 1>}, {pipeline_mode = #tpu.pipeline_mode<synchronous>, transform_indices = @transform_4, window_bounds = array<i64: 1, 1>}, {transform_indices = @transform_5, window_bounds = array<i64: 8, 64>}, {transform_indices = @transform_6, window_bounds = array<i64: 8, 1>}]} {
    %c0 = arith.constant 0 : index
    %c0_0 = arith.constant 0 : index
    %0 = vector.load %arg1[%c0, %c0_0] : memref<8x1568xf32, #tpu.memory_space<vmem>>, vector<8x1568xf32>
    %c0_1 = arith.constant 0 : index
    %c0_2 = arith.constant 0 : index
    %1 = vector.load %arg2[%c0_1, %c0_2] : memref<1568x64xf32, #tpu.memory_space<vmem>>, vector<1568x64xf32>
    %cst = arith.constant dense<0.000000e+00> : vector<8x64xf32>
    %2 = tpu.matmul %0, %1, %cst {dimension_numbers = #tpu.dot_dimension_numbers<[1], [0], [0], [1], [0, 0, 1, 1], [], []>} : vector<8x1568xf32>, vector<1568x64xf32>, vector<8x64xf32> -> vector<8x64xf32>
    %c0_3 = arith.constant 0 : index
    %c0_4 = arith.constant 0 : index
    %3 = vector.load %arg3[%c0_3, %c0_4] : memref<1x64xf32, #tpu.memory_space<vmem>>, vector<1x64xf32>
    %4 = vector.broadcast %3 : vector<1x64xf32> to vector<8x64xf32>
    %5 = arith.addf %2, %4 : vector<8x64xf32>
    %cst_5 = arith.constant 0.000000e+00 : f32
    %6 = vector.broadcast %cst_5 : f32 to vector<8x64xf32>
    %7 = arith.maximumf %5, %6 : vector<8x64xf32>
    %c0_6 = arith.constant 0 : index
    %c0_7 = arith.constant 0 : index
    %8 = vector.load %arg6[%c0_6, %c0_7] : memref<8x64xf32, #tpu.memory_space<vmem>>, vector<8x64xf32>
    tpu.vector_store %arg6[%c0_6, %c0_7], %7 {strides = array<i32>} : memref<8x64xf32, #tpu.memory_space<vmem>>, vector<8x64xf32>,
    %c0_8 = arith.constant 0 : index
    %c0_9 = arith.constant 0 : index
    %9 = vector.load %arg4[%c0_8, %c0_9] : memref<64x1xf32, #tpu.memory_space<vmem>>, vector<64x1xf32>
    %cst_10 = arith.constant dense<0.000000e+00> : vector<8x1xf32>
    %10 = tpu.matmul %7, %9, %cst_10 {dimension_numbers = #tpu.dot_dimension_numbers<[1], [0], [0], [1], [0, 0, 1, 1], [], []>} : vector<8x64xf32>, vector<64x1xf32>, vector<8x1xf32> -> vector<8x1xf32>
    %c0_11 = arith.constant 0 : index
    %c0_12 = arith.constant 0 : index
    %11 = vector.load %arg5[%c0_11, %c0_12] : memref<1x1xf32, #tpu.memory_space<vmem>>, vector<1x1xf32>
    %12 = vector.broadcast %11 : vector<1x1xf32> to vector<8x1xf32>
    %13 = arith.addf %10, %12 : vector<8x1xf32>
    %c0_13 = arith.constant 0 : index
    %c0_14 = arith.constant 0 : index
    %14 = vector.load %arg7[%c0_13, %c0_14] : memref<8x1xf32, #tpu.memory_space<vmem>>, vector<8x1xf32>
    tpu.vector_store %arg7[%c0_13, %c0_14], %13 {strides = array<i32>} : memref<8x1xf32, #tpu.memory_space<vmem>>, vector<8x1xf32>,
    return
  }
  func.func @transform_0(%arg0: i32) -> (i32, i32) {
    %c0_i32 = arith.constant 0 : i32
    %c0_i32_0 = arith.constant 0 : i32
    return %arg0, %c0_i32 : i32, i32
  }
  func.func @transform_1(%arg0: i32) -> (i32, i32) {
    %c0_i32 = arith.constant 0 : i32
    %c0_i32_0 = arith.constant 0 : i32
    %c0_i32_1 = arith.constant 0 : i32
    return %c0_i32, %c0_i32_0 : i32, i32
  }
  func.func @transform_2(%arg0: i32) -> (i32, i32) {
    %c0_i32 = arith.constant 0 : i32
    %c0_i32_0 = arith.constant 0 : i32
    %c0_i32_1 = arith.constant 0 : i32
    return %c0_i32, %c0_i32_0 : i32, i32
  }
  func.func @transform_3(%arg0: i32) -> (i32, i32) {
    %c0_i32 = arith.constant 0 : i32
    %c0_i32_0 = arith.constant 0 : i32
    %c0_i32_1 = arith.constant 0 : i32
    return %c0_i32, %c0_i32_0 : i32, i32
  }
  func.func @transform_4(%arg0: i32) -> (i32, i32) {
    %c0_i32 = arith.constant 0 : i32
    %c0_i32_0 = arith.constant 0 : i32
    %c0_i32_1 = arith.constant 0 : i32
    return %c0_i32, %c0_i32_0 : i32, i32
  }
  func.func @transform_5(%arg0: i32) -> (i32, i32) {
    %c0_i32 = arith.constant 0 : i32
    %c0_i32_0 = arith.constant 0 : i32
    return %arg0, %c0_i32 : i32, i32
  }
  func.func @transform_6(%arg0: i32) -> (i32, i32) {
    %c0_i32 = arith.constant 0 : i32
    %c0_i32_0 = arith.constant 0 : i32
    return %arg0, %c0_i32 : i32, i32
  }
}

</mosaic_0001>

<llo_original>
// kernel: cnnbase_forward.3
$region0: #{cnnbase_forward.3}
  #allocation0 [shape = 'u32[]', space=smem, size = 0x4, offset = 0x4, fixed_abs, tag = 'smem constant byte address 0x4 - core index']
  #allocation1 [shape = 'u32[144,128]{1,0:T(1,128)}', space=vmem, size = 0x12000, scoped, tag = 'internal scratch']
  %s0 = inlined_call_operand.vmem [shape: f32[2,463,64], index: 0, kind: input, shape index: {}]
  %s1 = inlined_call_operand.vmem [shape: f32[4,64,32], index: 1, kind: input, shape index: {}]
  %s2 = inlined_call_operand.vmem [shape: f32[1,32], index: 2, kind: input, shape index: {}]
  %s3 = inlined_call_operand.vmem [shape: f32[2,441,32], index: 3, kind: output, shape index: {}]
  %s4 = sld [smem:[#allocation0]]
  $region45: #{cnnbase_forward.3} parent=0
    _
  %s6 = ssub.s32 1, %s4
  %s7 = scalar_select 0, %s6, %s4
  loop: start=0, step=1, limit=4
  $region2: #{cnnbase_forward.3} parent=0 // loop_pre_header
    _
  $region3: #{cnnbase_forward.3} parent=0 // loop_header
    %s9 = sphi 0, %s13
    %p10 = scmp.ge.s32.totalorder %s9, 4
    %s19 = sphi 0, %s21
    %s22 = sphi 0, %s19
    %s23 = sphi 0, %s22
    %s39 = sphi 0, %s23
    %s43 = sphi 0, %s43
    %s45 = sphi 0, %s43
    %s46 = sphi 0, %s45
    %s60 = sphi 0, %s46
    %s64 = sphi 0, %s64
    %s66 = sphi 0, %s64
    %s67 = sphi 0, %s66
    %s81 = sphi 0, %s67
    %s87 = sphi 0, %s89
    %s90 = sphi 0, %s87
    %s91 = sphi 0, %s90
    %s107 = sphi 0, %s91
  $region4: #{cnnbase_forward.3} parent=0 // loop_header_branch
    %12 = sbr.rel (%p10) target = $region8
  $region5: #{cnnbase_forward.3} parent=0 // loop_body
    %s14 = ssub.s32 %s9, 1
    %s15 = ssub.s32 %s9, 2
    %s16 = sadd.s32 %s9, 1
    %s17 = ssub.s32 %s9, %s16
    %p18 = scmp.eq.s32.totalorder %s17, 0
    %s20 = sadd.s32 %s19, 1
    %s21 = scalar_select %p18, %s19, %s20
    %p24 = pneg %p18
    %p25 = scmp.eq.s32.totalorder %s9, 1
    %p26 = por %p24, %p25
    %p27 = scmp.ne.s32.totalorder %s19, %s22
    %p28 = scmp.eq.s32.totalorder %s9, 0
    %p29 = por %p27, %p28
    %p30 = scmp.ne.s32.totalorder %s19, %s22
    %p31 = scmp.eq.s32.totalorder %s14, 1
    %p32 = por %p30, %p31
    %p33 = scmp.ne.s32.totalorder %s22, %s23
    %p34 = scmp.eq.s32.totalorder %s14, 0
    %p35 = por %p33, %p34
    %p36 = scmp.ne.s32.totalorder %s22, %s23
    %p37 = scmp.eq.s32.totalorder %s15, 1
    %p38 = por %p36, %p37
    %p40 = scmp.ne.s32.totalorder %s23, %s39
    %p41 = scmp.eq.s32.totalorder %s15, 0
    %p42 = por %p40, %p41
    %s44 = sadd.s32 %s43, 1
    %p47 = scmp.eq.s32.totalorder %s9, 1
    %p48 = scmp.ne.s32.totalorder %s43, %s45
    %p49 = scmp.eq.s32.totalorder %s9, 0
    %p50 = por %p48, %p49
    %p51 = scmp.ne.s32.totalorder %s43, %s45
    %p52 = scmp.eq.s32.totalorder %s14, 1
    %p53 = por %p51, %p52
    %p54 = scmp.ne.s32.totalorder %s45, %s46
    %p55 = scmp.eq.s32.totalorder %s14, 0
    %p56 = por %p54, %p55
    %p57 = scmp.ne.s32.totalorder %s45, %s46
    %p58 = scmp.eq.s32.totalorder %s15, 1
    %p59 = por %p57, %p58
    %p61 = scmp.ne.s32.totalorder %s46, %s60
    %p62 = scmp.eq.s32.totalorder %s15, 0
    %p63 = por %p61, %p62
    %s65 = sadd.s32 %s64, 1
    %p68 = scmp.eq.s32.totalorder %s9, 1
    %p69 = scmp.ne.s32.totalorder %s64, %s66
    %p70 = scmp.eq.s32.totalorder %s9, 0
    %p71 = por %p69, %p70
    %p72 = scmp.ne.s32.totalorder %s64, %s66
    %p73 = scmp.eq.s32.totalorder %s14, 1
    %p74 = por %p72, %p73
    %p75 = scmp.ne.s32.totalorder %s66, %s67
    %p76 = scmp.eq.s32.totalorder %s14, 0
    %p77 = por %p75, %p76
    %p78 = scmp.ne.s32.totalorder %s66, %s67
    %p79 = scmp.eq.s32.totalorder %s15, 1
    %p80 = por %p78, %p79
    %p82 = scmp.ne.s32.totalorder %s67, %s81
    %p83 = scmp.eq.s32.totalorder %s15, 0
    %p84 = por %p82, %p83
    %s85 = ssub.s32 %s9, %s16
    %p86 = scmp.eq.s32.totalorder %s85, 0
    %s88 = sadd.s32 %s87, 1
    %s89 = scalar_select %p86, %s87, %s88
    %p92 = pneg %p86
    %p93 = scmp.eq.s32.totalorder %s9, 1
    %p94 = por %p92, %p93
    %p95 = scmp.ne.s32.totalorder %s87, %s90
    %p96 = scmp.eq.s32.totalorder %s9, 0
    %p97 = por %p95, %p96
    %p98 = scmp.ne.s32.totalorder %s87, %s90
    %p99 = scmp.eq.s32.totalorder %s14, 1
    %p100 = por %p98, %p99
    %p101 = scmp.ne.s32.totalorder %s90, %s91
    %p102 = scmp.eq.s32.totalorder %s14, 0
    %p103 = por %p101, %p102
    %p104 = scmp.ne.s32.totalorder %s90, %s91
    %p105 = scmp.eq.s32.totalorder %s15, 1
    %p106 = por %p104, %p105
    %p108 = scmp.ne.s32.totalorder %s91, %s107
    %p109 = scmp.eq.s32.totalorder %s15, 0
    %p110 = por %p108, %p109
    %p111 = scmp.le.s32.totalorder 1, %s9
    %p112 = scmp.lt.s32.totalorder %s9, 3
    %p113 = pnand %p111, %p112
    %p114 = pneg %p113
    // Predicated region
    $region9: #{cnnbase_forward.3} parent=5 // pred_check
      _
    $region10: #{cnnbase_forward.3} parent=5 // pred_check_branch
      %116 = sbr.rel (%p113) target = $region12
    $region11: #{cnnbase_forward.3} parent=5 // pred_region
      %s117 = ssub.s32 %s9, 1
      // Predicated region
      $region13: #{cnnbase_forward.3} parent=11 // pred_check
        %p118 = pneg %p56
      $region14: #{cnnbase_forward.3} parent=11 // pred_check_branch
        %120 = sbr.rel (%p118) target = $region16
      $region15: #{cnnbase_forward.3} parent=11 // pred_region
        _
      $region16: #{cnnbase_forward.3} parent=11 // pred_fallthru
        _
      // Predicated region
      $region17: #{cnnbase_forward.3} parent=11 // pred_check
        %p121 = pneg %p77
      $region18: #{cnnbase_forward.3} parent=11 // pred_check_branch
        %123 = sbr.rel (%p121) target = $region20
      $region19: #{cnnbase_forward.3} parent=11 // pred_region
        _
      $region20: #{cnnbase_forward.3} parent=11 // pred_fallthru
        _
    $region12: #{cnnbase_forward.3} parent=5 // pred_fallthru
      _
    %p124 = scmp.lt.s32.totalorder %s9, 2
    // Predicated region
    $region21: #{cnnbase_forward.3} parent=5 // pred_check
      %p125 = pneg %p124
    $region22: #{cnnbase_forward.3} parent=5 // pred_check_branch
      %127 = sbr.rel (%p125) target = $region24
    $region23: #{cnnbase_forward.3} parent=5 // pred_region
      // Predicated region
      $region25: #{cnnbase_forward.3} parent=23 // pred_check
        %p128 = pneg %p29
      $region26: #{cnnbase_forward.3} parent=23 // pred_check_branch
        %130 = sbr.rel (%p128) target = $region28
      $region27: #{cnnbase_forward.3} parent=23 // pred_region
        %p131 = scmp.lt.s32.totalorder %s9, 1
        %s132 = scalar_select %p131, %s9, 1
        %s133 = smul.addr %s132, 58
        %s134 = smul.addr %s133, 8
        %s135 = scalar_lea.vmem %s0, %s134
      $region28: #{cnnbase_forward.3} parent=23 // pred_fallthru
        _
    $region24: #{cnnbase_forward.3} parent=5 // pred_fallthru
      _
    %p136 = scmp.le.s32.totalorder 1, %s9
    %p137 = scmp.lt.s32.totalorder %s9, 3
    %p138 = pnand %p136, %p137
    %p139 = pneg %p138
    // Predicated region
    $region29: #{cnnbase_forward.3} parent=5 // pred_check
      _
    $region30: #{cnnbase_forward.3} parent=5 // pred_check_branch
      %141 = sbr.rel (%p138) target = $region32
    $region31: #{cnnbase_forward.3} parent=5 // pred_region
      %s142 = ssub.s32 %s9, 1
      %p143 = scmp.lt.s32.totalorder %s14, 1
      %s144 = scalar_select %p143, %s14, 1
      %s145 = smul.addr %s144, 58
      %s146 = smul.addr %s145, 8
      %s147 = scalar_lea.vmem %s0, %s146
      %p148 = pneg %p35
      %p149 = pneg %p32
      %p150 = pneg %p56
      %p151 = pneg %p53
      %p152 = pneg %p77
      %p153 = pneg %p74
      %p154 = pneg %p103
      %p155 = pneg %p100
      %p156 = scmp.lt.s32.totalorder %s14, 1
      %s157 = scalar_select %p156, %s14, 1
      %s158 = smul.addr %s157, 56
      %s159 = smul.addr %s158, 8
      %s160 = scalar_lea.vmem %s3, %s159
      %p161 = scmp.lt.s32.totalorder %s14, 1
      %s162 = scalar_select %p161, %s14, 1
      %s163 = smul.addr %s162, 58
      %s164 = smul.addr %s163, 8
      %s165 = scalar_lea.vmem %s0, %s164
      %p166 = scmp.lt.s32.totalorder %s14, 1
      %s167 = scalar_select %p166, %s14, 1
      %s168 = smul.addr %s167, 56
      %s169 = smul.addr %s168, 8
      %s170 = scalar_lea.vmem %s3, %s169
      %vm171 = vcmask 261120
      %172 = vst.msk [vmem:[%s170] sm:$0xff] %vm171, 0.0
      %173 = vst.msk [vmem:[%s170 + $0x8] sm:$0xff] %vm171, 0.0
      %174 = vst.msk [vmem:[%s170 + $0x10] sm:$0xff] %vm171, 0.0
      %175 = vst.msk [vmem:[%s170 + $0x18] sm:$0xff] %vm171, 0.0
      %176 = vst.msk [vmem:[%s170 + $0x20] sm:$0xff] %vm171, 0.0
      %177 = vst.msk [vmem:[%s170 + $0x28] sm:$0xff] %vm171, 0.0
      %178 = vst.msk [vmem:[%s170 + $0x30] sm:$0xff] %vm171, 0.0
      %179 = vst.msk [vmem:[%s170 + $0x38] sm:$0xff] %vm171, 0.0
      %180 = vst.msk [vmem:[%s170 + $0x40] sm:$0xff] %vm171, 0.0
      %181 = vst.msk [vmem:[%s170 + $0x48] sm:$0xff] %vm171, 0.0
      %182 = vst.msk [vmem:[%s170 + $0x50] sm:$0xff] %vm171, 0.0
      %183 = vst.msk [vmem:[%s170 + $0x58] sm:$0xff] %vm171, 0.0
      %184 = vst.msk [vmem:[%s170 + $0x60] sm:$0xff] %vm171, 0.0
      %185 = vst.msk [vmem:[%s170 + $0x68] sm:$0xff] %vm171, 0.0
      %186 = vst.msk [vmem:[%s170 + $0x70] sm:$0xff] %vm171, 0.0
      %187 = vst.msk [vmem:[%s170 + $0x78] sm:$0xff] %vm171, 0.0
      %188 = vst.msk [vmem:[%s170 + $0x80] sm:$0xff] %vm171, 0.0
      %189 = vst.msk [vmem:[%s170 + $0x88] sm:$0xff] %vm171, 0.0
      %190 = vst.msk [vmem:[%s170 + $0x90] sm:$0xff] %vm171, 0.0
      %191 = vst.msk [vmem:[%s170 + $0x98] sm:$0xff] %vm171, 0.0
      %192 = vst.msk [vmem:[%s170 + $0xa0] sm:$0xff] %vm171, 0.0
      %193 = vst.msk [vmem:[%s170 + $0xa8] sm:$0xff] %vm171, 0.0
      %194 = vst.msk [vmem:[%s170 + $0xb0] sm:$0xff] %vm171, 0.0
      %195 = vst.msk [vmem:[%s170 + $0xb8] sm:$0xff] %vm171, 0.0
      %196 = vst.msk [vmem:[%s170 + $0xc0] sm:$0xff] %vm171, 0.0
      %197 = vst.msk [vmem:[%s170 + $0xc8] sm:$0xff] %vm171, 0.0
      %198 = vst.msk [vmem:[%s170 + $0xd0] sm:$0xff] %vm171, 0.0
      %199 = vst.msk [vmem:[%s170 + $0xd8] sm:$0xff] %vm171, 0.0
      %200 = vst.msk [vmem:[%s170 + $0xe0] sm:$0xff] %vm171, 0.0
      %201 = vst.msk [vmem:[%s170 + $0xe8] sm:$0xff] %vm171, 0.0
      %202 = vst.msk [vmem:[%s170 + $0xf0] sm:$0xff] %vm171, 0.0
      %203 = vst.msk [vmem:[%s170 + $0xf8] sm:$0xff] %vm171, 0.0
      %204 = vst.msk [vmem:[%s170 + $0x100] sm:$0xff] %vm171, 0.0
      %205 = vst.msk [vmem:[%s170 + $0x108] sm:$0xff] %vm171, 0.0
      %206 = vst.msk [vmem:[%s170 + $0x110] sm:$0xff] %vm171, 0.0
      %207 = vst.msk [vmem:[%s170 + $0x118] sm:$0xff] %vm171, 0.0
      %208 = vst.msk [vmem:[%s170 + $0x120] sm:$0xff] %vm171, 0.0
      %209 = vst.msk [vmem:[%s170 + $0x128] sm:$0xff] %vm171, 0.0
      %210 = vst.msk [vmem:[%s170 + $0x130] sm:$0xff] %vm171, 0.0
      %211 = vst.msk [vmem:[%s170 + $0x138] sm:$0xff] %vm171, 0.0
      %212 = vst.msk [vmem:[%s170 + $0x140] sm:$0xff] %vm171, 0.0
      %213 = vst.msk [vmem:[%s170 + $0x148] sm:$0xff] %vm171, 0.0
      %214 = vst.msk [vmem:[%s170 + $0x150] sm:$0xff] %vm171, 0.0
      %215 = vst.msk [vmem:[%s170 + $0x158] sm:$0xff] %vm171, 0.0
      %216 = vst.msk [vmem:[%s170 + $0x160] sm:$0xff] %vm171, 0.0
      %217 = vst.msk [vmem:[%s170 + $0x168] sm:$0xff] %vm171, 0.0
      %218 = vst.msk [vmem:[%s170 + $0x170] sm:$0xff] %vm171, 0.0
      %219 = vst.msk [vmem:[%s170 + $0x178] sm:$0xff] %vm171, 0.0
      %220 = vst.msk [vmem:[%s170 + $0x180] sm:$0xff] %vm171, 0.0
      %221 = vst.msk [vmem:[%s170 + $0x188] sm:$0xff] %vm171, 0.0
      %222 = vst.msk [vmem:[%s170 + $0x190] sm:$0xff] %vm171, 0.0
      %223 = vst.msk [vmem:[%s170 + $0x198] sm:$0xff] %vm171, 0.0
      %224 = vst.msk [vmem:[%s170 + $0x1a0] sm:$0xff] %vm171, 0.0
      %225 = vst.msk [vmem:[%s170 + $0x1a8] sm:$0xff] %vm171, 0.0
      %226 = vst.msk [vmem:[%s170 + $0x1b0] sm:$0xff] %vm171, 0.0
      %vm227 = vcmask 253952
      %228 = vst.msk [vmem:[%s170 + $0x1b8] sm:$0x1] %vm227, 0.0
      %v229 = vld [vmem:[%s170] sm:$0xff]
      %v230 = vld [vmem:[%s170 + $0x8] sm:$0xff]
      %v231 = vld [vmem:[%s170 + $0x10] sm:$0xff]
      %v232 = vld [vmem:[%s170 + $0x18] sm:$0xff]
      %v233 = vld [vmem:[%s170 + $0x20] sm:$0xff]
      %v234 = vld [vmem:[%s170 + $0x28] sm:$0xff]
      %v235 = vld [vmem:[%s170 + $0x30] sm:$0xff]
      %v236 = vld [vmem:[%s170 + $0x38] sm:$0xff]
      %v237 = vld [vmem:[%s170 + $0x40] sm:$0xff]
      %v238 = vld [vmem:[%s170 + $0x48] sm:$0xff]
      %v239 = vld [vmem:[%s170 + $0x50] sm:$0xff]
      %v240 = vld [vmem:[%s170 + $0x58] sm:$0xff]
      %v241 = vld [vmem:[%s170 + $0x60] sm:$0xff]
      %v242 = vld [vmem:[%s170 + $0x68] sm:$0xff]
      %v243 = vld [vmem:[%s170 + $0x70] sm:$0xff]
      %v244 = vld [vmem:[%s170 + $0x78] sm:$0xff]
      %v245 = vld [vmem:[%s170 + $0x80] sm:$0xff]
      %v246 = vld [vmem:[%s170 + $0x88] sm:$0xff]
      %v247 = vld [vmem:[%s170 + $0x90] sm:$0xff]
      %v248 = vld [vmem:[%s170 + $0x98] sm:$0xff]
      %v249 = vld [vmem:[%s170 + $0xa0] sm:$0xff]
      %v250 = vld [vmem:[%s170 + $0xa8] sm:$0xff]
      %v251 = vld [vmem:[%s170 + $0xb0] sm:$0xff]
      %v252 = vld [vmem:[%s170 + $0xb8] sm:$0xff]
      %v253 = vld [vmem:[%s170 + $0xc0] sm:$0xff]
      %v254 = vld [vmem:[%s170 + $0xc8] sm:$0xff]
      %v255 = vld [vmem:[%s170 + $0xd0] sm:$0xff]
      %v256 = vld [vmem:[%s170 + $0xd8] sm:$0xff]
      %v257 = vld [vmem:[%s170 + $0xe0] sm:$0xff]
      %v258 = vld [vmem:[%s170 + $0xe8] sm:$0xff]
      %v259 = vld [vmem:[%s170 + $0xf0] sm:$0xff]
      %v260 = vld [vmem:[%s170 + $0xf8] sm:$0xff]
      %v261 = vld [vmem:[%s170 + $0x100] sm:$0xff]
      %v262 = vld [vmem:[%s170 + $0x108] sm:$0xff]
      %v263 = vld [vmem:[%s170 + $0x110] sm:$0xff]
      %v264 = vld [vmem:[%s170 + $0x118] sm:$0xff]
      %v265 = vld [vmem:[%s170 + $0x120] sm:$0xff]
      %v266 = vld [vmem:[%s170 + $0x128] sm:$0xff]
      %v267 = vld [vmem:[%s170 + $0x130] sm:$0xff]
      %v268 = vld [vmem:[%s170 + $0x138] sm:$0xff]
      %v269 = vld [vmem:[%s170 + $0x140] sm:$0xff]
      %v270 = vld [vmem:[%s170 + $0x148] sm:$0xff]
      %v271 = vld [vmem:[%s170 + $0x150] sm:$0xff]
      %v272 = vld [vmem:[%s170 + $0x158] sm:$0xff]
      %v273 = vld [vmem:[%s170 + $0x160] sm:$0xff]
      %v274 = vld [vmem:[%s170 + $0x168] sm:$0xff]
      %v275 = vld [vmem:[%s170 + $0x170] sm:$0xff]
      %v276 = vld [vmem:[%s170 + $0x178] sm:$0xff]
      %v277 = vld [vmem:[%s170 + $0x180] sm:$0xff]
      %v278 = vld [vmem:[%s170 + $0x188] sm:$0xff]
      %v279 = vld [vmem:[%s170 + $0x190] sm:$0xff]
      %v280 = vld [vmem:[%s170 + $0x198] sm:$0xff]
      %v281 = vld [vmem:[%s170 + $0x1a0] sm:$0xff]
      %v282 = vld [vmem:[%s170 + $0x1a8] sm:$0xff]
      %v283 = vld [vmem:[%s170 + $0x1b0] sm:$0xff]
      %v284 = vld [vmem:[%s170 + $0x1b8] sm:$0x1]
      %v285 = vld [vmem:[%s165] sm:$0xff]
      %v286 = vld [vmem:[%s165 + $0x8] sm:$0xff]
      %v287 = vld [vmem:[%s165 + $0x10] sm:$0xff]
      %v288 = vld [vmem:[%s165 + $0x18] sm:$0xff]
      %v289 = vld [vmem:[%s165 + $0x20] sm:$0xff]
      %v290 = vld [vmem:[%s165 + $0x28] sm:$0xff]
      %v291 = vld [vmem:[%s165 + $0x30] sm:$0xff]
      %v292 = vld [vmem:[%s165 + $0x38] sm:$0xff]
      %v293 = vld [vmem:[%s165 + $0x40] sm:$0xff]
      %v294 = vld [vmem:[%s165 + $0x48] sm:$0xff]
      %v295 = vld [vmem:[%s165 + $0x50] sm:$0xff]
      %v296 = vld [vmem:[%s165 + $0x58] sm:$0xff]
      %v297 = vld [vmem:[%s165 + $0x60] sm:$0xff]
      %v298 = vld [vmem:[%s165 + $0x68] sm:$0xff]
      %v299 = vld [vmem:[%s165 + $0x70] sm:$0xff]
      %v300 = vld [vmem:[%s165 + $0x78] sm:$0xff]
      %v301 = vld [vmem:[%s165 + $0x80] sm:$0xff]
      %v302 = vld [vmem:[%s165 + $0x88] sm:$0xff]
      %v303 = vld [vmem:[%s165 + $0x90] sm:$0xff]
      %v304 = vld [vmem:[%s165 + $0x98] sm:$0xff]
      %v305 = vld [vmem:[%s165 + $0xa0] sm:$0xff]
      %v306 = vld [vmem:[%s165 + $0xa8] sm:$0xff]
      %v307 = vld [vmem:[%s165 + $0xb0] sm:$0xff]
      %v308 = vld [vmem:[%s165 + $0xb8] sm:$0xff]
      %v309 = vld [vmem:[%s165 + $0xc0] sm:$0xff]
      %v310 = vld [vmem:[%s165 + $0xc8] sm:$0xff]
      %v311 = vld [vmem:[%s165 + $0xd0] sm:$0xff]
      %v312 = vld [vmem:[%s165 + $0xd8] sm:$0xff]
      %v313 = vld [vmem:[%s165 + $0xe0] sm:$0xff]
      %v314 = vld [vmem:[%s165 + $0xe8] sm:$0xff]
      %v315 = vld [vmem:[%s165 + $0xf0] sm:$0xff]
      %v316 = vld [vmem:[%s165 + $0xf8] sm:$0xff]
      %v317 = vld [vmem:[%s165 + $0x100] sm:$0xff]
      %v318 = vld [vmem:[%s165 + $0x108] sm:$0xff]
      %v319 = vld [vmem:[%s165 + $0x110] sm:$0xff]
      %v320 = vld [vmem:[%s165 + $0x118] sm:$0xff]
      %v321 = vld [vmem:[%s165 + $0x120] sm:$0xff]
      %v322 = vld [vmem:[%s165 + $0x128] sm:$0xff]
      %v323 = vld [vmem:[%s165 + $0x130] sm:$0xff]
      %v324 = vld [vmem:[%s165 + $0x138] sm:$0xff]
      %v325 = vld [vmem:[%s165 + $0x140] sm:$0xff]
      %v326 = vld [vmem:[%s165 + $0x148] sm:$0xff]
      %v327 = vld [vmem:[%s165 + $0x150] sm:$0xff]
      %v328 = vld [vmem:[%s165 + $0x158] sm:$0xff]
      %v329 = vld [vmem:[%s165 + $0x160] sm:$0xff]
      %v330 = vld [vmem:[%s165 + $0x168] sm:$0xff]
      %v331 = vld [vmem:[%s165 + $0x170] sm:$0xff]
      %v332 = vld [vmem:[%s165 + $0x178] sm:$0xff]
      %v333 = vld [vmem:[%s165 + $0x180] sm:$0xff]
      %v334 = vld [vmem:[%s165 + $0x188] sm:$0xff]
      %v335 = vld [vmem:[%s165 + $0x190] sm:$0xff]
      %v336 = vld [vmem:[%s165 + $0x198] sm:$0xff]
      %v337 = vld [vmem:[%s165 + $0x1a0] sm:$0xff]
      %v338 = vld [vmem:[%s165 + $0x1a8] sm:$0xff]
      %v339 = vld [vmem:[%s165 + $0x1b0] sm:$0xff]
      %v340 = vld [vmem:[%s165 + $0x1b8] sm:$0x1]
      %v341 = vld [vmem:[%s1] sm:$0xff]
      %v342 = vld [vmem:[%s1 + $0x8] sm:$0xff]
      %v343 = vld [vmem:[%s1 + $0x10] sm:$0xff]
      %v344 = vld [vmem:[%s1 + $0x18] sm:$0xff]
      %v345 = vld [vmem:[%s1 + $0x20] sm:$0xff]
      %v346 = vld [vmem:[%s1 + $0x28] sm:$0xff]
      %v347 = vld [vmem:[%s1 + $0x30] sm:$0xff]
      %v348 = vld [vmem:[%s1 + $0x38] sm:$0xff]
      %vm349 = vcmask 523264
      %v351 = vsel %vm349, %v285, 0
      %v354 = vsel %vm349, %v286, 0
      %v357 = vsel %vm349, %v287, 0
      %v360 = vsel %vm349, %v288, 0
      %v363 = vsel %vm349, %v289, 0
      %v366 = vsel %vm349, %v290, 0
      %v369 = vsel %vm349, %v291, 0
      %v372 = vsel %vm349, %v292, 0
      %v375 = vsel %vm349, %v293, 0
      %v378 = vsel %vm349, %v294, 0
      %v381 = vsel %vm349, %v295, 0
      %v384 = vsel %vm349, %v296, 0
      %v387 = vsel %vm349, %v297, 0
      %v390 = vsel %vm349, %v298, 0
      %v393 = vsel %vm349, %v299, 0
      %v396 = vsel %vm349, %v300, 0
      %v399 = vsel %vm349, %v301, 0
      %v402 = vsel %vm349, %v302, 0
      %v405 = vsel %vm349, %v303, 0
      %v408 = vsel %vm349, %v304, 0
      %v411 = vsel %vm349, %v305, 0
      %v414 = vsel %vm349, %v306, 0
      %v417 = vsel %vm349, %v307, 0
      %v420 = vsel %vm349, %v308, 0
      %v423 = vsel %vm349, %v309, 0
      %v426 = vsel %vm349, %v310, 0
      %v429 = vsel %vm349, %v311, 0
      %v432 = vsel %vm349, %v312, 0
      %v435 = vsel %vm349, %v313, 0
      %v438 = vsel %vm349, %v314, 0
      %v441 = vsel %vm349, %v315, 0
      %v444 = vsel %vm349, %v316, 0
      %v447 = vsel %vm349, %v317, 0
      %v450 = vsel %vm349, %v318, 0
      %v453 = vsel %vm349, %v319, 0
      %v456 = vsel %vm349, %v320, 0
      %v459 = vsel %vm349, %v321, 0
      %v462 = vsel %vm349, %v322, 0
      %v465 = vsel %vm349, %v323, 0
      %v468 = vsel %vm349, %v324, 0
      %v471 = vsel %vm349, %v325, 0
      %v474 = vsel %vm349, %v326, 0
      %v477 = vsel %vm349, %v327, 0
      %v480 = vsel %vm349, %v328, 0
      %v483 = vsel %vm349, %v329, 0
      %v486 = vsel %vm349, %v330, 0
      %v489 = vsel %vm349, %v331, 0
      %v492 = vsel %vm349, %v332, 0
      %v495 = vsel %vm349, %v333, 0
      %v498 = vsel %vm349, %v334, 0
      %v501 = vsel %vm349, %v335, 0
      %v504 = vsel %vm349, %v336, 0
      %v507 = vsel %vm349, %v337, 0
      %v510 = vsel %vm349, %v338, 0
      %v513 = vsel %vm349, %v339, 0
      %v516 = vsel %vm349, %v340, 0
      %518 = vmatprep.subr.mxu0 0.0
      %519 = vmatpush1.msra.mxu0 0.0
      %520 = vmatprep.subr.mxu0 0.0
      %521 = vmatpush1.msra.mxu0 0.0
      %522 = vmatprep.subr.mxu0 0.0
      %523 = vmatpush1.msra.mxu0 0.0
      %524 = vmatprep.subr.mxu0 0.0
      %525 = vmatpush1.msra.mxu0 0.0
      %526 = vmatprep.subr.mxu0 0.0
      %527 = vmatpush1.msra.mxu0 0.0
      %528 = vmatprep.subr.mxu0 0.0
      %529 = vmatpush1.msra.mxu0 0.0
      %530 = vmatprep.subr.mxu0 0.0
      %531 = vmatpush1.msra.mxu0 0.0
      %532 = vmatprep.subr.mxu0 0.0
      %533 = vmatpush1.msra.mxu0 0.0
      %534 = vmatprep.subr.mxu0 0.0
      %535 = vmatpush1.msra.mxu0 %v348
      %536 = vmatprep.subr.mxu0 0.0
      %537 = vmatpush1.msra.mxu0 %v347
      %538 = vmatprep.subr.mxu0 0.0
      %539 = vmatpush1.msra.mxu0 %v346
      %540 = vmatprep.subr.mxu0 0.0
      %541 = vmatpush1.msra.mxu0 %v345
      %542 = vmatprep.subr.mxu0 0.0
      %543 = vmatpush1.msra.mxu0 %v344
      %544 = vmatprep.subr.mxu0 0.0
      %545 = vmatpush1.msra.mxu0 %v343
      %546 = vmatprep.subr.mxu0 0.0
      %547 = vmatpush1.msra.mxu0 %v342
      %548 = vmatprep.subr.mxu0 0.0
      %549 = vmatpush1.msra.mxu0 %v341
      %550 = vmatprep.subr.mxu0 0.0
      %551 = vmatpush2.msra.mxu0 0.0
      %552 = vmatprep.subr.mxu0 0.0
      %553 = vmatpush2.msra.mxu0 0.0
      %554 = vmatprep.subr.mxu0 0.0
      %555 = vmatpush2.msra.mxu0 0.0
      %556 = vmatprep.subr.mxu0 0.0
      %557 = vmatpush2.msra.mxu0 0.0
      %558 = vmatprep.subr.mxu0 0.0
      %559 = vmatpush2.msra.mxu0 0.0
      %560 = vmatprep.subr.mxu0 0.0
      %561 = vmatpush2.msra.mxu0 0.0
      %562 = vmatprep.subr.mxu0 0.0
      %563 = vmatpush2.msra.mxu0 0.0
      %564 = vmatprep.subr.mxu0 0.0
      %565 = vmatpush2.msra.mxu0 0.0
      %566 = vmatprep.subr.mxu0 0.0
      %567 = vmatpush2.msra.mxu0 0.0
      %568 = vmatprep.subr.mxu0 0.0
      %569 = vmatpush2.msra.mxu0 0.0
      %570 = vmatprep.subr.mxu0 0.0
      %571 = vmatpush2.msra.mxu0 0.0
      %572 = vmatprep.subr.mxu0 0.0
      %573 = vmatpush2.msra.mxu0 0.0
      %574 = vmatprep.subr.mxu0 0.0
      %575 = vmatpush2.msra.mxu0 0.0
      %576 = vmatprep.subr.mxu0 0.0
      %577 = vmatpush2.msra.mxu0 0.0
      %578 = vmatprep.subr.mxu0 0.0
      %579 = vmatpush2.msra.mxu0 0.0
      %580 = vmatprep.subr.mxu0 0.0
      %581 = vmatpush2.msra.mxu0 0.0
      %582 = vmatprep.mubr.f32.mxu0 0.0
      %583 = vmatmul.mubr.f32.gmra.mxu0 %v351
      %v584 = vpop.f32.mrf.mxu0
      %v585 = vadd.f32 0.0, %v584
      %v586 = vpop.f32.mrf.mxu0
      %587 = vmatprep.mubr.f32.mxu0 0.0
      %588 = vmatmul.mubr.f32.gmra.mxu0 %v354
      %v589 = vpop.f32.mrf.mxu0
      %v590 = vadd.f32 0.0, %v589
      %v591 = vpop.f32.mrf.mxu0
      %592 = vmatprep.mubr.f32.mxu0 0.0
      %593 = vmatmul.mubr.f32.gmra.mxu0 %v357
      %v594 = vpop.f32.mrf.mxu0
      %v595 = vadd.f32 0.0, %v594
      %v596 = vpop.f32.mrf.mxu0
      %597 = vmatprep.mubr.f32.mxu0 0.0
      %598 = vmatmul.mubr.f32.gmra.mxu0 %v360
      %v599 = vpop.f32.mrf.mxu0
      %v600 = vadd.f32 0.0, %v599
      %v601 = vpop.f32.mrf.mxu0
      %602 = vmatprep.mubr.f32.mxu0 0.0
      %603 = vmatmul.mubr.f32.gmra.mxu0 %v363
      %v604 = vpop.f32.mrf.mxu0
      %v605 = vadd.f32 0.0, %v604
      %v606 = vpop.f32.mrf.mxu0
      %607 = vmatprep.mubr.f32.mxu0 0.0
      %608 = vmatmul.mubr.f32.gmra.mxu0 %v366
      %v609 = vpop.f32.mrf.mxu0
      %v610 = vadd.f32 0.0, %v609
      %v611 = vpop.f32.mrf.mxu0
      %612 = vmatprep.mubr.f32.mxu0 0.0
      %613 = vmatmul.mubr.f32.gmra.mxu0 %v369
      %v614 = vpop.f32.mrf.mxu0
      %v615 = vadd.f32 0.0, %v614
      %v616 = vpop.f32.mrf.mxu0
      %617 = vmatprep.mubr.f32.mxu0 0.0
      %618 = vmatmul.mubr.f32.gmra.mxu0 %v372
      %v619 = vpop.f32.mrf.mxu0
      %v620 = vadd.f32 0.0, %v619
      %v621 = vpop.f32.mrf.mxu0
      %622 = vmatprep.mubr.f32.mxu0 0.0
      %623 = vmatmul.mubr.f32.gmra.mxu0 %v375
      %v624 = vpop.f32.mrf.mxu0
      %v625 = vadd.f32 0.0, %v624
      %v626 = vpop.f32.mrf.mxu0
      %627 = vmatprep.mubr.f32.mxu0 0.0
      %628 = vmatmul.mubr.f32.gmra.mxu0 %v378
      %v629 = vpop.f32.mrf.mxu0
      %v630 = vadd.f32 0.0, %v629
      %v631 = vpop.f32.mrf.mxu0
      %632 = vmatprep.mubr.f32.mxu0 0.0
      %633 = vmatmul.mubr.f32.gmra.mxu0 %v381
      %v634 = vpop.f32.mrf.mxu0
      %v635 = vadd.f32 0.0, %v634
      %v636 = vpop.f32.mrf.mxu0
      %637 = vmatprep.mubr.f32.mxu0 0.0
      %638 = vmatmul.mubr.f32.gmra.mxu0 %v384
      %v639 = vpop.f32.mrf.mxu0
      %v640 = vadd.f32 0.0, %v639
      %v641 = vpop.f32.mrf.mxu0
      %642 = vmatprep.mubr.f32.mxu0 0.0
      %643 = vmatmul.mubr.f32.gmra.mxu0 %v387
      %v644 = vpop.f32.mrf.mxu0
      %v645 = vadd.f32 0.0, %v644
      %v646 = vpop.f32.mrf.mxu0
      %647 = vmatprep.mubr.f32.mxu0 0.0
      %648 = vmatmul.mubr.f32.gmra.mxu0 %v390
      %v649 = vpop.f32.mrf.mxu0
      %v650 = vadd.f32 0.0, %v649
      %v651 = vpop.f32.mrf.mxu0
      %652 = vmatprep.mubr.f32.mxu0 0.0
      %653 = vmatmul.mubr.f32.gmra.mxu0 %v393
      %v654 = vpop.f32.mrf.mxu0
      %v655 = vadd.f32 0.0, %v654
      %v656 = vpop.f32.mrf.mxu0
      %657 = vmatprep.mubr.f32.mxu0 0.0
      %658 = vmatmul.mubr.f32.gmra.mxu0 %v396
      %v659 = vpop.f32.mrf.mxu0
      %v660 = vadd.f32 0.0, %v659
      %v661 = vpop.f32.mrf.mxu0
      %662 = vmatprep.mubr.f32.mxu0 0.0
      %663 = vmatmul.mubr.f32.gmra.mxu0 %v399
      %v664 = vpop.f32.mrf.mxu0
      %v665 = vadd.f32 0.0, %v664
      %v666 = vpop.f32.mrf.mxu0
      %667 = vmatprep.mubr.f32.mxu0 0.0
      %668 = vmatmul.mubr.f32.gmra.mxu0 %v402
      %v669 = vpop.f32.mrf.mxu0
      %v670 = vadd.f32 0.0, %v669
      %v671 = vpop.f32.mrf.mxu0
      %672 = vmatprep.mubr.f32.mxu0 0.0
      %673 = vmatmul.mubr.f32.gmra.mxu0 %v405
      %v674 = vpop.f32.mrf.mxu0
      %v675 = vadd.f32 0.0, %v674
      %v676 = vpop.f32.mrf.mxu0
      %677 = vmatprep.mubr.f32.mxu0 0.0
      %678 = vmatmul.mubr.f32.gmra.mxu0 %v408
      %v679 = vpop.f32.mrf.mxu0
      %v680 = vadd.f32 0.0, %v679
      %v681 = vpop.f32.mrf.mxu0
      %682 = vmatprep.mubr.f32.mxu0 0.0
      %683 = vmatmul.mubr.f32.gmra.mxu0 %v411
      %v684 = vpop.f32.mrf.mxu0
      %v685 = vadd.f32 0.0, %v684
      %v686 = vpop.f32.mrf.mxu0
      %687 = vmatprep.mubr.f32.mxu0 0.0
      %688 = vmatmul.mubr.f32.gmra.mxu0 %v414
      %v689 = vpop.f32.mrf.mxu0
      %v690 = vadd.f32 0.0, %v689
      %v691 = vpop.f32.mrf.mxu0
      %692 = vmatprep.mubr.f32.mxu0 0.0
      %693 = vmatmul.mubr.f32.gmra.mxu0 %v417
      %v694 = vpop.f32.mrf.mxu0
      %v695 = vadd.f32 0.0, %v694
      %v696 = vpop.f32.mrf.mxu0
      %697 = vmatprep.mubr.f32.mxu0 0.0
      %698 = vmatmul.mubr.f32.gmra.mxu0 %v420
      %v699 = vpop.f32.mrf.mxu0
      %v700 = vadd.f32 0.0, %v699
      %v701 = vpop.f32.mrf.mxu0
      %702 = vmatprep.mubr.f32.mxu0 0.0
      %703 = vmatmul.mubr.f32.gmra.mxu0 %v423
      %v704 = vpop.f32.mrf.mxu0
      %v705 = vadd.f32 0.0, %v704
      %v706 = vpop.f32.mrf.mxu0
      %707 = vmatprep.mubr.f32.mxu0 0.0
      %708 = vmatmul.mubr.f32.gmra.mxu0 %v426
      %v709 = vpop.f32.mrf.mxu0
      %v710 = vadd.f32 0.0, %v709
      %v711 = vpop.f32.mrf.mxu0
      %712 = vmatprep.mubr.f32.mxu0 0.0
      %713 = vmatmul.mubr.f32.gmra.mxu0 %v429
      %v714 = vpop.f32.mrf.mxu0
      %v715 = vadd.f32 0.0, %v714
      %v716 = vpop.f32.mrf.mxu0
      %717 = vmatprep.mubr.f32.mxu0 0.0
      %718 = vmatmul.mubr.f32.gmra.mxu0 %v432
      %v719 = vpop.f32.mrf.mxu0
      %v720 = vadd.f32 0.0, %v719
      %v721 = vpop.f32.mrf.mxu0
      %722 = vmatprep.mubr.f32.mxu0 0.0
      %723 = vmatmul.mubr.f32.gmra.mxu0 %v435
      %v724 = vpop.f32.mrf.mxu0
      %v725 = vadd.f32 0.0, %v724
      %v726 = vpop.f32.mrf.mxu0
      %727 = vmatprep.mubr.f32.mxu0 0.0
      %728 = vmatmul.mubr.f32.gmra.mxu0 %v438
      %v729 = vpop.f32.mrf.mxu0
      %v730 = vadd.f32 0.0, %v729
      %v731 = vpop.f32.mrf.mxu0
      %732 = vmatprep.mubr.f32.mxu0 0.0
      %733 = vmatmul.mubr.f32.gmra.mxu0 %v441
      %v734 = vpop.f32.mrf.mxu0
      %v735 = vadd.f32 0.0, %v734
      %v736 = vpop.f32.mrf.mxu0
      %737 = vmatprep.mubr.f32.mxu0 0.0
      %738 = vmatmul.mubr.f32.gmra.mxu0 %v444
      %v739 = vpop.f32.mrf.mxu0
      %v740 = vadd.f32 0.0, %v739
      %v741 = vpop.f32.mrf.mxu0
      %742 = vmatprep.mubr.f32.mxu0 0.0
      %743 = vmatmul.mubr.f32.gmra.mxu0 %v447
      %v744 = vpop.f32.mrf.mxu0
      %v745 = vadd.f32 0.0, %v744
      %v746 = vpop.f32.mrf.mxu0
      %747 = vmatprep.mubr.f32.mxu0 0.0
      %748 = vmatmul.mubr.f32.gmra.mxu0 %v450
      %v749 = vpop.f32.mrf.mxu0
      %v750 = vadd.f32 0.0, %v749
      %v751 = vpop.f32.mrf.mxu0
      %752 = vmatprep.mubr.f32.mxu0 0.0
      %753 = vmatmul.mubr.f32.gmra.mxu0 %v453
      %v754 = vpop.f32.mrf.mxu0
      %v755 = vadd.f32 0.0, %v754
      %v756 = vpop.f32.mrf.mxu0
      %757 = vmatprep.mubr.f32.mxu0 0.0
      %758 = vmatmul.mubr.f32.gmra.mxu0 %v456
      %v759 = vpop.f32.mrf.mxu0
      %v760 = vadd.f32 0.0, %v759
      %v761 = vpop.f32.mrf.mxu0
      %762 = vmatprep.mubr.f32.mxu0 0.0
      %763 = vmatmul.mubr.f32.gmra.mxu0 %v459
      %v764 = vpop.f32.mrf.mxu0
      %v765 = vadd.f32 0.0, %v764
      %v766 = vpop.f32.mrf.mxu0
      %767 = vmatprep.mubr.f32.mxu0 0.0
      %768 = vmatmul.mubr.f32.gmra.mxu0 %v462
      %v769 = vpop.f32.mrf.mxu0
      %v770 = vadd.f32 0.0, %v769
      %v771 = vpop.f32.mrf.mxu0
      %772 = vmatprep.mubr.f32.mxu0 0.0
      %773 = vmatmul.mubr.f32.gmra.mxu0 %v465
      %v774 = vpop.f32.mrf.mxu0
      %v775 = vadd.f32 0.0, %v774
      %v776 = vpop.f32.mrf.mxu0
      %777 = vmatprep.mubr.f32.mxu0 0.0
      %778 = vmatmul.mubr.f32.gmra.mxu0 %v468
      %v779 = vpop.f32.mrf.mxu0
      %v780 = vadd.f32 0.0, %v779
      %v781 = vpop.f32.mrf.mxu0
      %782 = vmatprep.mubr.f32.mxu0 0.0
      %783 = vmatmul.mubr.f32.gmra.mxu0 %v471
      %v784 = vpop.f32.mrf.mxu0
      %v785 = vadd.f32 0.0, %v784
      %v786 = vpop.f32.mrf.mxu0
      %787 = vmatprep.mubr.f32.mxu0 0.0
      %788 = vmatmul.mubr.f32.gmra.mxu0 %v474
      %v789 = vpop.f32.mrf.mxu0
      %v790 = vadd.f32 0.0, %v789
      %v791 = vpop.f32.mrf.mxu0
      %792 = vmatprep.mubr.f32.mxu0 0.0
      %793 = vmatmul.mubr.f32.gmra.mxu0 %v477
      %v794 = vpop.f32.mrf.mxu0
      %v795 = vadd.f32 0.0, %v794
      %v796 = vpop.f32.mrf.mxu0
      %797 = vmatprep.mubr.f32.mxu0 0.0
      %798 = vmatmul.mubr.f32.gmra.mxu0 %v480
      %v799 = vpop.f32.mrf.mxu0
      %v800 = vadd.f32 0.0, %v799
      %v801 = vpop.f32.mrf.mxu0
      %802 = vmatprep.mubr.f32.mxu0 0.0
      %803 = vmatmul.mubr.f32.gmra.mxu0 %v483
      %v804 = vpop.f32.mrf.mxu0
      %v805 = vadd.f32 0.0, %v804
      %v806 = vpop.f32.mrf.mxu0
      %807 = vmatprep.mubr.f32.mxu0 0.0
      %808 = vmatmul.mubr.f32.gmra.mxu0 %v486
      %v809 = vpop.f32.mrf.mxu0
      %v810 = vadd.f32 0.0, %v809
      %v811 = vpop.f32.mrf.mxu0
      %812 = vmatprep.mubr.f32.mxu0 0.0
      %813 = vmatmul.mubr.f32.gmra.mxu0 %v489
      %v814 = vpop.f32.mrf.mxu0
      %v815 = vadd.f32 0.0, %v814
      %v816 = vpop.f32.mrf.mxu0
      %817 = vmatprep.mubr.f32.mxu0 0.0
      %818 = vmatmul.mubr.f32.gmra.mxu0 %v492
      %v819 = vpop.f32.mrf.mxu0
      %v820 = vadd.f32 0.0, %v819
      %v821 = vpop.f32.mrf.mxu0
      %822 = vmatprep.mubr.f32.mxu0 0.0
      %823 = vmatmul.mubr.f32.gmra.mxu0 %v495
      %v824 = vpop.f32.mrf.mxu0
      %v825 = vadd.f32 0.0, %v824
      %v826 = vpop.f32.mrf.mxu0
      %827 = vmatprep.mubr.f32.mxu0 0.0
      %828 = vmatmul.mubr.f32.gmra.mxu0 %v498
      %v829 = vpop.f32.mrf.mxu0
      %v830 = vadd.f32 0.0, %v829
      %v831 = vpop.f32.mrf.mxu0
      %832 = vmatprep.mubr.f32.mxu0 0.0
      %833 = vmatmul.mubr.f32.gmra.mxu0 %v501
      %v834 = vpop.f32.mrf.mxu0
      %v835 = vadd.f32 0.0, %v834
      %v836 = vpop.f32.mrf.mxu0
      %837 = vmatprep.mubr.f32.mxu0 0.0
      %838 = vmatmul.mubr.f32.gmra.mxu0 %v504
      %v839 = vpop.f32.mrf.mxu0
      %v840 = vadd.f32 0.0, %v839
      %v841 = vpop.f32.mrf.mxu0
      %842 = vmatprep.mubr.f32.mxu0 0.0
      %843 = vmatmul.mubr.f32.gmra.mxu0 %v507
      %v844 = vpop.f32.mrf.mxu0
      %v845 = vadd.f32 0.0, %v844
      %v846 = vpop.f32.mrf.mxu0
      %847 = vmatprep.mubr.f32.mxu0 0.0
      %848 = vmatmul.mubr.f32.gmra.mxu0 %v510
      %v849 = vpop.f32.mrf.mxu0
      %v850 = vadd.f32 0.0, %v849
      %v851 = vpop.f32.mrf.mxu0
      %852 = vmatprep.mubr.f32.mxu0 0.0
      %853 = vmatmul.mubr.f32.gmra.mxu0 %v513
      %v854 = vpop.f32.mrf.mxu0
      %v855 = vadd.f32 0.0, %v854
      %v856 = vpop.f32.mrf.mxu0
      %857 = vmatprep.mubr.f32.mxu0 0.0
      %858 = vmatmul.mubr.f32.gmra.mxu0 %v516
      %v859 = vpop.f32.mrf.mxu0
      %v860 = vadd.f32 0.0, %v859
      %v861 = vpop.f32.mrf.mxu0
      %862 = vdwg.mxu0
      %v863 = vadd.f32 %v229, %v585
      %v864 = vadd.f32 %v230, %v590
      %v865 = vadd.f32 %v231, %v595
      %v866 = vadd.f32 %v232, %v600
      %v867 = vadd.f32 %v233, %v605
      %v868 = vadd.f32 %v234, %v610
      %v869 = vadd.f32 %v235, %v615
      %v870 = vadd.f32 %v236, %v620
      %v871 = vadd.f32 %v237, %v625
      %v872 = vadd.f32 %v238, %v630
      %v873 = vadd.f32 %v239, %v635
      %v874 = vadd.f32 %v240, %v640
      %v875 = vadd.f32 %v241, %v645
      %v876 = vadd.f32 %v242, %v650
      %v877 = vadd.f32 %v243, %v655
      %v878 = vadd.f32 %v244, %v660
      %v879 = vadd.f32 %v245, %v665
      %v880 = vadd.f32 %v246, %v670
      %v881 = vadd.f32 %v247, %v675
      %v882 = vadd.f32 %v248, %v680
      %v883 = vadd.f32 %v249, %v685
      %v884 = vadd.f32 %v250, %v690
      %v885 = vadd.f32 %v251, %v695
      %v886 = vadd.f32 %v252, %v700
      %v887 = vadd.f32 %v253, %v705
      %v888 = vadd.f32 %v254, %v710
      %v889 = vadd.f32 %v255, %v715
      %v890 = vadd.f32 %v256, %v720
      %v891 = vadd.f32 %v257, %v725
      %v892 = vadd.f32 %v258, %v730
      %v893 = vadd.f32 %v259, %v735
      %v894 = vadd.f32 %v260, %v740
      %v895 = vadd.f32 %v261, %v745
      %v896 = vadd.f32 %v262, %v750
      %v897 = vadd.f32 %v263, %v755
      %v898 = vadd.f32 %v264, %v760
      %v899 = vadd.f32 %v265, %v765
      %v900 = vadd.f32 %v266, %v770
      %v901 = vadd.f32 %v267, %v775
      %v902 = vadd.f32 %v268, %v780
      %v903 = vadd.f32 %v269, %v785
      %v904 = vadd.f32 %v270, %v790
      %v905 = vadd.f32 %v271, %v795
      %v906 = vadd.f32 %v272, %v800
      %v907 = vadd.f32 %v273, %v805
      %v908 = vadd.f32 %v274, %v810
      %v909 = vadd.f32 %v275, %v815
      %v910 = vadd.f32 %v276, %v820
      %v911 = vadd.f32 %v277, %v825
      %v912 = vadd.f32 %v278, %v830
      %v913 = vadd.f32 %v279, %v835
      %v914 = vadd.f32 %v280, %v840
      %v915 = vadd.f32 %v281, %v845
      %v916 = vadd.f32 %v282, %v850
      %v917 = vadd.f32 %v283, %v855
      %v918 = vadd.f32 %v284, %v860
      %919 = vst.msk [vmem:[%s170] sm:$0xff] %vm171, %v863
      %920 = vst.msk [vmem:[%s170 + $0x8] sm:$0xff] %vm171, %v864
      %921 = vst.msk [vmem:[%s170 + $0x10] sm:$0xff] %vm171, %v865
      %922 = vst.msk [vmem:[%s170 + $0x18] sm:$0xff] %vm171, %v866
      %923 = vst.msk [vmem:[%s170 + $0x20] sm:$0xff] %vm171, %v867
      %924 = vst.msk [vmem:[%s170 + $0x28] sm:$0xff] %vm171, %v868
      %925 = vst.msk [vmem:[%s170 + $0x30] sm:$0xff] %vm171, %v869
      %926 = vst.msk [vmem:[%s170 + $0x38] sm:$0xff] %vm171, %v870
      %927 = vst.msk [vmem:[%s170 + $0x40] sm:$0xff] %vm171, %v871
      %928 = vst.msk [vmem:[%s170 + $0x48] sm:$0xff] %vm171, %v872
      %929 = vst.msk [vmem:[%s170 + $0x50] sm:$0xff] %vm171, %v873
      %930 = vst.msk [vmem:[%s170 + $0x58] sm:$0xff] %vm171, %v874
      %931 = vst.msk [vmem:[%s170 + $0x60] sm:$0xff] %vm171, %v875
      %932 = vst.msk [vmem:[%s170 + $0x68] sm:$0xff] %vm171, %v876
      %933 = vst.msk [vmem:[%s170 + $0x70] sm:$0xff] %vm171, %v877
      %934 = vst.msk [vmem:[%s170 + $0x78] sm:$0xff] %vm171, %v878
      %935 = vst.msk [vmem:[%s170 + $0x80] sm:$0xff] %vm171, %v879
      %936 = vst.msk [vmem:[%s170 + $0x88] sm:$0xff] %vm171, %v880
      %937 = vst.msk [vmem:[%s170 + $0x90] sm:$0xff] %vm171, %v881
      %938 = vst.msk [vmem:[%s170 + $0x98] sm:$0xff] %vm171, %v882
      %939 = vst.msk [vmem:[%s170 + $0xa0] sm:$0xff] %vm171, %v883
      %940 = vst.msk [vmem:[%s170 + $0xa8] sm:$0xff] %vm171, %v884
      %941 = vst.msk [vmem:[%s170 + $0xb0] sm:$0xff] %vm171, %v885
      %942 = vst.msk [vmem:[%s170 + $0xb8] sm:$0xff] %vm171, %v886
      %943 = vst.msk [vmem:[%s170 + $0xc0] sm:$0xff] %vm171, %v887
      %944 = vst.msk [vmem:[%s170 + $0xc8] sm:$0xff] %vm171, %v888
      %945 = vst.msk [vmem:[%s170 + $0xd0] sm:$0xff] %vm171, %v889
      %946 = vst.msk [vmem:[%s170 + $0xd8] sm:$0xff] %vm171, %v890
      %947 = vst.msk [vmem:[%s170 + $0xe0] sm:$0xff] %vm171, %v891
      %948 = vst.msk [vmem:[%s170 + $0xe8] sm:$0xff] %vm171, %v892
      %949 = vst.msk [vmem:[%s170 + $0xf0] sm:$0xff] %vm171, %v893
      %950 = vst.msk [vmem:[%s170 + $0xf8] sm:$0xff] %vm171, %v894
      %951 = vst.msk [vmem:[%s170 + $0x100] sm:$0xff] %vm171, %v895
      %952 = vst.msk [vmem:[%s170 + $0x108] sm:$0xff] %vm171, %v896
      %953 = vst.msk [vmem:[%s170 + $0x110] sm:$0xff] %vm171, %v897
      %954 = vst.msk [vmem:[%s170 + $0x118] sm:$0xff] %vm171, %v898
      %955 = vst.msk [vmem:[%s170 + $0x120] sm:$0xff] %vm171, %v899
      %956 = vst.msk [vmem:[%s170 + $0x128] sm:$0xff] %vm171, %v900
      %957 = vst.msk [vmem:[%s170 + $0x130] sm:$0xff] %vm171, %v901
      %958 = vst.msk [vmem:[%s170 + $0x138] sm:$0xff] %vm171, %v902
      %959 = vst.msk [vmem:[%s170 + $0x140] sm:$0xff] %vm171, %v903
      %960 = vst.msk [vmem:[%s170 + $0x148] sm:$0xff] %vm171, %v904
      %961 = vst.msk [vmem:[%s170 + $0x150] sm:$0xff] %vm171, %v905
      %962 = vst.msk [vmem:[%s170 + $0x158] sm:$0xff] %vm171, %v906
      %963 = vst.msk [vmem:[%s170 + $0x160] sm:$0xff] %vm171, %v907
      %964 = vst.msk [vmem:[%s170 + $0x168] sm:$0xff] %vm171, %v908
      %965 = vst.msk [vmem:[%s170 + $0x170] sm:$0xff] %vm171, %v909
      %966 = vst.msk [vmem:[%s170 + $0x178] sm:$0xff] %vm171, %v910
      %967 = vst.msk [vmem:[%s170 + $0x180] sm:$0xff] %vm171, %v911
      %968 = vst.msk [vmem:[%s170 + $0x188] sm:$0xff] %vm171, %v912
      %969 = vst.msk [vmem:[%s170 + $0x190] sm:$0xff] %vm171, %v913
      %970 = vst.msk [vmem:[%s170 + $0x198] sm:$0xff] %vm171, %v914
      %971 = vst.msk [vmem:[%s170 + $0x1a0] sm:$0xff] %vm171, %v915
      %972 = vst.msk [vmem:[%s170 + $0x1a8] sm:$0xff] %vm171, %v916
      %973 = vst.msk [vmem:[%s170 + $0x1b0] sm:$0xff] %vm171, %v917
      %974 = vst.msk [vmem:[%s170 + $0x1b8] sm:$0x1] %vm227, %v918
      %v975 = vld [vmem:[%s170] sm:$0xff]
      %v976 = vld [vmem:[%s170 + $0x8] sm:$0xff]
      %v977 = vld [vmem:[%s170 + $0x10] sm:$0xff]
      %v978 = vld [vmem:[%s170 + $0x18] sm:$0xff]
      %v979 = vld [vmem:[%s170 + $0x20] sm:$0xff]
      %v980 = vld [vmem:[%s170 + $0x28] sm:$0xff]
      %v981 = vld [vmem:[%s170 + $0x30] sm:$0xff]
      %v982 = vld [vmem:[%s170 + $0x38] sm:$0xff]
      %v983 = vld [vmem:[%s170 + $0x40] sm:$0xff]
      %v984 = vld [vmem:[%s170 + $0x48] sm:$0xff]
      %v985 = vld [vmem:[%s170 + $0x50] sm:$0xff]
      %v986 = vld [vmem:[%s170 + $0x58] sm:$0xff]
      %v987 = vld [vmem:[%s170 + $0x60] sm:$0xff]
      %v988 = vld [vmem:[%s170 + $0x68] sm:$0xff]
      %v989 = vld [vmem:[%s170 + $0x70] sm:$0xff]
      %v990 = vld [vmem:[%s170 + $0x78] sm:$0xff]
      %v991 = vld [vmem:[%s170 + $0x80] sm:$0xff]
      %v992 = vld [vmem:[%s170 + $0x88] sm:$0xff]
      %v993 = vld [vmem:[%s170 + $0x90] sm:$0xff]
      %v994 = vld [vmem:[%s170 + $0x98] sm:$0xff]
      %v995 = vld [vmem:[%s170 + $0xa0] sm:$0xff]
      %v996 = vld [vmem:[%s170 + $0xa8] sm:$0xff]
      %v997 = vld [vmem:[%s170 + $0xb0] sm:$0xff]
      %v998 = vld [vmem:[%s170 + $0xb8] sm:$0xff]
      %v999 = vld [vmem:[%s170 + $0xc0] sm:$0xff]
      %v1000 = vld [vmem:[%s170 + $0xc8] sm:$0xff]
      %v1001 = vld [vmem:[%s170 + $0xd0] sm:$0xff]
      %v1002 = vld [vmem:[%s170 + $0xd8] sm:$0xff]
      %v1003 = vld [vmem:[%s170 + $0xe0] sm:$0xff]
      %v1004 = vld [vmem:[%s170 + $0xe8] sm:$0xff]
      %v1005 = vld [vmem:[%s170 + $0xf0] sm:$0xff]
      %v1006 = vld [vmem:[%s170 + $0xf8] sm:$0xff]
      %v1007 = vld [vmem:[%s170 + $0x100] sm:$0xff]
      %v1008 = vld [vmem:[%s170 + $0x108] sm:$0xff]
      %v1009 = vld [vmem:[%s170 + $0x110] sm:$0xff]
      %v1010 = vld [vmem:[%s170 + $0x118] sm:$0xff]
      %v1011 = vld [vmem:[%s170 + $0x120] sm:$0xff]
      %v1012 = vld [vmem:[%s170 + $0x128] sm:$0xff]
      %v1013 = vld [vmem:[%s170 + $0x130] sm:$0xff]
      %v1014 = vld [vmem:[%s170 + $0x138] sm:$0xff]
      %v1015 = vld [vmem:[%s170 + $0x140] sm:$0xff]
      %v1016 = vld [vmem:[%s170 + $0x148] sm:$0xff]
      %v1017 = vld [vmem:[%s170 + $0x150] sm:$0xff]
      %v1018 = vld [vmem:[%s170 + $0x158] sm:$0xff]
      %v1019 = vld [vmem:[%s170 + $0x160] sm:$0xff]
      %v1020 = vld [vmem:[%s170 + $0x168] sm:$0xff]
      %v1021 = vld [vmem:[%s170 + $0x170] sm:$0xff]
      %v1022 = vld [vmem:[%s170 + $0x178] sm:$0xff]
      %v1023 = vld [vmem:[%s170 + $0x180] sm:$0xff]
      %v1024 = vld [vmem:[%s170 + $0x188] sm:$0xff]
      %v1025 = vld [vmem:[%s170 + $0x190] sm:$0xff]
      %v1026 = vld [vmem:[%s170 + $0x198] sm:$0xff]
      %v1027 = vld [vmem:[%s170 + $0x1a0] sm:$0xff]
      %v1028 = vld [vmem:[%s170 + $0x1a8] sm:$0xff]
      %v1029 = vld [vmem:[%s170 + $0x1b0] sm:$0xff]
      %v1030 = vld [vmem:[%s170 + $0x1b8] sm:$0x1]
      %v1031 = vld [vmem:[%s165 + $0x1] sm:$0xff]
      %v1032 = vld [vmem:[%s165 + $0x9] sm:$0xff]
      %v1033 = vld [vmem:[%s165 + $0x11] sm:$0xff]
      %v1034 = vld [vmem:[%s165 + $0x19] sm:$0xff]
      %v1035 = vld [vmem:[%s165 + $0x21] sm:$0xff]
      %v1036 = vld [vmem:[%s165 + $0x29] sm:$0xff]
      %v1037 = vld [vmem:[%s165 + $0x31] sm:$0xff]
      %v1038 = vld [vmem:[%s165 + $0x39] sm:$0xff]
      %v1039 = vld [vmem:[%s165 + $0x41] sm:$0xff]
      %v1040 = vld [vmem:[%s165 + $0x49] sm:$0xff]
      %v1041 = vld [vmem:[%s165 + $0x51] sm:$0xff]
      %v1042 = vld [vmem:[%s165 + $0x59] sm:$0xff]
      %v1043 = vld [vmem:[%s165 + $0x61] sm:$0xff]
      %v1044 = vld [vmem:[%s165 + $0x69] sm:$0xff]
      %v1045 = vld [vmem:[%s165 + $0x71] sm:$0xff]
      %v1046 = vld [vmem:[%s165 + $0x79] sm:$0xff]
      %v1047 = vld [vmem:[%s165 + $0x81] sm:$0xff]
      %v1048 = vld [vmem:[%s165 + $0x89] sm:$0xff]
      %v1049 = vld [vmem:[%s165 + $0x91] sm:$0xff]
      %v1050 = vld [vmem:[%s165 + $0x99] sm:$0xff]
      %v1051 = vld [vmem:[%s165 + $0xa1] sm:$0xff]
      %v1052 = vld [vmem:[%s165 + $0xa9] sm:$0xff]
      %v1053 = vld [vmem:[%s165 + $0xb1] sm:$0xff]
      %v1054 = vld [vmem:[%s165 + $0xb9] sm:$0xff]
      %v1055 = vld [vmem:[%s165 + $0xc1] sm:$0xff]
      %v1056 = vld [vmem:[%s165 + $0xc9] sm:$0xff]
      %v1057 = vld [vmem:[%s165 + $0xd1] sm:$0xff]
      %v1058 = vld [vmem:[%s165 + $0xd9] sm:$0xff]
      %v1059 = vld [vmem:[%s165 + $0xe1] sm:$0xff]
      %v1060 = vld [vmem:[%s165 + $0xe9] sm:$0xff]
      %v1061 = vld [vmem:[%s165 + $0xf1] sm:$0xff]
      %v1062 = vld [vmem:[%s165 + $0xf9] sm:$0xff]
      %v1063 = vld [vmem:[%s165 + $0x101] sm:$0xff]
      %v1064 = vld [vmem:[%s165 + $0x109] sm:$0xff]
      %v1065 = vld [vmem:[%s165 + $0x111] sm:$0xff]
      %v1066 = vld [vmem:[%s165 + $0x119] sm:$0xff]
      %v1067 = vld [vmem:[%s165 + $0x121] sm:$0xff]
      %v1068 = vld [vmem:[%s165 + $0x129] sm:$0xff]
      %v1069 = vld [vmem:[%s165 + $0x131] sm:$0xff]
      %v1070 = vld [vmem:[%s165 + $0x139] sm:$0xff]
      %v1071 = vld [vmem:[%s165 + $0x141] sm:$0xff]
      %v1072 = vld [vmem:[%s165 + $0x149] sm:$0xff]
      %v1073 = vld [vmem:[%s165 + $0x151] sm:$0xff]
      %v1074 = vld [vmem:[%s165 + $0x159] sm:$0xff]
      %v1075 = vld [vmem:[%s165 + $0x161] sm:$0xff]
      %v1076 = vld [vmem:[%s165 + $0x169] sm:$0xff]
      %v1077 = vld [vmem:[%s165 + $0x171] sm:$0xff]
      %v1078 = vld [vmem:[%s165 + $0x179] sm:$0xff]
      %v1079 = vld [vmem:[%s165 + $0x181] sm:$0xff]
      %v1080 = vld [vmem:[%s165 + $0x189] sm:$0xff]
      %v1081 = vld [vmem:[%s165 + $0x191] sm:$0xff]
      %v1082 = vld [vmem:[%s165 + $0x199] sm:$0xff]
      %v1083 = vld [vmem:[%s165 + $0x1a1] sm:$0xff]
      %v1084 = vld [vmem:[%s165 + $0x1a9] sm:$0xff]
      %v1085 = vld [vmem:[%s165 + $0x1b1] sm:$0xff]
      %v1086 = vld [vmem:[%s165 + $0x1b9] sm:$0x1]
      %s1087 = scalar_lea.vmem %s1, 64
      %v1088 = vld [vmem:[%s1087] sm:$0xff]
      %v1089 = vld [vmem:[%s1087 + $0x8] sm:$0xff]
      %v1090 = vld [vmem:[%s1087 + $0x10] sm:$0xff]
      %v1091 = vld [vmem:[%s1087 + $0x18] sm:$0xff]
      %v1092 = vld [vmem:[%s1087 + $0x20] sm:$0xff]
      %v1093 = vld [vmem:[%s1087 + $0x28] sm:$0xff]
      %v1094 = vld [vmem:[%s1087 + $0x30] sm:$0xff]
      %v1095 = vld [vmem:[%s1087 + $0x38] sm:$0xff]
      %v1097 = vsel %vm349, %v1031, 0
      %v1100 = vsel %vm349, %v1032, 0
      %v1103 = vsel %vm349, %v1033, 0
      %v1106 = vsel %vm349, %v1034, 0
      %v1109 = vsel %vm349, %v1035, 0
      %v1112 = vsel %vm349, %v1036, 0
      %v1115 = vsel %vm349, %v1037, 0
      %v1118 = vsel %vm349, %v1038, 0
      %v1121 = vsel %vm349, %v1039, 0
      %v1124 = vsel %vm349, %v1040, 0
      %v1127 = vsel %vm349, %v1041, 0
      %v1130 = vsel %vm349, %v1042, 0
      %v1133 = vsel %vm349, %v1043, 0
      %v1136 = vsel %vm349, %v1044, 0
      %v1139 = vsel %vm349, %v1045, 0
      %v1142 = vsel %vm349, %v1046, 0
      %v1145 = vsel %vm349, %v1047, 0
      %v1148 = vsel %vm349, %v1048, 0
      %v1151 = vsel %vm349, %v1049, 0
      %v1154 = vsel %vm349, %v1050, 0
      %v1157 = vsel %vm349, %v1051, 0
      %v1160 = vsel %vm349, %v1052, 0
      %v1163 = vsel %vm349, %v1053, 0
      %v1166 = vsel %vm349, %v1054, 0
      %v1169 = vsel %vm349, %v1055, 0
      %v1172 = vsel %vm349, %v1056, 0
      %v1175 = vsel %vm349, %v1057, 0
      %v1178 = vsel %vm349, %v1058, 0
      %v1181 = vsel %vm349, %v1059, 0
      %v1184 = vsel %vm349, %v1060, 0
      %v1187 = vsel %vm349, %v1061, 0
      %v1190 = vsel %vm349, %v1062, 0
      %v1193 = vsel %vm349, %v1063, 0
      %v1196 = vsel %vm349, %v1064, 0
      %v1199 = vsel %vm349, %v1065, 0
      %v1202 = vsel %vm349, %v1066, 0
      %v1205 = vsel %vm349, %v1067, 0
      %v1208 = vsel %vm349, %v1068, 0
      %v1211 = vsel %vm349, %v1069, 0
      %v1214 = vsel %vm349, %v1070, 0
      %v1217 = vsel %vm349, %v1071, 0
      %v1220 = vsel %vm349, %v1072, 0
      %v1223 = vsel %vm349, %v1073, 0
      %v1226 = vsel %vm349, %v1074, 0
      %v1229 = vsel %vm349, %v1075, 0
      %v1232 = vsel %vm349, %v1076, 0
      %v1235 = vsel %vm349, %v1077, 0
      %v1238 = vsel %vm349, %v1078, 0
      %v1241 = vsel %vm349, %v1079, 0
      %v1244 = vsel %vm349, %v1080, 0
      %v1247 = vsel %vm349, %v1081, 0
      %v1250 = vsel %vm349, %v1082, 0
      %v1253 = vsel %vm349, %v1083, 0
      %v1256 = vsel %vm349, %v1084, 0
      %v1259 = vsel %vm349, %v1085, 0
      %v1262 = vsel %vm349, %v1086, 0
      %1264 = vmatprep.subr.mxu0 0.0
      %1265 = vmatpush1.msra.mxu0 0.0
      %1266 = vmatprep.subr.mxu0 0.0
      %1267 = vmatpush1.msra.mxu0 0.0
      %1268 = vmatprep.subr.mxu0 0.0
      %1269 = vmatpush1.msra.mxu0 0.0
      %1270 = vmatprep.subr.mxu0 0.0
      %1271 = vmatpush1.msra.mxu0 0.0
      %1272 = vmatprep.subr.mxu0 0.0
      %1273 = vmatpush1.msra.mxu0 0.0
      %1274 = vmatprep.subr.mxu0 0.0
      %1275 = vmatpush1.msra.mxu0 0.0
      %1276 = vmatprep.subr.mxu0 0.0
      %1277 = vmatpush1.msra.mxu0 0.0
      %1278 = vmatprep.subr.mxu0 0.0
      %1279 = vmatpush1.msra.mxu0 0.0
      %1280 = vmatprep.subr.mxu0 0.0
      %1281 = vmatpush1.msra.mxu0 %v1095
      %1282 = vmatprep.subr.mxu0 0.0
      %1283 = vmatpush1.msra.mxu0 %v1094
      %1284 = vmatprep.subr.mxu0 0.0
      %1285 = vmatpush1.msra.mxu0 %v1093
      %1286 = vmatprep.subr.mxu0 0.0
      %1287 = vmatpush1.msra.mxu0 %v1092
      %1288 = vmatprep.subr.mxu0 0.0
      %1289 = vmatpush1.msra.mxu0 %v1091
      %1290 = vmatprep.subr.mxu0 0.0
      %1291 = vmatpush1.msra.mxu0 %v1090
      %1292 = vmatprep.subr.mxu0 0.0
      %1293 = vmatpush1.msra.mxu0 %v1089
      %1294 = vmatprep.subr.mxu0 0.0
      %1295 = vmatpush1.msra.mxu0 %v1088
      %1296 = vmatprep.subr.mxu0 0.0
      %1297 = vmatpush2.msra.mxu0 0.0
      %1298 = vmatprep.subr.mxu0 0.0
      %1299 = vmatpush2.msra.mxu0 0.0
      %1300 = vmatprep.subr.mxu0 0.0
      %1301 = vmatpush2.msra.mxu0 0.0
      %1302 = vmatprep.subr.mxu0 0.0
      %1303 = vmatpush2.msra.mxu0 0.0
      %1304 = vmatprep.subr.mxu0 0.0
      %1305 = vmatpush2.msra.mxu0 0.0
      %1306 = vmatprep.subr.mxu0 0.0
      %1307 = vmatpush2.msra.mxu0 0.0
      %1308 = vmatprep.subr.mxu0 0.0
      %1309 = vmatpush2.msra.mxu0 0.0
      %1310 = vmatprep.subr.mxu0 0.0
      %1311 = vmatpush2.msra.mxu0 0.0
      %1312 = vmatprep.subr.mxu0 0.0
      %1313 = vmatpush2.msra.mxu0 0.0
      %1314 = vmatprep.subr.mxu0 0.0
      %1315 = vmatpush2.msra.mxu0 0.0
      %1316 = vmatprep.subr.mxu0 0.0
      %1317 = vmatpush2.msra.mxu0 0.0
      %1318 = vmatprep.subr.mxu0 0.0
      %1319 = vmatpush2.msra.mxu0 0.0
      %1320 = vmatprep.subr.mxu0 0.0
      %1321 = vmatpush2.msra.mxu0 0.0
      %1322 = vmatprep.subr.mxu0 0.0
      %1323 = vmatpush2.msra.mxu0 0.0
      %1324 = vmatprep.subr.mxu0 0.0
      %1325 = vmatpush2.msra.mxu0 0.0
      %1326 = vmatprep.subr.mxu0 0.0
      %1327 = vmatpush2.msra.mxu0 0.0
      %1328 = vmatprep.mubr.f32.mxu0 0.0
      %1329 = vmatmul.mubr.f32.gmra.mxu0 %v1097
      %v1330 = vpop.f32.mrf.mxu0
      %v1331 = vadd.f32 0.0, %v1330
      %v1332 = vpop.f32.mrf.mxu0
      %1333 = vmatprep.mubr.f32.mxu0 0.0
      %1334 = vmatmul.mubr.f32.gmra.mxu0 %v1100
      %v1335 = vpop.f32.mrf.mxu0
      %v1336 = vadd.f32 0.0, %v1335
      %v1337 = vpop.f32.mrf.mxu0
      %1338 = vmatprep.mubr.f32.mxu0 0.0
      %1339 = vmatmul.mubr.f32.gmra.mxu0 %v1103
      %v1340 = vpop.f32.mrf.mxu0
      %v1341 = vadd.f32 0.0, %v1340
      %v1342 = vpop.f32.mrf.mxu0
      %1343 = vmatprep.mubr.f32.mxu0 0.0
      %1344 = vmatmul.mubr.f32.gmra.mxu0 %v1106
      %v1345 = vpop.f32.mrf.mxu0
      %v1346 = vadd.f32 0.0, %v1345
      %v1347 = vpop.f32.mrf.mxu0
      %1348 = vmatprep.mubr.f32.mxu0 0.0
      %1349 = vmatmul.mubr.f32.gmra.mxu0 %v1109
      %v1350 = vpop.f32.mrf.mxu0
      %v1351 = vadd.f32 0.0, %v1350
      %v1352 = vpop.f32.mrf.mxu0
      %1353 = vmatprep.mubr.f32.mxu0 0.0
      %1354 = vmatmul.mubr.f32.gmra.mxu0 %v1112
      %v1355 = vpop.f32.mrf.mxu0
      %v1356 = vadd.f32 0.0, %v1355
      %v1357 = vpop.f32.mrf.mxu0
      %1358 = vmatprep.mubr.f32.mxu0 0.0
      %1359 = vmatmul.mubr.f32.gmra.mxu0 %v1115
      %v1360 = vpop.f32.mrf.mxu0
      %v1361 = vadd.f32 0.0, %v1360
      %v1362 = vpop.f32.mrf.mxu0
      %1363 = vmatprep.mubr.f32.mxu0 0.0
      %1364 = vmatmul.mubr.f32.gmra.mxu0 %v1118
      %v1365 = vpop.f32.mrf.mxu0
      %v1366 = vadd.f32 0.0, %v1365
      %v1367 = vpop.f32.mrf.mxu0
      %1368 = vmatprep.mubr.f32.mxu0 0.0
      %1369 = vmatmul.mubr.f32.gmra.mxu0 %v1121
      %v1370 = vpop.f32.mrf.mxu0
      %v1371 = vadd.f32 0.0, %v1370
      %v1372 = vpop.f32.mrf.mxu0
      %1373 = vmatprep.mubr.f32.mxu0 0.0
      %1374 = vmatmul.mubr.f32.gmra.mxu0 %v1124
      %v1375 = vpop.f32.mrf.mxu0
      %v1376 = vadd.f32 0.0, %v1375
      %v1377 = vpop.f32.mrf.mxu0
      %1378 = vmatprep.mubr.f32.mxu0 0.0
      %1379 = vmatmul.mubr.f32.gmra.mxu0 %v1127
      %v1380 = vpop.f32.mrf.mxu0
      %v1381 = vadd.f32 0.0, %v1380
      %v1382 = vpop.f32.mrf.mxu0
      %1383 = vmatprep.mubr.f32.mxu0 0.0
      %1384 = vmatmul.mubr.f32.gmra.mxu0 %v1130
      %v1385 = vpop.f32.mrf.mxu0
      %v1386 = vadd.f32 0.0, %v1385
      %v1387 = vpop.f32.mrf.mxu0
      %1388 = vmatprep.mubr.f32.mxu0 0.0
      %1389 = vmatmul.mubr.f32.gmra.mxu0 %v1133
      %v1390 = vpop.f32.mrf.mxu0
      %v1391 = vadd.f32 0.0, %v1390
      %v1392 = vpop.f32.mrf.mxu0
      %1393 = vmatprep.mubr.f32.mxu0 0.0
      %1394 = vmatmul.mubr.f32.gmra.mxu0 %v1136
      %v1395 = vpop.f32.mrf.mxu0
      %v1396 = vadd.f32 0.0, %v1395
      %v1397 = vpop.f32.mrf.mxu0
      %1398 = vmatprep.mubr.f32.mxu0 0.0
      %1399 = vmatmul.mubr.f32.gmra.mxu0 %v1139
      %v1400 = vpop.f32.mrf.mxu0
      %v1401 = vadd.f32 0.0, %v1400
      %v1402 = vpop.f32.mrf.mxu0
      %1403 = vmatprep.mubr.f32.mxu0 0.0
      %1404 = vmatmul.mubr.f32.gmra.mxu0 %v1142
      %v1405 = vpop.f32.mrf.mxu0
      %v1406 = vadd.f32 0.0, %v1405
      %v1407 = vpop.f32.mrf.mxu0
      %1408 = vmatprep.mubr.f32.mxu0 0.0
      %1409 = vmatmul.mubr.f32.gmra.mxu0 %v1145
      %v1410 = vpop.f32.mrf.mxu0
      %v1411 = vadd.f32 0.0, %v1410
      %v1412 = vpop.f32.mrf.mxu0
      %1413 = vmatprep.mubr.f32.mxu0 0.0
      %1414 = vmatmul.mubr.f32.gmra.mxu0 %v1148
      %v1415 = vpop.f32.mrf.mxu0
      %v1416 = vadd.f32 0.0, %v1415
      %v1417 = vpop.f32.mrf.mxu0
      %1418 = vmatprep.mubr.f32.mxu0 0.0
      %1419 = vmatmul.mubr.f32.gmra.mxu0 %v1151
      %v1420 = vpop.f32.mrf.mxu0
      %v1421 = vadd.f32 0.0, %v1420
      %v1422 = vpop.f32.mrf.mxu0
      %1423 = vmatprep.mubr.f32.mxu0 0.0
      %1424 = vmatmul.mubr.f32.gmra.mxu0 %v1154
      %v1425 = vpop.f32.mrf.mxu0
      %v1426 = vadd.f32 0.0, %v1425
      %v1427 = vpop.f32.mrf.mxu0
      %1428 = vmatprep.mubr.f32.mxu0 0.0
      %1429 = vmatmul.mubr.f32.gmra.mxu0 %v1157
      %v1430 = vpop.f32.mrf.mxu0
      %v1431 = vadd.f32 0.0, %v1430
      %v1432 = vpop.f32.mrf.mxu0
      %1433 = vmatprep.mubr.f32.mxu0 0.0
      %1434 = vmatmul.mubr.f32.gmra.mxu0 %v1160
      %v1435 = vpop.f32.mrf.mxu0
      %v1436 = vadd.f32 0.0, %v1435
      %v1437 = vpop.f32.mrf.mxu0
      %1438 = vmatprep.mubr.f32.mxu0 0.0
      %1439 = vmatmul.mubr.f32.gmra.mxu0 %v1163
      %v1440 = vpop.f32.mrf.mxu0
      %v1441 = vadd.f32 0.0, %v1440
      %v1442 = vpop.f32.mrf.mxu0
      %1443 = vmatprep.mubr.f32.mxu0 0.0
      %1444 = vmatmul.mubr.f32.gmra.mxu0 %v1166
      %v1445 = vpop.f32.mrf.mxu0
      %v1446 = vadd.f32 0.0, %v1445
      %v1447 = vpop.f32.mrf.mxu0
      %1448 = vmatprep.mubr.f32.mxu0 0.0
      %1449 = vmatmul.mubr.f32.gmra.mxu0 %v1169
      %v1450 = vpop.f32.mrf.mxu0
      %v1451 = vadd.f32 0.0, %v1450
      %v1452 = vpop.f32.mrf.mxu0
      %1453 = vmatprep.mubr.f32.mxu0 0.0
      %1454 = vmatmul.mubr.f32.gmra.mxu0 %v1172
      %v1455 = vpop.f32.mrf.mxu0
      %v1456 = vadd.f32 0.0, %v1455
      %v1457 = vpop.f32.mrf.mxu0
      %1458 = vmatprep.mubr.f32.mxu0 0.0
      %1459 = vmatmul.mubr.f32.gmra.mxu0 %v1175
      %v1460 = vpop.f32.mrf.mxu0
      %v1461 = vadd.f32 0.0, %v1460
      %v1462 = vpop.f32.mrf.mxu0
      %1463 = vmatprep.mubr.f32.mxu0 0.0
      %1464 = vmatmul.mubr.f32.gmra.mxu0 %v1178
      %v1465 = vpop.f32.mrf.mxu0
      %v1466 = vadd.f32 0.0, %v1465
      %v1467 = vpop.f32.mrf.mxu0
      %1468 = vmatprep.mubr.f32.mxu0 0.0
      %1469 = vmatmul.mubr.f32.gmra.mxu0 %v1181
      %v1470 = vpop.f32.mrf.mxu0
      %v1471 = vadd.f32 0.0, %v1470
      %v1472 = vpop.f32.mrf.mxu0
      %1473 = vmatprep.mubr.f32.mxu0 0.0
      %1474 = vmatmul.mubr.f32.gmra.mxu0 %v1184
      %v1475 = vpop.f32.mrf.mxu0
      %v1476 = vadd.f32 0.0, %v1475
      %v1477 = vpop.f32.mrf.mxu0
      %1478 = vmatprep.mubr.f32.mxu0 0.0
      %1479 = vmatmul.mubr.f32.gmra.mxu0 %v1187
      %v1480 = vpop.f32.mrf.mxu0
      %v1481 = vadd.f32 0.0, %v1480
      %v1482 = vpop.f32.mrf.mxu0
      %1483 = vmatprep.mubr.f32.mxu0 0.0
      %1484 = vmatmul.mubr.f32.gmra.mxu0 %v1190
      %v1485 = vpop.f32.mrf.mxu0
      %v1486 = vadd.f32 0.0, %v1485
      %v1487 = vpop.f32.mrf.mxu0
      %1488 = vmatprep.mubr.f32.mxu0 0.0
      %1489 = vmatmul.mubr.f32.gmra.mxu0 %v1193
      %v1490 = vpop.f32.mrf.mxu0
      %v1491 = vadd.f32 0.0, %v1490
      %v1492 = vpop.f32.mrf.mxu0
      %1493 = vmatprep.mubr.f32.mxu0 0.0
      %1494 = vmatmul.mubr.f32.gmra.mxu0 %v1196
      %v1495 = vpop.f32.mrf.mxu0
      %v1496 = vadd.f32 0.0, %v1495
      %v1497 = vpop.f32.mrf.mxu0
      %1498 = vmatprep.mubr.f32.mxu0 0.0
      %1499 = vmatmul.mubr.f32.gmra.mxu0 %v1199
      %v1500 = vpop.f32.mrf.mxu0
      %v1501 = vadd.f32 0.0, %v1500
      %v1502 = vpop.f32.mrf.mxu0
      %1503 = vmatprep.mubr.f32.mxu0 0.0
      %1504 = vmatmul.mubr.f32.gmra.mxu0 %v1202
      %v1505 = vpop.f32.mrf.mxu0
      %v1506 = vadd.f32 0.0, %v1505
      %v1507 = vpop.f32.mrf.mxu0
      %1508 = vmatprep.mubr.f32.mxu0 0.0
      %1509 = vmatmul.mubr.f32.gmra.mxu0 %v1205
      %v1510 = vpop.f32.mrf.mxu0
      %v1511 = vadd.f32 0.0, %v1510
      %v1512 = vpop.f32.mrf.mxu0
      %1513 = vmatprep.mubr.f32.mxu0 0.0
      %1514 = vmatmul.mubr.f32.gmra.mxu0 %v1208
      %v1515 = vpop.f32.mrf.mxu0
      %v1516 = vadd.f32 0.0, %v1515
      %v1517 = vpop.f32.mrf.mxu0
      %1518 = vmatprep.mubr.f32.mxu0 0.0
      %1519 = vmatmul.mubr.f32.gmra.mxu0 %v1211
      %v1520 = vpop.f32.mrf.mxu0
      %v1521 = vadd.f32 0.0, %v1520
      %v1522 = vpop.f32.mrf.mxu0
      %1523 = vmatprep.mubr.f32.mxu0 0.0
      %1524 = vmatmul.mubr.f32.gmra.mxu0 %v1214
      %v1525 = vpop.f32.mrf.mxu0
      %v1526 = vadd.f32 0.0, %v1525
      %v1527 = vpop.f32.mrf.mxu0
      %1528 = vmatprep.mubr.f32.mxu0 0.0
      %1529 = vmatmul.mubr.f32.gmra.mxu0 %v1217
      %v1530 = vpop.f32.mrf.mxu0
      %v1531 = vadd.f32 0.0, %v1530
      %v1532 = vpop.f32.mrf.mxu0
      %1533 = vmatprep.mubr.f32.mxu0 0.0
      %1534 = vmatmul.mubr.f32.gmra.mxu0 %v1220
      %v1535 = vpop.f32.mrf.mxu0
      %v1536 = vadd.f32 0.0, %v1535
      %v1537 = vpop.f32.mrf.mxu0
      %1538 = vmatprep.mubr.f32.mxu0 0.0
      %1539 = vmatmul.mubr.f32.gmra.mxu0 %v1223
      %v1540 = vpop.f32.mrf.mxu0
      %v1541 = vadd.f32 0.0, %v1540
      %v1542 = vpop.f32.mrf.mxu0
      %1543 = vmatprep.mubr.f32.mxu0 0.0
      %1544 = vmatmul.mubr.f32.gmra.mxu0 %v1226
      %v1545 = vpop.f32.mrf.mxu0
      %v1546 = vadd.f32 0.0, %v1545
      %v1547 = vpop.f32.mrf.mxu0
      %1548 = vmatprep.mubr.f32.mxu0 0.0
      %1549 = vmatmul.mubr.f32.gmra.mxu0 %v1229
      %v1550 = vpop.f32.mrf.mxu0
      %v1551 = vadd.f32 0.0, %v1550
      %v1552 = vpop.f32.mrf.mxu0
      %1553 = vmatprep.mubr.f32.mxu0 0.0
      %1554 = vmatmul.mubr.f32.gmra.mxu0 %v1232
      %v1555 = vpop.f32.mrf.mxu0
      %v1556 = vadd.f32 0.0, %v1555
      %v1557 = vpop.f32.mrf.mxu0
      %1558 = vmatprep.mubr.f32.mxu0 0.0
      %1559 = vmatmul.mubr.f32.gmra.mxu0 %v1235
      %v1560 = vpop.f32.mrf.mxu0
      %v1561 = vadd.f32 0.0, %v1560
      %v1562 = vpop.f32.mrf.mxu0
      %1563 = vmatprep.mubr.f32.mxu0 0.0
      %1564 = vmatmul.mubr.f32.gmra.mxu0 %v1238
      %v1565 = vpop.f32.mrf.mxu0
      %v1566 = vadd.f32 0.0, %v1565
      %v1567 = vpop.f32.mrf.mxu0
      %1568 = vmatprep.mubr.f32.mxu0 0.0
      %1569 = vmatmul.mubr.f32.gmra.mxu0 %v1241
      %v1570 = vpop.f32.mrf.mxu0
      %v1571 = vadd.f32 0.0, %v1570
      %v1572 = vpop.f32.mrf.mxu0
      %1573 = vmatprep.mubr.f32.mxu0 0.0
      %1574 = vmatmul.mubr.f32.gmra.mxu0 %v1244
      %v1575 = vpop.f32.mrf.mxu0
      %v1576 = vadd.f32 0.0, %v1575
      %v1577 = vpop.f32.mrf.mxu0
      %1578 = vmatprep.mubr.f32.mxu0 0.0
      %1579 = vmatmul.mubr.f32.gmra.mxu0 %v1247
      %v1580 = vpop.f32.mrf.mxu0
      %v1581 = vadd.f32 0.0, %v1580
      %v1582 = vpop.f32.mrf.mxu0
      %1583 = vmatprep.mubr.f32.mxu0 0.0
      %1584 = vmatmul.mubr.f32.gmra.mxu0 %v1250
      %v1585 = vpop.f32.mrf.mxu0
      %v1586 = vadd.f32 0.0, %v1585
      %v1587 = vpop.f32.mrf.mxu0
      %1588 = vmatprep.mubr.f32.mxu0 0.0
      %1589 = vmatmul.mubr.f32.gmra.mxu0 %v1253
      %v1590 = vpop.f32.mrf.mxu0
      %v1591 = vadd.f32 0.0, %v1590
      %v1592 = vpop.f32.mrf.mxu0
      %1593 = vmatprep.mubr.f32.mxu0 0.0
      %1594 = vmatmul.mubr.f32.gmra.mxu0 %v1256
      %v1595 = vpop.f32.mrf.mxu0
      %v1596 = vadd.f32 0.0, %v1595
      %v1597 = vpop.f32.mrf.mxu0
      %1598 = vmatprep.mubr.f32.mxu0 0.0
      %1599 = vmatmul.mubr.f32.gmra.mxu0 %v1259
      %v1600 = vpop.f32.mrf.mxu0
      %v1601 = vadd.f32 0.0, %v1600
      %v1602 = vpop.f32.mrf.mxu0
      %1603 = vmatprep.mubr.f32.mxu0 0.0
      %1604 = vmatmul.mubr.f32.gmra.mxu0 %v1262
      %v1605 = vpop.f32.mrf.mxu0
      %v1606 = vadd.f32 0.0, %v1605
      %v1607 = vpop.f32.mrf.mxu0
      %1608 = vdwg.mxu0
      %v1609 = vadd.f32 %v975, %v1331
      %v1610 = vadd.f32 %v976, %v1336
      %v1611 = vadd.f32 %v977, %v1341
      %v1612 = vadd.f32 %v978, %v1346
      %v1613 = vadd.f32 %v979, %v1351
      %v1614 = vadd.f32 %v980, %v1356
      %v1615 = vadd.f32 %v981, %v1361
      %v1616 = vadd.f32 %v982, %v1366
      %v1617 = vadd.f32 %v983, %v1371
      %v1618 = vadd.f32 %v984, %v1376
      %v1619 = vadd.f32 %v985, %v1381
      %v1620 = vadd.f32 %v986, %v1386
      %v1621 = vadd.f32 %v987, %v1391
      %v1622 = vadd.f32 %v988, %v1396
      %v1623 = vadd.f32 %v989, %v1401
      %v1624 = vadd.f32 %v990, %v1406
      %v1625 = vadd.f32 %v991, %v1411
      %v1626 = vadd.f32 %v992, %v1416
      %v1627 = vadd.f32 %v993, %v1421
      %v1628 = vadd.f32 %v994, %v1426
      %v1629 = vadd.f32 %v995, %v1431
      %v1630 = vadd.f32 %v996, %v1436
      %v1631 = vadd.f32 %v997, %v1441
      %v1632 = vadd.f32 %v998, %v1446
      %v1633 = vadd.f32 %v999, %v1451
      %v1634 = vadd.f32 %v1000, %v1456
      %v1635 = vadd.f32 %v1001, %v1461
      %v1636 = vadd.f32 %v1002, %v1466
      %v1637 = vadd.f32 %v1003, %v1471
      %v1638 = vadd.f32 %v1004, %v1476
      %v1639 = vadd.f32 %v1005, %v1481
      %v1640 = vadd.f32 %v1006, %v1486
      %v1641 = vadd.f32 %v1007, %v1491
      %v1642 = vadd.f32 %v1008, %v1496
      %v1643 = vadd.f32 %v1009, %v1501
      %v1644 = vadd.f32 %v1010, %v1506
      %v1645 = vadd.f32 %v1011, %v1511
      %v1646 = vadd.f32 %v1012, %v1516
      %v1647 = vadd.f32 %v1013, %v1521
      %v1648 = vadd.f32 %v1014, %v1526
      %v1649 = vadd.f32 %v1015, %v1531
      %v1650 = vadd.f32 %v1016, %v1536
      %v1651 = vadd.f32 %v1017, %v1541
      %v1652 = vadd.f32 %v1018, %v1546
      %v1653 = vadd.f32 %v1019, %v1551
      %v1654 = vadd.f32 %v1020, %v1556
      %v1655 = vadd.f32 %v1021, %v1561
      %v1656 = vadd.f32 %v1022, %v1566
      %v1657 = vadd.f32 %v1023, %v1571
      %v1658 = vadd.f32 %v1024, %v1576
      %v1659 = vadd.f32 %v1025, %v1581
      %v1660 = vadd.f32 %v1026, %v1586
      %v1661 = vadd.f32 %v1027, %v1591
      %v1662 = vadd.f32 %v1028, %v1596
      %v1663 = vadd.f32 %v1029, %v1601
      %v1664 = vadd.f32 %v1030, %v1606
      %1665 = vst.msk [vmem:[%s170] sm:$0xff] %vm171, %v1609
      %1666 = vst.msk [vmem:[%s170 + $0x8] sm:$0xff] %vm171, %v1610
      %1667 = vst.msk [vmem:[%s170 + $0x10] sm:$0xff] %vm171, %v1611
      %1668 = vst.msk [vmem:[%s170 + $0x18] sm:$0xff] %vm171, %v1612
      %1669 = vst.msk [vmem:[%s170 + $0x20] sm:$0xff] %vm171, %v1613
      %1670 = vst.msk [vmem:[%s170 + $0x28] sm:$0xff] %vm171, %v1614
      %1671 = vst.msk [vmem:[%s170 + $0x30] sm:$0xff] %vm171, %v1615
      %1672 = vst.msk [vmem:[%s170 + $0x38] sm:$0xff] %vm171, %v1616
      %1673 = vst.msk [vmem:[%s170 + $0x40] sm:$0xff] %vm171, %v1617
      %1674 = vst.msk [vmem:[%s170 + $0x48] sm:$0xff] %vm171, %v1618
      %1675 = vst.msk [vmem:[%s170 + $0x50] sm:$0xff] %vm171, %v1619
      %1676 = vst.msk [vmem:[%s170 + $0x58] sm:$0xff] %vm171, %v1620
      %1677 = vst.msk [vmem:[%s170 + $0x60] sm:$0xff] %vm171, %v1621
      %1678 = vst.msk [vmem:[%s170 + $0x68] sm:$0xff] %vm171, %v1622
      %1679 = vst.msk [vmem:[%s170 + $0x70] sm:$0xff] %vm171, %v1623
      %1680 = vst.msk [vmem:[%s170 + $0x78] sm:$0xff] %vm171, %v1624
      %1681 = vst.msk [vmem:[%s170 + $0x80] sm:$0xff] %vm171, %v1625
      %1682 = vst.msk [vmem:[%s170 + $0x88] sm:$0xff] %vm171, %v1626
      %1683 = vst.msk [vmem:[%s170 + $0x90] sm:$0xff] %vm171, %v1627
      %1684 = vst.msk [vmem:[%s170 + $0x98] sm:$0xff] %vm171, %v1628
      %1685 = vst.msk [vmem:[%s170 + $0xa0] sm:$0xff] %vm171, %v1629
      %1686 = vst.msk [vmem:[%s170 + $0xa8] sm:$0xff] %vm171, %v1630
      %1687 = vst.msk [vmem:[%s170 + $0xb0] sm:$0xff] %vm171, %v1631
      %1688 = vst.msk [vmem:[%s170 + $0xb8] sm:$0xff] %vm171, %v1632
      %1689 = vst.msk [vmem:[%s170 + $0xc0] sm:$0xff] %vm171, %v1633
      %1690 = vst.msk [vmem:[%s170 + $0xc8] sm:$0xff] %vm171, %v1634
      %1691 = vst.msk [vmem:[%s170 + $0xd0] sm:$0xff] %vm171, %v1635
      %1692 = vst.msk [vmem:[%s170 + $0xd8] sm:$0xff] %vm171, %v1636
      %1693 = vst.msk [vmem:[%s170 + $0xe0] sm:$0xff] %vm171, %v1637
      %1694 = vst.msk [vmem:[%s170 + $0xe8] sm:$0xff] %vm171, %v1638
      %1695 = vst.msk [vmem:[%s170 + $0xf0] sm:$0xff] %vm171, %v1639
      %1696 = vst.msk [vmem:[%s170 + $0xf8] sm:$0xff] %vm171, %v1640
      %1697 = vst.msk [vmem:[%s170 + $0x100] sm:$0xff] %vm171, %v1641
      %1698 = vst.msk [vmem:[%s170 + $0x108] sm:$0xff] %vm171, %v1642
      %1699 = vst.msk [vmem:[%s170 + $0x110] sm:$0xff] %vm171, %v1643
      %1700 = vst.msk [vmem:[%s170 + $0x118] sm:$0xff] %vm171, %v1644
      %1701 = vst.msk [vmem:[%s170 + $0x120] sm:$0xff] %vm171, %v1645
      %1702 = vst.msk [vmem:[%s170 + $0x128] sm:$0xff] %vm171, %v1646
      %1703 = vst.msk [vmem:[%s170 + $0x130] sm:$0xff] %vm171, %v1647
      %1704 = vst.msk [vmem:[%s170 + $0x138] sm:$0xff] %vm171, %v1648
      %1705 = vst.msk [vmem:[%s170 + $0x140] sm:$0xff] %vm171, %v1649
      %1706 = vst.msk [vmem:[%s170 + $0x148] sm:$0xff] %vm171, %v1650
      %1707 = vst.msk [vmem:[%s170 + $0x150] sm:$0xff] %vm171, %v1651
      %1708 = vst.msk [vmem:[%s170 + $0x158] sm:$0xff] %vm171, %v1652
      %1709 = vst.msk [vmem:[%s170 + $0x160] sm:$0xff] %vm171, %v1653
      %1710 = vst.msk [vmem:[%s170 + $0x168] sm:$0xff] %vm171, %v1654
      %1711 = vst.msk [vmem:[%s170 + $0x170] sm:$0xff] %vm171, %v1655
      %1712 = vst.msk [vmem:[%s170 + $0x178] sm:$0xff] %vm171, %v1656
      %1713 = vst.msk [vmem:[%s170 + $0x180] sm:$0xff] %vm171, %v1657
      %1714 = vst.msk [vmem:[%s170 + $0x188] sm:$0xff] %vm171, %v1658
      %1715 = vst.msk [vmem:[%s170 + $0x190] sm:$0xff] %vm171, %v1659
      %1716 = vst.msk [vmem:[%s170 + $0x198] sm:$0xff] %vm171, %v1660
      %1717 = vst.msk [vmem:[%s170 + $0x1a0] sm:$0xff] %vm171, %v1661
      %1718 = vst.msk [vmem:[%s170 + $0x1a8] sm:$0xff] %vm171, %v1662
      %1719 = vst.msk [vmem:[%s170 + $0x1b0] sm:$0xff] %vm171, %v1663
      %1720 = vst.msk [vmem:[%s170 + $0x1b8] sm:$0x1] %vm227, %v1664
      %v1721 = vld [vmem:[%s170] sm:$0xff]
      %v1722 = vld [vmem:[%s170 + $0x8] sm:$0xff]
      %v1723 = vld [vmem:[%s170 + $0x10] sm:$0xff]
      %v1724 = vld [vmem:[%s170 + $0x18] sm:$0xff]
      %v1725 = vld [vmem:[%s170 + $0x20] sm:$0xff]
      %v1726 = vld [vmem:[%s170 + $0x28] sm:$0xff]
      %v1727 = vld [vmem:[%s170 + $0x30] sm:$0xff]
      %v1728 = vld [vmem:[%s170 + $0x38] sm:$0xff]
      %v1729 = vld [vmem:[%s170 + $0x40] sm:$0xff]
      %v1730 = vld [vmem:[%s170 + $0x48] sm:$0xff]
      %v1731 = vld [vmem:[%s170 + $0x50] sm:$0xff]
      %v1732 = vld [vmem:[%s170 + $0x58] sm:$0xff]
      %v1733 = vld [vmem:[%s170 + $0x60] sm:$0xff]
      %v1734 = vld [vmem:[%s170 + $0x68] sm:$0xff]
      %v1735 = vld [vmem:[%s170 + $0x70] sm:$0xff]
      %v1736 = vld [vmem:[%s170 + $0x78] sm:$0xff]
      %v1737 = vld [vmem:[%s170 + $0x80] sm:$0xff]
      %v1738 = vld [vmem:[%s170 + $0x88] sm:$0xff]
      %v1739 = vld [vmem:[%s170 + $0x90] sm:$0xff]
      %v1740 = vld [vmem:[%s170 + $0x98] sm:$0xff]
      %v1741 = vld [vmem:[%s170 + $0xa0] sm:$0xff]
      %v1742 = vld [vmem:[%s170 + $0xa8] sm:$0xff]
      %v1743 = vld [vmem:[%s170 + $0xb0] sm:$0xff]
      %v1744 = vld [vmem:[%s170 + $0xb8] sm:$0xff]
      %v1745 = vld [vmem:[%s170 + $0xc0] sm:$0xff]
      %v1746 = vld [vmem:[%s170 + $0xc8] sm:$0xff]
      %v1747 = vld [vmem:[%s170 + $0xd0] sm:$0xff]
      %v1748 = vld [vmem:[%s170 + $0xd8] sm:$0xff]
      %v1749 = vld [vmem:[%s170 + $0xe0] sm:$0xff]
      %v1750 = vld [vmem:[%s170 + $0xe8] sm:$0xff]
      %v1751 = vld [vmem:[%s170 + $0xf0] sm:$0xff]
      %v1752 = vld [vmem:[%s170 + $0xf8] sm:$0xff]
      %v1753 = vld [vmem:[%s170 + $0x100] sm:$0xff]
      %v1754 = vld [vmem:[%s170 + $0x108] sm:$0xff]
      %v1755 = vld [vmem:[%s170 + $0x110] sm:$0xff]
      %v1756 = vld [vmem:[%s170 + $0x118] sm:$0xff]
      %v1757 = vld [vmem:[%s170 + $0x120] sm:$0xff]
      %v1758 = vld [vmem:[%s170 + $0x128] sm:$0xff]
      %v1759 = vld [vmem:[%s170 + $0x130] sm:$0xff]
      %v1760 = vld [vmem:[%s170 + $0x138] sm:$0xff]
      %v1761 = vld [vmem:[%s170 + $0x140] sm:$0xff]
      %v1762 = vld [vmem:[%s170 + $0x148] sm:$0xff]
      %v1763 = vld [vmem:[%s170 + $0x150] sm:$0xff]
      %v1764 = vld [vmem:[%s170 + $0x158] sm:$0xff]
      %v1765 = vld [vmem:[%s170 + $0x160] sm:$0xff]
      %v1766 = vld [vmem:[%s170 + $0x168] sm:$0xff]
      %v1767 = vld [vmem:[%s170 + $0x170] sm:$0xff]
      %v1768 = vld [vmem:[%s170 + $0x178] sm:$0xff]
      %v1769 = vld [vmem:[%s170 + $0x180] sm:$0xff]
      %v1770 = vld [vmem:[%s170 + $0x188] sm:$0xff]
      %v1771 = vld [vmem:[%s170 + $0x190] sm:$0xff]
      %v1772 = vld [vmem:[%s170 + $0x198] sm:$0xff]
      %v1773 = vld [vmem:[%s170 + $0x1a0] sm:$0xff]
      %v1774 = vld [vmem:[%s170 + $0x1a8] sm:$0xff]
      %v1775 = vld [vmem:[%s170 + $0x1b0] sm:$0xff]
      %v1776 = vld [vmem:[%s170 + $0x1b8] sm:$0x1]
      %v1777 = vld [vmem:[%s165 + $0x15] sm:$0xff]
      %v1778 = vld [vmem:[%s165 + $0x1d] sm:$0xff]
      %v1779 = vld [vmem:[%s165 + $0x25] sm:$0xff]
      %v1780 = vld [vmem:[%s165 + $0x2d] sm:$0xff]
      %v1781 = vld [vmem:[%s165 + $0x35] sm:$0xff]
      %v1782 = vld [vmem:[%s165 + $0x3d] sm:$0xff]
      %v1783 = vld [vmem:[%s165 + $0x45] sm:$0xff]
      %v1784 = vld [vmem:[%s165 + $0x4d] sm:$0xff]
      %v1785 = vld [vmem:[%s165 + $0x55] sm:$0xff]
      %v1786 = vld [vmem:[%s165 + $0x5d] sm:$0xff]
      %v1787 = vld [vmem:[%s165 + $0x65] sm:$0xff]
      %v1788 = vld [vmem:[%s165 + $0x6d] sm:$0xff]
      %v1789 = vld [vmem:[%s165 + $0x75] sm:$0xff]
      %v1790 = vld [vmem:[%s165 + $0x7d] sm:$0xff]
      %v1791 = vld [vmem:[%s165 + $0x85] sm:$0xff]
      %v1792 = vld [vmem:[%s165 + $0x8d] sm:$0xff]
      %v1793 = vld [vmem:[%s165 + $0x95] sm:$0xff]
      %v1794 = vld [vmem:[%s165 + $0x9d] sm:$0xff]
      %v1795 = vld [vmem:[%s165 + $0xa5] sm:$0xff]
      %v1796 = vld [vmem:[%s165 + $0xad] sm:$0xff]
      %v1797 = vld [vmem:[%s165 + $0xb5] sm:$0xff]
      %v1798 = vld [vmem:[%s165 + $0xbd] sm:$0xff]
      %v1799 = vld [vmem:[%s165 + $0xc5] sm:$0xff]
      %v1800 = vld [vmem:[%s165 + $0xcd] sm:$0xff]
      %v1801 = vld [vmem:[%s165 + $0xd5] sm:$0xff]
      %v1802 = vld [vmem:[%s165 + $0xdd] sm:$0xff]
      %v1803 = vld [vmem:[%s165 + $0xe5] sm:$0xff]
      %v1804 = vld [vmem:[%s165 + $0xed] sm:$0xff]
      %v1805 = vld [vmem:[%s165 + $0xf5] sm:$0xff]
      %v1806 = vld [vmem:[%s165 + $0xfd] sm:$0xff]
      %v1807 = vld [vmem:[%s165 + $0x105] sm:$0xff]
      %v1808 = vld [vmem:[%s165 + $0x10d] sm:$0xff]
      %v1809 = vld [vmem:[%s165 + $0x115] sm:$0xff]
      %v1810 = vld [vmem:[%s165 + $0x11d] sm:$0xff]
      %v1811 = vld [vmem:[%s165 + $0x125] sm:$0xff]
      %v1812 = vld [vmem:[%s165 + $0x12d] sm:$0xff]
      %v1813 = vld [vmem:[%s165 + $0x135] sm:$0xff]
      %v1814 = vld [vmem:[%s165 + $0x13d] sm:$0xff]
      %v1815 = vld [vmem:[%s165 + $0x145] sm:$0xff]
      %v1816 = vld [vmem:[%s165 + $0x14d] sm:$0xff]
      %v1817 = vld [vmem:[%s165 + $0x155] sm:$0xff]
      %v1818 = vld [vmem:[%s165 + $0x15d] sm:$0xff]
      %v1819 = vld [vmem:[%s165 + $0x165] sm:$0xff]
      %v1820 = vld [vmem:[%s165 + $0x16d] sm:$0xff]
      %v1821 = vld [vmem:[%s165 + $0x175] sm:$0xff]
      %v1822 = vld [vmem:[%s165 + $0x17d] sm:$0xff]
      %v1823 = vld [vmem:[%s165 + $0x185] sm:$0xff]
      %v1824 = vld [vmem:[%s165 + $0x18d] sm:$0xff]
      %v1825 = vld [vmem:[%s165 + $0x195] sm:$0xff]
      %v1826 = vld [vmem:[%s165 + $0x19d] sm:$0xff]
      %v1827 = vld [vmem:[%s165 + $0x1a5] sm:$0xff]
      %v1828 = vld [vmem:[%s165 + $0x1ad] sm:$0xff]
      %v1829 = vld [vmem:[%s165 + $0x1b5] sm:$0xff]
      %v1830 = vld [vmem:[%s165 + $0x1bd] sm:$0xff]
      %v1831 = vld [vmem:[%s165 + $0x1c5] sm:$0xff]
      %v1832 = vld [vmem:[%s165 + $0x1cd] sm:$0x1]
      %s1833 = scalar_lea.vmem %s1, 128
      %v1834 = vld [vmem:[%s1833] sm:$0xff]
      %v1835 = vld [vmem:[%s1833 + $0x8] sm:$0xff]
      %v1836 = vld [vmem:[%s1833 + $0x10] sm:$0xff]
      %v1837 = vld [vmem:[%s1833 + $0x18] sm:$0xff]
      %v1838 = vld [vmem:[%s1833 + $0x20] sm:$0xff]
      %v1839 = vld [vmem:[%s1833 + $0x28] sm:$0xff]
      %v1840 = vld [vmem:[%s1833 + $0x30] sm:$0xff]
      %v1841 = vld [vmem:[%s1833 + $0x38] sm:$0xff]
      %v1843 = vsel %vm349, %v1777, 0
      %v1846 = vsel %vm349, %v1778, 0
      %v1849 = vsel %vm349, %v1779, 0
      %v1852 = vsel %vm349, %v1780, 0
      %v1855 = vsel %vm349, %v1781, 0
      %v1858 = vsel %vm349, %v1782, 0
      %v1861 = vsel %vm349, %v1783, 0
      %v1864 = vsel %vm349, %v1784, 0
      %v1867 = vsel %vm349, %v1785, 0
      %v1870 = vsel %vm349, %v1786, 0
      %v1873 = vsel %vm349, %v1787, 0
      %v1876 = vsel %vm349, %v1788, 0
      %v1879 = vsel %vm349, %v1789, 0
      %v1882 = vsel %vm349, %v1790, 0
      %v1885 = vsel %vm349, %v1791, 0
      %v1888 = vsel %vm349, %v1792, 0
      %v1891 = vsel %vm349, %v1793, 0
      %v1894 = vsel %vm349, %v1794, 0
      %v1897 = vsel %vm349, %v1795, 0
      %v1900 = vsel %vm349, %v1796, 0
      %v1903 = vsel %vm349, %v1797, 0
      %v1906 = vsel %vm349, %v1798, 0
      %v1909 = vsel %vm349, %v1799, 0
      %v1912 = vsel %vm349, %v1800, 0
      %v1915 = vsel %vm349, %v1801, 0
      %v1918 = vsel %vm349, %v1802, 0
      %v1921 = vsel %vm349, %v1803, 0
      %v1924 = vsel %vm349, %v1804, 0
      %v1927 = vsel %vm349, %v1805, 0
      %v1930 = vsel %vm349, %v1806, 0
      %v1933 = vsel %vm349, %v1807, 0
      %v1936 = vsel %vm349, %v1808, 0
      %v1939 = vsel %vm349, %v1809, 0
      %v1942 = vsel %vm349, %v1810, 0
      %v1945 = vsel %vm349, %v1811, 0
      %v1948 = vsel %vm349, %v1812, 0
      %v1951 = vsel %vm349, %v1813, 0
      %v1954 = vsel %vm349, %v1814, 0
      %v1957 = vsel %vm349, %v1815, 0
      %v1960 = vsel %vm349, %v1816, 0
      %v1963 = vsel %vm349, %v1817, 0
      %v1966 = vsel %vm349, %v1818, 0
      %v1969 = vsel %vm349, %v1819, 0
      %v1972 = vsel %vm349, %v1820, 0
      %v1975 = vsel %vm349, %v1821, 0
      %v1978 = vsel %vm349, %v1822, 0
      %v1981 = vsel %vm349, %v1823, 0
      %v1984 = vsel %vm349, %v1824, 0
      %v1987 = vsel %vm349, %v1825, 0
      %v1990 = vsel %vm349, %v1826, 0
      %v1993 = vsel %vm349, %v1827, 0
      %v1996 = vsel %vm349, %v1828, 0
      %v1999 = vsel %vm349, %v1829, 0
      %v2002 = vsel %vm349, %v1830, 0
      %v2005 = vsel %vm349, %v1831, 0
      %v2008 = vsel %vm349, %v1832, 0
      %2010 = vmatprep.subr.mxu0 0.0
      %2011 = vmatpush1.msra.mxu0 0.0
      %2012 = vmatprep.subr.mxu0 0.0
      %2013 = vmatpush1.msra.mxu0 0.0
      %2014 = vmatprep.subr.mxu0 0.0
      %2015 = vmatpush1.msra.mxu0 0.0
      %2016 = vmatprep.subr.mxu0 0.0
      %2017 = vmatpush1.msra.mxu0 0.0
      %2018 = vmatprep.subr.mxu0 0.0
      %2019 = vmatpush1.msra.mxu0 0.0
      %2020 = vmatprep.subr.mxu0 0.0
      %2021 = vmatpush1.msra.mxu0 0.0
      %2022 = vmatprep.subr.mxu0 0.0
      %2023 = vmatpush1.msra.mxu0 0.0
      %2024 = vmatprep.subr.mxu0 0.0
      %2025 = vmatpush1.msra.mxu0 0.0
      %2026 = vmatprep.subr.mxu0 0.0
      %2027 = vmatpush1.msra.mxu0 %v1841
      %2028 = vmatprep.subr.mxu0 0.0
      %2029 = vmatpush1.msra.mxu0 %v1840
      %2030 = vmatprep.subr.mxu0 0.0
      %2031 = vmatpush1.msra.mxu0 %v1839
      %2032 = vmatprep.subr.mxu0 0.0
      %2033 = vmatpush1.msra.mxu0 %v1838
      %2034 = vmatprep.subr.mxu0 0.0
      %2035 = vmatpush1.msra.mxu0 %v1837
      %2036 = vmatprep.subr.mxu0 0.0
      %2037 = vmatpush1.msra.mxu0 %v1836
      %2038 = vmatprep.subr.mxu0 0.0
      %2039 = vmatpush1.msra.mxu0 %v1835
      %2040 = vmatprep.subr.mxu0 0.0
      %2041 = vmatpush1.msra.mxu0 %v1834
      %2042 = vmatprep.subr.mxu0 0.0
      %2043 = vmatpush2.msra.mxu0 0.0
      %2044 = vmatprep.subr.mxu0 0.0
      %2045 = vmatpush2.msra.mxu0 0.0
      %2046 = vmatprep.subr.mxu0 0.0
      %2047 = vmatpush2.msra.mxu0 0.0
      %2048 = vmatprep.subr.mxu0 0.0
      %2049 = vmatpush2.msra.mxu0 0.0
      %2050 = vmatprep.subr.mxu0 0.0
      %2051 = vmatpush2.msra.mxu0 0.0
      %2052 = vmatprep.subr.mxu0 0.0
      %2053 = vmatpush2.msra.mxu0 0.0
      %2054 = vmatprep.subr.mxu0 0.0
      %2055 = vmatpush2.msra.mxu0 0.0
      %2056 = vmatprep.subr.mxu0 0.0
      %2057 = vmatpush2.msra.mxu0 0.0
      %2058 = vmatprep.subr.mxu0 0.0
      %2059 = vmatpush2.msra.mxu0 0.0
      %2060 = vmatprep.subr.mxu0 0.0
      %2061 = vmatpush2.msra.mxu0 0.0
      %2062 = vmatprep.subr.mxu0 0.0
      %2063 = vmatpush2.msra.mxu0 0.0
      %2064 = vmatprep.subr.mxu0 0.0
      %2065 = vmatpush2.msra.mxu0 0.0
      %2066 = vmatprep.subr.mxu0 0.0
      %2067 = vmatpush2.msra.mxu0 0.0
      %2068 = vmatprep.subr.mxu0 0.0
      %2069 = vmatpush2.msra.mxu0 0.0
      %2070 = vmatprep.subr.mxu0 0.0
      %2071 = vmatpush2.msra.mxu0 0.0
      %2072 = vmatprep.subr.mxu0 0.0
      %2073 = vmatpush2.msra.mxu0 0.0
      %2074 = vmatprep.mubr.f32.mxu0 0.0
      %2075 = vmatmul.mubr.f32.gmra.mxu0 %v1843
      %v2076 = vpop.f32.mrf.mxu0
      %v2077 = vadd.f32 0.0, %v2076
      %v2078 = vpop.f32.mrf.mxu0
      %2079 = vmatprep.mubr.f32.mxu0 0.0
      %2080 = vmatmul.mubr.f32.gmra.mxu0 %v1846
      %v2081 = vpop.f32.mrf.mxu0
      %v2082 = vadd.f32 0.0, %v2081
      %v2083 = vpop.f32.mrf.mxu0
      %2084 = vmatprep.mubr.f32.mxu0 0.0
      %2085 = vmatmul.mubr.f32.gmra.mxu0 %v1849
      %v2086 = vpop.f32.mrf.mxu0
      %v2087 = vadd.f32 0.0, %v2086
      %v2088 = vpop.f32.mrf.mxu0
      %2089 = vmatprep.mubr.f32.mxu0 0.0
      %2090 = vmatmul.mubr.f32.gmra.mxu0 %v1852
      %v2091 = vpop.f32.mrf.mxu0
      %v2092 = vadd.f32 0.0, %v2091
      %v2093 = vpop.f32.mrf.mxu0
      %2094 = vmatprep.mubr.f32.mxu0 0.0
      %2095 = vmatmul.mubr.f32.gmra.mxu0 %v1855
      %v2096 = vpop.f32.mrf.mxu0
      %v2097 = vadd.f32 0.0, %v2096
      %v2098 = vpop.f32.mrf.mxu0
      %2099 = vmatprep.mubr.f32.mxu0 0.0
      %2100 = vmatmul.mubr.f32.gmra.mxu0 %v1858
      %v2101 = vpop.f32.mrf.mxu0
      %v2102 = vadd.f32 0.0, %v2101
      %v2103 = vpop.f32.mrf.mxu0
      %2104 = vmatprep.mubr.f32.mxu0 0.0
      %2105 = vmatmul.mubr.f32.gmra.mxu0 %v1861
      %v2106 = vpop.f32.mrf.mxu0
      %v2107 = vadd.f32 0.0, %v2106
      %v2108 = vpop.f32.mrf.mxu0
      %2109 = vmatprep.mubr.f32.mxu0 0.0
      %2110 = vmatmul.mubr.f32.gmra.mxu0 %v1864
      %v2111 = vpop.f32.mrf.mxu0
      %v2112 = vadd.f32 0.0, %v2111
      %v2113 = vpop.f32.mrf.mxu0
      %2114 = vmatprep.mubr.f32.mxu0 0.0
      %2115 = vmatmul.mubr.f32.gmra.mxu0 %v1867
      %v2116 = vpop.f32.mrf.mxu0
      %v2117 = vadd.f32 0.0, %v2116
      %v2118 = vpop.f32.mrf.mxu0
      %2119 = vmatprep.mubr.f32.mxu0 0.0
      %2120 = vmatmul.mubr.f32.gmra.mxu0 %v1870
      %v2121 = vpop.f32.mrf.mxu0
      %v2122 = vadd.f32 0.0, %v2121
      %v2123 = vpop.f32.mrf.mxu0
      %2124 = vmatprep.mubr.f32.mxu0 0.0
      %2125 = vmatmul.mubr.f32.gmra.mxu0 %v1873
      %v2126 = vpop.f32.mrf.mxu0
      %v2127 = vadd.f32 0.0, %v2126
      %v2128 = vpop.f32.mrf.mxu0
      %2129 = vmatprep.mubr.f32.mxu0 0.0
      %2130 = vmatmul.mubr.f32.gmra.mxu0 %v1876
      %v2131 = vpop.f32.mrf.mxu0
      %v2132 = vadd.f32 0.0, %v2131
      %v2133 = vpop.f32.mrf.mxu0
      %2134 = vmatprep.mubr.f32.mxu0 0.0
      %2135 = vmatmul.mubr.f32.gmra.mxu0 %v1879
      %v2136 = vpop.f32.mrf.mxu0
      %v2137 = vadd.f32 0.0, %v2136
      %v2138 = vpop.f32.mrf.mxu0
      %2139 = vmatprep.mubr.f32.mxu0 0.0
      %2140 = vmatmul.mubr.f32.gmra.mxu0 %v1882
      %v2141 = vpop.f32.mrf.mxu0
      %v2142 = vadd.f32 0.0, %v2141
      %v2143 = vpop.f32.mrf.mxu0
      %2144 = vmatprep.mubr.f32.mxu0 0.0
      %2145 = vmatmul.mubr.f32.gmra.mxu0 %v1885
      %v2146 = vpop.f32.mrf.mxu0
      %v2147 = vadd.f32 0.0, %v2146
      %v2148 = vpop.f32.mrf.mxu0
      %2149 = vmatprep.mubr.f32.mxu0 0.0
      %2150 = vmatmul.mubr.f32.gmra.mxu0 %v1888
      %v2151 = vpop.f32.mrf.mxu0
      %v2152 = vadd.f32 0.0, %v2151
      %v2153 = vpop.f32.mrf.mxu0
      %2154 = vmatprep.mubr.f32.mxu0 0.0
      %2155 = vmatmul.mubr.f32.gmra.mxu0 %v1891
      %v2156 = vpop.f32.mrf.mxu0
      %v2157 = vadd.f32 0.0, %v2156
      %v2158 = vpop.f32.mrf.mxu0
      %2159 = vmatprep.mubr.f32.mxu0 0.0
      %2160 = vmatmul.mubr.f32.gmra.mxu0 %v1894
      %v2161 = vpop.f32.mrf.mxu0
      %v2162 = vadd.f32 0.0, %v2161
      %v2163 = vpop.f32.mrf.mxu0
      %2164 = vmatprep.mubr.f32.mxu0 0.0
      %2165 = vmatmul.mubr.f32.gmra.mxu0 %v1897
      %v2166 = vpop.f32.mrf.mxu0
      %v2167 = vadd.f32 0.0, %v2166
      %v2168 = vpop.f32.mrf.mxu0
      %2169 = vmatprep.mubr.f32.mxu0 0.0
      %2170 = vmatmul.mubr.f32.gmra.mxu0 %v1900
      %v2171 = vpop.f32.mrf.mxu0
      %v2172 = vadd.f32 0.0, %v2171
      %v2173 = vpop.f32.mrf.mxu0
      %2174 = vmatprep.mubr.f32.mxu0 0.0
      %2175 = vmatmul.mubr.f32.gmra.mxu0 %v1903
      %v2176 = vpop.f32.mrf.mxu0
      %v2177 = vadd.f32 0.0, %v2176
      %v2178 = vpop.f32.mrf.mxu0
      %2179 = vmatprep.mubr.f32.mxu0 0.0
      %2180 = vmatmul.mubr.f32.gmra.mxu0 %v1906
      %v2181 = vpop.f32.mrf.mxu0
      %v2182 = vadd.f32 0.0, %v2181
      %v2183 = vpop.f32.mrf.mxu0
      %2184 = vmatprep.mubr.f32.mxu0 0.0
      %2185 = vmatmul.mubr.f32.gmra.mxu0 %v1909
      %v2186 = vpop.f32.mrf.mxu0
      %v2187 = vadd.f32 0.0, %v2186
      %v2188 = vpop.f32.mrf.mxu0
      %2189 = vmatprep.mubr.f32.mxu0 0.0
      %2190 = vmatmul.mubr.f32.gmra.mxu0 %v1912
      %v2191 = vpop.f32.mrf.mxu0
      %v2192 = vadd.f32 0.0, %v2191
      %v2193 = vpop.f32.mrf.mxu0
      %2194 = vmatprep.mubr.f32.mxu0 0.0
      %2195 = vmatmul.mubr.f32.gmra.mxu0 %v1915
      %v2196 = vpop.f32.mrf.mxu0
      %v2197 = vadd.f32 0.0, %v2196
      %v2198 = vpop.f32.mrf.mxu0
      %2199 = vmatprep.mubr.f32.mxu0 0.0
      %2200 = vmatmul.mubr.f32.gmra.mxu0 %v1918
      %v2201 = vpop.f32.mrf.mxu0
      %v2202 = vadd.f32 0.0, %v2201
      %v2203 = vpop.f32.mrf.mxu0
      %2204 = vmatprep.mubr.f32.mxu0 0.0
      %2205 = vmatmul.mubr.f32.gmra.mxu0 %v1921
      %v2206 = vpop.f32.mrf.mxu0
      %v2207 = vadd.f32 0.0, %v2206
      %v2208 = vpop.f32.mrf.mxu0
      %2209 = vmatprep.mubr.f32.mxu0 0.0
      %2210 = vmatmul.mubr.f32.gmra.mxu0 %v1924
      %v2211 = vpop.f32.mrf.mxu0
      %v2212 = vadd.f32 0.0, %v2211
      %v2213 = vpop.f32.mrf.mxu0
      %2214 = vmatprep.mubr.f32.mxu0 0.0
      %2215 = vmatmul.mubr.f32.gmra.mxu0 %v1927
      %v2216 = vpop.f32.mrf.mxu0
      %v2217 = vadd.f32 0.0, %v2216
      %v2218 = vpop.f32.mrf.mxu0
      %2219 = vmatprep.mubr.f32.mxu0 0.0
      %2220 = vmatmul.mubr.f32.gmra.mxu0 %v1930
      %v2221 = vpop.f32.mrf.mxu0
      %v2222 = vadd.f32 0.0, %v2221
      %v2223 = vpop.f32.mrf.mxu0
      %2224 = vmatprep.mubr.f32.mxu0 0.0
      %2225 = vmatmul.mubr.f32.gmra.mxu0 %v1933
      %v2226 = vpop.f32.mrf.mxu0
      %v2227 = vadd.f32 0.0, %v2226
      %v2228 = vpop.f32.mrf.mxu0
      %2229 = vmatprep.mubr.f32.mxu0 0.0
      %2230 = vmatmul.mubr.f32.gmra.mxu0 %v1936
      %v2231 = vpop.f32.mrf.mxu0
      %v2232 = vadd.f32 0.0, %v2231
      %v2233 = vpop.f32.mrf.mxu0
      %2234 = vmatprep.mubr.f32.mxu0 0.0
      %2235 = vmatmul.mubr.f32.gmra.mxu0 %v1939
      %v2236 = vpop.f32.mrf.mxu0
      %v2237 = vadd.f32 0.0, %v2236
      %v2238 = vpop.f32.mrf.mxu0
      %2239 = vmatprep.mubr.f32.mxu0 0.0
      %2240 = vmatmul.mubr.f32.gmra.mxu0 %v1942
      %v2241 = vpop.f32.mrf.mxu0
      %v2242 = vadd.f32 0.0, %v2241
      %v2243 = vpop.f32.mrf.mxu0
      %2244 = vmatprep.mubr.f32.mxu0 0.0
      %2245 = vmatmul.mubr.f32.gmra.mxu0 %v1945
      %v2246 = vpop.f32.mrf.mxu0
      %v2247 = vadd.f32 0.0, %v2246
      %v2248 = vpop.f32.mrf.mxu0
      %2249 = vmatprep.mubr.f32.mxu0 0.0
      %2250 = vmatmul.mubr.f32.gmra.mxu0 %v1948
      %v2251 = vpop.f32.mrf.mxu0
      %v2252 = vadd.f32 0.0, %v2251
      %v2253 = vpop.f32.mrf.mxu0
      %2254 = vmatprep.mubr.f32.mxu0 0.0
      %2255 = vmatmul.mubr.f32.gmra.mxu0 %v1951
      %v2256 = vpop.f32.mrf.mxu0
      %v2257 = vadd.f32 0.0, %v2256
      %v2258 = vpop.f32.mrf.mxu0
      %2259 = vmatprep.mubr.f32.mxu0 0.0
      %2260 = vmatmul.mubr.f32.gmra.mxu0 %v1954
      %v2261 = vpop.f32.mrf.mxu0
      %v2262 = vadd.f32 0.0, %v2261
      %v2263 = vpop.f32.mrf.mxu0
      %2264 = vmatprep.mubr.f32.mxu0 0.0
      %2265 = vmatmul.mubr.f32.gmra.mxu0 %v1957
      %v2266 = vpop.f32.mrf.mxu0
      %v2267 = vadd.f32 0.0, %v2266
      %v2268 = vpop.f32.mrf.mxu0
      %2269 = vmatprep.mubr.f32.mxu0 0.0
      %2270 = vmatmul.mubr.f32.gmra.mxu0 %v1960
      %v2271 = vpop.f32.mrf.mxu0
      %v2272 = vadd.f32 0.0, %v2271
      %v2273 = vpop.f32.mrf.mxu0
      %2274 = vmatprep.mubr.f32.mxu0 0.0
      %2275 = vmatmul.mubr.f32.gmra.mxu0 %v1963
      %v2276 = vpop.f32.mrf.mxu0
      %v2277 = vadd.f32 0.0, %v2276
      %v2278 = vpop.f32.mrf.mxu0
      %2279 = vmatprep.mubr.f32.mxu0 0.0
      %2280 = vmatmul.mubr.f32.gmra.mxu0 %v1966
      %v2281 = vpop.f32.mrf.mxu0
      %v2282 = vadd.f32 0.0, %v2281
      %v2283 = vpop.f32.mrf.mxu0
      %2284 = vmatprep.mubr.f32.mxu0 0.0
      %2285 = vmatmul.mubr.f32.gmra.mxu0 %v1969
      %v2286 = vpop.f32.mrf.mxu0
      %v2287 = vadd.f32 0.0, %v2286
      %v2288 = vpop.f32.mrf.mxu0
      %2289 = vmatprep.mubr.f32.mxu0 0.0
      %2290 = vmatmul.mubr.f32.gmra.mxu0 %v1972
      %v2291 = vpop.f32.mrf.mxu0
      %v2292 = vadd.f32 0.0, %v2291
      %v2293 = vpop.f32.mrf.mxu0
      %2294 = vmatprep.mubr.f32.mxu0 0.0
      %2295 = vmatmul.mubr.f32.gmra.mxu0 %v1975
      %v2296 = vpop.f32.mrf.mxu0
      %v2297 = vadd.f32 0.0, %v2296
      %v2298 = vpop.f32.mrf.mxu0
      %2299 = vmatprep.mubr.f32.mxu0 0.0
      %2300 = vmatmul.mubr.f32.gmra.mxu0 %v1978
      %v2301 = vpop.f32.mrf.mxu0
      %v2302 = vadd.f32 0.0, %v2301
      %v2303 = vpop.f32.mrf.mxu0
      %2304 = vmatprep.mubr.f32.mxu0 0.0
      %2305 = vmatmul.mubr.f32.gmra.mxu0 %v1981
      %v2306 = vpop.f32.mrf.mxu0
      %v2307 = vadd.f32 0.0, %v2306
      %v2308 = vpop.f32.mrf.mxu0
      %2309 = vmatprep.mubr.f32.mxu0 0.0
      %2310 = vmatmul.mubr.f32.gmra.mxu0 %v1984
      %v2311 = vpop.f32.mrf.mxu0
      %v2312 = vadd.f32 0.0, %v2311
      %v2313 = vpop.f32.mrf.mxu0
      %2314 = vmatprep.mubr.f32.mxu0 0.0
      %2315 = vmatmul.mubr.f32.gmra.mxu0 %v1987
      %v2316 = vpop.f32.mrf.mxu0
      %v2317 = vadd.f32 0.0, %v2316
      %v2318 = vpop.f32.mrf.mxu0
      %2319 = vmatprep.mubr.f32.mxu0 0.0
      %2320 = vmatmul.mubr.f32.gmra.mxu0 %v1990
      %v2321 = vpop.f32.mrf.mxu0
      %v2322 = vadd.f32 0.0, %v2321
      %v2323 = vpop.f32.mrf.mxu0
      %2324 = vmatprep.mubr.f32.mxu0 0.0
      %2325 = vmatmul.mubr.f32.gmra.mxu0 %v1993
      %v2326 = vpop.f32.mrf.mxu0
      %v2327 = vadd.f32 0.0, %v2326
      %v2328 = vpop.f32.mrf.mxu0
      %2329 = vmatprep.mubr.f32.mxu0 0.0
      %2330 = vmatmul.mubr.f32.gmra.mxu0 %v1996
      %v2331 = vpop.f32.mrf.mxu0
      %v2332 = vadd.f32 0.0, %v2331
      %v2333 = vpop.f32.mrf.mxu0
      %2334 = vmatprep.mubr.f32.mxu0 0.0
      %2335 = vmatmul.mubr.f32.gmra.mxu0 %v1999
      %v2336 = vpop.f32.mrf.mxu0
      %v2337 = vadd.f32 0.0, %v2336
      %v2338 = vpop.f32.mrf.mxu0
      %2339 = vmatprep.mubr.f32.mxu0 0.0
      %2340 = vmatmul.mubr.f32.gmra.mxu0 %v2002
      %v2341 = vpop.f32.mrf.mxu0
      %v2342 = vadd.f32 0.0, %v2341
      %v2343 = vpop.f32.mrf.mxu0
      %2344 = vmatprep.mubr.f32.mxu0 0.0
      %2345 = vmatmul.mubr.f32.gmra.mxu0 %v2005
      %v2346 = vpop.f32.mrf.mxu0
      %v2347 = vadd.f32 0.0, %v2346
      %v2348 = vpop.f32.mrf.mxu0
      %2349 = vmatprep.mubr.f32.mxu0 0.0
      %2350 = vmatmul.mubr.f32.gmra.mxu0 %v2008
      %v2351 = vpop.f32.mrf.mxu0
      %v2352 = vadd.f32 0.0, %v2351
      %v2353 = vpop.f32.mrf.mxu0
      %2354 = vdwg.mxu0
      %v2355 = vadd.f32 %v1721, %v2077
      %v2356 = vadd.f32 %v1722, %v2082
      %v2357 = vadd.f32 %v1723, %v2087
      %v2358 = vadd.f32 %v1724, %v2092
      %v2359 = vadd.f32 %v1725, %v2097
      %v2360 = vadd.f32 %v1726, %v2102
      %v2361 = vadd.f32 %v1727, %v2107
      %v2362 = vadd.f32 %v1728, %v2112
      %v2363 = vadd.f32 %v1729, %v2117
      %v2364 = vadd.f32 %v1730, %v2122
      %v2365 = vadd.f32 %v1731, %v2127
      %v2366 = vadd.f32 %v1732, %v2132
      %v2367 = vadd.f32 %v1733, %v2137
      %v2368 = vadd.f32 %v1734, %v2142
      %v2369 = vadd.f32 %v1735, %v2147
      %v2370 = vadd.f32 %v1736, %v2152
      %v2371 = vadd.f32 %v1737, %v2157
      %v2372 = vadd.f32 %v1738, %v2162
      %v2373 = vadd.f32 %v1739, %v2167
      %v2374 = vadd.f32 %v1740, %v2172
      %v2375 = vadd.f32 %v1741, %v2177
      %v2376 = vadd.f32 %v1742, %v2182
      %v2377 = vadd.f32 %v1743, %v2187
      %v2378 = vadd.f32 %v1744, %v2192
      %v2379 = vadd.f32 %v1745, %v2197
      %v2380 = vadd.f32 %v1746, %v2202
      %v2381 = vadd.f32 %v1747, %v2207
      %v2382 = vadd.f32 %v1748, %v2212
      %v2383 = vadd.f32 %v1749, %v2217
      %v2384 = vadd.f32 %v1750, %v2222
      %v2385 = vadd.f32 %v1751, %v2227
      %v2386 = vadd.f32 %v1752, %v2232
      %v2387 = vadd.f32 %v1753, %v2237
      %v2388 = vadd.f32 %v1754, %v2242
      %v2389 = vadd.f32 %v1755, %v2247
      %v2390 = vadd.f32 %v1756, %v2252
      %v2391 = vadd.f32 %v1757, %v2257
      %v2392 = vadd.f32 %v1758, %v2262
      %v2393 = vadd.f32 %v1759, %v2267
      %v2394 = vadd.f32 %v1760, %v2272
      %v2395 = vadd.f32 %v1761, %v2277
      %v2396 = vadd.f32 %v1762, %v2282
      %v2397 = vadd.f32 %v1763, %v2287
      %v2398 = vadd.f32 %v1764, %v2292
      %v2399 = vadd.f32 %v1765, %v2297
      %v2400 = vadd.f32 %v1766, %v2302
      %v2401 = vadd.f32 %v1767, %v2307
      %v2402 = vadd.f32 %v1768, %v2312
      %v2403 = vadd.f32 %v1769, %v2317
      %v2404 = vadd.f32 %v1770, %v2322
      %v2405 = vadd.f32 %v1771, %v2327
      %v2406 = vadd.f32 %v1772, %v2332
      %v2407 = vadd.f32 %v1773, %v2337
      %v2408 = vadd.f32 %v1774, %v2342
      %v2409 = vadd.f32 %v1775, %v2347
      %v2410 = vadd.f32 %v1776, %v2352
      %2411 = vst.msk [vmem:[%s170] sm:$0xff] %vm171, %v2355
      %2412 = vst.msk [vmem:[%s170 + $0x8] sm:$0xff] %vm171, %v2356
      %2413 = vst.msk [vmem:[%s170 + $0x10] sm:$0xff] %vm171, %v2357
      %2414 = vst.msk [vmem:[%s170 + $0x18] sm:$0xff] %vm171, %v2358
      %2415 = vst.msk [vmem:[%s170 + $0x20] sm:$0xff] %vm171, %v2359
      %2416 = vst.msk [vmem:[%s170 + $0x28] sm:$0xff] %vm171, %v2360
      %2417 = vst.msk [vmem:[%s170 + $0x30] sm:$0xff] %vm171, %v2361
      %2418 = vst.msk [vmem:[%s170 + $0x38] sm:$0xff] %vm171, %v2362
      %2419 = vst.msk [vmem:[%s170 + $0x40] sm:$0xff] %vm171, %v2363
      %2420 = vst.msk [vmem:[%s170 + $0x48] sm:$0xff] %vm171, %v2364
      %2421 = vst.msk [vmem:[%s170 + $0x50] sm:$0xff] %vm171, %v2365
      %2422 = vst.msk [vmem:[%s170 + $0x58] sm:$0xff] %vm171, %v2366
      %2423 = vst.msk [vmem:[%s170 + $0x60] sm:$0xff] %vm171, %v2367
      %2424 = vst.msk [vmem:[%s170 + $0x68] sm:$0xff] %vm171, %v2368
      %2425 = vst.msk [vmem:[%s170 + $0x70] sm:$0xff] %vm171, %v2369
      %2426 = vst.msk [vmem:[%s170 + $0x78] sm:$0xff] %vm171, %v2370
      %2427 = vst.msk [vmem:[%s170 + $0x80] sm:$0xff] %vm171, %v2371
      %2428 = vst.msk [vmem:[%s170 + $0x88] sm:$0xff] %vm171, %v2372
      %2429 = vst.msk [vmem:[%s170 + $0x90] sm:$0xff] %vm171, %v2373
      %2430 = vst.msk [vmem:[%s170 + $0x98] sm:$0xff] %vm171, %v2374
      %2431 = vst.msk [vmem:[%s170 + $0xa0] sm:$0xff] %vm171, %v2375
      %2432 = vst.msk [vmem:[%s170 + $0xa8] sm:$0xff] %vm171, %v2376
      %2433 = vst.msk [vmem:[%s170 + $0xb0] sm:$0xff] %vm171, %v2377
      %2434 = vst.msk [vmem:[%s170 + $0xb8] sm:$0xff] %vm171, %v2378
      %2435 = vst.msk [vmem:[%s170 + $0xc0] sm:$0xff] %vm171, %v2379
      %2436 = vst.msk [vmem:[%s170 + $0xc8] sm:$0xff] %vm171, %v2380
      %2437 = vst.msk [vmem:[%s170 + $0xd0] sm:$0xff] %vm171, %v2381
      %2438 = vst.msk [vmem:[%s170 + $0xd8] sm:$0xff] %vm171, %v2382
      %2439 = vst.msk [vmem:[%s170 + $0xe0] sm:$0xff] %vm171, %v2383
      %2440 = vst.msk [vmem:[%s170 + $0xe8] sm:$0xff] %vm171, %v2384
      %2441 = vst.msk [vmem:[%s170 + $0xf0] sm:$0xff] %vm171, %v2385
      %2442 = vst.msk [vmem:[%s170 + $0xf8] sm:$0xff] %vm171, %v2386
      %2443 = vst.msk [vmem:[%s170 + $0x100] sm:$0xff] %vm171, %v2387
      %2444 = vst.msk [vmem:[%s170 + $0x108] sm:$0xff] %vm171, %v2388
      %2445 = vst.msk [vmem:[%s170 + $0x110] sm:$0xff] %vm171, %v2389
      %2446 = vst.msk [vmem:[%s170 + $0x118] sm:$0xff] %vm171, %v2390
      %2447 = vst.msk [vmem:[%s170 + $0x120] sm:$0xff] %vm171, %v2391
      %2448 = vst.msk [vmem:[%s170 + $0x128] sm:$0xff] %vm171, %v2392
      %2449 = vst.msk [vmem:[%s170 + $0x130] sm:$0xff] %vm171, %v2393
      %2450 = vst.msk [vmem:[%s170 + $0x138] sm:$0xff] %vm171, %v2394
      %2451 = vst.msk [vmem:[%s170 + $0x140] sm:$0xff] %vm171, %v2395
      %2452 = vst.msk [vmem:[%s170 + $0x148] sm:$0xff] %vm171, %v2396
      %2453 = vst.msk [vmem:[%s170 + $0x150] sm:$0xff] %vm171, %v2397
      %2454 = vst.msk [vmem:[%s170 + $0x158] sm:$0xff] %vm171, %v2398
      %2455 = vst.msk [vmem:[%s170 + $0x160] sm:$0xff] %vm171, %v2399
      %2456 = vst.msk [vmem:[%s170 + $0x168] sm:$0xff] %vm171, %v2400
      %2457 = vst.msk [vmem:[%s170 + $0x170] sm:$0xff] %vm171, %v2401
      %2458 = vst.msk [vmem:[%s170 + $0x178] sm:$0xff] %vm171, %v2402
      %2459 = vst.msk [vmem:[%s170 + $0x180] sm:$0xff] %vm171, %v2403
      %2460 = vst.msk [vmem:[%s170 + $0x188] sm:$0xff] %vm171, %v2404
      %2461 = vst.msk [vmem:[%s170 + $0x190] sm:$0xff] %vm171, %v2405
      %2462 = vst.msk [vmem:[%s170 + $0x198] sm:$0xff] %vm171, %v2406
      %2463 = vst.msk [vmem:[%s170 + $0x1a0] sm:$0xff] %vm171, %v2407
      %2464 = vst.msk [vmem:[%s170 + $0x1a8] sm:$0xff] %vm171, %v2408
      %2465 = vst.msk [vmem:[%s170 + $0x1b0] sm:$0xff] %vm171, %v2409
      %2466 = vst.msk [vmem:[%s170 + $0x1b8] sm:$0x1] %vm227, %v2410
      %v2467 = vld [vmem:[%s170] sm:$0xff]
      %v2468 = vld [vmem:[%s170 + $0x8] sm:$0xff]
      %v2469 = vld [vmem:[%s170 + $0x10] sm:$0xff]
      %v2470 = vld [vmem:[%s170 + $0x18] sm:$0xff]
      %v2471 = vld [vmem:[%s170 + $0x20] sm:$0xff]
      %v2472 = vld [vmem:[%s170 + $0x28] sm:$0xff]
      %v2473 = vld [vmem:[%s170 + $0x30] sm:$0xff]
      %v2474 = vld [vmem:[%s170 + $0x38] sm:$0xff]
      %v2475 = vld [vmem:[%s170 + $0x40] sm:$0xff]
      %v2476 = vld [vmem:[%s170 + $0x48] sm:$0xff]
      %v2477 = vld [vmem:[%s170 + $0x50] sm:$0xff]
      %v2478 = vld [vmem:[%s170 + $0x58] sm:$0xff]
      %v2479 = vld [vmem:[%s170 + $0x60] sm:$0xff]
      %v2480 = vld [vmem:[%s170 + $0x68] sm:$0xff]
      %v2481 = vld [vmem:[%s170 + $0x70] sm:$0xff]
      %v2482 = vld [vmem:[%s170 + $0x78] sm:$0xff]
      %v2483 = vld [vmem:[%s170 + $0x80] sm:$0xff]
      %v2484 = vld [vmem:[%s170 + $0x88] sm:$0xff]
      %v2485 = vld [vmem:[%s170 + $0x90] sm:$0xff]
      %v2486 = vld [vmem:[%s170 + $0x98] sm:$0xff]
      %v2487 = vld [vmem:[%s170 + $0xa0] sm:$0xff]
      %v2488 = vld [vmem:[%s170 + $0xa8] sm:$0xff]
      %v2489 = vld [vmem:[%s170 + $0xb0] sm:$0xff]
      %v2490 = vld [vmem:[%s170 + $0xb8] sm:$0xff]
      %v2491 = vld [vmem:[%s170 + $0xc0] sm:$0xff]
      %v2492 = vld [vmem:[%s170 + $0xc8] sm:$0xff]
      %v2493 = vld [vmem:[%s170 + $0xd0] sm:$0xff]
      %v2494 = vld [vmem:[%s170 + $0xd8] sm:$0xff]
      %v2495 = vld [vmem:[%s170 + $0xe0] sm:$0xff]
      %v2496 = vld [vmem:[%s170 + $0xe8] sm:$0xff]
      %v2497 = vld [vmem:[%s170 + $0xf0] sm:$0xff]
      %v2498 = vld [vmem:[%s170 + $0xf8] sm:$0xff]
      %v2499 = vld [vmem:[%s170 + $0x100] sm:$0xff]
      %v2500 = vld [vmem:[%s170 + $0x108] sm:$0xff]
      %v2501 = vld [vmem:[%s170 + $0x110] sm:$0xff]
      %v2502 = vld [vmem:[%s170 + $0x118] sm:$0xff]
      %v2503 = vld [vmem:[%s170 + $0x120] sm:$0xff]
      %v2504 = vld [vmem:[%s170 + $0x128] sm:$0xff]
      %v2505 = vld [vmem:[%s170 + $0x130] sm:$0xff]
      %v2506 = vld [vmem:[%s170 + $0x138] sm:$0xff]
      %v2507 = vld [vmem:[%s170 + $0x140] sm:$0xff]
      %v2508 = vld [vmem:[%s170 + $0x148] sm:$0xff]
      %v2509 = vld [vmem:[%s170 + $0x150] sm:$0xff]
      %v2510 = vld [vmem:[%s170 + $0x158] sm:$0xff]
      %v2511 = vld [vmem:[%s170 + $0x160] sm:$0xff]
      %v2512 = vld [vmem:[%s170 + $0x168] sm:$0xff]
      %v2513 = vld [vmem:[%s170 + $0x170] sm:$0xff]
      %v2514 = vld [vmem:[%s170 + $0x178] sm:$0xff]
      %v2515 = vld [vmem:[%s170 + $0x180] sm:$0xff]
      %v2516 = vld [vmem:[%s170 + $0x188] sm:$0xff]
      %v2517 = vld [vmem:[%s170 + $0x190] sm:$0xff]
      %v2518 = vld [vmem:[%s170 + $0x198] sm:$0xff]
      %v2519 = vld [vmem:[%s170 + $0x1a0] sm:$0xff]
      %v2520 = vld [vmem:[%s170 + $0x1a8] sm:$0xff]
      %v2521 = vld [vmem:[%s170 + $0x1b0] sm:$0xff]
      %v2522 = vld [vmem:[%s170 + $0x1b8] sm:$0x1]
      %v2523 = vld [vmem:[%s165 + $0x16] sm:$0xff]
      %v2524 = vld [vmem:[%s165 + $0x1e] sm:$0xff]
      %v2525 = vld [vmem:[%s165 + $0x26] sm:$0xff]
      %v2526 = vld [vmem:[%s165 + $0x2e] sm:$0xff]
      %v2527 = vld [vmem:[%s165 + $0x36] sm:$0xff]
      %v2528 = vld [vmem:[%s165 + $0x3e] sm:$0xff]
      %v2529 = vld [vmem:[%s165 + $0x46] sm:$0xff]
      %v2530 = vld [vmem:[%s165 + $0x4e] sm:$0xff]
      %v2531 = vld [vmem:[%s165 + $0x56] sm:$0xff]
      %v2532 = vld [vmem:[%s165 + $0x5e] sm:$0xff]
      %v2533 = vld [vmem:[%s165 + $0x66] sm:$0xff]
      %v2534 = vld [vmem:[%s165 + $0x6e] sm:$0xff]
      %v2535 = vld [vmem:[%s165 + $0x76] sm:$0xff]
      %v2536 = vld [vmem:[%s165 + $0x7e] sm:$0xff]
      %v2537 = vld [vmem:[%s165 + $0x86] sm:$0xff]
      %v2538 = vld [vmem:[%s165 + $0x8e] sm:$0xff]
      %v2539 = vld [vmem:[%s165 + $0x96] sm:$0xff]
      %v2540 = vld [vmem:[%s165 + $0x9e] sm:$0xff]
      %v2541 = vld [vmem:[%s165 + $0xa6] sm:$0xff]
      %v2542 = vld [vmem:[%s165 + $0xae] sm:$0xff]
      %v2543 = vld [vmem:[%s165 + $0xb6] sm:$0xff]
      %v2544 = vld [vmem:[%s165 + $0xbe] sm:$0xff]
      %v2545 = vld [vmem:[%s165 + $0xc6] sm:$0xff]
      %v2546 = vld [vmem:[%s165 + $0xce] sm:$0xff]
      %v2547 = vld [vmem:[%s165 + $0xd6] sm:$0xff]
      %v2548 = vld [vmem:[%s165 + $0xde] sm:$0xff]
      %v2549 = vld [vmem:[%s165 + $0xe6] sm:$0xff]
      %v2550 = vld [vmem:[%s165 + $0xee] sm:$0xff]
      %v2551 = vld [vmem:[%s165 + $0xf6] sm:$0xff]
      %v2552 = vld [vmem:[%s165 + $0xfe] sm:$0xff]
      %v2553 = vld [vmem:[%s165 + $0x106] sm:$0xff]
      %v2554 = vld [vmem:[%s165 + $0x10e] sm:$0xff]
      %v2555 = vld [vmem:[%s165 + $0x116] sm:$0xff]
      %v2556 = vld [vmem:[%s165 + $0x11e] sm:$0xff]
      %v2557 = vld [vmem:[%s165 + $0x126] sm:$0xff]
      %v2558 = vld [vmem:[%s165 + $0x12e] sm:$0xff]
      %v2559 = vld [vmem:[%s165 + $0x136] sm:$0xff]
      %v2560 = vld [vmem:[%s165 + $0x13e] sm:$0xff]
      %v2561 = vld [vmem:[%s165 + $0x146] sm:$0xff]
      %v2562 = vld [vmem:[%s165 + $0x14e] sm:$0xff]
      %v2563 = vld [vmem:[%s165 + $0x156] sm:$0xff]
      %v2564 = vld [vmem:[%s165 + $0x15e] sm:$0xff]
      %v2565 = vld [vmem:[%s165 + $0x166] sm:$0xff]
      %v2566 = vld [vmem:[%s165 + $0x16e] sm:$0xff]
      %v2567 = vld [vmem:[%s165 + $0x176] sm:$0xff]
      %v2568 = vld [vmem:[%s165 + $0x17e] sm:$0xff]
      %v2569 = vld [vmem:[%s165 + $0x186] sm:$0xff]
      %v2570 = vld [vmem:[%s165 + $0x18e] sm:$0xff]
      %v2571 = vld [vmem:[%s165 + $0x196] sm:$0xff]
      %v2572 = vld [vmem:[%s165 + $0x19e] sm:$0xff]
      %v2573 = vld [vmem:[%s165 + $0x1a6] sm:$0xff]
      %v2574 = vld [vmem:[%s165 + $0x1ae] sm:$0xff]
      %v2575 = vld [vmem:[%s165 + $0x1b6] sm:$0xff]
      %v2576 = vld [vmem:[%s165 + $0x1be] sm:$0xff]
      %v2577 = vld [vmem:[%s165 + $0x1c6] sm:$0xff]
      %v2578 = vld [vmem:[%s165 + $0x1ce] sm:$0x1]
      %s2579 = scalar_lea.vmem %s1, 192
      %v2580 = vld [vmem:[%s2579] sm:$0xff]
      %v2581 = vld [vmem:[%s2579 + $0x8] sm:$0xff]
      %v2582 = vld [vmem:[%s2579 + $0x10] sm:$0xff]
      %v2583 = vld [vmem:[%s2579 + $0x18] sm:$0xff]
      %v2584 = vld [vmem:[%s2579 + $0x20] sm:$0xff]
      %v2585 = vld [vmem:[%s2579 + $0x28] sm:$0xff]
      %v2586 = vld [vmem:[%s2579 + $0x30] sm:$0xff]
      %v2587 = vld [vmem:[%s2579 + $0x38] sm:$0xff]
      %v2589 = vsel %vm349, %v2523, 0
      %v2592 = vsel %vm349, %v2524, 0
      %v2595 = vsel %vm349, %v2525, 0
      %v2598 = vsel %vm349, %v2526, 0
      %v2601 = vsel %vm349, %v2527, 0
      %v2604 = vsel %vm349, %v2528, 0
      %v2607 = vsel %vm349, %v2529, 0
      %v2610 = vsel %vm349, %v2530, 0
      %v2613 = vsel %vm349, %v2531, 0
      %v2616 = vsel %vm349, %v2532, 0
      %v2619 = vsel %vm349, %v2533, 0
      %v2622 = vsel %vm349, %v2534, 0
      %v2625 = vsel %vm349, %v2535, 0
      %v2628 = vsel %vm349, %v2536, 0
      %v2631 = vsel %vm349, %v2537, 0
      %v2634 = vsel %vm349, %v2538, 0
      %v2637 = vsel %vm349, %v2539, 0
      %v2640 = vsel %vm349, %v2540, 0
      %v2643 = vsel %vm349, %v2541, 0
      %v2646 = vsel %vm349, %v2542, 0
      %v2649 = vsel %vm349, %v2543, 0
      %v2652 = vsel %vm349, %v2544, 0
      %v2655 = vsel %vm349, %v2545, 0
      %v2658 = vsel %vm349, %v2546, 0
      %v2661 = vsel %vm349, %v2547, 0
      %v2664 = vsel %vm349, %v2548, 0
      %v2667 = vsel %vm349, %v2549, 0
      %v2670 = vsel %vm349, %v2550, 0
      %v2673 = vsel %vm349, %v2551, 0
      %v2676 = vsel %vm349, %v2552, 0
      %v2679 = vsel %vm349, %v2553, 0
      %v2682 = vsel %vm349, %v2554, 0
      %v2685 = vsel %vm349, %v2555, 0
      %v2688 = vsel %vm349, %v2556, 0
      %v2691 = vsel %vm349, %v2557, 0
      %v2694 = vsel %vm349, %v2558, 0
      %v2697 = vsel %vm349, %v2559, 0
      %v2700 = vsel %vm349, %v2560, 0
      %v2703 = vsel %vm349, %v2561, 0
      %v2706 = vsel %vm349, %v2562, 0
      %v2709 = vsel %vm349, %v2563, 0
      %v2712 = vsel %vm349, %v2564, 0
      %v2715 = vsel %vm349, %v2565, 0
      %v2718 = vsel %vm349, %v2566, 0
      %v2721 = vsel %vm349, %v2567, 0
      %v2724 = vsel %vm349, %v2568, 0
      %v2727 = vsel %vm349, %v2569, 0
      %v2730 = vsel %vm349, %v2570, 0
      %v2733 = vsel %vm349, %v2571, 0
      %v2736 = vsel %vm349, %v2572, 0
      %v2739 = vsel %vm349, %v2573, 0
      %v2742 = vsel %vm349, %v2574, 0
      %v2745 = vsel %vm349, %v2575, 0
      %v2748 = vsel %vm349, %v2576, 0
      %v2751 = vsel %vm349, %v2577, 0
      %v2754 = vsel %vm349, %v2578, 0
      %2756 = vmatprep.subr.mxu0 0.0
      %2757 = vmatpush1.msra.mxu0 0.0
      %2758 = vmatprep.subr.mxu0 0.0
      %2759 = vmatpush1.msra.mxu0 0.0
      %2760 = vmatprep.subr.mxu0 0.0
      %2761 = vmatpush1.msra.mxu0 0.0
      %2762 = vmatprep.subr.mxu0 0.0
      %2763 = vmatpush1.msra.mxu0 0.0
      %2764 = vmatprep.subr.mxu0 0.0
      %2765 = vmatpush1.msra.mxu0 0.0
      %2766 = vmatprep.subr.mxu0 0.0
      %2767 = vmatpush1.msra.mxu0 0.0
      %2768 = vmatprep.subr.mxu0 0.0
      %2769 = vmatpush1.msra.mxu0 0.0
      %2770 = vmatprep.subr.mxu0 0.0
      %2771 = vmatpush1.msra.mxu0 0.0
      %2772 = vmatprep.subr.mxu0 0.0
      %2773 = vmatpush1.msra.mxu0 %v2587
      %2774 = vmatprep.subr.mxu0 0.0
      %2775 = vmatpush1.msra.mxu0 %v2586
      %2776 = vmatprep.subr.mxu0 0.0
      %2777 = vmatpush1.msra.mxu0 %v2585
      %2778 = vmatprep.subr.mxu0 0.0
      %2779 = vmatpush1.msra.mxu0 %v2584
      %2780 = vmatprep.subr.mxu0 0.0
      %2781 = vmatpush1.msra.mxu0 %v2583
      %2782 = vmatprep.subr.mxu0 0.0
      %2783 = vmatpush1.msra.mxu0 %v2582
      %2784 = vmatprep.subr.mxu0 0.0
      %2785 = vmatpush1.msra.mxu0 %v2581
      %2786 = vmatprep.subr.mxu0 0.0
      %2787 = vmatpush1.msra.mxu0 %v2580
      %2788 = vmatprep.subr.mxu0 0.0
      %2789 = vmatpush2.msra.mxu0 0.0
      %2790 = vmatprep.subr.mxu0 0.0
      %2791 = vmatpush2.msra.mxu0 0.0
      %2792 = vmatprep.subr.mxu0 0.0
      %2793 = vmatpush2.msra.mxu0 0.0
      %2794 = vmatprep.subr.mxu0 0.0
      %2795 = vmatpush2.msra.mxu0 0.0
      %2796 = vmatprep.subr.mxu0 0.0
      %2797 = vmatpush2.msra.mxu0 0.0
      %2798 = vmatprep.subr.mxu0 0.0
      %2799 = vmatpush2.msra.mxu0 0.0
      %2800 = vmatprep.subr.mxu0 0.0
      %2801 = vmatpush2.msra.mxu0 0.0
      %2802 = vmatprep.subr.mxu0 0.0
      %2803 = vmatpush2.msra.mxu0 0.0
      %2804 = vmatprep.subr.mxu0 0.0
      %2805 = vmatpush2.msra.mxu0 0.0
      %2806 = vmatprep.subr.mxu0 0.0
      %2807 = vmatpush2.msra.mxu0 0.0
      %2808 = vmatprep.subr.mxu0 0.0
      %2809 = vmatpush2.msra.mxu0 0.0
      %2810 = vmatprep.subr.mxu0 0.0
      %2811 = vmatpush2.msra.mxu0 0.0
      %2812 = vmatprep.subr.mxu0 0.0
      %2813 = vmatpush2.msra.mxu0 0.0
      %2814 = vmatprep.subr.mxu0 0.0
      %2815 = vmatpush2.msra.mxu0 0.0
      %2816 = vmatprep.subr.mxu0 0.0
      %2817 = vmatpush2.msra.mxu0 0.0
      %2818 = vmatprep.subr.mxu0 0.0
      %2819 = vmatpush2.msra.mxu0 0.0
      %2820 = vmatprep.mubr.f32.mxu0 0.0
      %2821 = vmatmul.mubr.f32.gmra.mxu0 %v2589
      %v2822 = vpop.f32.mrf.mxu0
      %v2823 = vadd.f32 0.0, %v2822
      %v2824 = vpop.f32.mrf.mxu0
      %2825 = vmatprep.mubr.f32.mxu0 0.0
      %2826 = vmatmul.mubr.f32.gmra.mxu0 %v2592
      %v2827 = vpop.f32.mrf.mxu0
      %v2828 = vadd.f32 0.0, %v2827
      %v2829 = vpop.f32.mrf.mxu0
      %2830 = vmatprep.mubr.f32.mxu0 0.0
      %2831 = vmatmul.mubr.f32.gmra.mxu0 %v2595
      %v2832 = vpop.f32.mrf.mxu0
      %v2833 = vadd.f32 0.0, %v2832
      %v2834 = vpop.f32.mrf.mxu0
      %2835 = vmatprep.mubr.f32.mxu0 0.0
      %2836 = vmatmul.mubr.f32.gmra.mxu0 %v2598
      %v2837 = vpop.f32.mrf.mxu0
      %v2838 = vadd.f32 0.0, %v2837
      %v2839 = vpop.f32.mrf.mxu0
      %2840 = vmatprep.mubr.f32.mxu0 0.0
      %2841 = vmatmul.mubr.f32.gmra.mxu0 %v2601
      %v2842 = vpop.f32.mrf.mxu0
      %v2843 = vadd.f32 0.0, %v2842
      %v2844 = vpop.f32.mrf.mxu0
      %2845 = vmatprep.mubr.f32.mxu0 0.0
      %2846 = vmatmul.mubr.f32.gmra.mxu0 %v2604
      %v2847 = vpop.f32.mrf.mxu0
      %v2848 = vadd.f32 0.0, %v2847
      %v2849 = vpop.f32.mrf.mxu0
      %2850 = vmatprep.mubr.f32.mxu0 0.0
      %2851 = vmatmul.mubr.f32.gmra.mxu0 %v2607
      %v2852 = vpop.f32.mrf.mxu0
      %v2853 = vadd.f32 0.0, %v2852
      %v2854 = vpop.f32.mrf.mxu0
      %2855 = vmatprep.mubr.f32.mxu0 0.0
      %2856 = vmatmul.mubr.f32.gmra.mxu0 %v2610
      %v2857 = vpop.f32.mrf.mxu0
      %v2858 = vadd.f32 0.0, %v2857
      %v2859 = vpop.f32.mrf.mxu0
      %2860 = vmatprep.mubr.f32.mxu0 0.0
      %2861 = vmatmul.mubr.f32.gmra.mxu0 %v2613
      %v2862 = vpop.f32.mrf.mxu0
      %v2863 = vadd.f32 0.0, %v2862
      %v2864 = vpop.f32.mrf.mxu0
      %2865 = vmatprep.mubr.f32.mxu0 0.0
      %2866 = vmatmul.mubr.f32.gmra.mxu0 %v2616
      %v2867 = vpop.f32.mrf.mxu0
      %v2868 = vadd.f32 0.0, %v2867
      %v2869 = vpop.f32.mrf.mxu0
      %2870 = vmatprep.mubr.f32.mxu0 0.0
      %2871 = vmatmul.mubr.f32.gmra.mxu0 %v2619
      %v2872 = vpop.f32.mrf.mxu0
      %v2873 = vadd.f32 0.0, %v2872
      %v2874 = vpop.f32.mrf.mxu0
      %2875 = vmatprep.mubr.f32.mxu0 0.0
      %2876 = vmatmul.mubr.f32.gmra.mxu0 %v2622
      %v2877 = vpop.f32.mrf.mxu0
      %v2878 = vadd.f32 0.0, %v2877
      %v2879 = vpop.f32.mrf.mxu0
      %2880 = vmatprep.mubr.f32.mxu0 0.0
      %2881 = vmatmul.mubr.f32.gmra.mxu0 %v2625
      %v2882 = vpop.f32.mrf.mxu0
      %v2883 = vadd.f32 0.0, %v2882
      %v2884 = vpop.f32.mrf.mxu0
      %2885 = vmatprep.mubr.f32.mxu0 0.0
      %2886 = vmatmul.mubr.f32.gmra.mxu0 %v2628
      %v2887 = vpop.f32.mrf.mxu0
      %v2888 = vadd.f32 0.0, %v2887
      %v2889 = vpop.f32.mrf.mxu0
      %2890 = vmatprep.mubr.f32.mxu0 0.0
      %2891 = vmatmul.mubr.f32.gmra.mxu0 %v2631
      %v2892 = vpop.f32.mrf.mxu0
      %v2893 = vadd.f32 0.0, %v2892
      %v2894 = vpop.f32.mrf.mxu0
      %2895 = vmatprep.mubr.f32.mxu0 0.0
      %2896 = vmatmul.mubr.f32.gmra.mxu0 %v2634
      %v2897 = vpop.f32.mrf.mxu0
      %v2898 = vadd.f32 0.0, %v2897
      %v2899 = vpop.f32.mrf.mxu0
      %2900 = vmatprep.mubr.f32.mxu0 0.0
      %2901 = vmatmul.mubr.f32.gmra.mxu0 %v2637
      %v2902 = vpop.f32.mrf.mxu0
      %v2903 = vadd.f32 0.0, %v2902
      %v2904 = vpop.f32.mrf.mxu0
      %2905 = vmatprep.mubr.f32.mxu0 0.0
      %2906 = vmatmul.mubr.f32.gmra.mxu0 %v2640
      %v2907 = vpop.f32.mrf.mxu0
      %v2908 = vadd.f32 0.0, %v2907
      %v2909 = vpop.f32.mrf.mxu0
      %2910 = vmatprep.mubr.f32.mxu0 0.0
      %2911 = vmatmul.mubr.f32.gmra.mxu0 %v2643
      %v2912 = vpop.f32.mrf.mxu0
      %v2913 = vadd.f32 0.0, %v2912
      %v2914 = vpop.f32.mrf.mxu0
      %2915 = vmatprep.mubr.f32.mxu0 0.0
      %2916 = vmatmul.mubr.f32.gmra.mxu0 %v2646
      %v2917 = vpop.f32.mrf.mxu0
      %v2918 = vadd.f32 0.0, %v2917
      %v2919 = vpop.f32.mrf.mxu0
      %2920 = vmatprep.mubr.f32.mxu0 0.0
      %2921 = vmatmul.mubr.f32.gmra.mxu0 %v2649
      %v2922 = vpop.f32.mrf.mxu0
      %v2923 = vadd.f32 0.0, %v2922
      %v2924 = vpop.f32.mrf.mxu0
      %2925 = vmatprep.mubr.f32.mxu0 0.0
      %2926 = vmatmul.mubr.f32.gmra.mxu0 %v2652
      %v2927 = vpop.f32.mrf.mxu0
      %v2928 = vadd.f32 0.0, %v2927
      %v2929 = vpop.f32.mrf.mxu0
      %2930 = vmatprep.mubr.f32.mxu0 0.0
      %2931 = vmatmul.mubr.f32.gmra.mxu0 %v2655
      %v2932 = vpop.f32.mrf.mxu0
      %v2933 = vadd.f32 0.0, %v2932
      %v2934 = vpop.f32.mrf.mxu0
      %2935 = vmatprep.mubr.f32.mxu0 0.0
      %2936 = vmatmul.mubr.f32.gmra.mxu0 %v2658
      %v2937 = vpop.f32.mrf.mxu0
      %v2938 = vadd.f32 0.0, %v2937
      %v2939 = vpop.f32.mrf.mxu0
      %2940 = vmatprep.mubr.f32.mxu0 0.0
      %2941 = vmatmul.mubr.f32.gmra.mxu0 %v2661
      %v2942 = vpop.f32.mrf.mxu0
      %v2943 = vadd.f32 0.0, %v2942
      %v2944 = vpop.f32.mrf.mxu0
      %2945 = vmatprep.mubr.f32.mxu0 0.0
      %2946 = vmatmul.mubr.f32.gmra.mxu0 %v2664
      %v2947 = vpop.f32.mrf.mxu0
      %v2948 = vadd.f32 0.0, %v2947
      %v2949 = vpop.f32.mrf.mxu0
      %2950 = vmatprep.mubr.f32.mxu0 0.0
      %2951 = vmatmul.mubr.f32.gmra.mxu0 %v2667
      %v2952 = vpop.f32.mrf.mxu0
      %v2953 = vadd.f32 0.0, %v2952
      %v2954 = vpop.f32.mrf.mxu0
      %2955 = vmatprep.mubr.f32.mxu0 0.0
      %2956 = vmatmul.mubr.f32.gmra.mxu0 %v2670
      %v2957 = vpop.f32.mrf.mxu0
      %v2958 = vadd.f32 0.0, %v2957
      %v2959 = vpop.f32.mrf.mxu0
      %2960 = vmatprep.mubr.f32.mxu0 0.0
      %2961 = vmatmul.mubr.f32.gmra.mxu0 %v2673
      %v2962 = vpop.f32.mrf.mxu0
      %v2963 = vadd.f32 0.0, %v2962
      %v2964 = vpop.f32.mrf.mxu0
      %2965 = vmatprep.mubr.f32.mxu0 0.0
      %2966 = vmatmul.mubr.f32.gmra.mxu0 %v2676
      %v2967 = vpop.f32.mrf.mxu0
      %v2968 = vadd.f32 0.0, %v2967
      %v2969 = vpop.f32.mrf.mxu0
      %2970 = vmatprep.mubr.f32.mxu0 0.0
      %2971 = vmatmul.mubr.f32.gmra.mxu0 %v2679
      %v2972 = vpop.f32.mrf.mxu0
      %v2973 = vadd.f32 0.0, %v2972
      %v2974 = vpop.f32.mrf.mxu0
      %2975 = vmatprep.mubr.f32.mxu0 0.0
      %2976 = vmatmul.mubr.f32.gmra.mxu0 %v2682
      %v2977 = vpop.f32.mrf.mxu0
      %v2978 = vadd.f32 0.0, %v2977
      %v2979 = vpop.f32.mrf.mxu0
      %2980 = vmatprep.mubr.f32.mxu0 0.0
      %2981 = vmatmul.mubr.f32.gmra.mxu0 %v2685
      %v2982 = vpop.f32.mrf.mxu0
      %v2983 = vadd.f32 0.0, %v2982
      %v2984 = vpop.f32.mrf.mxu0
      %2985 = vmatprep.mubr.f32.mxu0 0.0
      %2986 = vmatmul.mubr.f32.gmra.mxu0 %v2688
      %v2987 = vpop.f32.mrf.mxu0
      %v2988 = vadd.f32 0.0, %v2987
      %v2989 = vpop.f32.mrf.mxu0
      %2990 = vmatprep.mubr.f32.mxu0 0.0
      %2991 = vmatmul.mubr.f32.gmra.mxu0 %v2691
      %v2992 = vpop.f32.mrf.mxu0
      %v2993 = vadd.f32 0.0, %v2992
      %v2994 = vpop.f32.mrf.mxu0
      %2995 = vmatprep.mubr.f32.mxu0 0.0
      %2996 = vmatmul.mubr.f32.gmra.mxu0 %v2694
      %v2997 = vpop.f32.mrf.mxu0
      %v2998 = vadd.f32 0.0, %v2997
      %v2999 = vpop.f32.mrf.mxu0
      %3000 = vmatprep.mubr.f32.mxu0 0.0
      %3001 = vmatmul.mubr.f32.gmra.mxu0 %v2697
      %v3002 = vpop.f32.mrf.mxu0
      %v3003 = vadd.f32 0.0, %v3002
      %v3004 = vpop.f32.mrf.mxu0
      %3005 = vmatprep.mubr.f32.mxu0 0.0
      %3006 = vmatmul.mubr.f32.gmra.mxu0 %v2700
      %v3007 = vpop.f32.mrf.mxu0
      %v3008 = vadd.f32 0.0, %v3007
      %v3009 = vpop.f32.mrf.mxu0
      %3010 = vmatprep.mubr.f32.mxu0 0.0
      %3011 = vmatmul.mubr.f32.gmra.mxu0 %v2703
      %v3012 = vpop.f32.mrf.mxu0
      %v3013 = vadd.f32 0.0, %v3012
      %v3014 = vpop.f32.mrf.mxu0
      %3015 = vmatprep.mubr.f32.mxu0 0.0
      %3016 = vmatmul.mubr.f32.gmra.mxu0 %v2706
      %v3017 = vpop.f32.mrf.mxu0
      %v3018 = vadd.f32 0.0, %v3017
      %v3019 = vpop.f32.mrf.mxu0
      %3020 = vmatprep.mubr.f32.mxu0 0.0
      %3021 = vmatmul.mubr.f32.gmra.mxu0 %v2709
      %v3022 = vpop.f32.mrf.mxu0
      %v3023 = vadd.f32 0.0, %v3022
      %v3024 = vpop.f32.mrf.mxu0
      %3025 = vmatprep.mubr.f32.mxu0 0.0
      %3026 = vmatmul.mubr.f32.gmra.mxu0 %v2712
      %v3027 = vpop.f32.mrf.mxu0
      %v3028 = vadd.f32 0.0, %v3027
      %v3029 = vpop.f32.mrf.mxu0
      %3030 = vmatprep.mubr.f32.mxu0 0.0
      %3031 = vmatmul.mubr.f32.gmra.mxu0 %v2715
      %v3032 = vpop.f32.mrf.mxu0
      %v3033 = vadd.f32 0.0, %v3032
      %v3034 = vpop.f32.mrf.mxu0
      %3035 = vmatprep.mubr.f32.mxu0 0.0
      %3036 = vmatmul.mubr.f32.gmra.mxu0 %v2718
      %v3037 = vpop.f32.mrf.mxu0
      %v3038 = vadd.f32 0.0, %v3037
      %v3039 = vpop.f32.mrf.mxu0
      %3040 = vmatprep.mubr.f32.mxu0 0.0
      %3041 = vmatmul.mubr.f32.gmra.mxu0 %v2721
      %v3042 = vpop.f32.mrf.mxu0
      %v3043 = vadd.f32 0.0, %v3042
      %v3044 = vpop.f32.mrf.mxu0
      %3045 = vmatprep.mubr.f32.mxu0 0.0
      %3046 = vmatmul.mubr.f32.gmra.mxu0 %v2724
      %v3047 = vpop.f32.mrf.mxu0
      %v3048 = vadd.f32 0.0, %v3047
      %v3049 = vpop.f32.mrf.mxu0
      %3050 = vmatprep.mubr.f32.mxu0 0.0
      %3051 = vmatmul.mubr.f32.gmra.mxu0 %v2727
      %v3052 = vpop.f32.mrf.mxu0
      %v3053 = vadd.f32 0.0, %v3052
      %v3054 = vpop.f32.mrf.mxu0
      %3055 = vmatprep.mubr.f32.mxu0 0.0
      %3056 = vmatmul.mubr.f32.gmra.mxu0 %v2730
      %v3057 = vpop.f32.mrf.mxu0
      %v3058 = vadd.f32 0.0, %v3057
      %v3059 = vpop.f32.mrf.mxu0
      %3060 = vmatprep.mubr.f32.mxu0 0.0
      %3061 = vmatmul.mubr.f32.gmra.mxu0 %v2733
      %v3062 = vpop.f32.mrf.mxu0
      %v3063 = vadd.f32 0.0, %v3062
      %v3064 = vpop.f32.mrf.mxu0
      %3065 = vmatprep.mubr.f32.mxu0 0.0
      %3066 = vmatmul.mubr.f32.gmra.mxu0 %v2736
      %v3067 = vpop.f32.mrf.mxu0
      %v3068 = vadd.f32 0.0, %v3067
      %v3069 = vpop.f32.mrf.mxu0
      %3070 = vmatprep.mubr.f32.mxu0 0.0
      %3071 = vmatmul.mubr.f32.gmra.mxu0 %v2739
      %v3072 = vpop.f32.mrf.mxu0
      %v3073 = vadd.f32 0.0, %v3072
      %v3074 = vpop.f32.mrf.mxu0
      %3075 = vmatprep.mubr.f32.mxu0 0.0
      %3076 = vmatmul.mubr.f32.gmra.mxu0 %v2742
      %v3077 = vpop.f32.mrf.mxu0
      %v3078 = vadd.f32 0.0, %v3077
      %v3079 = vpop.f32.mrf.mxu0
      %3080 = vmatprep.mubr.f32.mxu0 0.0
      %3081 = vmatmul.mubr.f32.gmra.mxu0 %v2745
      %v3082 = vpop.f32.mrf.mxu0
      %v3083 = vadd.f32 0.0, %v3082
      %v3084 = vpop.f32.mrf.mxu0
      %3085 = vmatprep.mubr.f32.mxu0 0.0
      %3086 = vmatmul.mubr.f32.gmra.mxu0 %v2748
      %v3087 = vpop.f32.mrf.mxu0
      %v3088 = vadd.f32 0.0, %v3087
      %v3089 = vpop.f32.mrf.mxu0
      %3090 = vmatprep.mubr.f32.mxu0 0.0
      %3091 = vmatmul.mubr.f32.gmra.mxu0 %v2751
      %v3092 = vpop.f32.mrf.mxu0
      %v3093 = vadd.f32 0.0, %v3092
      %v3094 = vpop.f32.mrf.mxu0
      %3095 = vmatprep.mubr.f32.mxu0 0.0
      %3096 = vmatmul.mubr.f32.gmra.mxu0 %v2754
      %v3097 = vpop.f32.mrf.mxu0
      %v3098 = vadd.f32 0.0, %v3097
      %v3099 = vpop.f32.mrf.mxu0
      %3100 = vdwg.mxu0
      %v3101 = vadd.f32 %v2467, %v2823
      %v3102 = vadd.f32 %v2468, %v2828
      %v3103 = vadd.f32 %v2469, %v2833
      %v3104 = vadd.f32 %v2470, %v2838
      %v3105 = vadd.f32 %v2471, %v2843
      %v3106 = vadd.f32 %v2472, %v2848
      %v3107 = vadd.f32 %v2473, %v2853
      %v3108 = vadd.f32 %v2474, %v2858
      %v3109 = vadd.f32 %v2475, %v2863
      %v3110 = vadd.f32 %v2476, %v2868
      %v3111 = vadd.f32 %v2477, %v2873
      %v3112 = vadd.f32 %v2478, %v2878
      %v3113 = vadd.f32 %v2479, %v2883
      %v3114 = vadd.f32 %v2480, %v2888
      %v3115 = vadd.f32 %v2481, %v2893
      %v3116 = vadd.f32 %v2482, %v2898
      %v3117 = vadd.f32 %v2483, %v2903
      %v3118 = vadd.f32 %v2484, %v2908
      %v3119 = vadd.f32 %v2485, %v2913
      %v3120 = vadd.f32 %v2486, %v2918
      %v3121 = vadd.f32 %v2487, %v2923
      %v3122 = vadd.f32 %v2488, %v2928
      %v3123 = vadd.f32 %v2489, %v2933
      %v3124 = vadd.f32 %v2490, %v2938
      %v3125 = vadd.f32 %v2491, %v2943
      %v3126 = vadd.f32 %v2492, %v2948
      %v3127 = vadd.f32 %v2493, %v2953
      %v3128 = vadd.f32 %v2494, %v2958
      %v3129 = vadd.f32 %v2495, %v2963
      %v3130 = vadd.f32 %v2496, %v2968
      %v3131 = vadd.f32 %v2497, %v2973
      %v3132 = vadd.f32 %v2498, %v2978
      %v3133 = vadd.f32 %v2499, %v2983
      %v3134 = vadd.f32 %v2500, %v2988
      %v3135 = vadd.f32 %v2501, %v2993
      %v3136 = vadd.f32 %v2502, %v2998
      %v3137 = vadd.f32 %v2503, %v3003
      %v3138 = vadd.f32 %v2504, %v3008
      %v3139 = vadd.f32 %v2505, %v3013
      %v3140 = vadd.f32 %v2506, %v3018
      %v3141 = vadd.f32 %v2507, %v3023
      %v3142 = vadd.f32 %v2508, %v3028
      %v3143 = vadd.f32 %v2509, %v3033
      %v3144 = vadd.f32 %v2510, %v3038
      %v3145 = vadd.f32 %v2511, %v3043
      %v3146 = vadd.f32 %v2512, %v3048
      %v3147 = vadd.f32 %v2513, %v3053
      %v3148 = vadd.f32 %v2514, %v3058
      %v3149 = vadd.f32 %v2515, %v3063
      %v3150 = vadd.f32 %v2516, %v3068
      %v3151 = vadd.f32 %v2517, %v3073
      %v3152 = vadd.f32 %v2518, %v3078
      %v3153 = vadd.f32 %v2519, %v3083
      %v3154 = vadd.f32 %v2520, %v3088
      %v3155 = vadd.f32 %v2521, %v3093
      %v3156 = vadd.f32 %v2522, %v3098
      %3157 = vst.msk [vmem:[%s170] sm:$0xff] %vm171, %v3101
      %3158 = vst.msk [vmem:[%s170 + $0x8] sm:$0xff] %vm171, %v3102
      %3159 = vst.msk [vmem:[%s170 + $0x10] sm:$0xff] %vm171, %v3103
      %3160 = vst.msk [vmem:[%s170 + $0x18] sm:$0xff] %vm171, %v3104
      %3161 = vst.msk [vmem:[%s170 + $0x20] sm:$0xff] %vm171, %v3105
      %3162 = vst.msk [vmem:[%s170 + $0x28] sm:$0xff] %vm171, %v3106
      %3163 = vst.msk [vmem:[%s170 + $0x30] sm:$0xff] %vm171, %v3107
      %3164 = vst.msk [vmem:[%s170 + $0x38] sm:$0xff] %vm171, %v3108
      %3165 = vst.msk [vmem:[%s170 + $0x40] sm:$0xff] %vm171, %v3109
      %3166 = vst.msk [vmem:[%s170 + $0x48] sm:$0xff] %vm171, %v3110
      %3167 = vst.msk [vmem:[%s170 + $0x50] sm:$0xff] %vm171, %v3111
      %3168 = vst.msk [vmem:[%s170 + $0x58] sm:$0xff] %vm171, %v3112
      %3169 = vst.msk [vmem:[%s170 + $0x60] sm:$0xff] %vm171, %v3113
      %3170 = vst.msk [vmem:[%s170 + $0x68] sm:$0xff] %vm171, %v3114
      %3171 = vst.msk [vmem:[%s170 + $0x70] sm:$0xff] %vm171, %v3115
      %3172 = vst.msk [vmem:[%s170 + $0x78] sm:$0xff] %vm171, %v3116
      %3173 = vst.msk [vmem:[%s170 + $0x80] sm:$0xff] %vm171, %v3117
      %3174 = vst.msk [vmem:[%s170 + $0x88] sm:$0xff] %vm171, %v3118
      %3175 = vst.msk [vmem:[%s170 + $0x90] sm:$0xff] %vm171, %v3119
      %3176 = vst.msk [vmem:[%s170 + $0x98] sm:$0xff] %vm171, %v3120
      %3177 = vst.msk [vmem:[%s170 + $0xa0] sm:$0xff] %vm171, %v3121
      %3178 = vst.msk [vmem:[%s170 + $0xa8] sm:$0xff] %vm171, %v3122
      %3179 = vst.msk [vmem:[%s170 + $0xb0] sm:$0xff] %vm171, %v3123
      %3180 = vst.msk [vmem:[%s170 + $0xb8] sm:$0xff] %vm171, %v3124
      %3181 = vst.msk [vmem:[%s170 + $0xc0] sm:$0xff] %vm171, %v3125
      %3182 = vst.msk [vmem:[%s170 + $0xc8] sm:$0xff] %vm171, %v3126
      %3183 = vst.msk [vmem:[%s170 + $0xd0] sm:$0xff] %vm171, %v3127
      %3184 = vst.msk [vmem:[%s170 + $0xd8] sm:$0xff] %vm171, %v3128
      %3185 = vst.msk [vmem:[%s170 + $0xe0] sm:$0xff] %vm171, %v3129
      %3186 = vst.msk [vmem:[%s170 + $0xe8] sm:$0xff] %vm171, %v3130
      %3187 = vst.msk [vmem:[%s170 + $0xf0] sm:$0xff] %vm171, %v3131
      %3188 = vst.msk [vmem:[%s170 + $0xf8] sm:$0xff] %vm171, %v3132
      %3189 = vst.msk [vmem:[%s170 + $0x100] sm:$0xff] %vm171, %v3133
      %3190 = vst.msk [vmem:[%s170 + $0x108] sm:$0xff] %vm171, %v3134
      %3191 = vst.msk [vmem:[%s170 + $0x110] sm:$0xff] %vm171, %v3135
      %3192 = vst.msk [vmem:[%s170 + $0x118] sm:$0xff] %vm171, %v3136
      %3193 = vst.msk [vmem:[%s170 + $0x120] sm:$0xff] %vm171, %v3137
      %3194 = vst.msk [vmem:[%s170 + $0x128] sm:$0xff] %vm171, %v3138
      %3195 = vst.msk [vmem:[%s170 + $0x130] sm:$0xff] %vm171, %v3139
      %3196 = vst.msk [vmem:[%s170 + $0x138] sm:$0xff] %vm171, %v3140
      %3197 = vst.msk [vmem:[%s170 + $0x140] sm:$0xff] %vm171, %v3141
      %3198 = vst.msk [vmem:[%s170 + $0x148] sm:$0xff] %vm171, %v3142
      %3199 = vst.msk [vmem:[%s170 + $0x150] sm:$0xff] %vm171, %v3143
      %3200 = vst.msk [vmem:[%s170 + $0x158] sm:$0xff] %vm171, %v3144
      %3201 = vst.msk [vmem:[%s170 + $0x160] sm:$0xff] %vm171, %v3145
      %3202 = vst.msk [vmem:[%s170 + $0x168] sm:$0xff] %vm171, %v3146
      %3203 = vst.msk [vmem:[%s170 + $0x170] sm:$0xff] %vm171, %v3147
      %3204 = vst.msk [vmem:[%s170 + $0x178] sm:$0xff] %vm171, %v3148
      %3205 = vst.msk [vmem:[%s170 + $0x180] sm:$0xff] %vm171, %v3149
      %3206 = vst.msk [vmem:[%s170 + $0x188] sm:$0xff] %vm171, %v3150
      %3207 = vst.msk [vmem:[%s170 + $0x190] sm:$0xff] %vm171, %v3151
      %3208 = vst.msk [vmem:[%s170 + $0x198] sm:$0xff] %vm171, %v3152
      %3209 = vst.msk [vmem:[%s170 + $0x1a0] sm:$0xff] %vm171, %v3153
      %3210 = vst.msk [vmem:[%s170 + $0x1a8] sm:$0xff] %vm171, %v3154
      %3211 = vst.msk [vmem:[%s170 + $0x1b0] sm:$0xff] %vm171, %v3155
      %3212 = vst.msk [vmem:[%s170 + $0x1b8] sm:$0x1] %vm227, %v3156
      %v3213 = vld [vmem:[%s170] sm:$0xff]
      %v3214 = vld [vmem:[%s170 + $0x8] sm:$0xff]
      %v3215 = vld [vmem:[%s170 + $0x10] sm:$0xff]
      %v3216 = vld [vmem:[%s170 + $0x18] sm:$0xff]
      %v3217 = vld [vmem:[%s170 + $0x20] sm:$0xff]
      %v3218 = vld [vmem:[%s170 + $0x28] sm:$0xff]
      %v3219 = vld [vmem:[%s170 + $0x30] sm:$0xff]
      %v3220 = vld [vmem:[%s170 + $0x38] sm:$0xff]
      %v3221 = vld [vmem:[%s170 + $0x40] sm:$0xff]
      %v3222 = vld [vmem:[%s170 + $0x48] sm:$0xff]
      %v3223 = vld [vmem:[%s170 + $0x50] sm:$0xff]
      %v3224 = vld [vmem:[%s170 + $0x58] sm:$0xff]
      %v3225 = vld [vmem:[%s170 + $0x60] sm:$0xff]
      %v3226 = vld [vmem:[%s170 + $0x68] sm:$0xff]
      %v3227 = vld [vmem:[%s170 + $0x70] sm:$0xff]
      %v3228 = vld [vmem:[%s170 + $0x78] sm:$0xff]
      %v3229 = vld [vmem:[%s170 + $0x80] sm:$0xff]
      %v3230 = vld [vmem:[%s170 + $0x88] sm:$0xff]
      %v3231 = vld [vmem:[%s170 + $0x90] sm:$0xff]
      %v3232 = vld [vmem:[%s170 + $0x98] sm:$0xff]
      %v3233 = vld [vmem:[%s170 + $0xa0] sm:$0xff]
      %v3234 = vld [vmem:[%s170 + $0xa8] sm:$0xff]
      %v3235 = vld [vmem:[%s170 + $0xb0] sm:$0xff]
      %v3236 = vld [vmem:[%s170 + $0xb8] sm:$0xff]
      %v3237 = vld [vmem:[%s170 + $0xc0] sm:$0xff]
      %v3238 = vld [vmem:[%s170 + $0xc8] sm:$0xff]
      %v3239 = vld [vmem:[%s170 + $0xd0] sm:$0xff]
      %v3240 = vld [vmem:[%s170 + $0xd8] sm:$0xff]
      %v3241 = vld [vmem:[%s170 + $0xe0] sm:$0xff]
      %v3242 = vld [vmem:[%s170 + $0xe8] sm:$0xff]
      %v3243 = vld [vmem:[%s170 + $0xf0] sm:$0xff]
      %v3244 = vld [vmem:[%s170 + $0xf8] sm:$0xff]
      %v3245 = vld [vmem:[%s170 + $0x100] sm:$0xff]
      %v3246 = vld [vmem:[%s170 + $0x108] sm:$0xff]
      %v3247 = vld [vmem:[%s170 + $0x110] sm:$0xff]
      %v3248 = vld [vmem:[%s170 + $0x118] sm:$0xff]
      %v3249 = vld [vmem:[%s170 + $0x120] sm:$0xff]
      %v3250 = vld [vmem:[%s170 + $0x128] sm:$0xff]
      %v3251 = vld [vmem:[%s170 + $0x130] sm:$0xff]
      %v3252 = vld [vmem:[%s170 + $0x138] sm:$0xff]
      %v3253 = vld [vmem:[%s170 + $0x140] sm:$0xff]
      %v3254 = vld [vmem:[%s170 + $0x148] sm:$0xff]
      %v3255 = vld [vmem:[%s170 + $0x150] sm:$0xff]
      %v3256 = vld [vmem:[%s170 + $0x158] sm:$0xff]
      %v3257 = vld [vmem:[%s170 + $0x160] sm:$0xff]
      %v3258 = vld [vmem:[%s170 + $0x168] sm:$0xff]
      %v3259 = vld [vmem:[%s170 + $0x170] sm:$0xff]
      %v3260 = vld [vmem:[%s170 + $0x178] sm:$0xff]
      %v3261 = vld [vmem:[%s170 + $0x180] sm:$0xff]
      %v3262 = vld [vmem:[%s170 + $0x188] sm:$0xff]
      %v3263 = vld [vmem:[%s170 + $0x190] sm:$0xff]
      %v3264 = vld [vmem:[%s170 + $0x198] sm:$0xff]
      %v3265 = vld [vmem:[%s170 + $0x1a0] sm:$0xff]
      %v3266 = vld [vmem:[%s170 + $0x1a8] sm:$0xff]
      %v3267 = vld [vmem:[%s170 + $0x1b0] sm:$0xff]
      %v3268 = vld [vmem:[%s170 + $0x1b8] sm:$0x1]
      %v3269 = vld [vmem:[%s2] sm:$0x1]
      %v3271 = vlaneseq
      %v3272 = vshrl.u32 %v3271, 7
      %v3273 = vsub.s32 0, %v3272
      %v3274 = vrot.slane %v3269, %v3273
      %v3276 = vadd.f32 %v3213, %v3274
      %v3277 = vadd.f32 %v3214, %v3274
      %v3278 = vadd.f32 %v3215, %v3274
      %v3279 = vadd.f32 %v3216, %v3274
      %v3280 = vadd.f32 %v3217, %v3274
      %v3281 = vadd.f32 %v3218, %v3274
      %v3282 = vadd.f32 %v3219, %v3274
      %v3283 = vadd.f32 %v3220, %v3274
      %v3284 = vadd.f32 %v3221, %v3274
      %v3285 = vadd.f32 %v3222, %v3274
      %v3286 = vadd.f32 %v3223, %v3274
      %v3287 = vadd.f32 %v3224, %v3274
      %v3288 = vadd.f32 %v3225, %v3274
      %v3289 = vadd.f32 %v3226, %v3274
      %v3290 = vadd.f32 %v3227, %v3274
      %v3291 = vadd.f32 %v3228, %v3274
      %v3292 = vadd.f32 %v3229, %v3274
      %v3293 = vadd.f32 %v3230, %v3274
      %v3294 = vadd.f32 %v3231, %v3274
      %v3295 = vadd.f32 %v3232, %v3274
      %v3296 = vadd.f32 %v3233, %v3274
      %v3297 = vadd.f32 %v3234, %v3274
      %v3298 = vadd.f32 %v3235, %v3274
      %v3299 = vadd.f32 %v3236, %v3274
      %v3300 = vadd.f32 %v3237, %v3274
      %v3301 = vadd.f32 %v3238, %v3274
      %v3302 = vadd.f32 %v3239, %v3274
      %v3303 = vadd.f32 %v3240, %v3274
      %v3304 = vadd.f32 %v3241, %v3274
      %v3305 = vadd.f32 %v3242, %v3274
      %v3306 = vadd.f32 %v3243, %v3274
      %v3307 = vadd.f32 %v3244, %v3274
      %v3308 = vadd.f32 %v3245, %v3274
      %v3309 = vadd.f32 %v3246, %v3274
      %v3310 = vadd.f32 %v3247, %v3274
      %v3311 = vadd.f32 %v3248, %v3274
      %v3312 = vadd.f32 %v3249, %v3274
      %v3313 = vadd.f32 %v3250, %v3274
      %v3314 = vadd.f32 %v3251, %v3274
      %v3315 = vadd.f32 %v3252, %v3274
      %v3316 = vadd.f32 %v3253, %v3274
      %v3317 = vadd.f32 %v3254, %v3274
      %v3318 = vadd.f32 %v3255, %v3274
      %v3319 = vadd.f32 %v3256, %v3274
      %v3320 = vadd.f32 %v3257, %v3274
      %v3321 = vadd.f32 %v3258, %v3274
      %v3322 = vadd.f32 %v3259, %v3274
      %v3323 = vadd.f32 %v3260, %v3274
      %v3324 = vadd.f32 %v3261, %v3274
      %v3325 = vadd.f32 %v3262, %v3274
      %v3326 = vadd.f32 %v3263, %v3274
      %v3327 = vadd.f32 %v3264, %v3274
      %v3328 = vadd.f32 %v3265, %v3274
      %v3329 = vadd.f32 %v3266, %v3274
      %v3330 = vadd.f32 %v3267, %v3274
      %v3331 = vadd.f32 %v3268, %v3274
      %v3332 = vmax.f32 %v3276, 0.0
      %v3333 = vmax.f32 %v3277, 0.0
      %v3334 = vmax.f32 %v3278, 0.0
      %v3335 = vmax.f32 %v3279, 0.0
      %v3336 = vmax.f32 %v3280, 0.0
      %v3337 = vmax.f32 %v3281, 0.0
      %v3338 = vmax.f32 %v3282, 0.0
      %v3339 = vmax.f32 %v3283, 0.0
      %v3340 = vmax.f32 %v3284, 0.0
      %v3341 = vmax.f32 %v3285, 0.0
      %v3342 = vmax.f32 %v3286, 0.0
      %v3343 = vmax.f32 %v3287, 0.0
      %v3344 = vmax.f32 %v3288, 0.0
      %v3345 = vmax.f32 %v3289, 0.0
      %v3346 = vmax.f32 %v3290, 0.0
      %v3347 = vmax.f32 %v3291, 0.0
      %v3348 = vmax.f32 %v3292, 0.0
      %v3349 = vmax.f32 %v3293, 0.0
      %v3350 = vmax.f32 %v3294, 0.0
      %v3351 = vmax.f32 %v3295, 0.0
      %v3352 = vmax.f32 %v3296, 0.0
      %v3353 = vmax.f32 %v3297, 0.0
      %v3354 = vmax.f32 %v3298, 0.0
      %v3355 = vmax.f32 %v3299, 0.0
      %v3356 = vmax.f32 %v3300, 0.0
      %v3357 = vmax.f32 %v3301, 0.0
      %v3358 = vmax.f32 %v3302, 0.0
      %v3359 = vmax.f32 %v3303, 0.0
      %v3360 = vmax.f32 %v3304, 0.0
      %v3361 = vmax.f32 %v3305, 0.0
      %v3362 = vmax.f32 %v3306, 0.0
      %v3363 = vmax.f32 %v3307, 0.0
      %v3364 = vmax.f32 %v3308, 0.0
      %v3365 = vmax.f32 %v3309, 0.0
      %v3366 = vmax.f32 %v3310, 0.0
      %v3367 = vmax.f32 %v3311, 0.0
      %v3368 = vmax.f32 %v3312, 0.0
      %v3369 = vmax.f32 %v3313, 0.0
      %v3370 = vmax.f32 %v3314, 0.0
      %v3371 = vmax.f32 %v3315, 0.0
      %v3372 = vmax.f32 %v3316, 0.0
      %v3373 = vmax.f32 %v3317, 0.0
      %v3374 = vmax.f32 %v3318, 0.0
      %v3375 = vmax.f32 %v3319, 0.0
      %v3376 = vmax.f32 %v3320, 0.0
      %v3377 = vmax.f32 %v3321, 0.0
      %v3378 = vmax.f32 %v3322, 0.0
      %v3379 = vmax.f32 %v3323, 0.0
      %v3380 = vmax.f32 %v3324, 0.0
      %v3381 = vmax.f32 %v3325, 0.0
      %v3382 = vmax.f32 %v3326, 0.0
      %v3383 = vmax.f32 %v3327, 0.0
      %v3384 = vmax.f32 %v3328, 0.0
      %v3385 = vmax.f32 %v3329, 0.0
      %v3386 = vmax.f32 %v3330, 0.0
      %v3387 = vmax.f32 %v3331, 0.0
      %3388 = vst.msk [vmem:[%s170] sm:$0xff] %vm171, %v3332
      %3389 = vst.msk [vmem:[%s170 + $0x8] sm:$0xff] %vm171, %v3333
      %3390 = vst.msk [vmem:[%s170 + $0x10] sm:$0xff] %vm171, %v3334
      %3391 = vst.msk [vmem:[%s170 + $0x18] sm:$0xff] %vm171, %v3335
      %3392 = vst.msk [vmem:[%s170 + $0x20] sm:$0xff] %vm171, %v3336
      %3393 = vst.msk [vmem:[%s170 + $0x28] sm:$0xff] %vm171, %v3337
      %3394 = vst.msk [vmem:[%s170 + $0x30] sm:$0xff] %vm171, %v3338
      %3395 = vst.msk [vmem:[%s170 + $0x38] sm:$0xff] %vm171, %v3339
      %3396 = vst.msk [vmem:[%s170 + $0x40] sm:$0xff] %vm171, %v3340
      %3397 = vst.msk [vmem:[%s170 + $0x48] sm:$0xff] %vm171, %v3341
      %3398 = vst.msk [vmem:[%s170 + $0x50] sm:$0xff] %vm171, %v3342
      %3399 = vst.msk [vmem:[%s170 + $0x58] sm:$0xff] %vm171, %v3343
      %3400 = vst.msk [vmem:[%s170 + $0x60] sm:$0xff] %vm171, %v3344
      %3401 = vst.msk [vmem:[%s170 + $0x68] sm:$0xff] %vm171, %v3345
      %3402 = vst.msk [vmem:[%s170 + $0x70] sm:$0xff] %vm171, %v3346
      %3403 = vst.msk [vmem:[%s170 + $0x78] sm:$0xff] %vm171, %v3347
      %3404 = vst.msk [vmem:[%s170 + $0x80] sm:$0xff] %vm171, %v3348
      %3405 = vst.msk [vmem:[%s170 + $0x88] sm:$0xff] %vm171, %v3349
      %3406 = vst.msk [vmem:[%s170 + $0x90] sm:$0xff] %vm171, %v3350
      %3407 = vst.msk [vmem:[%s170 + $0x98] sm:$0xff] %vm171, %v3351
      %3408 = vst.msk [vmem:[%s170 + $0xa0] sm:$0xff] %vm171, %v3352
      %3409 = vst.msk [vmem:[%s170 + $0xa8] sm:$0xff] %vm171, %v3353
      %3410 = vst.msk [vmem:[%s170 + $0xb0] sm:$0xff] %vm171, %v3354
      %3411 = vst.msk [vmem:[%s170 + $0xb8] sm:$0xff] %vm171, %v3355
      %3412 = vst.msk [vmem:[%s170 + $0xc0] sm:$0xff] %vm171, %v3356
      %3413 = vst.msk [vmem:[%s170 + $0xc8] sm:$0xff] %vm171, %v3357
      %3414 = vst.msk [vmem:[%s170 + $0xd0] sm:$0xff] %vm171, %v3358
      %3415 = vst.msk [vmem:[%s170 + $0xd8] sm:$0xff] %vm171, %v3359
      %3416 = vst.msk [vmem:[%s170 + $0xe0] sm:$0xff] %vm171, %v3360
      %3417 = vst.msk [vmem:[%s170 + $0xe8] sm:$0xff] %vm171, %v3361
      %3418 = vst.msk [vmem:[%s170 + $0xf0] sm:$0xff] %vm171, %v3362
      %3419 = vst.msk [vmem:[%s170 + $0xf8] sm:$0xff] %vm171, %v3363
      %3420 = vst.msk [vmem:[%s170 + $0x100] sm:$0xff] %vm171, %v3364
      %3421 = vst.msk [vmem:[%s170 + $0x108] sm:$0xff] %vm171, %v3365
      %3422 = vst.msk [vmem:[%s170 + $0x110] sm:$0xff] %vm171, %v3366
      %3423 = vst.msk [vmem:[%s170 + $0x118] sm:$0xff] %vm171, %v3367
      %3424 = vst.msk [vmem:[%s170 + $0x120] sm:$0xff] %vm171, %v3368
      %3425 = vst.msk [vmem:[%s170 + $0x128] sm:$0xff] %vm171, %v3369
      %3426 = vst.msk [vmem:[%s170 + $0x130] sm:$0xff] %vm171, %v3370
      %3427 = vst.msk [vmem:[%s170 + $0x138] sm:$0xff] %vm171, %v3371
      %3428 = vst.msk [vmem:[%s170 + $0x140] sm:$0xff] %vm171, %v3372
      %3429 = vst.msk [vmem:[%s170 + $0x148] sm:$0xff] %vm171, %v3373
      %3430 = vst.msk [vmem:[%s170 + $0x150] sm:$0xff] %vm171, %v3374
      %3431 = vst.msk [vmem:[%s170 + $0x158] sm:$0xff] %vm171, %v3375
      %3432 = vst.msk [vmem:[%s170 + $0x160] sm:$0xff] %vm171, %v3376
      %3433 = vst.msk [vmem:[%s170 + $0x168] sm:$0xff] %vm171, %v3377
      %3434 = vst.msk [vmem:[%s170 + $0x170] sm:$0xff] %vm171, %v3378
      %3435 = vst.msk [vmem:[%s170 + $0x178] sm:$0xff] %vm171, %v3379
      %3436 = vst.msk [vmem:[%s170 + $0x180] sm:$0xff] %vm171, %v3380
      %3437 = vst.msk [vmem:[%s170 + $0x188] sm:$0xff] %vm171, %v3381
      %3438 = vst.msk [vmem:[%s170 + $0x190] sm:$0xff] %vm171, %v3382
      %3439 = vst.msk [vmem:[%s170 + $0x198] sm:$0xff] %vm171, %v3383
      %3440 = vst.msk [vmem:[%s170 + $0x1a0] sm:$0xff] %vm171, %v3384
      %3441 = vst.msk [vmem:[%s170 + $0x1a8] sm:$0xff] %vm171, %v3385
      %3442 = vst.msk [vmem:[%s170 + $0x1b0] sm:$0xff] %vm171, %v3386
      %3443 = vst.msk [vmem:[%s170 + $0x1b8] sm:$0x1] %vm227, %v3387
      %p3444 = scmp.lt.s32.totalorder %s14, 1
      %s3445 = scalar_select %p3444, %s14, 1
      %s3446 = smul.addr %s3445, 56
      %s3447 = smul.addr %s3446, 8
      %s3448 = scalar_lea.vmem %s3, %s3447
      // Predicated region
      $region33: #{cnnbase_forward.3} parent=31 // pred_check
        %p3449 = pneg %p100
      $region34: #{cnnbase_forward.3} parent=31 // pred_check_branch
        %3451 = sbr.rel (%p3449) target = $region36
      $region35: #{cnnbase_forward.3} parent=31 // pred_region
        _
      $region36: #{cnnbase_forward.3} parent=31 // pred_fallthru
        _
    $region32: #{cnnbase_forward.3} parent=5 // pred_fallthru
      _
    %p3452 = scmp.le.s32.totalorder 2, %s9
    // Predicated region
    $region37: #{cnnbase_forward.3} parent=5 // pred_check
      %p3453 = pneg %p3452
    $region38: #{cnnbase_forward.3} parent=5 // pred_check_branch
      %3455 = sbr.rel (%p3453) target = $region40
    $region39: #{cnnbase_forward.3} parent=5 // pred_region
      %s3456 = ssub.s32 %s9, 2
      // Predicated region
      $region41: #{cnnbase_forward.3} parent=39 // pred_check
        %p3457 = pneg %p106
      $region42: #{cnnbase_forward.3} parent=39 // pred_check_branch
        %3459 = sbr.rel (%p3457) target = $region44
      $region43: #{cnnbase_forward.3} parent=39 // pred_region
        %p3460 = scmp.lt.s32.totalorder %s15, 1
        %s3461 = scalar_select %p3460, %s15, 1
        %s3462 = smul.addr %s3461, 56
        %s3463 = smul.addr %s3462, 8
        %s3464 = scalar_lea.vmem %s3, %s3463
      $region44: #{cnnbase_forward.3} parent=39 // pred_fallthru
        _
    $region40: #{cnnbase_forward.3} parent=5 // pred_fallthru
      _
  $region6: #{cnnbase_forward.3} parent=0 // loop_footer
    %s13 = sadd.s32 1, %s9
  $region7: #{cnnbase_forward.3} parent=0 // loop_footer_branch
    %8 = sbr.rel target = $region3
  $region8: #{cnnbase_forward.3} parent=0 // loop_exit
    _

// kernel: cnnbase_forward.5
$region0: #{cnnbase_forward.5}
  #allocation0 [shape = 'u32[]', space=smem, size = 0x4, offset = 0x4, fixed_abs, tag = 'smem constant byte address 0x4 - core index']
  #allocation1 [shape = 'u32[144,128]{1,0:T(1,128)}', space=vmem, size = 0x12000, scoped, tag = 'internal scratch']
  #allocation2 [shape = 'f32[1,1]{1,0:T(1,128)S(1)}', space=vmem, size = 0x200, scoped, tag = 'scoped memory for cnnbase_forward.5']
  %s0 = inlined_call_operand.vmem [shape: f32[8,1568], index: 0, kind: input, shape index: {}]
  %s1 = inlined_call_operand.vmem [shape: f32[1568,64], index: 1, kind: input, shape index: {}]
  %s2 = inlined_call_operand.vmem [shape: f32[1,64], index: 2, kind: input, shape index: {}]
  %s3 = inlined_call_operand.vmem [shape: f32[64,1], index: 3, kind: input, shape index: {}]
  %s4 = inlined_call_operand.<no memory space> [shape: f32[1,1], index: 4, kind: input, shape index: {}]
  %s5 = inlined_call_operand.vmem [shape: f32[8,64], index: 5, kind: output, shape index: {0}]
  %s6 = inlined_call_operand.vmem [shape: f32[8,1], index: 6, kind: output, shape index: {1}]
  %7 = xla_tuple %s5, %s6
  %s8 = sld [smem:[#allocation0]]
  $region38: #{cnnbase_forward.5} parent=0
    _
  %s10 = ssub.s32 1, %s8
  %s11 = scalar_select 0, %s10, %s8
  %v12 = vstv %s4
  %13 = vst [vmem:[#allocation2] sm:$0x1] %v12
  // Predicated region
  $region2: #{cnnbase_forward.5} parent=0 // pred_check
    _
  $region3: #{cnnbase_forward.5} parent=0 // pred_check_branch
    %15 = sbr.rel (0) target = $region5
  $region4: #{cnnbase_forward.5} parent=0 // pred_region
    _
  $region5: #{cnnbase_forward.5} parent=0 // pred_fallthru
    _
  // Predicated region
  $region6: #{cnnbase_forward.5} parent=0 // pred_check
    _
  $region7: #{cnnbase_forward.5} parent=0 // pred_check_branch
    %17 = sbr.rel (0) target = $region9
  $region8: #{cnnbase_forward.5} parent=0 // pred_region
    _
  $region9: #{cnnbase_forward.5} parent=0 // pred_fallthru
    _
  // Predicated region
  $region10: #{cnnbase_forward.5} parent=0 // pred_check
    _
  $region11: #{cnnbase_forward.5} parent=0 // pred_check_branch
    %19 = sbr.rel (0) target = $region13
  $region12: #{cnnbase_forward.5} parent=0 // pred_region
    _
  $region13: #{cnnbase_forward.5} parent=0 // pred_fallthru
    _
  // Predicated region
  $region14: #{cnnbase_forward.5} parent=0 // pred_check
    _
  $region15: #{cnnbase_forward.5} parent=0 // pred_check_branch
    %21 = sbr.rel (0) target = $region17
  $region16: #{cnnbase_forward.5} parent=0 // pred_region
    _
  $region17: #{cnnbase_forward.5} parent=0 // pred_fallthru
    _
  // Predicated region
  $region18: #{cnnbase_forward.5} parent=0 // pred_check
    _
  $region19: #{cnnbase_forward.5} parent=0 // pred_check_branch
    %23 = sbr.rel (0) target = $region21
  $region20: #{cnnbase_forward.5} parent=0 // pred_region
    _
  $region21: #{cnnbase_forward.5} parent=0 // pred_fallthru
    _
  %v24 = vld [vmem:[%s0] sm:$0xff]
  %v25 = vld [vmem:[%s0 + $0x8] sm:$0xff]
  %v26 = vld [vmem:[%s0 + $0x10] sm:$0xff]
  %v27 = vld [vmem:[%s0 + $0x18] sm:$0xff]
  %v28 = vld [vmem:[%s0 + $0x20] sm:$0xff]
  %v29 = vld [vmem:[%s0 + $0x28] sm:$0xff]
  %v30 = vld [vmem:[%s0 + $0x30] sm:$0xff]
  %v31 = vld [vmem:[%s0 + $0x38] sm:$0xff]
  %v32 = vld [vmem:[%s0 + $0x40] sm:$0xff]
  %v33 = vld [vmem:[%s0 + $0x48] sm:$0xff]
  %v34 = vld [vmem:[%s0 + $0x50] sm:$0xff]
  %v35 = vld [vmem:[%s0 + $0x58] sm:$0xff]
  %v36 = vld [vmem:[%s0 + $0x60] sm:$0xff]
  %v37 = vld [vmem:[%s1] sm:$0xff]
  %v38 = vld [vmem:[%s1 + $0x8] sm:$0xff]
  %v39 = vld [vmem:[%s1 + $0x10] sm:$0xff]
  %v40 = vld [vmem:[%s1 + $0x18] sm:$0xff]
  %v41 = vld [vmem:[%s1 + $0x20] sm:$0xff]
  %v42 = vld [vmem:[%s1 + $0x28] sm:$0xff]
  %v43 = vld [vmem:[%s1 + $0x30] sm:$0xff]
  %v44 = vld [vmem:[%s1 + $0x38] sm:$0xff]
  %v45 = vld [vmem:[%s1 + $0x40] sm:$0xff]
  %v46 = vld [vmem:[%s1 + $0x48] sm:$0xff]
  %v47 = vld [vmem:[%s1 + $0x50] sm:$0xff]
  %v48 = vld [vmem:[%s1 + $0x58] sm:$0xff]
  %v49 = vld [vmem:[%s1 + $0x60] sm:$0xff]
  %v50 = vld [vmem:[%s1 + $0x68] sm:$0xff]
  %v51 = vld [vmem:[%s1 + $0x70] sm:$0xff]
  %v52 = vld [vmem:[%s1 + $0x78] sm:$0xff]
  %v53 = vld [vmem:[%s1 + $0x80] sm:$0xff]
  %v54 = vld [vmem:[%s1 + $0x88] sm:$0xff]
  %v55 = vld [vmem:[%s1 + $0x90] sm:$0xff]
  %v56 = vld [vmem:[%s1 + $0x98] sm:$0xff]
  %v57 = vld [vmem:[%s1 + $0xa0] sm:$0xff]
  %v58 = vld [vmem:[%s1 + $0xa8] sm:$0xff]
  %v59 = vld [vmem:[%s1 + $0xb0] sm:$0xff]
  %v60 = vld [vmem:[%s1 + $0xb8] sm:$0xff]
  %v61 = vld [vmem:[%s1 + $0xc0] sm:$0xff]
  %v62 = vld [vmem:[%s1 + $0xc8] sm:$0xff]
  %v63 = vld [vmem:[%s1 + $0xd0] sm:$0xff]
  %v64 = vld [vmem:[%s1 + $0xd8] sm:$0xff]
  %v65 = vld [vmem:[%s1 + $0xe0] sm:$0xff]
  %v66 = vld [vmem:[%s1 + $0xe8] sm:$0xff]
  %v67 = vld [vmem:[%s1 + $0xf0] sm:$0xff]
  %v68 = vld [vmem:[%s1 + $0xf8] sm:$0xff]
  %v69 = vld [vmem:[%s1 + $0x100] sm:$0xff]
  %v70 = vld [vmem:[%s1 + $0x108] sm:$0xff]
  %v71 = vld [vmem:[%s1 + $0x110] sm:$0xff]
  %v72 = vld [vmem:[%s1 + $0x118] sm:$0xff]
  %v73 = vld [vmem:[%s1 + $0x120] sm:$0xff]
  %v74 = vld [vmem:[%s1 + $0x128] sm:$0xff]
  %v75 = vld [vmem:[%s1 + $0x130] sm:$0xff]
  %v76 = vld [vmem:[%s1 + $0x138] sm:$0xff]
  %v77 = vld [vmem:[%s1 + $0x140] sm:$0xff]
  %v78 = vld [vmem:[%s1 + $0x148] sm:$0xff]
  %v79 = vld [vmem:[%s1 + $0x150] sm:$0xff]
  %v80 = vld [vmem:[%s1 + $0x158] sm:$0xff]
  %v81 = vld [vmem:[%s1 + $0x160] sm:$0xff]
  %v82 = vld [vmem:[%s1 + $0x168] sm:$0xff]
  %v83 = vld [vmem:[%s1 + $0x170] sm:$0xff]
  %v84 = vld [vmem:[%s1 + $0x178] sm:$0xff]
  %v85 = vld [vmem:[%s1 + $0x180] sm:$0xff]
  %v86 = vld [vmem:[%s1 + $0x188] sm:$0xff]
  %v87 = vld [vmem:[%s1 + $0x190] sm:$0xff]
  %v88 = vld [vmem:[%s1 + $0x198] sm:$0xff]
  %v89 = vld [vmem:[%s1 + $0x1a0] sm:$0xff]
  %v90 = vld [vmem:[%s1 + $0x1a8] sm:$0xff]
  %v91 = vld [vmem:[%s1 + $0x1b0] sm:$0xff]
  %v92 = vld [vmem:[%s1 + $0x1b8] sm:$0xff]
  %v93 = vld [vmem:[%s1 + $0x1c0] sm:$0xff]
  %v94 = vld [vmem:[%s1 + $0x1c8] sm:$0xff]
  %v95 = vld [vmem:[%s1 + $0x1d0] sm:$0xff]
  %v96 = vld [vmem:[%s1 + $0x1d8] sm:$0xff]
  %v97 = vld [vmem:[%s1 + $0x1e0] sm:$0xff]
  %v98 = vld [vmem:[%s1 + $0x1e8] sm:$0xff]
  %v99 = vld [vmem:[%s1 + $0x1f0] sm:$0xff]
  %v100 = vld [vmem:[%s1 + $0x1f8] sm:$0xff]
  %v101 = vld [vmem:[%s1 + $0x200] sm:$0xff]
  %v102 = vld [vmem:[%s1 + $0x208] sm:$0xff]
  %v103 = vld [vmem:[%s1 + $0x210] sm:$0xff]
  %v104 = vld [vmem:[%s1 + $0x218] sm:$0xff]
  %v105 = vld [vmem:[%s1 + $0x220] sm:$0xff]
  %v106 = vld [vmem:[%s1 + $0x228] sm:$0xff]
  %v107 = vld [vmem:[%s1 + $0x230] sm:$0xff]
  %v108 = vld [vmem:[%s1 + $0x238] sm:$0xff]
  %v109 = vld [vmem:[%s1 + $0x240] sm:$0xff]
  %v110 = vld [vmem:[%s1 + $0x248] sm:$0xff]
  %v111 = vld [vmem:[%s1 + $0x250] sm:$0xff]
  %v112 = vld [vmem:[%s1 + $0x258] sm:$0xff]
  %v113 = vld [vmem:[%s1 + $0x260] sm:$0xff]
  %v114 = vld [vmem:[%s1 + $0x268] sm:$0xff]
  %v115 = vld [vmem:[%s1 + $0x270] sm:$0xff]
  %v116 = vld [vmem:[%s1 + $0x278] sm:$0xff]
  %v117 = vld [vmem:[%s1 + $0x280] sm:$0xff]
  %v118 = vld [vmem:[%s1 + $0x288] sm:$0xff]
  %v119 = vld [vmem:[%s1 + $0x290] sm:$0xff]
  %v120 = vld [vmem:[%s1 + $0x298] sm:$0xff]
  %v121 = vld [vmem:[%s1 + $0x2a0] sm:$0xff]
  %v122 = vld [vmem:[%s1 + $0x2a8] sm:$0xff]
  %v123 = vld [vmem:[%s1 + $0x2b0] sm:$0xff]
  %v124 = vld [vmem:[%s1 + $0x2b8] sm:$0xff]
  %v125 = vld [vmem:[%s1 + $0x2c0] sm:$0xff]
  %v126 = vld [vmem:[%s1 + $0x2c8] sm:$0xff]
  %v127 = vld [vmem:[%s1 + $0x2d0] sm:$0xff]
  %v128 = vld [vmem:[%s1 + $0x2d8] sm:$0xff]
  %v129 = vld [vmem:[%s1 + $0x2e0] sm:$0xff]
  %v130 = vld [vmem:[%s1 + $0x2e8] sm:$0xff]
  %v131 = vld [vmem:[%s1 + $0x2f0] sm:$0xff]
  %v132 = vld [vmem:[%s1 + $0x2f8] sm:$0xff]
  %v133 = vld [vmem:[%s1 + $0x300] sm:$0xff]
  %v134 = vld [vmem:[%s1 + $0x308] sm:$0xff]
  %v135 = vld [vmem:[%s1 + $0x310] sm:$0xff]
  %v136 = vld [vmem:[%s1 + $0x318] sm:$0xff]
  %v137 = vld [vmem:[%s1 + $0x320] sm:$0xff]
  %v138 = vld [vmem:[%s1 + $0x328] sm:$0xff]
  %v139 = vld [vmem:[%s1 + $0x330] sm:$0xff]
  %v140 = vld [vmem:[%s1 + $0x338] sm:$0xff]
  %v141 = vld [vmem:[%s1 + $0x340] sm:$0xff]
  %v142 = vld [vmem:[%s1 + $0x348] sm:$0xff]
  %v143 = vld [vmem:[%s1 + $0x350] sm:$0xff]
  %v144 = vld [vmem:[%s1 + $0x358] sm:$0xff]
  %v145 = vld [vmem:[%s1 + $0x360] sm:$0xff]
  %v146 = vld [vmem:[%s1 + $0x368] sm:$0xff]
  %v147 = vld [vmem:[%s1 + $0x370] sm:$0xff]
  %v148 = vld [vmem:[%s1 + $0x378] sm:$0xff]
  %v149 = vld [vmem:[%s1 + $0x380] sm:$0xff]
  %v150 = vld [vmem:[%s1 + $0x388] sm:$0xff]
  %v151 = vld [vmem:[%s1 + $0x390] sm:$0xff]
  %v152 = vld [vmem:[%s1 + $0x398] sm:$0xff]
  %v153 = vld [vmem:[%s1 + $0x3a0] sm:$0xff]
  %v154 = vld [vmem:[%s1 + $0x3a8] sm:$0xff]
  %v155 = vld [vmem:[%s1 + $0x3b0] sm:$0xff]
  %v156 = vld [vmem:[%s1 + $0x3b8] sm:$0xff]
  %v157 = vld [vmem:[%s1 + $0x3c0] sm:$0xff]
  %v158 = vld [vmem:[%s1 + $0x3c8] sm:$0xff]
  %v159 = vld [vmem:[%s1 + $0x3d0] sm:$0xff]
  %v160 = vld [vmem:[%s1 + $0x3d8] sm:$0xff]
  %v161 = vld [vmem:[%s1 + $0x3e0] sm:$0xff]
  %v162 = vld [vmem:[%s1 + $0x3e8] sm:$0xff]
  %v163 = vld [vmem:[%s1 + $0x3f0] sm:$0xff]
  %v164 = vld [vmem:[%s1 + $0x3f8] sm:$0xff]
  %v165 = vld [vmem:[%s1 + $0x400] sm:$0xff]
  %v166 = vld [vmem:[%s1 + $0x408] sm:$0xff]
  %v167 = vld [vmem:[%s1 + $0x410] sm:$0xff]
  %v168 = vld [vmem:[%s1 + $0x418] sm:$0xff]
  %v169 = vld [vmem:[%s1 + $0x420] sm:$0xff]
  %v170 = vld [vmem:[%s1 + $0x428] sm:$0xff]
  %v171 = vld [vmem:[%s1 + $0x430] sm:$0xff]
  %v172 = vld [vmem:[%s1 + $0x438] sm:$0xff]
  %v173 = vld [vmem:[%s1 + $0x440] sm:$0xff]
  %v174 = vld [vmem:[%s1 + $0x448] sm:$0xff]
  %v175 = vld [vmem:[%s1 + $0x450] sm:$0xff]
  %v176 = vld [vmem:[%s1 + $0x458] sm:$0xff]
  %v177 = vld [vmem:[%s1 + $0x460] sm:$0xff]
  %v178 = vld [vmem:[%s1 + $0x468] sm:$0xff]
  %v179 = vld [vmem:[%s1 + $0x470] sm:$0xff]
  %v180 = vld [vmem:[%s1 + $0x478] sm:$0xff]
  %v181 = vld [vmem:[%s1 + $0x480] sm:$0xff]
  %v182 = vld [vmem:[%s1 + $0x488] sm:$0xff]
  %v183 = vld [vmem:[%s1 + $0x490] sm:$0xff]
  %v184 = vld [vmem:[%s1 + $0x498] sm:$0xff]
  %v185 = vld [vmem:[%s1 + $0x4a0] sm:$0xff]
  %v186 = vld [vmem:[%s1 + $0x4a8] sm:$0xff]
  %v187 = vld [vmem:[%s1 + $0x4b0] sm:$0xff]
  %v188 = vld [vmem:[%s1 + $0x4b8] sm:$0xff]
  %v189 = vld [vmem:[%s1 + $0x4c0] sm:$0xff]
  %v190 = vld [vmem:[%s1 + $0x4c8] sm:$0xff]
  %v191 = vld [vmem:[%s1 + $0x4d0] sm:$0xff]
  %v192 = vld [vmem:[%s1 + $0x4d8] sm:$0xff]
  %v193 = vld [vmem:[%s1 + $0x4e0] sm:$0xff]
  %v194 = vld [vmem:[%s1 + $0x4e8] sm:$0xff]
  %v195 = vld [vmem:[%s1 + $0x4f0] sm:$0xff]
  %v196 = vld [vmem:[%s1 + $0x4f8] sm:$0xff]
  %v197 = vld [vmem:[%s1 + $0x500] sm:$0xff]
  %v198 = vld [vmem:[%s1 + $0x508] sm:$0xff]
  %v199 = vld [vmem:[%s1 + $0x510] sm:$0xff]
  %v200 = vld [vmem:[%s1 + $0x518] sm:$0xff]
  %v201 = vld [vmem:[%s1 + $0x520] sm:$0xff]
  %v202 = vld [vmem:[%s1 + $0x528] sm:$0xff]
  %v203 = vld [vmem:[%s1 + $0x530] sm:$0xff]
  %v204 = vld [vmem:[%s1 + $0x538] sm:$0xff]
  %v205 = vld [vmem:[%s1 + $0x540] sm:$0xff]
  %v206 = vld [vmem:[%s1 + $0x548] sm:$0xff]
  %v207 = vld [vmem:[%s1 + $0x550] sm:$0xff]
  %v208 = vld [vmem:[%s1 + $0x558] sm:$0xff]
  %v209 = vld [vmem:[%s1 + $0x560] sm:$0xff]
  %v210 = vld [vmem:[%s1 + $0x568] sm:$0xff]
  %v211 = vld [vmem:[%s1 + $0x570] sm:$0xff]
  %v212 = vld [vmem:[%s1 + $0x578] sm:$0xff]
  %v213 = vld [vmem:[%s1 + $0x580] sm:$0xff]
  %v214 = vld [vmem:[%s1 + $0x588] sm:$0xff]
  %v215 = vld [vmem:[%s1 + $0x590] sm:$0xff]
  %v216 = vld [vmem:[%s1 + $0x598] sm:$0xff]
  %v217 = vld [vmem:[%s1 + $0x5a0] sm:$0xff]
  %v218 = vld [vmem:[%s1 + $0x5a8] sm:$0xff]
  %v219 = vld [vmem:[%s1 + $0x5b0] sm:$0xff]
  %v220 = vld [vmem:[%s1 + $0x5b8] sm:$0xff]
  %v221 = vld [vmem:[%s1 + $0x5c0] sm:$0xff]
  %v222 = vld [vmem:[%s1 + $0x5c8] sm:$0xff]
  %v223 = vld [vmem:[%s1 + $0x5d0] sm:$0xff]
  %v224 = vld [vmem:[%s1 + $0x5d8] sm:$0xff]
  %v225 = vld [vmem:[%s1 + $0x5e0] sm:$0xff]
  %v226 = vld [vmem:[%s1 + $0x5e8] sm:$0xff]
  %v227 = vld [vmem:[%s1 + $0x5f0] sm:$0xff]
  %v228 = vld [vmem:[%s1 + $0x5f8] sm:$0xff]
  %v229 = vld [vmem:[%s1 + $0x600] sm:$0xff]
  %v230 = vld [vmem:[%s1 + $0x608] sm:$0xff]
  %v231 = vld [vmem:[%s1 + $0x610] sm:$0xff]
  %v232 = vld [vmem:[%s1 + $0x618] sm:$0xff]
  %v233 = vld [vmem:[%s2] sm:$0x1]
  %v235 = vlaneseq
  %v236 = vshrl.u32 %v235, 7
  %v237 = vsub.s32 0, %v236
  %v238 = vrot.slane %v233, %v237
  %vm240 = vcmask 261120
  %v242 = vsel %vm240, %v36, 0
  %244 = vmatprep.subr.mxu0 0.0
  %245 = vmatpush1.msra.mxu0 %v52
  %246 = vmatprep.subr.mxu0 0.0
  %247 = vmatpush1.msra.mxu0 %v51
  %248 = vmatprep.subr.mxu0 0.0
  %249 = vmatpush1.msra.mxu0 %v50
  %250 = vmatprep.subr.mxu0 0.0
  %251 = vmatpush1.msra.mxu0 %v49
  %252 = vmatprep.subr.mxu0 0.0
  %253 = vmatpush1.msra.mxu0 %v48
  %254 = vmatprep.subr.mxu0 0.0
  %255 = vmatpush1.msra.mxu0 %v47
  %256 = vmatprep.subr.mxu0 0.0
  %257 = vmatpush1.msra.mxu0 %v46
  %258 = vmatprep.subr.mxu0 0.0
  %259 = vmatpush1.msra.mxu0 %v45
  %260 = vmatprep.subr.mxu0 0.0
  %261 = vmatpush1.msra.mxu0 %v44
  %262 = vmatprep.subr.mxu0 0.0
  %263 = vmatpush1.msra.mxu0 %v43
  %264 = vmatprep.subr.mxu0 0.0
  %265 = vmatpush1.msra.mxu0 %v42
  %266 = vmatprep.subr.mxu0 0.0
  %267 = vmatpush1.msra.mxu0 %v41
  %268 = vmatprep.subr.mxu0 0.0
  %269 = vmatpush1.msra.mxu0 %v40
  %270 = vmatprep.subr.mxu0 0.0
  %271 = vmatpush1.msra.mxu0 %v39
  %272 = vmatprep.subr.mxu0 0.0
  %273 = vmatpush1.msra.mxu0 %v38
  %274 = vmatprep.subr.mxu0 0.0
  %275 = vmatpush1.msra.mxu0 %v37
  %276 = vmatprep.subr.mxu0 0.0
  %277 = vmatpush2.msra.mxu0 %v68
  %278 = vmatprep.subr.mxu0 0.0
  %279 = vmatpush2.msra.mxu0 %v67
  %280 = vmatprep.subr.mxu0 0.0
  %281 = vmatpush2.msra.mxu0 %v66
  %282 = vmatprep.subr.mxu0 0.0
  %283 = vmatpush2.msra.mxu0 %v65
  %284 = vmatprep.subr.mxu0 0.0
  %285 = vmatpush2.msra.mxu0 %v64
  %286 = vmatprep.subr.mxu0 0.0
  %287 = vmatpush2.msra.mxu0 %v63
  %288 = vmatprep.subr.mxu0 0.0
  %289 = vmatpush2.msra.mxu0 %v62
  %290 = vmatprep.subr.mxu0 0.0
  %291 = vmatpush2.msra.mxu0 %v61
  %292 = vmatprep.subr.mxu0 0.0
  %293 = vmatpush2.msra.mxu0 %v60
  %294 = vmatprep.subr.mxu0 0.0
  %295 = vmatpush2.msra.mxu0 %v59
  %296 = vmatprep.subr.mxu0 0.0
  %297 = vmatpush2.msra.mxu0 %v58
  %298 = vmatprep.subr.mxu0 0.0
  %299 = vmatpush2.msra.mxu0 %v57
  %300 = vmatprep.subr.mxu0 0.0
  %301 = vmatpush2.msra.mxu0 %v56
  %302 = vmatprep.subr.mxu0 0.0
  %303 = vmatpush2.msra.mxu0 %v55
  %304 = vmatprep.subr.mxu0 0.0
  %305 = vmatpush2.msra.mxu0 %v54
  %306 = vmatprep.subr.mxu0 0.0
  %307 = vmatpush2.msra.mxu0 %v53
  %308 = vmatprep.mubr.f32.mxu0 %v25
  %309 = vmatmul.mubr.f32.gmra.mxu0 %v24
  %v310 = vpop.f32.mrf.mxu0
  %v311 = vadd.f32 %v238, %v310
  %v312 = vpop.f32.mrf.mxu0
  %313 = vdwg.mxu0
  %314 = vmatprep.subr.mxu0 0.0
  %315 = vmatpush1.msra.mxu0 %v84
  %316 = vmatprep.subr.mxu0 0.0
  %317 = vmatpush1.msra.mxu0 %v83
  %318 = vmatprep.subr.mxu0 0.0
  %319 = vmatpush1.msra.mxu0 %v82
  %320 = vmatprep.subr.mxu0 0.0
  %321 = vmatpush1.msra.mxu0 %v81
  %322 = vmatprep.subr.mxu0 0.0
  %323 = vmatpush1.msra.mxu0 %v80
  %324 = vmatprep.subr.mxu0 0.0
  %325 = vmatpush1.msra.mxu0 %v79
  %326 = vmatprep.subr.mxu0 0.0
  %327 = vmatpush1.msra.mxu0 %v78
  %328 = vmatprep.subr.mxu0 0.0
  %329 = vmatpush1.msra.mxu0 %v77
  %330 = vmatprep.subr.mxu0 0.0
  %331 = vmatpush1.msra.mxu0 %v76
  %332 = vmatprep.subr.mxu0 0.0
  %333 = vmatpush1.msra.mxu0 %v75
  %334 = vmatprep.subr.mxu0 0.0
  %335 = vmatpush1.msra.mxu0 %v74
  %336 = vmatprep.subr.mxu0 0.0
  %337 = vmatpush1.msra.mxu0 %v73
  %338 = vmatprep.subr.mxu0 0.0
  %339 = vmatpush1.msra.mxu0 %v72
  %340 = vmatprep.subr.mxu0 0.0
  %341 = vmatpush1.msra.mxu0 %v71
  %342 = vmatprep.subr.mxu0 0.0
  %343 = vmatpush1.msra.mxu0 %v70
  %344 = vmatprep.subr.mxu0 0.0
  %345 = vmatpush1.msra.mxu0 %v69
  %346 = vmatprep.subr.mxu0 0.0
  %347 = vmatpush2.msra.mxu0 %v100
  %348 = vmatprep.subr.mxu0 0.0
  %349 = vmatpush2.msra.mxu0 %v99
  %350 = vmatprep.subr.mxu0 0.0
  %351 = vmatpush2.msra.mxu0 %v98
  %352 = vmatprep.subr.mxu0 0.0
  %353 = vmatpush2.msra.mxu0 %v97
  %354 = vmatprep.subr.mxu0 0.0
  %355 = vmatpush2.msra.mxu0 %v96
  %356 = vmatprep.subr.mxu0 0.0
  %357 = vmatpush2.msra.mxu0 %v95
  %358 = vmatprep.subr.mxu0 0.0
  %359 = vmatpush2.msra.mxu0 %v94
  %360 = vmatprep.subr.mxu0 0.0
  %361 = vmatpush2.msra.mxu0 %v93
  %362 = vmatprep.subr.mxu0 0.0
  %363 = vmatpush2.msra.mxu0 %v92
  %364 = vmatprep.subr.mxu0 0.0
  %365 = vmatpush2.msra.mxu0 %v91
  %366 = vmatprep.subr.mxu0 0.0
  %367 = vmatpush2.msra.mxu0 %v90
  %368 = vmatprep.subr.mxu0 0.0
  %369 = vmatpush2.msra.mxu0 %v89
  %370 = vmatprep.subr.mxu0 0.0
  %371 = vmatpush2.msra.mxu0 %v88
  %372 = vmatprep.subr.mxu0 0.0
  %373 = vmatpush2.msra.mxu0 %v87
  %374 = vmatprep.subr.mxu0 0.0
  %375 = vmatpush2.msra.mxu0 %v86
  %376 = vmatprep.subr.mxu0 0.0
  %377 = vmatpush2.msra.mxu0 %v85
  %378 = vmatprep.mubr.f32.mxu0 %v27
  %379 = vmatmul.mubr.f32.gmra.mxu0 %v26
  %v380 = vpop.f32.mrf.mxu0
  %v381 = vadd.f32 %v311, %v380
  %v382 = vpop.f32.mrf.mxu0
  %383 = vdwg.mxu0
  %384 = vmatprep.subr.mxu0 0.0
  %385 = vmatpush1.msra.mxu0 %v116
  %386 = vmatprep.subr.mxu0 0.0
  %387 = vmatpush1.msra.mxu0 %v115
  %388 = vmatprep.subr.mxu0 0.0
  %389 = vmatpush1.msra.mxu0 %v114
  %390 = vmatprep.subr.mxu0 0.0
  %391 = vmatpush1.msra.mxu0 %v113
  %392 = vmatprep.subr.mxu0 0.0
  %393 = vmatpush1.msra.mxu0 %v112
  %394 = vmatprep.subr.mxu0 0.0
  %395 = vmatpush1.msra.mxu0 %v111
  %396 = vmatprep.subr.mxu0 0.0
  %397 = vmatpush1.msra.mxu0 %v110
  %398 = vmatprep.subr.mxu0 0.0
  %399 = vmatpush1.msra.mxu0 %v109
  %400 = vmatprep.subr.mxu0 0.0
  %401 = vmatpush1.msra.mxu0 %v108
  %402 = vmatprep.subr.mxu0 0.0
  %403 = vmatpush1.msra.mxu0 %v107
  %404 = vmatprep.subr.mxu0 0.0
  %405 = vmatpush1.msra.mxu0 %v106
  %406 = vmatprep.subr.mxu0 0.0
  %407 = vmatpush1.msra.mxu0 %v105
  %408 = vmatprep.subr.mxu0 0.0
  %409 = vmatpush1.msra.mxu0 %v104
  %410 = vmatprep.subr.mxu0 0.0
  %411 = vmatpush1.msra.mxu0 %v103
  %412 = vmatprep.subr.mxu0 0.0
  %413 = vmatpush1.msra.mxu0 %v102
  %414 = vmatprep.subr.mxu0 0.0
  %415 = vmatpush1.msra.mxu0 %v101
  %416 = vmatprep.subr.mxu0 0.0
  %417 = vmatpush2.msra.mxu0 %v132
  %418 = vmatprep.subr.mxu0 0.0
  %419 = vmatpush2.msra.mxu0 %v131
  %420 = vmatprep.subr.mxu0 0.0
  %421 = vmatpush2.msra.mxu0 %v130
  %422 = vmatprep.subr.mxu0 0.0
  %423 = vmatpush2.msra.mxu0 %v129
  %424 = vmatprep.subr.mxu0 0.0
  %425 = vmatpush2.msra.mxu0 %v128
  %426 = vmatprep.subr.mxu0 0.0
  %427 = vmatpush2.msra.mxu0 %v127
  %428 = vmatprep.subr.mxu0 0.0
  %429 = vmatpush2.msra.mxu0 %v126
  %430 = vmatprep.subr.mxu0 0.0
  %431 = vmatpush2.msra.mxu0 %v125
  %432 = vmatprep.subr.mxu0 0.0
  %433 = vmatpush2.msra.mxu0 %v124
  %434 = vmatprep.subr.mxu0 0.0
  %435 = vmatpush2.msra.mxu0 %v123
  %436 = vmatprep.subr.mxu0 0.0
  %437 = vmatpush2.msra.mxu0 %v122
  %438 = vmatprep.subr.mxu0 0.0
  %439 = vmatpush2.msra.mxu0 %v121
  %440 = vmatprep.subr.mxu0 0.0
  %441 = vmatpush2.msra.mxu0 %v120
  %442 = vmatprep.subr.mxu0 0.0
  %443 = vmatpush2.msra.mxu0 %v119
  %444 = vmatprep.subr.mxu0 0.0
  %445 = vmatpush2.msra.mxu0 %v118
  %446 = vmatprep.subr.mxu0 0.0
  %447 = vmatpush2.msra.mxu0 %v117
  %448 = vmatprep.mubr.f32.mxu0 %v29
  %449 = vmatmul.mubr.f32.gmra.mxu0 %v28
  %v450 = vpop.f32.mrf.mxu0
  %v451 = vadd.f32 %v381, %v450
  %v452 = vpop.f32.mrf.mxu0
  %453 = vdwg.mxu0
  %454 = vmatprep.subr.mxu0 0.0
  %455 = vmatpush1.msra.mxu0 %v148
  %456 = vmatprep.subr.mxu0 0.0
  %457 = vmatpush1.msra.mxu0 %v147
  %458 = vmatprep.subr.mxu0 0.0
  %459 = vmatpush1.msra.mxu0 %v146
  %460 = vmatprep.subr.mxu0 0.0
  %461 = vmatpush1.msra.mxu0 %v145
  %462 = vmatprep.subr.mxu0 0.0
  %463 = vmatpush1.msra.mxu0 %v144
  %464 = vmatprep.subr.mxu0 0.0
  %465 = vmatpush1.msra.mxu0 %v143
  %466 = vmatprep.subr.mxu0 0.0
  %467 = vmatpush1.msra.mxu0 %v142
  %468 = vmatprep.subr.mxu0 0.0
  %469 = vmatpush1.msra.mxu0 %v141
  %470 = vmatprep.subr.mxu0 0.0
  %471 = vmatpush1.msra.mxu0 %v140
  %472 = vmatprep.subr.mxu0 0.0
  %473 = vmatpush1.msra.mxu0 %v139
  %474 = vmatprep.subr.mxu0 0.0
  %475 = vmatpush1.msra.mxu0 %v138
  %476 = vmatprep.subr.mxu0 0.0
  %477 = vmatpush1.msra.mxu0 %v137
  %478 = vmatprep.subr.mxu0 0.0
  %479 = vmatpush1.msra.mxu0 %v136
  %480 = vmatprep.subr.mxu0 0.0
  %481 = vmatpush1.msra.mxu0 %v135
  %482 = vmatprep.subr.mxu0 0.0
  %483 = vmatpush1.msra.mxu0 %v134
  %484 = vmatprep.subr.mxu0 0.0
  %485 = vmatpush1.msra.mxu0 %v133
  %486 = vmatprep.subr.mxu0 0.0
  %487 = vmatpush2.msra.mxu0 %v164
  %488 = vmatprep.subr.mxu0 0.0
  %489 = vmatpush2.msra.mxu0 %v163
  %490 = vmatprep.subr.mxu0 0.0
  %491 = vmatpush2.msra.mxu0 %v162
  %492 = vmatprep.subr.mxu0 0.0
  %493 = vmatpush2.msra.mxu0 %v161
  %494 = vmatprep.subr.mxu0 0.0
  %495 = vmatpush2.msra.mxu0 %v160
  %496 = vmatprep.subr.mxu0 0.0
  %497 = vmatpush2.msra.mxu0 %v159
  %498 = vmatprep.subr.mxu0 0.0
  %499 = vmatpush2.msra.mxu0 %v158
  %500 = vmatprep.subr.mxu0 0.0
  %501 = vmatpush2.msra.mxu0 %v157
  %502 = vmatprep.subr.mxu0 0.0
  %503 = vmatpush2.msra.mxu0 %v156
  %504 = vmatprep.subr.mxu0 0.0
  %505 = vmatpush2.msra.mxu0 %v155
  %506 = vmatprep.subr.mxu0 0.0
  %507 = vmatpush2.msra.mxu0 %v154
  %508 = vmatprep.subr.mxu0 0.0
  %509 = vmatpush2.msra.mxu0 %v153
  %510 = vmatprep.subr.mxu0 0.0
  %511 = vmatpush2.msra.mxu0 %v152
  %512 = vmatprep.subr.mxu0 0.0
  %513 = vmatpush2.msra.mxu0 %v151
  %514 = vmatprep.subr.mxu0 0.0
  %515 = vmatpush2.msra.mxu0 %v150
  %516 = vmatprep.subr.mxu0 0.0
  %517 = vmatpush2.msra.mxu0 %v149
  %518 = vmatprep.mubr.f32.mxu0 %v31
  %519 = vmatmul.mubr.f32.gmra.mxu0 %v30
  %v520 = vpop.f32.mrf.mxu0
  %v521 = vadd.f32 %v451, %v520
  %v522 = vpop.f32.mrf.mxu0
  %523 = vdwg.mxu0
  %524 = vmatprep.subr.mxu0 0.0
  %525 = vmatpush1.msra.mxu0 %v180
  %526 = vmatprep.subr.mxu0 0.0
  %527 = vmatpush1.msra.mxu0 %v179
  %528 = vmatprep.subr.mxu0 0.0
  %529 = vmatpush1.msra.mxu0 %v178
  %530 = vmatprep.subr.mxu0 0.0
  %531 = vmatpush1.msra.mxu0 %v177
  %532 = vmatprep.subr.mxu0 0.0
  %533 = vmatpush1.msra.mxu0 %v176
  %534 = vmatprep.subr.mxu0 0.0
  %535 = vmatpush1.msra.mxu0 %v175
  %536 = vmatprep.subr.mxu0 0.0
  %537 = vmatpush1.msra.mxu0 %v174
  %538 = vmatprep.subr.mxu0 0.0
  %539 = vmatpush1.msra.mxu0 %v173
  %540 = vmatprep.subr.mxu0 0.0
  %541 = vmatpush1.msra.mxu0 %v172
  %542 = vmatprep.subr.mxu0 0.0
  %543 = vmatpush1.msra.mxu0 %v171
  %544 = vmatprep.subr.mxu0 0.0
  %545 = vmatpush1.msra.mxu0 %v170
  %546 = vmatprep.subr.mxu0 0.0
  %547 = vmatpush1.msra.mxu0 %v169
  %548 = vmatprep.subr.mxu0 0.0
  %549 = vmatpush1.msra.mxu0 %v168
  %550 = vmatprep.subr.mxu0 0.0
  %551 = vmatpush1.msra.mxu0 %v167
  %552 = vmatprep.subr.mxu0 0.0
  %553 = vmatpush1.msra.mxu0 %v166
  %554 = vmatprep.subr.mxu0 0.0
  %555 = vmatpush1.msra.mxu0 %v165
  %556 = vmatprep.subr.mxu0 0.0
  %557 = vmatpush2.msra.mxu0 %v196
  %558 = vmatprep.subr.mxu0 0.0
  %559 = vmatpush2.msra.mxu0 %v195
  %560 = vmatprep.subr.mxu0 0.0
  %561 = vmatpush2.msra.mxu0 %v194
  %562 = vmatprep.subr.mxu0 0.0
  %563 = vmatpush2.msra.mxu0 %v193
  %564 = vmatprep.subr.mxu0 0.0
  %565 = vmatpush2.msra.mxu0 %v192
  %566 = vmatprep.subr.mxu0 0.0
  %567 = vmatpush2.msra.mxu0 %v191
  %568 = vmatprep.subr.mxu0 0.0
  %569 = vmatpush2.msra.mxu0 %v190
  %570 = vmatprep.subr.mxu0 0.0
  %571 = vmatpush2.msra.mxu0 %v189
  %572 = vmatprep.subr.mxu0 0.0
  %573 = vmatpush2.msra.mxu0 %v188
  %574 = vmatprep.subr.mxu0 0.0
  %575 = vmatpush2.msra.mxu0 %v187
  %576 = vmatprep.subr.mxu0 0.0
  %577 = vmatpush2.msra.mxu0 %v186
  %578 = vmatprep.subr.mxu0 0.0
  %579 = vmatpush2.msra.mxu0 %v185
  %580 = vmatprep.subr.mxu0 0.0
  %581 = vmatpush2.msra.mxu0 %v184
  %582 = vmatprep.subr.mxu0 0.0
  %583 = vmatpush2.msra.mxu0 %v183
  %584 = vmatprep.subr.mxu0 0.0
  %585 = vmatpush2.msra.mxu0 %v182
  %586 = vmatprep.subr.mxu0 0.0
  %587 = vmatpush2.msra.mxu0 %v181
  %588 = vmatprep.mubr.f32.mxu0 %v33
  %589 = vmatmul.mubr.f32.gmra.mxu0 %v32
  %v590 = vpop.f32.mrf.mxu0
  %v591 = vadd.f32 %v521, %v590
  %v592 = vpop.f32.mrf.mxu0
  %593 = vdwg.mxu0
  %594 = vmatprep.subr.mxu0 0.0
  %595 = vmatpush1.msra.mxu0 %v212
  %596 = vmatprep.subr.mxu0 0.0
  %597 = vmatpush1.msra.mxu0 %v211
  %598 = vmatprep.subr.mxu0 0.0
  %599 = vmatpush1.msra.mxu0 %v210
  %600 = vmatprep.subr.mxu0 0.0
  %601 = vmatpush1.msra.mxu0 %v209
  %602 = vmatprep.subr.mxu0 0.0
  %603 = vmatpush1.msra.mxu0 %v208
  %604 = vmatprep.subr.mxu0 0.0
  %605 = vmatpush1.msra.mxu0 %v207
  %606 = vmatprep.subr.mxu0 0.0
  %607 = vmatpush1.msra.mxu0 %v206
  %608 = vmatprep.subr.mxu0 0.0
  %609 = vmatpush1.msra.mxu0 %v205
  %610 = vmatprep.subr.mxu0 0.0
  %611 = vmatpush1.msra.mxu0 %v204
  %612 = vmatprep.subr.mxu0 0.0
  %613 = vmatpush1.msra.mxu0 %v203
  %614 = vmatprep.subr.mxu0 0.0
  %615 = vmatpush1.msra.mxu0 %v202
  %616 = vmatprep.subr.mxu0 0.0
  %617 = vmatpush1.msra.mxu0 %v201
  %618 = vmatprep.subr.mxu0 0.0
  %619 = vmatpush1.msra.mxu0 %v200
  %620 = vmatprep.subr.mxu0 0.0
  %621 = vmatpush1.msra.mxu0 %v199
  %622 = vmatprep.subr.mxu0 0.0
  %623 = vmatpush1.msra.mxu0 %v198
  %624 = vmatprep.subr.mxu0 0.0
  %625 = vmatpush1.msra.mxu0 %v197
  %626 = vmatprep.subr.mxu0 0.0
  %627 = vmatpush2.msra.mxu0 %v228
  %628 = vmatprep.subr.mxu0 0.0
  %629 = vmatpush2.msra.mxu0 %v227
  %630 = vmatprep.subr.mxu0 0.0
  %631 = vmatpush2.msra.mxu0 %v226
  %632 = vmatprep.subr.mxu0 0.0
  %633 = vmatpush2.msra.mxu0 %v225
  %634 = vmatprep.subr.mxu0 0.0
  %635 = vmatpush2.msra.mxu0 %v224
  %636 = vmatprep.subr.mxu0 0.0
  %637 = vmatpush2.msra.mxu0 %v223
  %638 = vmatprep.subr.mxu0 0.0
  %639 = vmatpush2.msra.mxu0 %v222
  %640 = vmatprep.subr.mxu0 0.0
  %641 = vmatpush2.msra.mxu0 %v221
  %642 = vmatprep.subr.mxu0 0.0
  %643 = vmatpush2.msra.mxu0 %v220
  %644 = vmatprep.subr.mxu0 0.0
  %645 = vmatpush2.msra.mxu0 %v219
  %646 = vmatprep.subr.mxu0 0.0
  %647 = vmatpush2.msra.mxu0 %v218
  %648 = vmatprep.subr.mxu0 0.0
  %649 = vmatpush2.msra.mxu0 %v217
  %650 = vmatprep.subr.mxu0 0.0
  %651 = vmatpush2.msra.mxu0 %v216
  %652 = vmatprep.subr.mxu0 0.0
  %653 = vmatpush2.msra.mxu0 %v215
  %654 = vmatprep.subr.mxu0 0.0
  %655 = vmatpush2.msra.mxu0 %v214
  %656 = vmatprep.subr.mxu0 0.0
  %657 = vmatpush2.msra.mxu0 %v213
  %658 = vmatprep.mubr.f32.mxu0 %v35
  %659 = vmatmul.mubr.f32.gmra.mxu0 %v34
  %v660 = vpop.f32.mrf.mxu0
  %v661 = vadd.f32 %v591, %v660
  %v662 = vpop.f32.mrf.mxu0
  %663 = vdwg.mxu0
  %664 = vmatprep.subr.mxu0 0.0
  %665 = vmatpush1.msra.mxu0 0.0
  %666 = vmatprep.subr.mxu0 0.0
  %667 = vmatpush1.msra.mxu0 0.0
  %668 = vmatprep.subr.mxu0 0.0
  %669 = vmatpush1.msra.mxu0 0.0
  %670 = vmatprep.subr.mxu0 0.0
  %671 = vmatpush1.msra.mxu0 0.0
  %672 = vmatprep.subr.mxu0 0.0
  %673 = vmatpush1.msra.mxu0 0.0
  %674 = vmatprep.subr.mxu0 0.0
  %675 = vmatpush1.msra.mxu0 0.0
  %676 = vmatprep.subr.mxu0 0.0
  %677 = vmatpush1.msra.mxu0 0.0
  %678 = vmatprep.subr.mxu0 0.0
  %679 = vmatpush1.msra.mxu0 0.0
  %680 = vmatprep.subr.mxu0 0.0
  %681 = vmatpush1.msra.mxu0 0.0
  %682 = vmatprep.subr.mxu0 0.0
  %683 = vmatpush1.msra.mxu0 0.0
  %684 = vmatprep.subr.mxu0 0.0
  %685 = vmatpush1.msra.mxu0 0.0
  %686 = vmatprep.subr.mxu0 0.0
  %687 = vmatpush1.msra.mxu0 0.0
  %688 = vmatprep.subr.mxu0 0.0
  %689 = vmatpush1.msra.mxu0 %v232
  %690 = vmatprep.subr.mxu0 0.0
  %691 = vmatpush1.msra.mxu0 %v231
  %692 = vmatprep.subr.mxu0 0.0
  %693 = vmatpush1.msra.mxu0 %v230
  %694 = vmatprep.subr.mxu0 0.0
  %695 = vmatpush1.msra.mxu0 %v229
  %696 = vmatprep.subr.mxu0 0.0
  %697 = vmatpush2.msra.mxu0 0.0
  %698 = vmatprep.subr.mxu0 0.0
  %699 = vmatpush2.msra.mxu0 0.0
  %700 = vmatprep.subr.mxu0 0.0
  %701 = vmatpush2.msra.mxu0 0.0
  %702 = vmatprep.subr.mxu0 0.0
  %703 = vmatpush2.msra.mxu0 0.0
  %704 = vmatprep.subr.mxu0 0.0
  %705 = vmatpush2.msra.mxu0 0.0
  %706 = vmatprep.subr.mxu0 0.0
  %707 = vmatpush2.msra.mxu0 0.0
  %708 = vmatprep.subr.mxu0 0.0
  %709 = vmatpush2.msra.mxu0 0.0
  %710 = vmatprep.subr.mxu0 0.0
  %711 = vmatpush2.msra.mxu0 0.0
  %712 = vmatprep.subr.mxu0 0.0
  %713 = vmatpush2.msra.mxu0 0.0
  %714 = vmatprep.subr.mxu0 0.0
  %715 = vmatpush2.msra.mxu0 0.0
  %716 = vmatprep.subr.mxu0 0.0
  %717 = vmatpush2.msra.mxu0 0.0
  %718 = vmatprep.subr.mxu0 0.0
  %719 = vmatpush2.msra.mxu0 0.0
  %720 = vmatprep.subr.mxu0 0.0
  %721 = vmatpush2.msra.mxu0 0.0
  %722 = vmatprep.subr.mxu0 0.0
  %723 = vmatpush2.msra.mxu0 0.0
  %724 = vmatprep.subr.mxu0 0.0
  %725 = vmatpush2.msra.mxu0 0.0
  %726 = vmatprep.subr.mxu0 0.0
  %727 = vmatpush2.msra.mxu0 0.0
  %728 = vmatprep.mubr.f32.mxu0 0.0
  %729 = vmatmul.mubr.f32.gmra.mxu0 %v242
  %v730 = vpop.f32.mrf.mxu0
  %v731 = vadd.f32 %v661, %v730
  %v732 = vpop.f32.mrf.mxu0
  %733 = vdwg.mxu0
  %v734 = vmax.f32 %v731, 0.0
  %vm735 = vcmask 523264
  %736 = vst.msk [vmem:[%s5] sm:$0xff] %vm735, %v734
  %v737 = vld [vmem:[%s3] sm:$0xff]
  %v738 = vld [vmem:[%s3 + $0x8] sm:$0xff]
  %v739 = vld [vmem:[%s3 + $0x10] sm:$0xff]
  %v740 = vld [vmem:[%s3 + $0x18] sm:$0xff]
  %v741 = vld [vmem:[%s3 + $0x20] sm:$0xff]
  %v742 = vld [vmem:[%s3 + $0x28] sm:$0xff]
  %v743 = vld [vmem:[%s3 + $0x30] sm:$0xff]
  %v744 = vld [vmem:[%s3 + $0x38] sm:$0xff]
  %v745 = vld [vmem:[#allocation2] sm:$0x1]
  %v747 = vlaneseq
  %v748 = vshrl.u32 %v747, 7
  %v749 = vsub.s32 0, %v748
  %v750 = vrot.slane %v745, %v749
  %v753 = vsel %vm735, %v734, 0
  %755 = vmatprep.subr.mxu0 0.0
  %756 = vmatpush1.msra.mxu0 0.0
  %757 = vmatprep.subr.mxu0 0.0
  %758 = vmatpush1.msra.mxu0 0.0
  %759 = vmatprep.subr.mxu0 0.0
  %760 = vmatpush1.msra.mxu0 0.0
  %761 = vmatprep.subr.mxu0 0.0
  %762 = vmatpush1.msra.mxu0 0.0
  %763 = vmatprep.subr.mxu0 0.0
  %764 = vmatpush1.msra.mxu0 0.0
  %765 = vmatprep.subr.mxu0 0.0
  %766 = vmatpush1.msra.mxu0 0.0
  %767 = vmatprep.subr.mxu0 0.0
  %768 = vmatpush1.msra.mxu0 0.0
  %769 = vmatprep.subr.mxu0 0.0
  %770 = vmatpush1.msra.mxu0 0.0
  %771 = vmatprep.subr.mxu0 0.0
  %772 = vmatpush1.msra.mxu0 %v744
  %773 = vmatprep.subr.mxu0 0.0
  %774 = vmatpush1.msra.mxu0 %v743
  %775 = vmatprep.subr.mxu0 0.0
  %776 = vmatpush1.msra.mxu0 %v742
  %777 = vmatprep.subr.mxu0 0.0
  %778 = vmatpush1.msra.mxu0 %v741
  %779 = vmatprep.subr.mxu0 0.0
  %780 = vmatpush1.msra.mxu0 %v740
  %781 = vmatprep.subr.mxu0 0.0
  %782 = vmatpush1.msra.mxu0 %v739
  %783 = vmatprep.subr.mxu0 0.0
  %784 = vmatpush1.msra.mxu0 %v738
  %785 = vmatprep.subr.mxu0 0.0
  %786 = vmatpush1.msra.mxu0 %v737
  %787 = vmatprep.subr.mxu0 0.0
  %788 = vmatpush2.msra.mxu0 0.0
  %789 = vmatprep.subr.mxu0 0.0
  %790 = vmatpush2.msra.mxu0 0.0
  %791 = vmatprep.subr.mxu0 0.0
  %792 = vmatpush2.msra.mxu0 0.0
  %793 = vmatprep.subr.mxu0 0.0
  %794 = vmatpush2.msra.mxu0 0.0
  %795 = vmatprep.subr.mxu0 0.0
  %796 = vmatpush2.msra.mxu0 0.0
  %797 = vmatprep.subr.mxu0 0.0
  %798 = vmatpush2.msra.mxu0 0.0
  %799 = vmatprep.subr.mxu0 0.0
  %800 = vmatpush2.msra.mxu0 0.0
  %801 = vmatprep.subr.mxu0 0.0
  %802 = vmatpush2.msra.mxu0 0.0
  %803 = vmatprep.subr.mxu0 0.0
  %804 = vmatpush2.msra.mxu0 0.0
  %805 = vmatprep.subr.mxu0 0.0
  %806 = vmatpush2.msra.mxu0 0.0
  %807 = vmatprep.subr.mxu0 0.0
  %808 = vmatpush2.msra.mxu0 0.0
  %809 = vmatprep.subr.mxu0 0.0
  %810 = vmatpush2.msra.mxu0 0.0
  %811 = vmatprep.subr.mxu0 0.0
  %812 = vmatpush2.msra.mxu0 0.0
  %813 = vmatprep.subr.mxu0 0.0
  %814 = vmatpush2.msra.mxu0 0.0
  %815 = vmatprep.subr.mxu0 0.0
  %816 = vmatpush2.msra.mxu0 0.0
  %817 = vmatprep.subr.mxu0 0.0
  %818 = vmatpush2.msra.mxu0 0.0
  %819 = vmatprep.mubr.f32.mxu0 0.0
  %820 = vmatmul.mubr.f32.gmra.mxu0 %v753
  %v821 = vpop.f32.mrf.mxu0
  %v822 = vadd.f32 %v750, %v821
  %v823 = vpop.f32.mrf.mxu0
  %824 = vdwg.mxu0
  %vm825 = vcmask 7168
  %826 = vst.msk [vmem:[%s6] sm:$0xff] %vm825, %v822
  // Predicated region
  $region22: #{cnnbase_forward.5} parent=0 // pred_check
    _
  $region23: #{cnnbase_forward.5} parent=0 // pred_check_branch
    %828 = sbr.rel (0) target = $region25
  $region24: #{cnnbase_forward.5} parent=0 // pred_region
    _
  $region25: #{cnnbase_forward.5} parent=0 // pred_fallthru
    _
  // Predicated region
  $region26: #{cnnbase_forward.5} parent=0 // pred_check
    _
  $region27: #{cnnbase_forward.5} parent=0 // pred_check_branch
    %830 = sbr.rel (0) target = $region29
  $region28: #{cnnbase_forward.5} parent=0 // pred_region
    _
  $region29: #{cnnbase_forward.5} parent=0 // pred_fallthru
    _
  // Predicated region
  $region30: #{cnnbase_forward.5} parent=0 // pred_check
    _
  $region31: #{cnnbase_forward.5} parent=0 // pred_check_branch
    %832 = sbr.rel (0) target = $region33
  $region32: #{cnnbase_forward.5} parent=0 // pred_region
    _
  $region33: #{cnnbase_forward.5} parent=0 // pred_fallthru
    _
  // Predicated region
  $region34: #{cnnbase_forward.5} parent=0 // pred_check
    _
  $region35: #{cnnbase_forward.5} parent=0 // pred_check_branch
    %834 = sbr.rel (0) target = $region37
  $region36: #{cnnbase_forward.5} parent=0 // pred_region
    _
  $region37: #{cnnbase_forward.5} parent=0 // pred_fallthru
    _

// kernel: cnnbase_forward.4
$region0: #{cnnbase_forward.4}
  #allocation0 [shape = 'u32[]', space=smem, size = 0x4, offset = 0x4, fixed_abs, tag = 'smem constant byte address 0x4 - core index']
  #allocation1 [shape = 'u32[144,128]{1,0:T(1,128)}', space=vmem, size = 0x12000, scoped, tag = 'internal scratch']
  #allocation2 [shape = 'f32[122,64]{1,0:T(8,128)}', space=vmem, size = 0x10000, scoped, tag = 'scratch operand']
  %s0 = inlined_call_operand.vmem [shape: f32[2,111,128], index: 0, kind: input, shape index: {}]
  %s1 = inlined_call_operand.vmem [shape: f32[4,128,64], index: 1, kind: input, shape index: {}]
  %s2 = inlined_call_operand.vmem [shape: f32[1,64], index: 2, kind: input, shape index: {}]
  %s3 = inlined_call_operand.vmem [shape: f32[9,64,32], index: 3, kind: input, shape index: {}]
  %s4 = inlined_call_operand.vmem [shape: f32[1,32], index: 4, kind: input, shape index: {}]
  %s5 = inlined_call_operand.vmem [shape: f32[2,100,32], index: 5, kind: output, shape index: {}]
  %s6 = sld [smem:[#allocation0]]
  $region53: #{cnnbase_forward.4} parent=0
    _
  %s8 = ssub.s32 1, %s6
  %s9 = scalar_select 0, %s8, %s6
  loop: start=0, step=1, limit=4
  $region2: #{cnnbase_forward.4} parent=0 // loop_pre_header
    _
  $region3: #{cnnbase_forward.4} parent=0 // loop_header
    %s11 = sphi 0, %s15
    %p12 = scmp.ge.s32.totalorder %s11, 4
    %s21 = sphi 0, %s23
    %s24 = sphi 0, %s21
    %s25 = sphi 0, %s24
    %s41 = sphi 0, %s25
    %s45 = sphi 0, %s45
    %s47 = sphi 0, %s45
    %s48 = sphi 0, %s47
    %s62 = sphi 0, %s48
    %s66 = sphi 0, %s66
    %s68 = sphi 0, %s66
    %s69 = sphi 0, %s68
    %s83 = sphi 0, %s69
    %s87 = sphi 0, %s87
    %s89 = sphi 0, %s87
    %s90 = sphi 0, %s89
    %s104 = sphi 0, %s90
    %s108 = sphi 0, %s108
    %s110 = sphi 0, %s108
    %s111 = sphi 0, %s110
    %s125 = sphi 0, %s111
    %s131 = sphi 0, %s133
    %s134 = sphi 0, %s131
    %s135 = sphi 0, %s134
    %s151 = sphi 0, %s135
  $region4: #{cnnbase_forward.4} parent=0 // loop_header_branch
    %14 = sbr.rel (%p12) target = $region8
  $region5: #{cnnbase_forward.4} parent=0 // loop_body
    %s16 = ssub.s32 %s11, 1
    %s17 = ssub.s32 %s11, 2
    %s18 = sadd.s32 %s11, 1
    %s19 = ssub.s32 %s11, %s18
    %p20 = scmp.eq.s32.totalorder %s19, 0
    %s22 = sadd.s32 %s21, 1
    %s23 = scalar_select %p20, %s21, %s22
    %p26 = pneg %p20
    %p27 = scmp.eq.s32.totalorder %s11, 1
    %p28 = por %p26, %p27
    %p29 = scmp.ne.s32.totalorder %s21, %s24
    %p30 = scmp.eq.s32.totalorder %s11, 0
    %p31 = por %p29, %p30
    %p32 = scmp.ne.s32.totalorder %s21, %s24
    %p33 = scmp.eq.s32.totalorder %s16, 1
    %p34 = por %p32, %p33
    %p35 = scmp.ne.s32.totalorder %s24, %s25
    %p36 = scmp.eq.s32.totalorder %s16, 0
    %p37 = por %p35, %p36
    %p38 = scmp.ne.s32.totalorder %s24, %s25
    %p39 = scmp.eq.s32.totalorder %s17, 1
    %p40 = por %p38, %p39
    %p42 = scmp.ne.s32.totalorder %s25, %s41
    %p43 = scmp.eq.s32.totalorder %s17, 0
    %p44 = por %p42, %p43
    %s46 = sadd.s32 %s45, 1
    %p49 = scmp.eq.s32.totalorder %s11, 1
    %p50 = scmp.ne.s32.totalorder %s45, %s47
    %p51 = scmp.eq.s32.totalorder %s11, 0
    %p52 = por %p50, %p51
    %p53 = scmp.ne.s32.totalorder %s45, %s47
    %p54 = scmp.eq.s32.totalorder %s16, 1
    %p55 = por %p53, %p54
    %p56 = scmp.ne.s32.totalorder %s47, %s48
    %p57 = scmp.eq.s32.totalorder %s16, 0
    %p58 = por %p56, %p57
    %p59 = scmp.ne.s32.totalorder %s47, %s48
    %p60 = scmp.eq.s32.totalorder %s17, 1
    %p61 = por %p59, %p60
    %p63 = scmp.ne.s32.totalorder %s48, %s62
    %p64 = scmp.eq.s32.totalorder %s17, 0
    %p65 = por %p63, %p64
    %s67 = sadd.s32 %s66, 1
    %p70 = scmp.eq.s32.totalorder %s11, 1
    %p71 = scmp.ne.s32.totalorder %s66, %s68
    %p72 = scmp.eq.s32.totalorder %s11, 0
    %p73 = por %p71, %p72
    %p74 = scmp.ne.s32.totalorder %s66, %s68
    %p75 = scmp.eq.s32.totalorder %s16, 1
    %p76 = por %p74, %p75
    %p77 = scmp.ne.s32.totalorder %s68, %s69
    %p78 = scmp.eq.s32.totalorder %s16, 0
    %p79 = por %p77, %p78
    %p80 = scmp.ne.s32.totalorder %s68, %s69
    %p81 = scmp.eq.s32.totalorder %s17, 1
    %p82 = por %p80, %p81
    %p84 = scmp.ne.s32.totalorder %s69, %s83
    %p85 = scmp.eq.s32.totalorder %s17, 0
    %p86 = por %p84, %p85
    %s88 = sadd.s32 %s87, 1
    %p91 = scmp.eq.s32.totalorder %s11, 1
    %p92 = scmp.ne.s32.totalorder %s87, %s89
    %p93 = scmp.eq.s32.totalorder %s11, 0
    %p94 = por %p92, %p93
    %p95 = scmp.ne.s32.totalorder %s87, %s89
    %p96 = scmp.eq.s32.totalorder %s16, 1
    %p97 = por %p95, %p96
    %p98 = scmp.ne.s32.totalorder %s89, %s90
    %p99 = scmp.eq.s32.totalorder %s16, 0
    %p100 = por %p98, %p99
    %p101 = scmp.ne.s32.totalorder %s89, %s90
    %p102 = scmp.eq.s32.totalorder %s17, 1
    %p103 = por %p101, %p102
    %p105 = scmp.ne.s32.totalorder %s90, %s104
    %p106 = scmp.eq.s32.totalorder %s17, 0
    %p107 = por %p105, %p106
    %s109 = sadd.s32 %s108, 1
    %p112 = scmp.eq.s32.totalorder %s11, 1
    %p113 = scmp.ne.s32.totalorder %s108, %s110
    %p114 = scmp.eq.s32.totalorder %s11, 0
    %p115 = por %p113, %p114
    %p116 = scmp.ne.s32.totalorder %s108, %s110
    %p117 = scmp.eq.s32.totalorder %s16, 1
    %p118 = por %p116, %p117
    %p119 = scmp.ne.s32.totalorder %s110, %s111
    %p120 = scmp.eq.s32.totalorder %s16, 0
    %p121 = por %p119, %p120
    %p122 = scmp.ne.s32.totalorder %s110, %s111
    %p123 = scmp.eq.s32.totalorder %s17, 1
    %p124 = por %p122, %p123
    %p126 = scmp.ne.s32.totalorder %s111, %s125
    %p127 = scmp.eq.s32.totalorder %s17, 0
    %p128 = por %p126, %p127
    %s129 = ssub.s32 %s11, %s18
    %p130 = scmp.eq.s32.totalorder %s129, 0
    %s132 = sadd.s32 %s131, 1
    %s133 = scalar_select %p130, %s131, %s132
    %p136 = pneg %p130
    %p137 = scmp.eq.s32.totalorder %s11, 1
    %p138 = por %p136, %p137
    %p139 = scmp.ne.s32.totalorder %s131, %s134
    %p140 = scmp.eq.s32.totalorder %s11, 0
    %p141 = por %p139, %p140
    %p142 = scmp.ne.s32.totalorder %s131, %s134
    %p143 = scmp.eq.s32.totalorder %s16, 1
    %p144 = por %p142, %p143
    %p145 = scmp.ne.s32.totalorder %s134, %s135
    %p146 = scmp.eq.s32.totalorder %s16, 0
    %p147 = por %p145, %p146
    %p148 = scmp.ne.s32.totalorder %s134, %s135
    %p149 = scmp.eq.s32.totalorder %s17, 1
    %p150 = por %p148, %p149
    %p152 = scmp.ne.s32.totalorder %s135, %s151
    %p153 = scmp.eq.s32.totalorder %s17, 0
    %p154 = por %p152, %p153
    %p155 = scmp.le.s32.totalorder 1, %s11
    %p156 = scmp.lt.s32.totalorder %s11, 3
    %p157 = pnand %p155, %p156
    %p158 = pneg %p157
    // Predicated region
    $region9: #{cnnbase_forward.4} parent=5 // pred_check
      _
    $region10: #{cnnbase_forward.4} parent=5 // pred_check_branch
      %160 = sbr.rel (%p157) target = $region12
    $region11: #{cnnbase_forward.4} parent=5 // pred_region
      %s161 = ssub.s32 %s11, 1
      // Predicated region
      $region13: #{cnnbase_forward.4} parent=11 // pred_check
        %p162 = pneg %p58
      $region14: #{cnnbase_forward.4} parent=11 // pred_check_branch
        %164 = sbr.rel (%p162) target = $region16
      $region15: #{cnnbase_forward.4} parent=11 // pred_region
        _
      $region16: #{cnnbase_forward.4} parent=11 // pred_fallthru
        _
      // Predicated region
      $region17: #{cnnbase_forward.4} parent=11 // pred_check
        %p165 = pneg %p79
      $region18: #{cnnbase_forward.4} parent=11 // pred_check_branch
        %167 = sbr.rel (%p165) target = $region20
      $region19: #{cnnbase_forward.4} parent=11 // pred_region
        _
      $region20: #{cnnbase_forward.4} parent=11 // pred_fallthru
        _
      // Predicated region
      $region21: #{cnnbase_forward.4} parent=11 // pred_check
        %p168 = pneg %p100
      $region22: #{cnnbase_forward.4} parent=11 // pred_check_branch
        %170 = sbr.rel (%p168) target = $region24
      $region23: #{cnnbase_forward.4} parent=11 // pred_region
        _
      $region24: #{cnnbase_forward.4} parent=11 // pred_fallthru
        _
      // Predicated region
      $region25: #{cnnbase_forward.4} parent=11 // pred_check
        %p171 = pneg %p121
      $region26: #{cnnbase_forward.4} parent=11 // pred_check_branch
        %173 = sbr.rel (%p171) target = $region28
      $region27: #{cnnbase_forward.4} parent=11 // pred_region
        _
      $region28: #{cnnbase_forward.4} parent=11 // pred_fallthru
        _
    $region12: #{cnnbase_forward.4} parent=5 // pred_fallthru
      _
    %p174 = scmp.lt.s32.totalorder %s11, 2
    // Predicated region
    $region29: #{cnnbase_forward.4} parent=5 // pred_check
      %p175 = pneg %p174
    $region30: #{cnnbase_forward.4} parent=5 // pred_check_branch
      %177 = sbr.rel (%p175) target = $region32
    $region31: #{cnnbase_forward.4} parent=5 // pred_region
      // Predicated region
      $region33: #{cnnbase_forward.4} parent=31 // pred_check
        %p178 = pneg %p31
      $region34: #{cnnbase_forward.4} parent=31 // pred_check_branch
        %180 = sbr.rel (%p178) target = $region36
      $region35: #{cnnbase_forward.4} parent=31 // pred_region
        %p181 = scmp.lt.s32.totalorder %s11, 1
        %s182 = scalar_select %p181, %s11, 1
        %s183 = smul.addr %s182, 14
        %s184 = smul.addr %s183, 8
        %s185 = scalar_lea.vmem %s0, %s184
      $region36: #{cnnbase_forward.4} parent=31 // pred_fallthru
        _
    $region32: #{cnnbase_forward.4} parent=5 // pred_fallthru
      _
    %p186 = scmp.le.s32.totalorder 1, %s11
    %p187 = scmp.lt.s32.totalorder %s11, 3
    %p188 = pnand %p186, %p187
    %p189 = pneg %p188
    // Predicated region
    $region37: #{cnnbase_forward.4} parent=5 // pred_check
      _
    $region38: #{cnnbase_forward.4} parent=5 // pred_check_branch
      %191 = sbr.rel (%p188) target = $region40
    $region39: #{cnnbase_forward.4} parent=5 // pred_region
      %s192 = ssub.s32 %s11, 1
      %p193 = scmp.lt.s32.totalorder %s16, 1
      %s194 = scalar_select %p193, %s16, 1
      %s195 = smul.addr %s194, 14
      %s196 = smul.addr %s195, 8
      %s197 = scalar_lea.vmem %s0, %s196
      %p198 = pneg %p37
      %p199 = pneg %p34
      %p200 = pneg %p58
      %p201 = pneg %p55
      %p202 = pneg %p79
      %p203 = pneg %p76
      %p204 = pneg %p100
      %p205 = pneg %p97
      %p206 = pneg %p121
      %p207 = pneg %p118
      %p208 = pneg %p147
      %p209 = pneg %p144
      %p210 = scmp.lt.s32.totalorder %s16, 1
      %s211 = scalar_select %p210, %s16, 1
      %s212 = smul.addr %s211, 13
      %s213 = smul.addr %s212, 8
      %s214 = scalar_lea.vmem %s5, %s213
      %p215 = scmp.lt.s32.totalorder %s16, 1
      %s216 = scalar_select %p215, %s16, 1
      %s217 = smul.addr %s216, 14
      %s218 = smul.addr %s217, 8
      %s219 = scalar_lea.vmem %s0, %s218
      %p220 = scmp.lt.s32.totalorder %s16, 1
      %s221 = scalar_select %p220, %s16, 1
      %s222 = smul.addr %s221, 13
      %s223 = smul.addr %s222, 8
      %s224 = scalar_lea.vmem %s5, %s223
      %vm225 = vcmask 523264
      %226 = vst.msk [vmem:[#allocation2] sm:$0xff] %vm225, 0.0
      %227 = vst.msk [vmem:[#allocation2 + $0x8] sm:$0xff] %vm225, 0.0
      %228 = vst.msk [vmem:[#allocation2 + $0x10] sm:$0xff] %vm225, 0.0
      %229 = vst.msk [vmem:[#allocation2 + $0x18] sm:$0xff] %vm225, 0.0
      %230 = vst.msk [vmem:[#allocation2 + $0x20] sm:$0xff] %vm225, 0.0
      %231 = vst.msk [vmem:[#allocation2 + $0x28] sm:$0xff] %vm225, 0.0
      %232 = vst.msk [vmem:[#allocation2 + $0x30] sm:$0xff] %vm225, 0.0
      %233 = vst.msk [vmem:[#allocation2 + $0x38] sm:$0xff] %vm225, 0.0
      %234 = vst.msk [vmem:[#allocation2 + $0x40] sm:$0xff] %vm225, 0.0
      %235 = vst.msk [vmem:[#allocation2 + $0x48] sm:$0xff] %vm225, 0.0
      %236 = vst.msk [vmem:[#allocation2 + $0x50] sm:$0xff] %vm225, 0.0
      %237 = vst.msk [vmem:[#allocation2 + $0x58] sm:$0xff] %vm225, 0.0
      %238 = vst.msk [vmem:[#allocation2 + $0x60] sm:$0xff] %vm225, 0.0
      %239 = vst.msk [vmem:[#allocation2 + $0x68] sm:$0xff] %vm225, 0.0
      %240 = vst.msk [vmem:[#allocation2 + $0x70] sm:$0xff] %vm225, 0.0
      %vm241 = vcmask 517120
      %242 = vst.msk [vmem:[#allocation2 + $0x78] sm:$0x3] %vm241, 0.0
      %v243 = vld [vmem:[#allocation2] sm:$0xff]
      %v244 = vld [vmem:[#allocation2 + $0x8] sm:$0xff]
      %v245 = vld [vmem:[#allocation2 + $0x10] sm:$0xff]
      %v246 = vld [vmem:[#allocation2 + $0x18] sm:$0xff]
      %v247 = vld [vmem:[#allocation2 + $0x20] sm:$0xff]
      %v248 = vld [vmem:[#allocation2 + $0x28] sm:$0xff]
      %v249 = vld [vmem:[#allocation2 + $0x30] sm:$0xff]
      %v250 = vld [vmem:[#allocation2 + $0x38] sm:$0xff]
      %v251 = vld [vmem:[#allocation2 + $0x40] sm:$0xff]
      %v252 = vld [vmem:[#allocation2 + $0x48] sm:$0xff]
      %v253 = vld [vmem:[#allocation2 + $0x50] sm:$0xff]
      %v254 = vld [vmem:[#allocation2 + $0x58] sm:$0xff]
      %v255 = vld [vmem:[#allocation2 + $0x60] sm:$0xf]
      %v256 = vld [vmem:[%s219] sm:$0xff]
      %v257 = vld [vmem:[%s219 + $0x8] sm:$0xff]
      %v258 = vld [vmem:[%s219 + $0x10] sm:$0xff]
      %v259 = vld [vmem:[%s219 + $0x18] sm:$0xff]
      %v260 = vld [vmem:[%s219 + $0x20] sm:$0xff]
      %v261 = vld [vmem:[%s219 + $0x28] sm:$0xff]
      %v262 = vld [vmem:[%s219 + $0x30] sm:$0xff]
      %v263 = vld [vmem:[%s219 + $0x38] sm:$0xff]
      %v264 = vld [vmem:[%s219 + $0x40] sm:$0xff]
      %v265 = vld [vmem:[%s219 + $0x48] sm:$0xff]
      %v266 = vld [vmem:[%s219 + $0x50] sm:$0xff]
      %v267 = vld [vmem:[%s219 + $0x58] sm:$0xff]
      %v268 = vld [vmem:[%s219 + $0x60] sm:$0xf]
      %v269 = vld [vmem:[%s1] sm:$0xff]
      %v270 = vld [vmem:[%s1 + $0x8] sm:$0xff]
      %v271 = vld [vmem:[%s1 + $0x10] sm:$0xff]
      %v272 = vld [vmem:[%s1 + $0x18] sm:$0xff]
      %v273 = vld [vmem:[%s1 + $0x20] sm:$0xff]
      %v274 = vld [vmem:[%s1 + $0x28] sm:$0xff]
      %v275 = vld [vmem:[%s1 + $0x30] sm:$0xff]
      %v276 = vld [vmem:[%s1 + $0x38] sm:$0xff]
      %v277 = vld [vmem:[%s1 + $0x40] sm:$0xff]
      %v278 = vld [vmem:[%s1 + $0x48] sm:$0xff]
      %v279 = vld [vmem:[%s1 + $0x50] sm:$0xff]
      %v280 = vld [vmem:[%s1 + $0x58] sm:$0xff]
      %v281 = vld [vmem:[%s1 + $0x60] sm:$0xff]
      %v282 = vld [vmem:[%s1 + $0x68] sm:$0xff]
      %v283 = vld [vmem:[%s1 + $0x70] sm:$0xff]
      %v284 = vld [vmem:[%s1 + $0x78] sm:$0xff]
      %285 = vmatprep.subr.mxu0 0.0
      %286 = vmatpush1.msra.mxu0 %v284
      %287 = vmatprep.subr.mxu0 0.0
      %288 = vmatpush1.msra.mxu0 %v283
      %289 = vmatprep.subr.mxu0 0.0
      %290 = vmatpush1.msra.mxu0 %v282
      %291 = vmatprep.subr.mxu0 0.0
      %292 = vmatpush1.msra.mxu0 %v281
      %293 = vmatprep.subr.mxu0 0.0
      %294 = vmatpush1.msra.mxu0 %v280
      %295 = vmatprep.subr.mxu0 0.0
      %296 = vmatpush1.msra.mxu0 %v279
      %297 = vmatprep.subr.mxu0 0.0
      %298 = vmatpush1.msra.mxu0 %v278
      %299 = vmatprep.subr.mxu0 0.0
      %300 = vmatpush1.msra.mxu0 %v277
      %301 = vmatprep.subr.mxu0 0.0
      %302 = vmatpush1.msra.mxu0 %v276
      %303 = vmatprep.subr.mxu0 0.0
      %304 = vmatpush1.msra.mxu0 %v275
      %305 = vmatprep.subr.mxu0 0.0
      %306 = vmatpush1.msra.mxu0 %v274
      %307 = vmatprep.subr.mxu0 0.0
      %308 = vmatpush1.msra.mxu0 %v273
      %309 = vmatprep.subr.mxu0 0.0
      %310 = vmatpush1.msra.mxu0 %v272
      %311 = vmatprep.subr.mxu0 0.0
      %312 = vmatpush1.msra.mxu0 %v271
      %313 = vmatprep.subr.mxu0 0.0
      %314 = vmatpush1.msra.mxu0 %v270
      %315 = vmatprep.subr.mxu0 0.0
      %316 = vmatpush1.msra.mxu0 %v269
      %317 = vmatprep.subr.mxu0 0.0
      %318 = vmatpush2.msra.mxu0 0.0
      %319 = vmatprep.subr.mxu0 0.0
      %320 = vmatpush2.msra.mxu0 0.0
      %321 = vmatprep.subr.mxu0 0.0
      %322 = vmatpush2.msra.mxu0 0.0
      %323 = vmatprep.subr.mxu0 0.0
      %324 = vmatpush2.msra.mxu0 0.0
      %325 = vmatprep.subr.mxu0 0.0
      %326 = vmatpush2.msra.mxu0 0.0
      %327 = vmatprep.subr.mxu0 0.0
      %328 = vmatpush2.msra.mxu0 0.0
      %329 = vmatprep.subr.mxu0 0.0
      %330 = vmatpush2.msra.mxu0 0.0
      %331 = vmatprep.subr.mxu0 0.0
      %332 = vmatpush2.msra.mxu0 0.0
      %333 = vmatprep.subr.mxu0 0.0
      %334 = vmatpush2.msra.mxu0 0.0
      %335 = vmatprep.subr.mxu0 0.0
      %336 = vmatpush2.msra.mxu0 0.0
      %337 = vmatprep.subr.mxu0 0.0
      %338 = vmatpush2.msra.mxu0 0.0
      %339 = vmatprep.subr.mxu0 0.0
      %340 = vmatpush2.msra.mxu0 0.0
      %341 = vmatprep.subr.mxu0 0.0
      %342 = vmatpush2.msra.mxu0 0.0
      %343 = vmatprep.subr.mxu0 0.0
      %344 = vmatpush2.msra.mxu0 0.0
      %345 = vmatprep.subr.mxu0 0.0
      %346 = vmatpush2.msra.mxu0 0.0
      %347 = vmatprep.subr.mxu0 0.0
      %348 = vmatpush2.msra.mxu0 0.0
      %349 = vmatprep.mubr.f32.mxu0 0.0
      %350 = vmatmul.mubr.f32.gmra.mxu0 %v256
      %v351 = vpop.f32.mrf.mxu0
      %v352 = vadd.f32 0.0, %v351
      %v353 = vpop.f32.mrf.mxu0
      %354 = vmatprep.mubr.f32.mxu0 0.0
      %355 = vmatmul.mubr.f32.gmra.mxu0 %v257
      %v356 = vpop.f32.mrf.mxu0
      %v357 = vadd.f32 0.0, %v356
      %v358 = vpop.f32.mrf.mxu0
      %359 = vmatprep.mubr.f32.mxu0 0.0
      %360 = vmatmul.mubr.f32.gmra.mxu0 %v258
      %v361 = vpop.f32.mrf.mxu0
      %v362 = vadd.f32 0.0, %v361
      %v363 = vpop.f32.mrf.mxu0
      %364 = vmatprep.mubr.f32.mxu0 0.0
      %365 = vmatmul.mubr.f32.gmra.mxu0 %v259
      %v366 = vpop.f32.mrf.mxu0
      %v367 = vadd.f32 0.0, %v366
      %v368 = vpop.f32.mrf.mxu0
      %369 = vmatprep.mubr.f32.mxu0 0.0
      %370 = vmatmul.mubr.f32.gmra.mxu0 %v260
      %v371 = vpop.f32.mrf.mxu0
      %v372 = vadd.f32 0.0, %v371
      %v373 = vpop.f32.mrf.mxu0
      %374 = vmatprep.mubr.f32.mxu0 0.0
      %375 = vmatmul.mubr.f32.gmra.mxu0 %v261
      %v376 = vpop.f32.mrf.mxu0
      %v377 = vadd.f32 0.0, %v376
      %v378 = vpop.f32.mrf.mxu0
      %379 = vmatprep.mubr.f32.mxu0 0.0
      %380 = vmatmul.mubr.f32.gmra.mxu0 %v262
      %v381 = vpop.f32.mrf.mxu0
      %v382 = vadd.f32 0.0, %v381
      %v383 = vpop.f32.mrf.mxu0
      %384 = vmatprep.mubr.f32.mxu0 0.0
      %385 = vmatmul.mubr.f32.gmra.mxu0 %v263
      %v386 = vpop.f32.mrf.mxu0
      %v387 = vadd.f32 0.0, %v386
      %v388 = vpop.f32.mrf.mxu0
      %389 = vmatprep.mubr.f32.mxu0 0.0
      %390 = vmatmul.mubr.f32.gmra.mxu0 %v264
      %v391 = vpop.f32.mrf.mxu0
      %v392 = vadd.f32 0.0, %v391
      %v393 = vpop.f32.mrf.mxu0
      %394 = vmatprep.mubr.f32.mxu0 0.0
      %395 = vmatmul.mubr.f32.gmra.mxu0 %v265
      %v396 = vpop.f32.mrf.mxu0
      %v397 = vadd.f32 0.0, %v396
      %v398 = vpop.f32.mrf.mxu0
      %399 = vmatprep.mubr.f32.mxu0 0.0
      %400 = vmatmul.mubr.f32.gmra.mxu0 %v266
      %v401 = vpop.f32.mrf.mxu0
      %v402 = vadd.f32 0.0, %v401
      %v403 = vpop.f32.mrf.mxu0
      %404 = vmatprep.mubr.f32.mxu0 0.0
      %405 = vmatmul.mubr.f32.gmra.mxu0 %v267
      %v406 = vpop.f32.mrf.mxu0
      %v407 = vadd.f32 0.0, %v406
      %v408 = vpop.f32.mrf.mxu0
      %409 = vmatprep.mubr.f32.mxu0 0.0
      %410 = vmatmul.mubr.f32.gmra.mxu0 %v268
      %v411 = vpop.f32.mrf.mxu0
      %v412 = vadd.f32 0.0, %v411
      %v413 = vpop.f32.mrf.mxu0
      %414 = vdwg.mxu0
      %v415 = vadd.f32 %v243, %v352
      %v416 = vadd.f32 %v244, %v357
      %v417 = vadd.f32 %v245, %v362
      %v418 = vadd.f32 %v246, %v367
      %v419 = vadd.f32 %v247, %v372
      %v420 = vadd.f32 %v248, %v377
      %v421 = vadd.f32 %v249, %v382
      %v422 = vadd.f32 %v250, %v387
      %v423 = vadd.f32 %v251, %v392
      %v424 = vadd.f32 %v252, %v397
      %v425 = vadd.f32 %v253, %v402
      %v426 = vadd.f32 %v254, %v407
      %v427 = vadd.f32 %v255, %v412
      %428 = vst.msk [vmem:[#allocation2] sm:$0xff] %vm225, %v415
      %429 = vst.msk [vmem:[#allocation2 + $0x8] sm:$0xff] %vm225, %v416
      %430 = vst.msk [vmem:[#allocation2 + $0x10] sm:$0xff] %vm225, %v417
      %431 = vst.msk [vmem:[#allocation2 + $0x18] sm:$0xff] %vm225, %v418
      %432 = vst.msk [vmem:[#allocation2 + $0x20] sm:$0xff] %vm225, %v419
      %433 = vst.msk [vmem:[#allocation2 + $0x28] sm:$0xff] %vm225, %v420
      %434 = vst.msk [vmem:[#allocation2 + $0x30] sm:$0xff] %vm225, %v421
      %435 = vst.msk [vmem:[#allocation2 + $0x38] sm:$0xff] %vm225, %v422
      %436 = vst.msk [vmem:[#allocation2 + $0x40] sm:$0xff] %vm225, %v423
      %437 = vst.msk [vmem:[#allocation2 + $0x48] sm:$0xff] %vm225, %v424
      %438 = vst.msk [vmem:[#allocation2 + $0x50] sm:$0xff] %vm225, %v425
      %439 = vst.msk [vmem:[#allocation2 + $0x58] sm:$0xff] %vm225, %v426
      %vm440 = vcmask 519168
      %441 = vst.msk [vmem:[#allocation2 + $0x60] sm:$0xf] %vm440, %v427
      %v442 = vld [vmem:[#allocation2] sm:$0xff]
      %v443 = vld [vmem:[#allocation2 + $0x8] sm:$0xff]
      %v444 = vld [vmem:[#allocation2 + $0x10] sm:$0xff]
      %v445 = vld [vmem:[#allocation2 + $0x18] sm:$0xff]
      %v446 = vld [vmem:[#allocation2 + $0x20] sm:$0xff]
      %v447 = vld [vmem:[#allocation2 + $0x28] sm:$0xff]
      %v448 = vld [vmem:[#allocation2 + $0x30] sm:$0xff]
      %v449 = vld [vmem:[#allocation2 + $0x38] sm:$0xff]
      %v450 = vld [vmem:[#allocation2 + $0x40] sm:$0xff]
      %v451 = vld [vmem:[#allocation2 + $0x48] sm:$0xff]
      %v452 = vld [vmem:[#allocation2 + $0x50] sm:$0xff]
      %v453 = vld [vmem:[#allocation2 + $0x58] sm:$0xff]
      %v454 = vld [vmem:[#allocation2 + $0x60] sm:$0xf]
      %v455 = vld [vmem:[%s219 + $0x1] sm:$0xff]
      %v456 = vld [vmem:[%s219 + $0x9] sm:$0xff]
      %v457 = vld [vmem:[%s219 + $0x11] sm:$0xff]
      %v458 = vld [vmem:[%s219 + $0x19] sm:$0xff]
      %v459 = vld [vmem:[%s219 + $0x21] sm:$0xff]
      %v460 = vld [vmem:[%s219 + $0x29] sm:$0xff]
      %v461 = vld [vmem:[%s219 + $0x31] sm:$0xff]
      %v462 = vld [vmem:[%s219 + $0x39] sm:$0xff]
      %v463 = vld [vmem:[%s219 + $0x41] sm:$0xff]
      %v464 = vld [vmem:[%s219 + $0x49] sm:$0xff]
      %v465 = vld [vmem:[%s219 + $0x51] sm:$0xff]
      %v466 = vld [vmem:[%s219 + $0x59] sm:$0xff]
      %v467 = vld [vmem:[%s219 + $0x61] sm:$0xf]
      %s468 = scalar_lea.vmem %s1, 128
      %v469 = vld [vmem:[%s468] sm:$0xff]
      %v470 = vld [vmem:[%s468 + $0x8] sm:$0xff]
      %v471 = vld [vmem:[%s468 + $0x10] sm:$0xff]
      %v472 = vld [vmem:[%s468 + $0x18] sm:$0xff]
      %v473 = vld [vmem:[%s468 + $0x20] sm:$0xff]
      %v474 = vld [vmem:[%s468 + $0x28] sm:$0xff]
      %v475 = vld [vmem:[%s468 + $0x30] sm:$0xff]
      %v476 = vld [vmem:[%s468 + $0x38] sm:$0xff]
      %v477 = vld [vmem:[%s468 + $0x40] sm:$0xff]
      %v478 = vld [vmem:[%s468 + $0x48] sm:$0xff]
      %v479 = vld [vmem:[%s468 + $0x50] sm:$0xff]
      %v480 = vld [vmem:[%s468 + $0x58] sm:$0xff]
      %v481 = vld [vmem:[%s468 + $0x60] sm:$0xff]
      %v482 = vld [vmem:[%s468 + $0x68] sm:$0xff]
      %v483 = vld [vmem:[%s468 + $0x70] sm:$0xff]
      %v484 = vld [vmem:[%s468 + $0x78] sm:$0xff]
      %485 = vmatprep.subr.mxu0 0.0
      %486 = vmatpush1.msra.mxu0 %v484
      %487 = vmatprep.subr.mxu0 0.0
      %488 = vmatpush1.msra.mxu0 %v483
      %489 = vmatprep.subr.mxu0 0.0
      %490 = vmatpush1.msra.mxu0 %v482
      %491 = vmatprep.subr.mxu0 0.0
      %492 = vmatpush1.msra.mxu0 %v481
      %493 = vmatprep.subr.mxu0 0.0
      %494 = vmatpush1.msra.mxu0 %v480
      %495 = vmatprep.subr.mxu0 0.0
      %496 = vmatpush1.msra.mxu0 %v479
      %497 = vmatprep.subr.mxu0 0.0
      %498 = vmatpush1.msra.mxu0 %v478
      %499 = vmatprep.subr.mxu0 0.0
      %500 = vmatpush1.msra.mxu0 %v477
      %501 = vmatprep.subr.mxu0 0.0
      %502 = vmatpush1.msra.mxu0 %v476
      %503 = vmatprep.subr.mxu0 0.0
      %504 = vmatpush1.msra.mxu0 %v475
      %505 = vmatprep.subr.mxu0 0.0
      %506 = vmatpush1.msra.mxu0 %v474
      %507 = vmatprep.subr.mxu0 0.0
      %508 = vmatpush1.msra.mxu0 %v473
      %509 = vmatprep.subr.mxu0 0.0
      %510 = vmatpush1.msra.mxu0 %v472
      %511 = vmatprep.subr.mxu0 0.0
      %512 = vmatpush1.msra.mxu0 %v471
      %513 = vmatprep.subr.mxu0 0.0
      %514 = vmatpush1.msra.mxu0 %v470
      %515 = vmatprep.subr.mxu0 0.0
      %516 = vmatpush1.msra.mxu0 %v469
      %517 = vmatprep.subr.mxu0 0.0
      %518 = vmatpush2.msra.mxu0 0.0
      %519 = vmatprep.subr.mxu0 0.0
      %520 = vmatpush2.msra.mxu0 0.0
      %521 = vmatprep.subr.mxu0 0.0
      %522 = vmatpush2.msra.mxu0 0.0
      %523 = vmatprep.subr.mxu0 0.0
      %524 = vmatpush2.msra.mxu0 0.0
      %525 = vmatprep.subr.mxu0 0.0
      %526 = vmatpush2.msra.mxu0 0.0
      %527 = vmatprep.subr.mxu0 0.0
      %528 = vmatpush2.msra.mxu0 0.0
      %529 = vmatprep.subr.mxu0 0.0
      %530 = vmatpush2.msra.mxu0 0.0
      %531 = vmatprep.subr.mxu0 0.0
      %532 = vmatpush2.msra.mxu0 0.0
      %533 = vmatprep.subr.mxu0 0.0
      %534 = vmatpush2.msra.mxu0 0.0
      %535 = vmatprep.subr.mxu0 0.0
      %536 = vmatpush2.msra.mxu0 0.0
      %537 = vmatprep.subr.mxu0 0.0
      %538 = vmatpush2.msra.mxu0 0.0
      %539 = vmatprep.subr.mxu0 0.0
      %540 = vmatpush2.msra.mxu0 0.0
      %541 = vmatprep.subr.mxu0 0.0
      %542 = vmatpush2.msra.mxu0 0.0
      %543 = vmatprep.subr.mxu0 0.0
      %544 = vmatpush2.msra.mxu0 0.0
      %545 = vmatprep.subr.mxu0 0.0
      %546 = vmatpush2.msra.mxu0 0.0
      %547 = vmatprep.subr.mxu0 0.0
      %548 = vmatpush2.msra.mxu0 0.0
      %549 = vmatprep.mubr.f32.mxu0 0.0
      %550 = vmatmul.mubr.f32.gmra.mxu0 %v455
      %v551 = vpop.f32.mrf.mxu0
      %v552 = vadd.f32 0.0, %v551
      %v553 = vpop.f32.mrf.mxu0
      %554 = vmatprep.mubr.f32.mxu0 0.0
      %555 = vmatmul.mubr.f32.gmra.mxu0 %v456
      %v556 = vpop.f32.mrf.mxu0
      %v557 = vadd.f32 0.0, %v556
      %v558 = vpop.f32.mrf.mxu0
      %559 = vmatprep.mubr.f32.mxu0 0.0
      %560 = vmatmul.mubr.f32.gmra.mxu0 %v457
      %v561 = vpop.f32.mrf.mxu0
      %v562 = vadd.f32 0.0, %v561
      %v563 = vpop.f32.mrf.mxu0
      %564 = vmatprep.mubr.f32.mxu0 0.0
      %565 = vmatmul.mubr.f32.gmra.mxu0 %v458
      %v566 = vpop.f32.mrf.mxu0
      %v567 = vadd.f32 0.0, %v566
      %v568 = vpop.f32.mrf.mxu0
      %569 = vmatprep.mubr.f32.mxu0 0.0
      %570 = vmatmul.mubr.f32.gmra.mxu0 %v459
      %v571 = vpop.f32.mrf.mxu0
      %v572 = vadd.f32 0.0, %v571
      %v573 = vpop.f32.mrf.mxu0
      %574 = vmatprep.mubr.f32.mxu0 0.0
      %575 = vmatmul.mubr.f32.gmra.mxu0 %v460
      %v576 = vpop.f32.mrf.mxu0
      %v577 = vadd.f32 0.0, %v576
      %v578 = vpop.f32.mrf.mxu0
      %579 = vmatprep.mubr.f32.mxu0 0.0
      %580 = vmatmul.mubr.f32.gmra.mxu0 %v461
      %v581 = vpop.f32.mrf.mxu0
      %v582 = vadd.f32 0.0, %v581
      %v583 = vpop.f32.mrf.mxu0
      %584 = vmatprep.mubr.f32.mxu0 0.0
      %585 = vmatmul.mubr.f32.gmra.mxu0 %v462
      %v586 = vpop.f32.mrf.mxu0
      %v587 = vadd.f32 0.0, %v586
      %v588 = vpop.f32.mrf.mxu0
      %589 = vmatprep.mubr.f32.mxu0 0.0
      %590 = vmatmul.mubr.f32.gmra.mxu0 %v463
      %v591 = vpop.f32.mrf.mxu0
      %v592 = vadd.f32 0.0, %v591
      %v593 = vpop.f32.mrf.mxu0
      %594 = vmatprep.mubr.f32.mxu0 0.0
      %595 = vmatmul.mubr.f32.gmra.mxu0 %v464
      %v596 = vpop.f32.mrf.mxu0
      %v597 = vadd.f32 0.0, %v596
      %v598 = vpop.f32.mrf.mxu0
      %599 = vmatprep.mubr.f32.mxu0 0.0
      %600 = vmatmul.mubr.f32.gmra.mxu0 %v465
      %v601 = vpop.f32.mrf.mxu0
      %v602 = vadd.f32 0.0, %v601
      %v603 = vpop.f32.mrf.mxu0
      %604 = vmatprep.mubr.f32.mxu0 0.0
      %605 = vmatmul.mubr.f32.gmra.mxu0 %v466
      %v606 = vpop.f32.mrf.mxu0
      %v607 = vadd.f32 0.0, %v606
      %v608 = vpop.f32.mrf.mxu0
      %609 = vmatprep.mubr.f32.mxu0 0.0
      %610 = vmatmul.mubr.f32.gmra.mxu0 %v467
      %v611 = vpop.f32.mrf.mxu0
      %v612 = vadd.f32 0.0, %v611
      %v613 = vpop.f32.mrf.mxu0
      %614 = vdwg.mxu0
      %v615 = vadd.f32 %v442, %v552
      %v616 = vadd.f32 %v443, %v557
      %v617 = vadd.f32 %v444, %v562
      %v618 = vadd.f32 %v445, %v567
      %v619 = vadd.f32 %v446, %v572
      %v620 = vadd.f32 %v447, %v577
      %v621 = vadd.f32 %v448, %v582
      %v622 = vadd.f32 %v449, %v587
      %v623 = vadd.f32 %v450, %v592
      %v624 = vadd.f32 %v451, %v597
      %v625 = vadd.f32 %v452, %v602
      %v626 = vadd.f32 %v453, %v607
      %v627 = vadd.f32 %v454, %v612
      %628 = vst.msk [vmem:[#allocation2] sm:$0xff] %vm225, %v615
      %629 = vst.msk [vmem:[#allocation2 + $0x8] sm:$0xff] %vm225, %v616
      %630 = vst.msk [vmem:[#allocation2 + $0x10] sm:$0xff] %vm225, %v617
      %631 = vst.msk [vmem:[#allocation2 + $0x18] sm:$0xff] %vm225, %v618
      %632 = vst.msk [vmem:[#allocation2 + $0x20] sm:$0xff] %vm225, %v619
      %633 = vst.msk [vmem:[#allocation2 + $0x28] sm:$0xff] %vm225, %v620
      %634 = vst.msk [vmem:[#allocation2 + $0x30] sm:$0xff] %vm225, %v621
      %635 = vst.msk [vmem:[#allocation2 + $0x38] sm:$0xff] %vm225, %v622
      %636 = vst.msk [vmem:[#allocation2 + $0x40] sm:$0xff] %vm225, %v623
      %637 = vst.msk [vmem:[#allocation2 + $0x48] sm:$0xff] %vm225, %v624
      %638 = vst.msk [vmem:[#allocation2 + $0x50] sm:$0xff] %vm225, %v625
      %639 = vst.msk [vmem:[#allocation2 + $0x58] sm:$0xff] %vm225, %v626
      %640 = vst.msk [vmem:[#allocation2 + $0x60] sm:$0xf] %vm440, %v627
      %v641 = vld [vmem:[#allocation2] sm:$0xff]
      %v642 = vld [vmem:[#allocation2 + $0x8] sm:$0xff]
      %v643 = vld [vmem:[#allocation2 + $0x10] sm:$0xff]
      %v644 = vld [vmem:[#allocation2 + $0x18] sm:$0xff]
      %v645 = vld [vmem:[#allocation2 + $0x20] sm:$0xff]
      %v646 = vld [vmem:[#allocation2 + $0x28] sm:$0xff]
      %v647 = vld [vmem:[#allocation2 + $0x30] sm:$0xff]
      %v648 = vld [vmem:[#allocation2 + $0x38] sm:$0xff]
      %v649 = vld [vmem:[#allocation2 + $0x40] sm:$0xff]
      %v650 = vld [vmem:[#allocation2 + $0x48] sm:$0xff]
      %v651 = vld [vmem:[#allocation2 + $0x50] sm:$0xff]
      %v652 = vld [vmem:[#allocation2 + $0x58] sm:$0xff]
      %v653 = vld [vmem:[#allocation2 + $0x60] sm:$0xf]
      %v654 = vld [vmem:[%s219 + $0xa] sm:$0xff]
      %v655 = vld [vmem:[%s219 + $0x12] sm:$0xff]
      %v656 = vld [vmem:[%s219 + $0x1a] sm:$0xff]
      %v657 = vld [vmem:[%s219 + $0x22] sm:$0xff]
      %v658 = vld [vmem:[%s219 + $0x2a] sm:$0xff]
      %v659 = vld [vmem:[%s219 + $0x32] sm:$0xff]
      %v660 = vld [vmem:[%s219 + $0x3a] sm:$0xff]
      %v661 = vld [vmem:[%s219 + $0x42] sm:$0xff]
      %v662 = vld [vmem:[%s219 + $0x4a] sm:$0xff]
      %v663 = vld [vmem:[%s219 + $0x52] sm:$0xff]
      %v664 = vld [vmem:[%s219 + $0x5a] sm:$0xff]
      %v665 = vld [vmem:[%s219 + $0x62] sm:$0xff]
      %v666 = vld [vmem:[%s219 + $0x6a] sm:$0xf]
      %s667 = scalar_lea.vmem %s1, 256
      %v668 = vld [vmem:[%s667] sm:$0xff]
      %v669 = vld [vmem:[%s667 + $0x8] sm:$0xff]
      %v670 = vld [vmem:[%s667 + $0x10] sm:$0xff]
      %v671 = vld [vmem:[%s667 + $0x18] sm:$0xff]
      %v672 = vld [vmem:[%s667 + $0x20] sm:$0xff]
      %v673 = vld [vmem:[%s667 + $0x28] sm:$0xff]
      %v674 = vld [vmem:[%s667 + $0x30] sm:$0xff]
      %v675 = vld [vmem:[%s667 + $0x38] sm:$0xff]
      %v676 = vld [vmem:[%s667 + $0x40] sm:$0xff]
      %v677 = vld [vmem:[%s667 + $0x48] sm:$0xff]
      %v678 = vld [vmem:[%s667 + $0x50] sm:$0xff]
      %v679 = vld [vmem:[%s667 + $0x58] sm:$0xff]
      %v680 = vld [vmem:[%s667 + $0x60] sm:$0xff]
      %v681 = vld [vmem:[%s667 + $0x68] sm:$0xff]
      %v682 = vld [vmem:[%s667 + $0x70] sm:$0xff]
      %v683 = vld [vmem:[%s667 + $0x78] sm:$0xff]
      %684 = vmatprep.subr.mxu0 0.0
      %685 = vmatpush1.msra.mxu0 %v683
      %686 = vmatprep.subr.mxu0 0.0
      %687 = vmatpush1.msra.mxu0 %v682
      %688 = vmatprep.subr.mxu0 0.0
      %689 = vmatpush1.msra.mxu0 %v681
      %690 = vmatprep.subr.mxu0 0.0
      %691 = vmatpush1.msra.mxu0 %v680
      %692 = vmatprep.subr.mxu0 0.0
      %693 = vmatpush1.msra.mxu0 %v679
      %694 = vmatprep.subr.mxu0 0.0
      %695 = vmatpush1.msra.mxu0 %v678
      %696 = vmatprep.subr.mxu0 0.0
      %697 = vmatpush1.msra.mxu0 %v677
      %698 = vmatprep.subr.mxu0 0.0
      %699 = vmatpush1.msra.mxu0 %v676
      %700 = vmatprep.subr.mxu0 0.0
      %701 = vmatpush1.msra.mxu0 %v675
      %702 = vmatprep.subr.mxu0 0.0
      %703 = vmatpush1.msra.mxu0 %v674
      %704 = vmatprep.subr.mxu0 0.0
      %705 = vmatpush1.msra.mxu0 %v673
      %706 = vmatprep.subr.mxu0 0.0
      %707 = vmatpush1.msra.mxu0 %v672
      %708 = vmatprep.subr.mxu0 0.0
      %709 = vmatpush1.msra.mxu0 %v671
      %710 = vmatprep.subr.mxu0 0.0
      %711 = vmatpush1.msra.mxu0 %v670
      %712 = vmatprep.subr.mxu0 0.0
      %713 = vmatpush1.msra.mxu0 %v669
      %714 = vmatprep.subr.mxu0 0.0
      %715 = vmatpush1.msra.mxu0 %v668
      %716 = vmatprep.subr.mxu0 0.0
      %717 = vmatpush2.msra.mxu0 0.0
      %718 = vmatprep.subr.mxu0 0.0
      %719 = vmatpush2.msra.mxu0 0.0
      %720 = vmatprep.subr.mxu0 0.0
      %721 = vmatpush2.msra.mxu0 0.0
      %722 = vmatprep.subr.mxu0 0.0
      %723 = vmatpush2.msra.mxu0 0.0
      %724 = vmatprep.subr.mxu0 0.0
      %725 = vmatpush2.msra.mxu0 0.0
      %726 = vmatprep.subr.mxu0 0.0
      %727 = vmatpush2.msra.mxu0 0.0
      %728 = vmatprep.subr.mxu0 0.0
      %729 = vmatpush2.msra.mxu0 0.0
      %730 = vmatprep.subr.mxu0 0.0
      %731 = vmatpush2.msra.mxu0 0.0
      %732 = vmatprep.subr.mxu0 0.0
      %733 = vmatpush2.msra.mxu0 0.0
      %734 = vmatprep.subr.mxu0 0.0
      %735 = vmatpush2.msra.mxu0 0.0
      %736 = vmatprep.subr.mxu0 0.0
      %737 = vmatpush2.msra.mxu0 0.0
      %738 = vmatprep.subr.mxu0 0.0
      %739 = vmatpush2.msra.mxu0 0.0
      %740 = vmatprep.subr.mxu0 0.0
      %741 = vmatpush2.msra.mxu0 0.0
      %742 = vmatprep.subr.mxu0 0.0
      %743 = vmatpush2.msra.mxu0 0.0
      %744 = vmatprep.subr.mxu0 0.0
      %745 = vmatpush2.msra.mxu0 0.0
      %746 = vmatprep.subr.mxu0 0.0
      %747 = vmatpush2.msra.mxu0 0.0
      %748 = vmatprep.mubr.f32.mxu0 0.0
      %749 = vmatmul.mubr.f32.gmra.mxu0 %v654
      %v750 = vpop.f32.mrf.mxu0
      %v751 = vadd.f32 0.0, %v750
      %v752 = vpop.f32.mrf.mxu0
      %753 = vmatprep.mubr.f32.mxu0 0.0
      %754 = vmatmul.mubr.f32.gmra.mxu0 %v655
      %v755 = vpop.f32.mrf.mxu0
      %v756 = vadd.f32 0.0, %v755
      %v757 = vpop.f32.mrf.mxu0
      %758 = vmatprep.mubr.f32.mxu0 0.0
      %759 = vmatmul.mubr.f32.gmra.mxu0 %v656
      %v760 = vpop.f32.mrf.mxu0
      %v761 = vadd.f32 0.0, %v760
      %v762 = vpop.f32.mrf.mxu0
      %763 = vmatprep.mubr.f32.mxu0 0.0
      %764 = vmatmul.mubr.f32.gmra.mxu0 %v657
      %v765 = vpop.f32.mrf.mxu0
      %v766 = vadd.f32 0.0, %v765
      %v767 = vpop.f32.mrf.mxu0
      %768 = vmatprep.mubr.f32.mxu0 0.0
      %769 = vmatmul.mubr.f32.gmra.mxu0 %v658
      %v770 = vpop.f32.mrf.mxu0
      %v771 = vadd.f32 0.0, %v770
      %v772 = vpop.f32.mrf.mxu0
      %773 = vmatprep.mubr.f32.mxu0 0.0
      %774 = vmatmul.mubr.f32.gmra.mxu0 %v659
      %v775 = vpop.f32.mrf.mxu0
      %v776 = vadd.f32 0.0, %v775
      %v777 = vpop.f32.mrf.mxu0
      %778 = vmatprep.mubr.f32.mxu0 0.0
      %779 = vmatmul.mubr.f32.gmra.mxu0 %v660
      %v780 = vpop.f32.mrf.mxu0
      %v781 = vadd.f32 0.0, %v780
      %v782 = vpop.f32.mrf.mxu0
      %783 = vmatprep.mubr.f32.mxu0 0.0
      %784 = vmatmul.mubr.f32.gmra.mxu0 %v661
      %v785 = vpop.f32.mrf.mxu0
      %v786 = vadd.f32 0.0, %v785
      %v787 = vpop.f32.mrf.mxu0
      %788 = vmatprep.mubr.f32.mxu0 0.0
      %789 = vmatmul.mubr.f32.gmra.mxu0 %v662
      %v790 = vpop.f32.mrf.mxu0
      %v791 = vadd.f32 0.0, %v790
      %v792 = vpop.f32.mrf.mxu0
      %793 = vmatprep.mubr.f32.mxu0 0.0
      %794 = vmatmul.mubr.f32.gmra.mxu0 %v663
      %v795 = vpop.f32.mrf.mxu0
      %v796 = vadd.f32 0.0, %v795
      %v797 = vpop.f32.mrf.mxu0
      %798 = vmatprep.mubr.f32.mxu0 0.0
      %799 = vmatmul.mubr.f32.gmra.mxu0 %v664
      %v800 = vpop.f32.mrf.mxu0
      %v801 = vadd.f32 0.0, %v800
      %v802 = vpop.f32.mrf.mxu0
      %803 = vmatprep.mubr.f32.mxu0 0.0
      %804 = vmatmul.mubr.f32.gmra.mxu0 %v665
      %v805 = vpop.f32.mrf.mxu0
      %v806 = vadd.f32 0.0, %v805
      %v807 = vpop.f32.mrf.mxu0
      %808 = vmatprep.mubr.f32.mxu0 0.0
      %809 = vmatmul.mubr.f32.gmra.mxu0 %v666
      %v810 = vpop.f32.mrf.mxu0
      %v811 = vadd.f32 0.0, %v810
      %v812 = vpop.f32.mrf.mxu0
      %813 = vdwg.mxu0
      %v814 = vadd.f32 %v641, %v751
      %v815 = vadd.f32 %v642, %v756
      %v816 = vadd.f32 %v643, %v761
      %v817 = vadd.f32 %v644, %v766
      %v818 = vadd.f32 %v645, %v771
      %v819 = vadd.f32 %v646, %v776
      %v820 = vadd.f32 %v647, %v781
      %v821 = vadd.f32 %v648, %v786
      %v822 = vadd.f32 %v649, %v791
      %v823 = vadd.f32 %v650, %v796
      %v824 = vadd.f32 %v651, %v801
      %v825 = vadd.f32 %v652, %v806
      %v826 = vadd.f32 %v653, %v811
      %827 = vst.msk [vmem:[#allocation2] sm:$0xff] %vm225, %v814
      %828 = vst.msk [vmem:[#allocation2 + $0x8] sm:$0xff] %vm225, %v815
      %829 = vst.msk [vmem:[#allocation2 + $0x10] sm:$0xff] %vm225, %v816
      %830 = vst.msk [vmem:[#allocation2 + $0x18] sm:$0xff] %vm225, %v817
      %831 = vst.msk [vmem:[#allocation2 + $0x20] sm:$0xff] %vm225, %v818
      %832 = vst.msk [vmem:[#allocation2 + $0x28] sm:$0xff] %vm225, %v819
      %833 = vst.msk [vmem:[#allocation2 + $0x30] sm:$0xff] %vm225, %v820
      %834 = vst.msk [vmem:[#allocation2 + $0x38] sm:$0xff] %vm225, %v821
      %835 = vst.msk [vmem:[#allocation2 + $0x40] sm:$0xff] %vm225, %v822
      %836 = vst.msk [vmem:[#allocation2 + $0x48] sm:$0xff] %vm225, %v823
      %837 = vst.msk [vmem:[#allocation2 + $0x50] sm:$0xff] %vm225, %v824
      %838 = vst.msk [vmem:[#allocation2 + $0x58] sm:$0xff] %vm225, %v825
      %839 = vst.msk [vmem:[#allocation2 + $0x60] sm:$0xf] %vm440, %v826
      %v840 = vld [vmem:[#allocation2] sm:$0xff]
      %v841 = vld [vmem:[#allocation2 + $0x8] sm:$0xff]
      %v842 = vld [vmem:[#allocation2 + $0x10] sm:$0xff]
      %v843 = vld [vmem:[#allocation2 + $0x18] sm:$0xff]
      %v844 = vld [vmem:[#allocation2 + $0x20] sm:$0xff]
      %v845 = vld [vmem:[#allocation2 + $0x28] sm:$0xff]
      %v846 = vld [vmem:[#allocation2 + $0x30] sm:$0xff]
      %v847 = vld [vmem:[#allocation2 + $0x38] sm:$0xff]
      %v848 = vld [vmem:[#allocation2 + $0x40] sm:$0xff]
      %v849 = vld [vmem:[#allocation2 + $0x48] sm:$0xff]
      %v850 = vld [vmem:[#allocation2 + $0x50] sm:$0xff]
      %v851 = vld [vmem:[#allocation2 + $0x58] sm:$0xff]
      %v852 = vld [vmem:[#allocation2 + $0x60] sm:$0xf]
      %v853 = vld [vmem:[%s219 + $0xb] sm:$0xff]
      %v854 = vld [vmem:[%s219 + $0x13] sm:$0xff]
      %v855 = vld [vmem:[%s219 + $0x1b] sm:$0xff]
      %v856 = vld [vmem:[%s219 + $0x23] sm:$0xff]
      %v857 = vld [vmem:[%s219 + $0x2b] sm:$0xff]
      %v858 = vld [vmem:[%s219 + $0x33] sm:$0xff]
      %v859 = vld [vmem:[%s219 + $0x3b] sm:$0xff]
      %v860 = vld [vmem:[%s219 + $0x43] sm:$0xff]
      %v861 = vld [vmem:[%s219 + $0x4b] sm:$0xff]
      %v862 = vld [vmem:[%s219 + $0x53] sm:$0xff]
      %v863 = vld [vmem:[%s219 + $0x5b] sm:$0xff]
      %v864 = vld [vmem:[%s219 + $0x63] sm:$0xff]
      %v865 = vld [vmem:[%s219 + $0x6b] sm:$0xf]
      %s866 = scalar_lea.vmem %s1, 384
      %v867 = vld [vmem:[%s866] sm:$0xff]
      %v868 = vld [vmem:[%s866 + $0x8] sm:$0xff]
      %v869 = vld [vmem:[%s866 + $0x10] sm:$0xff]
      %v870 = vld [vmem:[%s866 + $0x18] sm:$0xff]
      %v871 = vld [vmem:[%s866 + $0x20] sm:$0xff]
      %v872 = vld [vmem:[%s866 + $0x28] sm:$0xff]
      %v873 = vld [vmem:[%s866 + $0x30] sm:$0xff]
      %v874 = vld [vmem:[%s866 + $0x38] sm:$0xff]
      %v875 = vld [vmem:[%s866 + $0x40] sm:$0xff]
      %v876 = vld [vmem:[%s866 + $0x48] sm:$0xff]
      %v877 = vld [vmem:[%s866 + $0x50] sm:$0xff]
      %v878 = vld [vmem:[%s866 + $0x58] sm:$0xff]
      %v879 = vld [vmem:[%s866 + $0x60] sm:$0xff]
      %v880 = vld [vmem:[%s866 + $0x68] sm:$0xff]
      %v881 = vld [vmem:[%s866 + $0x70] sm:$0xff]
      %v882 = vld [vmem:[%s866 + $0x78] sm:$0xff]
      %883 = vmatprep.subr.mxu0 0.0
      %884 = vmatpush1.msra.mxu0 %v882
      %885 = vmatprep.subr.mxu0 0.0
      %886 = vmatpush1.msra.mxu0 %v881
      %887 = vmatprep.subr.mxu0 0.0
      %888 = vmatpush1.msra.mxu0 %v880
      %889 = vmatprep.subr.mxu0 0.0
      %890 = vmatpush1.msra.mxu0 %v879
      %891 = vmatprep.subr.mxu0 0.0
      %892 = vmatpush1.msra.mxu0 %v878
      %893 = vmatprep.subr.mxu0 0.0
      %894 = vmatpush1.msra.mxu0 %v877
      %895 = vmatprep.subr.mxu0 0.0
      %896 = vmatpush1.msra.mxu0 %v876
      %897 = vmatprep.subr.mxu0 0.0
      %898 = vmatpush1.msra.mxu0 %v875
      %899 = vmatprep.subr.mxu0 0.0
      %900 = vmatpush1.msra.mxu0 %v874
      %901 = vmatprep.subr.mxu0 0.0
      %902 = vmatpush1.msra.mxu0 %v873
      %903 = vmatprep.subr.mxu0 0.0
      %904 = vmatpush1.msra.mxu0 %v872
      %905 = vmatprep.subr.mxu0 0.0
      %906 = vmatpush1.msra.mxu0 %v871
      %907 = vmatprep.subr.mxu0 0.0
      %908 = vmatpush1.msra.mxu0 %v870
      %909 = vmatprep.subr.mxu0 0.0
      %910 = vmatpush1.msra.mxu0 %v869
      %911 = vmatprep.subr.mxu0 0.0
      %912 = vmatpush1.msra.mxu0 %v868
      %913 = vmatprep.subr.mxu0 0.0
      %914 = vmatpush1.msra.mxu0 %v867
      %915 = vmatprep.subr.mxu0 0.0
      %916 = vmatpush2.msra.mxu0 0.0
      %917 = vmatprep.subr.mxu0 0.0
      %918 = vmatpush2.msra.mxu0 0.0
      %919 = vmatprep.subr.mxu0 0.0
      %920 = vmatpush2.msra.mxu0 0.0
      %921 = vmatprep.subr.mxu0 0.0
      %922 = vmatpush2.msra.mxu0 0.0
      %923 = vmatprep.subr.mxu0 0.0
      %924 = vmatpush2.msra.mxu0 0.0
      %925 = vmatprep.subr.mxu0 0.0
      %926 = vmatpush2.msra.mxu0 0.0
      %927 = vmatprep.subr.mxu0 0.0
      %928 = vmatpush2.msra.mxu0 0.0
      %929 = vmatprep.subr.mxu0 0.0
      %930 = vmatpush2.msra.mxu0 0.0
      %931 = vmatprep.subr.mxu0 0.0
      %932 = vmatpush2.msra.mxu0 0.0
      %933 = vmatprep.subr.mxu0 0.0
      %934 = vmatpush2.msra.mxu0 0.0
      %935 = vmatprep.subr.mxu0 0.0
      %936 = vmatpush2.msra.mxu0 0.0
      %937 = vmatprep.subr.mxu0 0.0
      %938 = vmatpush2.msra.mxu0 0.0
      %939 = vmatprep.subr.mxu0 0.0
      %940 = vmatpush2.msra.mxu0 0.0
      %941 = vmatprep.subr.mxu0 0.0
      %942 = vmatpush2.msra.mxu0 0.0
      %943 = vmatprep.subr.mxu0 0.0
      %944 = vmatpush2.msra.mxu0 0.0
      %945 = vmatprep.subr.mxu0 0.0
      %946 = vmatpush2.msra.mxu0 0.0
      %947 = vmatprep.mubr.f32.mxu0 0.0
      %948 = vmatmul.mubr.f32.gmra.mxu0 %v853
      %v949 = vpop.f32.mrf.mxu0
      %v950 = vadd.f32 0.0, %v949
      %v951 = vpop.f32.mrf.mxu0
      %952 = vmatprep.mubr.f32.mxu0 0.0
      %953 = vmatmul.mubr.f32.gmra.mxu0 %v854
      %v954 = vpop.f32.mrf.mxu0
      %v955 = vadd.f32 0.0, %v954
      %v956 = vpop.f32.mrf.mxu0
      %957 = vmatprep.mubr.f32.mxu0 0.0
      %958 = vmatmul.mubr.f32.gmra.mxu0 %v855
      %v959 = vpop.f32.mrf.mxu0
      %v960 = vadd.f32 0.0, %v959
      %v961 = vpop.f32.mrf.mxu0
      %962 = vmatprep.mubr.f32.mxu0 0.0
      %963 = vmatmul.mubr.f32.gmra.mxu0 %v856
      %v964 = vpop.f32.mrf.mxu0
      %v965 = vadd.f32 0.0, %v964
      %v966 = vpop.f32.mrf.mxu0
      %967 = vmatprep.mubr.f32.mxu0 0.0
      %968 = vmatmul.mubr.f32.gmra.mxu0 %v857
      %v969 = vpop.f32.mrf.mxu0
      %v970 = vadd.f32 0.0, %v969
      %v971 = vpop.f32.mrf.mxu0
      %972 = vmatprep.mubr.f32.mxu0 0.0
      %973 = vmatmul.mubr.f32.gmra.mxu0 %v858
      %v974 = vpop.f32.mrf.mxu0
      %v975 = vadd.f32 0.0, %v974
      %v976 = vpop.f32.mrf.mxu0
      %977 = vmatprep.mubr.f32.mxu0 0.0
      %978 = vmatmul.mubr.f32.gmra.mxu0 %v859
      %v979 = vpop.f32.mrf.mxu0
      %v980 = vadd.f32 0.0, %v979
      %v981 = vpop.f32.mrf.mxu0
      %982 = vmatprep.mubr.f32.mxu0 0.0
      %983 = vmatmul.mubr.f32.gmra.mxu0 %v860
      %v984 = vpop.f32.mrf.mxu0
      %v985 = vadd.f32 0.0, %v984
      %v986 = vpop.f32.mrf.mxu0
      %987 = vmatprep.mubr.f32.mxu0 0.0
      %988 = vmatmul.mubr.f32.gmra.mxu0 %v861
      %v989 = vpop.f32.mrf.mxu0
      %v990 = vadd.f32 0.0, %v989
      %v991 = vpop.f32.mrf.mxu0
      %992 = vmatprep.mubr.f32.mxu0 0.0
      %993 = vmatmul.mubr.f32.gmra.mxu0 %v862
      %v994 = vpop.f32.mrf.mxu0
      %v995 = vadd.f32 0.0, %v994
      %v996 = vpop.f32.mrf.mxu0
      %997 = vmatprep.mubr.f32.mxu0 0.0
      %998 = vmatmul.mubr.f32.gmra.mxu0 %v863
      %v999 = vpop.f32.mrf.mxu0
      %v1000 = vadd.f32 0.0, %v999
      %v1001 = vpop.f32.mrf.mxu0
      %1002 = vmatprep.mubr.f32.mxu0 0.0
      %1003 = vmatmul.mubr.f32.gmra.mxu0 %v864
      %v1004 = vpop.f32.mrf.mxu0
      %v1005 = vadd.f32 0.0, %v1004
      %v1006 = vpop.f32.mrf.mxu0
      %1007 = vmatprep.mubr.f32.mxu0 0.0
      %1008 = vmatmul.mubr.f32.gmra.mxu0 %v865
      %v1009 = vpop.f32.mrf.mxu0
      %v1010 = vadd.f32 0.0, %v1009
      %v1011 = vpop.f32.mrf.mxu0
      %1012 = vdwg.mxu0
      %v1013 = vadd.f32 %v840, %v950
      %v1014 = vadd.f32 %v841, %v955
      %v1015 = vadd.f32 %v842, %v960
      %v1016 = vadd.f32 %v843, %v965
      %v1017 = vadd.f32 %v844, %v970
      %v1018 = vadd.f32 %v845, %v975
      %v1019 = vadd.f32 %v846, %v980
      %v1020 = vadd.f32 %v847, %v985
      %v1021 = vadd.f32 %v848, %v990
      %v1022 = vadd.f32 %v849, %v995
      %v1023 = vadd.f32 %v850, %v1000
      %v1024 = vadd.f32 %v851, %v1005
      %v1025 = vadd.f32 %v852, %v1010
      %1026 = vst.msk [vmem:[#allocation2] sm:$0xff] %vm225, %v1013
      %1027 = vst.msk [vmem:[#allocation2 + $0x8] sm:$0xff] %vm225, %v1014
      %1028 = vst.msk [vmem:[#allocation2 + $0x10] sm:$0xff] %vm225, %v1015
      %1029 = vst.msk [vmem:[#allocation2 + $0x18] sm:$0xff] %vm225, %v1016
      %1030 = vst.msk [vmem:[#allocation2 + $0x20] sm:$0xff] %vm225, %v1017
      %1031 = vst.msk [vmem:[#allocation2 + $0x28] sm:$0xff] %vm225, %v1018
      %1032 = vst.msk [vmem:[#allocation2 + $0x30] sm:$0xff] %vm225, %v1019
      %1033 = vst.msk [vmem:[#allocation2 + $0x38] sm:$0xff] %vm225, %v1020
      %1034 = vst.msk [vmem:[#allocation2 + $0x40] sm:$0xff] %vm225, %v1021
      %1035 = vst.msk [vmem:[#allocation2 + $0x48] sm:$0xff] %vm225, %v1022
      %1036 = vst.msk [vmem:[#allocation2 + $0x50] sm:$0xff] %vm225, %v1023
      %1037 = vst.msk [vmem:[#allocation2 + $0x58] sm:$0xff] %vm225, %v1024
      %1038 = vst.msk [vmem:[#allocation2 + $0x60] sm:$0xf] %vm440, %v1025
      %v1039 = vld [vmem:[#allocation2] sm:$0xff]
      %v1040 = vld [vmem:[#allocation2 + $0x8] sm:$0xff]
      %v1041 = vld [vmem:[#allocation2 + $0x10] sm:$0xff]
      %v1042 = vld [vmem:[#allocation2 + $0x18] sm:$0xff]
      %v1043 = vld [vmem:[#allocation2 + $0x20] sm:$0xff]
      %v1044 = vld [vmem:[#allocation2 + $0x28] sm:$0xff]
      %v1045 = vld [vmem:[#allocation2 + $0x30] sm:$0xff]
      %v1046 = vld [vmem:[#allocation2 + $0x38] sm:$0xff]
      %v1047 = vld [vmem:[#allocation2 + $0x40] sm:$0xff]
      %v1048 = vld [vmem:[#allocation2 + $0x48] sm:$0xff]
      %v1049 = vld [vmem:[#allocation2 + $0x50] sm:$0xff]
      %v1050 = vld [vmem:[#allocation2 + $0x58] sm:$0xff]
      %v1051 = vld [vmem:[#allocation2 + $0x60] sm:$0xf]
      %v1052 = vld [vmem:[%s2] sm:$0x1]
      %v1054 = vlaneseq
      %v1055 = vshrl.u32 %v1054, 7
      %v1056 = vsub.s32 0, %v1055
      %v1057 = vrot.slane %v1052, %v1056
      %v1059 = vadd.f32 %v1039, %v1057
      %v1060 = vadd.f32 %v1040, %v1057
      %v1061 = vadd.f32 %v1041, %v1057
      %v1062 = vadd.f32 %v1042, %v1057
      %v1063 = vadd.f32 %v1043, %v1057
      %v1064 = vadd.f32 %v1044, %v1057
      %v1065 = vadd.f32 %v1045, %v1057
      %v1066 = vadd.f32 %v1046, %v1057
      %v1067 = vadd.f32 %v1047, %v1057
      %v1068 = vadd.f32 %v1048, %v1057
      %v1069 = vadd.f32 %v1049, %v1057
      %v1070 = vadd.f32 %v1050, %v1057
      %v1071 = vadd.f32 %v1051, %v1057
      %v1072 = vmax.f32 %v1059, 0.0
      %v1073 = vmax.f32 %v1060, 0.0
      %v1074 = vmax.f32 %v1061, 0.0
      %v1075 = vmax.f32 %v1062, 0.0
      %v1076 = vmax.f32 %v1063, 0.0
      %v1077 = vmax.f32 %v1064, 0.0
      %v1078 = vmax.f32 %v1065, 0.0
      %v1079 = vmax.f32 %v1066, 0.0
      %v1080 = vmax.f32 %v1067, 0.0
      %v1081 = vmax.f32 %v1068, 0.0
      %v1082 = vmax.f32 %v1069, 0.0
      %v1083 = vmax.f32 %v1070, 0.0
      %v1084 = vmax.f32 %v1071, 0.0
      %1085 = vst.msk [vmem:[#allocation2] sm:$0xff] %vm225, %v1072
      %1086 = vst.msk [vmem:[#allocation2 + $0x8] sm:$0xff] %vm225, %v1073
      %1087 = vst.msk [vmem:[#allocation2 + $0x10] sm:$0xff] %vm225, %v1074
      %1088 = vst.msk [vmem:[#allocation2 + $0x18] sm:$0xff] %vm225, %v1075
      %1089 = vst.msk [vmem:[#allocation2 + $0x20] sm:$0xff] %vm225, %v1076
      %1090 = vst.msk [vmem:[#allocation2 + $0x28] sm:$0xff] %vm225, %v1077
      %1091 = vst.msk [vmem:[#allocation2 + $0x30] sm:$0xff] %vm225, %v1078
      %1092 = vst.msk [vmem:[#allocation2 + $0x38] sm:$0xff] %vm225, %v1079
      %1093 = vst.msk [vmem:[#allocation2 + $0x40] sm:$0xff] %vm225, %v1080
      %1094 = vst.msk [vmem:[#allocation2 + $0x48] sm:$0xff] %vm225, %v1081
      %1095 = vst.msk [vmem:[#allocation2 + $0x50] sm:$0xff] %vm225, %v1082
      %1096 = vst.msk [vmem:[#allocation2 + $0x58] sm:$0xff] %vm225, %v1083
      %1097 = vst.msk [vmem:[#allocation2 + $0x60] sm:$0xf] %vm440, %v1084
      %vm1098 = vcmask 261120
      %1099 = vst.msk [vmem:[%s224] sm:$0xff] %vm1098, 0.0
      %1100 = vst.msk [vmem:[%s224 + $0x8] sm:$0xff] %vm1098, 0.0
      %1101 = vst.msk [vmem:[%s224 + $0x10] sm:$0xff] %vm1098, 0.0
      %1102 = vst.msk [vmem:[%s224 + $0x18] sm:$0xff] %vm1098, 0.0
      %1103 = vst.msk [vmem:[%s224 + $0x20] sm:$0xff] %vm1098, 0.0
      %1104 = vst.msk [vmem:[%s224 + $0x28] sm:$0xff] %vm1098, 0.0
      %1105 = vst.msk [vmem:[%s224 + $0x30] sm:$0xff] %vm1098, 0.0
      %1106 = vst.msk [vmem:[%s224 + $0x38] sm:$0xff] %vm1098, 0.0
      %1107 = vst.msk [vmem:[%s224 + $0x40] sm:$0xff] %vm1098, 0.0
      %1108 = vst.msk [vmem:[%s224 + $0x48] sm:$0xff] %vm1098, 0.0
      %1109 = vst.msk [vmem:[%s224 + $0x50] sm:$0xff] %vm1098, 0.0
      %1110 = vst.msk [vmem:[%s224 + $0x58] sm:$0xff] %vm1098, 0.0
      %vm1111 = vcmask 257024
      %1112 = vst.msk [vmem:[%s224 + $0x60] sm:$0xf] %vm1111, 0.0
      %v1113 = vld [vmem:[%s224] sm:$0xff]
      %v1114 = vld [vmem:[%s224 + $0x8] sm:$0xff]
      %v1115 = vld [vmem:[%s224 + $0x10] sm:$0xff]
      %v1116 = vld [vmem:[%s224 + $0x18] sm:$0xff]
      %v1117 = vld [vmem:[%s224 + $0x20] sm:$0xff]
      %v1118 = vld [vmem:[%s224 + $0x28] sm:$0xff]
      %v1119 = vld [vmem:[%s224 + $0x30] sm:$0xff]
      %v1120 = vld [vmem:[%s224 + $0x38] sm:$0xff]
      %v1121 = vld [vmem:[%s224 + $0x40] sm:$0xff]
      %v1122 = vld [vmem:[%s224 + $0x48] sm:$0xff]
      %v1123 = vld [vmem:[%s224 + $0x50] sm:$0xff]
      %v1124 = vld [vmem:[%s224 + $0x58] sm:$0xff]
      %v1125 = vld [vmem:[%s224 + $0x60] sm:$0xf]
      %v1126 = vld [vmem:[#allocation2] sm:$0xff]
      %v1127 = vld [vmem:[#allocation2 + $0x8] sm:$0xff]
      %v1128 = vld [vmem:[#allocation2 + $0x10] sm:$0xff]
      %v1129 = vld [vmem:[#allocation2 + $0x18] sm:$0xff]
      %v1130 = vld [vmem:[#allocation2 + $0x20] sm:$0xff]
      %v1131 = vld [vmem:[#allocation2 + $0x28] sm:$0xff]
      %v1132 = vld [vmem:[#allocation2 + $0x30] sm:$0xff]
      %v1133 = vld [vmem:[#allocation2 + $0x38] sm:$0xff]
      %v1134 = vld [vmem:[#allocation2 + $0x40] sm:$0xff]
      %v1135 = vld [vmem:[#allocation2 + $0x48] sm:$0xff]
      %v1136 = vld [vmem:[#allocation2 + $0x50] sm:$0xff]
      %v1137 = vld [vmem:[#allocation2 + $0x58] sm:$0xff]
      %v1138 = vld [vmem:[#allocation2 + $0x60] sm:$0xf]
      %v1139 = vld [vmem:[%s3] sm:$0xff]
      %v1140 = vld [vmem:[%s3 + $0x8] sm:$0xff]
      %v1141 = vld [vmem:[%s3 + $0x10] sm:$0xff]
      %v1142 = vld [vmem:[%s3 + $0x18] sm:$0xff]
      %v1143 = vld [vmem:[%s3 + $0x20] sm:$0xff]
      %v1144 = vld [vmem:[%s3 + $0x28] sm:$0xff]
      %v1145 = vld [vmem:[%s3 + $0x30] sm:$0xff]
      %v1146 = vld [vmem:[%s3 + $0x38] sm:$0xff]
      %v1148 = vsel %vm225, %v1126, 0
      %v1151 = vsel %vm225, %v1127, 0
      %v1154 = vsel %vm225, %v1128, 0
      %v1157 = vsel %vm225, %v1129, 0
      %v1160 = vsel %vm225, %v1130, 0
      %v1163 = vsel %vm225, %v1131, 0
      %v1166 = vsel %vm225, %v1132, 0
      %v1169 = vsel %vm225, %v1133, 0
      %v1172 = vsel %vm225, %v1134, 0
      %v1175 = vsel %vm225, %v1135, 0
      %v1178 = vsel %vm225, %v1136, 0
      %v1181 = vsel %vm225, %v1137, 0
      %v1184 = vsel %vm225, %v1138, 0
      %1186 = vmatprep.subr.mxu0 0.0
      %1187 = vmatpush1.msra.mxu0 0.0
      %1188 = vmatprep.subr.mxu0 0.0
      %1189 = vmatpush1.msra.mxu0 0.0
      %1190 = vmatprep.subr.mxu0 0.0
      %1191 = vmatpush1.msra.mxu0 0.0
      %1192 = vmatprep.subr.mxu0 0.0
      %1193 = vmatpush1.msra.mxu0 0.0
      %1194 = vmatprep.subr.mxu0 0.0
      %1195 = vmatpush1.msra.mxu0 0.0
      %1196 = vmatprep.subr.mxu0 0.0
      %1197 = vmatpush1.msra.mxu0 0.0
      %1198 = vmatprep.subr.mxu0 0.0
      %1199 = vmatpush1.msra.mxu0 0.0
      %1200 = vmatprep.subr.mxu0 0.0
      %1201 = vmatpush1.msra.mxu0 0.0
      %1202 = vmatprep.subr.mxu0 0.0
      %1203 = vmatpush1.msra.mxu0 %v1146
      %1204 = vmatprep.subr.mxu0 0.0
      %1205 = vmatpush1.msra.mxu0 %v1145
      %1206 = vmatprep.subr.mxu0 0.0
      %1207 = vmatpush1.msra.mxu0 %v1144
      %1208 = vmatprep.subr.mxu0 0.0
      %1209 = vmatpush1.msra.mxu0 %v1143
      %1210 = vmatprep.subr.mxu0 0.0
      %1211 = vmatpush1.msra.mxu0 %v1142
      %1212 = vmatprep.subr.mxu0 0.0
      %1213 = vmatpush1.msra.mxu0 %v1141
      %1214 = vmatprep.subr.mxu0 0.0
      %1215 = vmatpush1.msra.mxu0 %v1140
      %1216 = vmatprep.subr.mxu0 0.0
      %1217 = vmatpush1.msra.mxu0 %v1139
      %1218 = vmatprep.subr.mxu0 0.0
      %1219 = vmatpush2.msra.mxu0 0.0
      %1220 = vmatprep.subr.mxu0 0.0
      %1221 = vmatpush2.msra.mxu0 0.0
      %1222 = vmatprep.subr.mxu0 0.0
      %1223 = vmatpush2.msra.mxu0 0.0
      %1224 = vmatprep.subr.mxu0 0.0
      %1225 = vmatpush2.msra.mxu0 0.0
      %1226 = vmatprep.subr.mxu0 0.0
      %1227 = vmatpush2.msra.mxu0 0.0
      %1228 = vmatprep.subr.mxu0 0.0
      %1229 = vmatpush2.msra.mxu0 0.0
      %1230 = vmatprep.subr.mxu0 0.0
      %1231 = vmatpush2.msra.mxu0 0.0
      %1232 = vmatprep.subr.mxu0 0.0
      %1233 = vmatpush2.msra.mxu0 0.0
      %1234 = vmatprep.subr.mxu0 0.0
      %1235 = vmatpush2.msra.mxu0 0.0
      %1236 = vmatprep.subr.mxu0 0.0
      %1237 = vmatpush2.msra.mxu0 0.0
      %1238 = vmatprep.subr.mxu0 0.0
      %1239 = vmatpush2.msra.mxu0 0.0
      %1240 = vmatprep.subr.mxu0 0.0
      %1241 = vmatpush2.msra.mxu0 0.0
      %1242 = vmatprep.subr.mxu0 0.0
      %1243 = vmatpush2.msra.mxu0 0.0
      %1244 = vmatprep.subr.mxu0 0.0
      %1245 = vmatpush2.msra.mxu0 0.0
      %1246 = vmatprep.subr.mxu0 0.0
      %1247 = vmatpush2.msra.mxu0 0.0
      %1248 = vmatprep.subr.mxu0 0.0
      %1249 = vmatpush2.msra.mxu0 0.0
      %1250 = vmatprep.mubr.f32.mxu0 0.0
      %1251 = vmatmul.mubr.f32.gmra.mxu0 %v1148
      %v1252 = vpop.f32.mrf.mxu0
      %v1253 = vadd.f32 0.0, %v1252
      %v1254 = vpop.f32.mrf.mxu0
      %1255 = vmatprep.mubr.f32.mxu0 0.0
      %1256 = vmatmul.mubr.f32.gmra.mxu0 %v1151
      %v1257 = vpop.f32.mrf.mxu0
      %v1258 = vadd.f32 0.0, %v1257
      %v1259 = vpop.f32.mrf.mxu0
      %1260 = vmatprep.mubr.f32.mxu0 0.0
      %1261 = vmatmul.mubr.f32.gmra.mxu0 %v1154
      %v1262 = vpop.f32.mrf.mxu0
      %v1263 = vadd.f32 0.0, %v1262
      %v1264 = vpop.f32.mrf.mxu0
      %1265 = vmatprep.mubr.f32.mxu0 0.0
      %1266 = vmatmul.mubr.f32.gmra.mxu0 %v1157
      %v1267 = vpop.f32.mrf.mxu0
      %v1268 = vadd.f32 0.0, %v1267
      %v1269 = vpop.f32.mrf.mxu0
      %1270 = vmatprep.mubr.f32.mxu0 0.0
      %1271 = vmatmul.mubr.f32.gmra.mxu0 %v1160
      %v1272 = vpop.f32.mrf.mxu0
      %v1273 = vadd.f32 0.0, %v1272
      %v1274 = vpop.f32.mrf.mxu0
      %1275 = vmatprep.mubr.f32.mxu0 0.0
      %1276 = vmatmul.mubr.f32.gmra.mxu0 %v1163
      %v1277 = vpop.f32.mrf.mxu0
      %v1278 = vadd.f32 0.0, %v1277
      %v1279 = vpop.f32.mrf.mxu0
      %1280 = vmatprep.mubr.f32.mxu0 0.0
      %1281 = vmatmul.mubr.f32.gmra.mxu0 %v1166
      %v1282 = vpop.f32.mrf.mxu0
      %v1283 = vadd.f32 0.0, %v1282
      %v1284 = vpop.f32.mrf.mxu0
      %1285 = vmatprep.mubr.f32.mxu0 0.0
      %1286 = vmatmul.mubr.f32.gmra.mxu0 %v1169
      %v1287 = vpop.f32.mrf.mxu0
      %v1288 = vadd.f32 0.0, %v1287
      %v1289 = vpop.f32.mrf.mxu0
      %1290 = vmatprep.mubr.f32.mxu0 0.0
      %1291 = vmatmul.mubr.f32.gmra.mxu0 %v1172
      %v1292 = vpop.f32.mrf.mxu0
      %v1293 = vadd.f32 0.0, %v1292
      %v1294 = vpop.f32.mrf.mxu0
      %1295 = vmatprep.mubr.f32.mxu0 0.0
      %1296 = vmatmul.mubr.f32.gmra.mxu0 %v1175
      %v1297 = vpop.f32.mrf.mxu0
      %v1298 = vadd.f32 0.0, %v1297
      %v1299 = vpop.f32.mrf.mxu0
      %1300 = vmatprep.mubr.f32.mxu0 0.0
      %1301 = vmatmul.mubr.f32.gmra.mxu0 %v1178
      %v1302 = vpop.f32.mrf.mxu0
      %v1303 = vadd.f32 0.0, %v1302
      %v1304 = vpop.f32.mrf.mxu0
      %1305 = vmatprep.mubr.f32.mxu0 0.0
      %1306 = vmatmul.mubr.f32.gmra.mxu0 %v1181
      %v1307 = vpop.f32.mrf.mxu0
      %v1308 = vadd.f32 0.0, %v1307
      %v1309 = vpop.f32.mrf.mxu0
      %1310 = vmatprep.mubr.f32.mxu0 0.0
      %1311 = vmatmul.mubr.f32.gmra.mxu0 %v1184
      %v1312 = vpop.f32.mrf.mxu0
      %v1313 = vadd.f32 0.0, %v1312
      %v1314 = vpop.f32.mrf.mxu0
      %1315 = vdwg.mxu0
      %v1316 = vadd.f32 %v1113, %v1253
      %v1317 = vadd.f32 %v1114, %v1258
      %v1318 = vadd.f32 %v1115, %v1263
      %v1319 = vadd.f32 %v1116, %v1268
      %v1320 = vadd.f32 %v1117, %v1273
      %v1321 = vadd.f32 %v1118, %v1278
      %v1322 = vadd.f32 %v1119, %v1283
      %v1323 = vadd.f32 %v1120, %v1288
      %v1324 = vadd.f32 %v1121, %v1293
      %v1325 = vadd.f32 %v1122, %v1298
      %v1326 = vadd.f32 %v1123, %v1303
      %v1327 = vadd.f32 %v1124, %v1308
      %v1328 = vadd.f32 %v1125, %v1313
      %1329 = vst.msk [vmem:[%s224] sm:$0xff] %vm1098, %v1316
      %1330 = vst.msk [vmem:[%s224 + $0x8] sm:$0xff] %vm1098, %v1317
      %1331 = vst.msk [vmem:[%s224 + $0x10] sm:$0xff] %vm1098, %v1318
      %1332 = vst.msk [vmem:[%s224 + $0x18] sm:$0xff] %vm1098, %v1319
      %1333 = vst.msk [vmem:[%s224 + $0x20] sm:$0xff] %vm1098, %v1320
      %1334 = vst.msk [vmem:[%s224 + $0x28] sm:$0xff] %vm1098, %v1321
      %1335 = vst.msk [vmem:[%s224 + $0x30] sm:$0xff] %vm1098, %v1322
      %1336 = vst.msk [vmem:[%s224 + $0x38] sm:$0xff] %vm1098, %v1323
      %1337 = vst.msk [vmem:[%s224 + $0x40] sm:$0xff] %vm1098, %v1324
      %1338 = vst.msk [vmem:[%s224 + $0x48] sm:$0xff] %vm1098, %v1325
      %1339 = vst.msk [vmem:[%s224 + $0x50] sm:$0xff] %vm1098, %v1326
      %1340 = vst.msk [vmem:[%s224 + $0x58] sm:$0xff] %vm1098, %v1327
      %1341 = vst.msk [vmem:[%s224 + $0x60] sm:$0xf] %vm1111, %v1328
      %v1342 = vld [vmem:[%s224] sm:$0xff]
      %v1343 = vld [vmem:[%s224 + $0x8] sm:$0xff]
      %v1344 = vld [vmem:[%s224 + $0x10] sm:$0xff]
      %v1345 = vld [vmem:[%s224 + $0x18] sm:$0xff]
      %v1346 = vld [vmem:[%s224 + $0x20] sm:$0xff]
      %v1347 = vld [vmem:[%s224 + $0x28] sm:$0xff]
      %v1348 = vld [vmem:[%s224 + $0x30] sm:$0xff]
      %v1349 = vld [vmem:[%s224 + $0x38] sm:$0xff]
      %v1350 = vld [vmem:[%s224 + $0x40] sm:$0xff]
      %v1351 = vld [vmem:[%s224 + $0x48] sm:$0xff]
      %v1352 = vld [vmem:[%s224 + $0x50] sm:$0xff]
      %v1353 = vld [vmem:[%s224 + $0x58] sm:$0xff]
      %v1354 = vld [vmem:[%s224 + $0x60] sm:$0xf]
      %v1355 = vld [vmem:[#allocation2 + $0x1] sm:$0xff]
      %v1356 = vld [vmem:[#allocation2 + $0x9] sm:$0xff]
      %v1357 = vld [vmem:[#allocation2 + $0x11] sm:$0xff]
      %v1358 = vld [vmem:[#allocation2 + $0x19] sm:$0xff]
      %v1359 = vld [vmem:[#allocation2 + $0x21] sm:$0xff]
      %v1360 = vld [vmem:[#allocation2 + $0x29] sm:$0xff]
      %v1361 = vld [vmem:[#allocation2 + $0x31] sm:$0xff]
      %v1362 = vld [vmem:[#allocation2 + $0x39] sm:$0xff]
      %v1363 = vld [vmem:[#allocation2 + $0x41] sm:$0xff]
      %v1364 = vld [vmem:[#allocation2 + $0x49] sm:$0xff]
      %v1365 = vld [vmem:[#allocation2 + $0x51] sm:$0xff]
      %v1366 = vld [vmem:[#allocation2 + $0x59] sm:$0xff]
      %v1367 = vld [vmem:[#allocation2 + $0x61] sm:$0xf]
      %s1368 = scalar_lea.vmem %s3, 64
      %v1369 = vld [vmem:[%s1368] sm:$0xff]
      %v1370 = vld [vmem:[%s1368 + $0x8] sm:$0xff]
      %v1371 = vld [vmem:[%s1368 + $0x10] sm:$0xff]
      %v1372 = vld [vmem:[%s1368 + $0x18] sm:$0xff]
      %v1373 = vld [vmem:[%s1368 + $0x20] sm:$0xff]
      %v1374 = vld [vmem:[%s1368 + $0x28] sm:$0xff]
      %v1375 = vld [vmem:[%s1368 + $0x30] sm:$0xff]
      %v1376 = vld [vmem:[%s1368 + $0x38] sm:$0xff]
      %v1378 = vsel %vm225, %v1355, 0
      %v1381 = vsel %vm225, %v1356, 0
      %v1384 = vsel %vm225, %v1357, 0
      %v1387 = vsel %vm225, %v1358, 0
      %v1390 = vsel %vm225, %v1359, 0
      %v1393 = vsel %vm225, %v1360, 0
      %v1396 = vsel %vm225, %v1361, 0
      %v1399 = vsel %vm225, %v1362, 0
      %v1402 = vsel %vm225, %v1363, 0
      %v1405 = vsel %vm225, %v1364, 0
      %v1408 = vsel %vm225, %v1365, 0
      %v1411 = vsel %vm225, %v1366, 0
      %v1414 = vsel %vm225, %v1367, 0
      %1416 = vmatprep.subr.mxu0 0.0
      %1417 = vmatpush1.msra.mxu0 0.0
      %1418 = vmatprep.subr.mxu0 0.0
      %1419 = vmatpush1.msra.mxu0 0.0
      %1420 = vmatprep.subr.mxu0 0.0
      %1421 = vmatpush1.msra.mxu0 0.0
      %1422 = vmatprep.subr.mxu0 0.0
      %1423 = vmatpush1.msra.mxu0 0.0
      %1424 = vmatprep.subr.mxu0 0.0
      %1425 = vmatpush1.msra.mxu0 0.0
      %1426 = vmatprep.subr.mxu0 0.0
      %1427 = vmatpush1.msra.mxu0 0.0
      %1428 = vmatprep.subr.mxu0 0.0
      %1429 = vmatpush1.msra.mxu0 0.0
      %1430 = vmatprep.subr.mxu0 0.0
      %1431 = vmatpush1.msra.mxu0 0.0
      %1432 = vmatprep.subr.mxu0 0.0
      %1433 = vmatpush1.msra.mxu0 %v1376
      %1434 = vmatprep.subr.mxu0 0.0
      %1435 = vmatpush1.msra.mxu0 %v1375
      %1436 = vmatprep.subr.mxu0 0.0
      %1437 = vmatpush1.msra.mxu0 %v1374
      %1438 = vmatprep.subr.mxu0 0.0
      %1439 = vmatpush1.msra.mxu0 %v1373
      %1440 = vmatprep.subr.mxu0 0.0
      %1441 = vmatpush1.msra.mxu0 %v1372
      %1442 = vmatprep.subr.mxu0 0.0
      %1443 = vmatpush1.msra.mxu0 %v1371
      %1444 = vmatprep.subr.mxu0 0.0
      %1445 = vmatpush1.msra.mxu0 %v1370
      %1446 = vmatprep.subr.mxu0 0.0
      %1447 = vmatpush1.msra.mxu0 %v1369
      %1448 = vmatprep.subr.mxu0 0.0
      %1449 = vmatpush2.msra.mxu0 0.0
      %1450 = vmatprep.subr.mxu0 0.0
      %1451 = vmatpush2.msra.mxu0 0.0
      %1452 = vmatprep.subr.mxu0 0.0
      %1453 = vmatpush2.msra.mxu0 0.0
      %1454 = vmatprep.subr.mxu0 0.0
      %1455 = vmatpush2.msra.mxu0 0.0
      %1456 = vmatprep.subr.mxu0 0.0
      %1457 = vmatpush2.msra.mxu0 0.0
      %1458 = vmatprep.subr.mxu0 0.0
      %1459 = vmatpush2.msra.mxu0 0.0
      %1460 = vmatprep.subr.mxu0 0.0
      %1461 = vmatpush2.msra.mxu0 0.0
      %1462 = vmatprep.subr.mxu0 0.0
      %1463 = vmatpush2.msra.mxu0 0.0
      %1464 = vmatprep.subr.mxu0 0.0
      %1465 = vmatpush2.msra.mxu0 0.0
      %1466 = vmatprep.subr.mxu0 0.0
      %1467 = vmatpush2.msra.mxu0 0.0
      %1468 = vmatprep.subr.mxu0 0.0
      %1469 = vmatpush2.msra.mxu0 0.0
      %1470 = vmatprep.subr.mxu0 0.0
      %1471 = vmatpush2.msra.mxu0 0.0
      %1472 = vmatprep.subr.mxu0 0.0
      %1473 = vmatpush2.msra.mxu0 0.0
      %1474 = vmatprep.subr.mxu0 0.0
      %1475 = vmatpush2.msra.mxu0 0.0
      %1476 = vmatprep.subr.mxu0 0.0
      %1477 = vmatpush2.msra.mxu0 0.0
      %1478 = vmatprep.subr.mxu0 0.0
      %1479 = vmatpush2.msra.mxu0 0.0
      %1480 = vmatprep.mubr.f32.mxu0 0.0
      %1481 = vmatmul.mubr.f32.gmra.mxu0 %v1378
      %v1482 = vpop.f32.mrf.mxu0
      %v1483 = vadd.f32 0.0, %v1482
      %v1484 = vpop.f32.mrf.mxu0
      %1485 = vmatprep.mubr.f32.mxu0 0.0
      %1486 = vmatmul.mubr.f32.gmra.mxu0 %v1381
      %v1487 = vpop.f32.mrf.mxu0
      %v1488 = vadd.f32 0.0, %v1487
      %v1489 = vpop.f32.mrf.mxu0
      %1490 = vmatprep.mubr.f32.mxu0 0.0
      %1491 = vmatmul.mubr.f32.gmra.mxu0 %v1384
      %v1492 = vpop.f32.mrf.mxu0
      %v1493 = vadd.f32 0.0, %v1492
      %v1494 = vpop.f32.mrf.mxu0
      %1495 = vmatprep.mubr.f32.mxu0 0.0
      %1496 = vmatmul.mubr.f32.gmra.mxu0 %v1387
      %v1497 = vpop.f32.mrf.mxu0
      %v1498 = vadd.f32 0.0, %v1497
      %v1499 = vpop.f32.mrf.mxu0
      %1500 = vmatprep.mubr.f32.mxu0 0.0
      %1501 = vmatmul.mubr.f32.gmra.mxu0 %v1390
      %v1502 = vpop.f32.mrf.mxu0
      %v1503 = vadd.f32 0.0, %v1502
      %v1504 = vpop.f32.mrf.mxu0
      %1505 = vmatprep.mubr.f32.mxu0 0.0
      %1506 = vmatmul.mubr.f32.gmra.mxu0 %v1393
      %v1507 = vpop.f32.mrf.mxu0
      %v1508 = vadd.f32 0.0, %v1507
      %v1509 = vpop.f32.mrf.mxu0
      %1510 = vmatprep.mubr.f32.mxu0 0.0
      %1511 = vmatmul.mubr.f32.gmra.mxu0 %v1396
      %v1512 = vpop.f32.mrf.mxu0
      %v1513 = vadd.f32 0.0, %v1512
      %v1514 = vpop.f32.mrf.mxu0
      %1515 = vmatprep.mubr.f32.mxu0 0.0
      %1516 = vmatmul.mubr.f32.gmra.mxu0 %v1399
      %v1517 = vpop.f32.mrf.mxu0
      %v1518 = vadd.f32 0.0, %v1517
      %v1519 = vpop.f32.mrf.mxu0
      %1520 = vmatprep.mubr.f32.mxu0 0.0
      %1521 = vmatmul.mubr.f32.gmra.mxu0 %v1402
      %v1522 = vpop.f32.mrf.mxu0
      %v1523 = vadd.f32 0.0, %v1522
      %v1524 = vpop.f32.mrf.mxu0
      %1525 = vmatprep.mubr.f32.mxu0 0.0
      %1526 = vmatmul.mubr.f32.gmra.mxu0 %v1405
      %v1527 = vpop.f32.mrf.mxu0
      %v1528 = vadd.f32 0.0, %v1527
      %v1529 = vpop.f32.mrf.mxu0
      %1530 = vmatprep.mubr.f32.mxu0 0.0
      %1531 = vmatmul.mubr.f32.gmra.mxu0 %v1408
      %v1532 = vpop.f32.mrf.mxu0
      %v1533 = vadd.f32 0.0, %v1532
      %v1534 = vpop.f32.mrf.mxu0
      %1535 = vmatprep.mubr.f32.mxu0 0.0
      %1536 = vmatmul.mubr.f32.gmra.mxu0 %v1411
      %v1537 = vpop.f32.mrf.mxu0
      %v1538 = vadd.f32 0.0, %v1537
      %v1539 = vpop.f32.mrf.mxu0
      %1540 = vmatprep.mubr.f32.mxu0 0.0
      %1541 = vmatmul.mubr.f32.gmra.mxu0 %v1414
      %v1542 = vpop.f32.mrf.mxu0
      %v1543 = vadd.f32 0.0, %v1542
      %v1544 = vpop.f32.mrf.mxu0
      %1545 = vdwg.mxu0
      %v1546 = vadd.f32 %v1342, %v1483
      %v1547 = vadd.f32 %v1343, %v1488
      %v1548 = vadd.f32 %v1344, %v1493
      %v1549 = vadd.f32 %v1345, %v1498
      %v1550 = vadd.f32 %v1346, %v1503
      %v1551 = vadd.f32 %v1347, %v1508
      %v1552 = vadd.f32 %v1348, %v1513
      %v1553 = vadd.f32 %v1349, %v1518
      %v1554 = vadd.f32 %v1350, %v1523
      %v1555 = vadd.f32 %v1351, %v1528
      %v1556 = vadd.f32 %v1352, %v1533
      %v1557 = vadd.f32 %v1353, %v1538
      %v1558 = vadd.f32 %v1354, %v1543
      %1559 = vst.msk [vmem:[%s224] sm:$0xff] %vm1098, %v1546
      %1560 = vst.msk [vmem:[%s224 + $0x8] sm:$0xff] %vm1098, %v1547
      %1561 = vst.msk [vmem:[%s224 + $0x10] sm:$0xff] %vm1098, %v1548
      %1562 = vst.msk [vmem:[%s224 + $0x18] sm:$0xff] %vm1098, %v1549
      %1563 = vst.msk [vmem:[%s224 + $0x20] sm:$0xff] %vm1098, %v1550
      %1564 = vst.msk [vmem:[%s224 + $0x28] sm:$0xff] %vm1098, %v1551
      %1565 = vst.msk [vmem:[%s224 + $0x30] sm:$0xff] %vm1098, %v1552
      %1566 = vst.msk [vmem:[%s224 + $0x38] sm:$0xff] %vm1098, %v1553
      %1567 = vst.msk [vmem:[%s224 + $0x40] sm:$0xff] %vm1098, %v1554
      %1568 = vst.msk [vmem:[%s224 + $0x48] sm:$0xff] %vm1098, %v1555
      %1569 = vst.msk [vmem:[%s224 + $0x50] sm:$0xff] %vm1098, %v1556
      %1570 = vst.msk [vmem:[%s224 + $0x58] sm:$0xff] %vm1098, %v1557
      %1571 = vst.msk [vmem:[%s224 + $0x60] sm:$0xf] %vm1111, %v1558
      %v1572 = vld [vmem:[%s224] sm:$0xff]
      %v1573 = vld [vmem:[%s224 + $0x8] sm:$0xff]
      %v1574 = vld [vmem:[%s224 + $0x10] sm:$0xff]
      %v1575 = vld [vmem:[%s224 + $0x18] sm:$0xff]
      %v1576 = vld [vmem:[%s224 + $0x20] sm:$0xff]
      %v1577 = vld [vmem:[%s224 + $0x28] sm:$0xff]
      %v1578 = vld [vmem:[%s224 + $0x30] sm:$0xff]
      %v1579 = vld [vmem:[%s224 + $0x38] sm:$0xff]
      %v1580 = vld [vmem:[%s224 + $0x40] sm:$0xff]
      %v1581 = vld [vmem:[%s224 + $0x48] sm:$0xff]
      %v1582 = vld [vmem:[%s224 + $0x50] sm:$0xff]
      %v1583 = vld [vmem:[%s224 + $0x58] sm:$0xff]
      %v1584 = vld [vmem:[%s224 + $0x60] sm:$0xf]
      %v1585 = vld [vmem:[#allocation2 + $0x2] sm:$0xff]
      %v1586 = vld [vmem:[#allocation2 + $0xa] sm:$0xff]
      %v1587 = vld [vmem:[#allocation2 + $0x12] sm:$0xff]
      %v1588 = vld [vmem:[#allocation2 + $0x1a] sm:$0xff]
      %v1589 = vld [vmem:[#allocation2 + $0x22] sm:$0xff]
      %v1590 = vld [vmem:[#allocation2 + $0x2a] sm:$0xff]
      %v1591 = vld [vmem:[#allocation2 + $0x32] sm:$0xff]
      %v1592 = vld [vmem:[#allocation2 + $0x3a] sm:$0xff]
      %v1593 = vld [vmem:[#allocation2 + $0x42] sm:$0xff]
      %v1594 = vld [vmem:[#allocation2 + $0x4a] sm:$0xff]
      %v1595 = vld [vmem:[#allocation2 + $0x52] sm:$0xff]
      %v1596 = vld [vmem:[#allocation2 + $0x5a] sm:$0xff]
      %v1597 = vld [vmem:[#allocation2 + $0x62] sm:$0xf]
      %s1598 = scalar_lea.vmem %s3, 128
      %v1599 = vld [vmem:[%s1598] sm:$0xff]
      %v1600 = vld [vmem:[%s1598 + $0x8] sm:$0xff]
      %v1601 = vld [vmem:[%s1598 + $0x10] sm:$0xff]
      %v1602 = vld [vmem:[%s1598 + $0x18] sm:$0xff]
      %v1603 = vld [vmem:[%s1598 + $0x20] sm:$0xff]
      %v1604 = vld [vmem:[%s1598 + $0x28] sm:$0xff]
      %v1605 = vld [vmem:[%s1598 + $0x30] sm:$0xff]
      %v1606 = vld [vmem:[%s1598 + $0x38] sm:$0xff]
      %v1608 = vsel %vm225, %v1585, 0
      %v1611 = vsel %vm225, %v1586, 0
      %v1614 = vsel %vm225, %v1587, 0
      %v1617 = vsel %vm225, %v1588, 0
      %v1620 = vsel %vm225, %v1589, 0
      %v1623 = vsel %vm225, %v1590, 0
      %v1626 = vsel %vm225, %v1591, 0
      %v1629 = vsel %vm225, %v1592, 0
      %v1632 = vsel %vm225, %v1593, 0
      %v1635 = vsel %vm225, %v1594, 0
      %v1638 = vsel %vm225, %v1595, 0
      %v1641 = vsel %vm225, %v1596, 0
      %v1644 = vsel %vm225, %v1597, 0
      %1646 = vmatprep.subr.mxu0 0.0
      %1647 = vmatpush1.msra.mxu0 0.0
      %1648 = vmatprep.subr.mxu0 0.0
      %1649 = vmatpush1.msra.mxu0 0.0
      %1650 = vmatprep.subr.mxu0 0.0
      %1651 = vmatpush1.msra.mxu0 0.0
      %1652 = vmatprep.subr.mxu0 0.0
      %1653 = vmatpush1.msra.mxu0 0.0
      %1654 = vmatprep.subr.mxu0 0.0
      %1655 = vmatpush1.msra.mxu0 0.0
      %1656 = vmatprep.subr.mxu0 0.0
      %1657 = vmatpush1.msra.mxu0 0.0
      %1658 = vmatprep.subr.mxu0 0.0
      %1659 = vmatpush1.msra.mxu0 0.0
      %1660 = vmatprep.subr.mxu0 0.0
      %1661 = vmatpush1.msra.mxu0 0.0
      %1662 = vmatprep.subr.mxu0 0.0
      %1663 = vmatpush1.msra.mxu0 %v1606
      %1664 = vmatprep.subr.mxu0 0.0
      %1665 = vmatpush1.msra.mxu0 %v1605
      %1666 = vmatprep.subr.mxu0 0.0
      %1667 = vmatpush1.msra.mxu0 %v1604
      %1668 = vmatprep.subr.mxu0 0.0
      %1669 = vmatpush1.msra.mxu0 %v1603
      %1670 = vmatprep.subr.mxu0 0.0
      %1671 = vmatpush1.msra.mxu0 %v1602
      %1672 = vmatprep.subr.mxu0 0.0
      %1673 = vmatpush1.msra.mxu0 %v1601
      %1674 = vmatprep.subr.mxu0 0.0
      %1675 = vmatpush1.msra.mxu0 %v1600
      %1676 = vmatprep.subr.mxu0 0.0
      %1677 = vmatpush1.msra.mxu0 %v1599
      %1678 = vmatprep.subr.mxu0 0.0
      %1679 = vmatpush2.msra.mxu0 0.0
      %1680 = vmatprep.subr.mxu0 0.0
      %1681 = vmatpush2.msra.mxu0 0.0
      %1682 = vmatprep.subr.mxu0 0.0
      %1683 = vmatpush2.msra.mxu0 0.0
      %1684 = vmatprep.subr.mxu0 0.0
      %1685 = vmatpush2.msra.mxu0 0.0
      %1686 = vmatprep.subr.mxu0 0.0
      %1687 = vmatpush2.msra.mxu0 0.0
      %1688 = vmatprep.subr.mxu0 0.0
      %1689 = vmatpush2.msra.mxu0 0.0
      %1690 = vmatprep.subr.mxu0 0.0
      %1691 = vmatpush2.msra.mxu0 0.0
      %1692 = vmatprep.subr.mxu0 0.0
      %1693 = vmatpush2.msra.mxu0 0.0
      %1694 = vmatprep.subr.mxu0 0.0
      %1695 = vmatpush2.msra.mxu0 0.0
      %1696 = vmatprep.subr.mxu0 0.0
      %1697 = vmatpush2.msra.mxu0 0.0
      %1698 = vmatprep.subr.mxu0 0.0
      %1699 = vmatpush2.msra.mxu0 0.0
      %1700 = vmatprep.subr.mxu0 0.0
      %1701 = vmatpush2.msra.mxu0 0.0
      %1702 = vmatprep.subr.mxu0 0.0
      %1703 = vmatpush2.msra.mxu0 0.0
      %1704 = vmatprep.subr.mxu0 0.0
      %1705 = vmatpush2.msra.mxu0 0.0
      %1706 = vmatprep.subr.mxu0 0.0
      %1707 = vmatpush2.msra.mxu0 0.0
      %1708 = vmatprep.subr.mxu0 0.0
      %1709 = vmatpush2.msra.mxu0 0.0
      %1710 = vmatprep.mubr.f32.mxu0 0.0
      %1711 = vmatmul.mubr.f32.gmra.mxu0 %v1608
      %v1712 = vpop.f32.mrf.mxu0
      %v1713 = vadd.f32 0.0, %v1712
      %v1714 = vpop.f32.mrf.mxu0
      %1715 = vmatprep.mubr.f32.mxu0 0.0
      %1716 = vmatmul.mubr.f32.gmra.mxu0 %v1611
      %v1717 = vpop.f32.mrf.mxu0
      %v1718 = vadd.f32 0.0, %v1717
      %v1719 = vpop.f32.mrf.mxu0
      %1720 = vmatprep.mubr.f32.mxu0 0.0
      %1721 = vmatmul.mubr.f32.gmra.mxu0 %v1614
      %v1722 = vpop.f32.mrf.mxu0
      %v1723 = vadd.f32 0.0, %v1722
      %v1724 = vpop.f32.mrf.mxu0
      %1725 = vmatprep.mubr.f32.mxu0 0.0
      %1726 = vmatmul.mubr.f32.gmra.mxu0 %v1617
      %v1727 = vpop.f32.mrf.mxu0
      %v1728 = vadd.f32 0.0, %v1727
      %v1729 = vpop.f32.mrf.mxu0
      %1730 = vmatprep.mubr.f32.mxu0 0.0
      %1731 = vmatmul.mubr.f32.gmra.mxu0 %v1620
      %v1732 = vpop.f32.mrf.mxu0
      %v1733 = vadd.f32 0.0, %v1732
      %v1734 = vpop.f32.mrf.mxu0
      %1735 = vmatprep.mubr.f32.mxu0 0.0
      %1736 = vmatmul.mubr.f32.gmra.mxu0 %v1623
      %v1737 = vpop.f32.mrf.mxu0
      %v1738 = vadd.f32 0.0, %v1737
      %v1739 = vpop.f32.mrf.mxu0
      %1740 = vmatprep.mubr.f32.mxu0 0.0
      %1741 = vmatmul.mubr.f32.gmra.mxu0 %v1626
      %v1742 = vpop.f32.mrf.mxu0
      %v1743 = vadd.f32 0.0, %v1742
      %v1744 = vpop.f32.mrf.mxu0
      %1745 = vmatprep.mubr.f32.mxu0 0.0
      %1746 = vmatmul.mubr.f32.gmra.mxu0 %v1629
      %v1747 = vpop.f32.mrf.mxu0
      %v1748 = vadd.f32 0.0, %v1747
      %v1749 = vpop.f32.mrf.mxu0
      %1750 = vmatprep.mubr.f32.mxu0 0.0
      %1751 = vmatmul.mubr.f32.gmra.mxu0 %v1632
      %v1752 = vpop.f32.mrf.mxu0
      %v1753 = vadd.f32 0.0, %v1752
      %v1754 = vpop.f32.mrf.mxu0
      %1755 = vmatprep.mubr.f32.mxu0 0.0
      %1756 = vmatmul.mubr.f32.gmra.mxu0 %v1635
      %v1757 = vpop.f32.mrf.mxu0
      %v1758 = vadd.f32 0.0, %v1757
      %v1759 = vpop.f32.mrf.mxu0
      %1760 = vmatprep.mubr.f32.mxu0 0.0
      %1761 = vmatmul.mubr.f32.gmra.mxu0 %v1638
      %v1762 = vpop.f32.mrf.mxu0
      %v1763 = vadd.f32 0.0, %v1762
      %v1764 = vpop.f32.mrf.mxu0
      %1765 = vmatprep.mubr.f32.mxu0 0.0
      %1766 = vmatmul.mubr.f32.gmra.mxu0 %v1641
      %v1767 = vpop.f32.mrf.mxu0
      %v1768 = vadd.f32 0.0, %v1767
      %v1769 = vpop.f32.mrf.mxu0
      %1770 = vmatprep.mubr.f32.mxu0 0.0
      %1771 = vmatmul.mubr.f32.gmra.mxu0 %v1644
      %v1772 = vpop.f32.mrf.mxu0
      %v1773 = vadd.f32 0.0, %v1772
      %v1774 = vpop.f32.mrf.mxu0
      %1775 = vdwg.mxu0
      %v1776 = vadd.f32 %v1572, %v1713
      %v1777 = vadd.f32 %v1573, %v1718
      %v1778 = vadd.f32 %v1574, %v1723
      %v1779 = vadd.f32 %v1575, %v1728
      %v1780 = vadd.f32 %v1576, %v1733
      %v1781 = vadd.f32 %v1577, %v1738
      %v1782 = vadd.f32 %v1578, %v1743
      %v1783 = vadd.f32 %v1579, %v1748
      %v1784 = vadd.f32 %v1580, %v1753
      %v1785 = vadd.f32 %v1581, %v1758
      %v1786 = vadd.f32 %v1582, %v1763
      %v1787 = vadd.f32 %v1583, %v1768
      %v1788 = vadd.f32 %v1584, %v1773
      %1789 = vst.msk [vmem:[%s224] sm:$0xff] %vm1098, %v1776
      %1790 = vst.msk [vmem:[%s224 + $0x8] sm:$0xff] %vm1098, %v1777
      %1791 = vst.msk [vmem:[%s224 + $0x10] sm:$0xff] %vm1098, %v1778
      %1792 = vst.msk [vmem:[%s224 + $0x18] sm:$0xff] %vm1098, %v1779
      %1793 = vst.msk [vmem:[%s224 + $0x20] sm:$0xff] %vm1098, %v1780
      %1794 = vst.msk [vmem:[%s224 + $0x28] sm:$0xff] %vm1098, %v1781
      %1795 = vst.msk [vmem:[%s224 + $0x30] sm:$0xff] %vm1098, %v1782
      %1796 = vst.msk [vmem:[%s224 + $0x38] sm:$0xff] %vm1098, %v1783
      %1797 = vst.msk [vmem:[%s224 + $0x40] sm:$0xff] %vm1098, %v1784
      %1798 = vst.msk [vmem:[%s224 + $0x48] sm:$0xff] %vm1098, %v1785
      %1799 = vst.msk [vmem:[%s224 + $0x50] sm:$0xff] %vm1098, %v1786
      %1800 = vst.msk [vmem:[%s224 + $0x58] sm:$0xff] %vm1098, %v1787
      %1801 = vst.msk [vmem:[%s224 + $0x60] sm:$0xf] %vm1111, %v1788
      %v1802 = vld [vmem:[%s224] sm:$0xff]
      %v1803 = vld [vmem:[%s224 + $0x8] sm:$0xff]
      %v1804 = vld [vmem:[%s224 + $0x10] sm:$0xff]
      %v1805 = vld [vmem:[%s224 + $0x18] sm:$0xff]
      %v1806 = vld [vmem:[%s224 + $0x20] sm:$0xff]
      %v1807 = vld [vmem:[%s224 + $0x28] sm:$0xff]
      %v1808 = vld [vmem:[%s224 + $0x30] sm:$0xff]
      %v1809 = vld [vmem:[%s224 + $0x38] sm:$0xff]
      %v1810 = vld [vmem:[%s224 + $0x40] sm:$0xff]
      %v1811 = vld [vmem:[%s224 + $0x48] sm:$0xff]
      %v1812 = vld [vmem:[%s224 + $0x50] sm:$0xff]
      %v1813 = vld [vmem:[%s224 + $0x58] sm:$0xff]
      %v1814 = vld [vmem:[%s224 + $0x60] sm:$0xf]
      %v1815 = vld [vmem:[#allocation2 + $0xa] sm:$0xff]
      %v1816 = vld [vmem:[#allocation2 + $0x12] sm:$0xff]
      %v1817 = vld [vmem:[#allocation2 + $0x1a] sm:$0xff]
      %v1818 = vld [vmem:[#allocation2 + $0x22] sm:$0xff]
      %v1819 = vld [vmem:[#allocation2 + $0x2a] sm:$0xff]
      %v1820 = vld [vmem:[#allocation2 + $0x32] sm:$0xff]
      %v1821 = vld [vmem:[#allocation2 + $0x3a] sm:$0xff]
      %v1822 = vld [vmem:[#allocation2 + $0x42] sm:$0xff]
      %v1823 = vld [vmem:[#allocation2 + $0x4a] sm:$0xff]
      %v1824 = vld [vmem:[#allocation2 + $0x52] sm:$0xff]
      %v1825 = vld [vmem:[#allocation2 + $0x5a] sm:$0xff]
      %v1826 = vld [vmem:[#allocation2 + $0x62] sm:$0xff]
      %v1827 = vld [vmem:[#allocation2 + $0x6a] sm:$0xf]
      %s1828 = scalar_lea.vmem %s3, 192
      %v1829 = vld [vmem:[%s1828] sm:$0xff]
      %v1830 = vld [vmem:[%s1828 + $0x8] sm:$0xff]
      %v1831 = vld [vmem:[%s1828 + $0x10] sm:$0xff]
      %v1832 = vld [vmem:[%s1828 + $0x18] sm:$0xff]
      %v1833 = vld [vmem:[%s1828 + $0x20] sm:$0xff]
      %v1834 = vld [vmem:[%s1828 + $0x28] sm:$0xff]
      %v1835 = vld [vmem:[%s1828 + $0x30] sm:$0xff]
      %v1836 = vld [vmem:[%s1828 + $0x38] sm:$0xff]
      %v1838 = vsel %vm225, %v1815, 0
      %v1841 = vsel %vm225, %v1816, 0
      %v1844 = vsel %vm225, %v1817, 0
      %v1847 = vsel %vm225, %v1818, 0
      %v1850 = vsel %vm225, %v1819, 0
      %v1853 = vsel %vm225, %v1820, 0
      %v1856 = vsel %vm225, %v1821, 0
      %v1859 = vsel %vm225, %v1822, 0
      %v1862 = vsel %vm225, %v1823, 0
      %v1865 = vsel %vm225, %v1824, 0
      %v1868 = vsel %vm225, %v1825, 0
      %v1871 = vsel %vm225, %v1826, 0
      %v1874 = vsel %vm225, %v1827, 0
      %1876 = vmatprep.subr.mxu0 0.0
      %1877 = vmatpush1.msra.mxu0 0.0
      %1878 = vmatprep.subr.mxu0 0.0
      %1879 = vmatpush1.msra.mxu0 0.0
      %1880 = vmatprep.subr.mxu0 0.0
      %1881 = vmatpush1.msra.mxu0 0.0
      %1882 = vmatprep.subr.mxu0 0.0
      %1883 = vmatpush1.msra.mxu0 0.0
      %1884 = vmatprep.subr.mxu0 0.0
      %1885 = vmatpush1.msra.mxu0 0.0
      %1886 = vmatprep.subr.mxu0 0.0
      %1887 = vmatpush1.msra.mxu0 0.0
      %1888 = vmatprep.subr.mxu0 0.0
      %1889 = vmatpush1.msra.mxu0 0.0
      %1890 = vmatprep.subr.mxu0 0.0
      %1891 = vmatpush1.msra.mxu0 0.0
      %1892 = vmatprep.subr.mxu0 0.0
      %1893 = vmatpush1.msra.mxu0 %v1836
      %1894 = vmatprep.subr.mxu0 0.0
      %1895 = vmatpush1.msra.mxu0 %v1835
      %1896 = vmatprep.subr.mxu0 0.0
      %1897 = vmatpush1.msra.mxu0 %v1834
      %1898 = vmatprep.subr.mxu0 0.0
      %1899 = vmatpush1.msra.mxu0 %v1833
      %1900 = vmatprep.subr.mxu0 0.0
      %1901 = vmatpush1.msra.mxu0 %v1832
      %1902 = vmatprep.subr.mxu0 0.0
      %1903 = vmatpush1.msra.mxu0 %v1831
      %1904 = vmatprep.subr.mxu0 0.0
      %1905 = vmatpush1.msra.mxu0 %v1830
      %1906 = vmatprep.subr.mxu0 0.0
      %1907 = vmatpush1.msra.mxu0 %v1829
      %1908 = vmatprep.subr.mxu0 0.0
      %1909 = vmatpush2.msra.mxu0 0.0
      %1910 = vmatprep.subr.mxu0 0.0
      %1911 = vmatpush2.msra.mxu0 0.0
      %1912 = vmatprep.subr.mxu0 0.0
      %1913 = vmatpush2.msra.mxu0 0.0
      %1914 = vmatprep.subr.mxu0 0.0
      %1915 = vmatpush2.msra.mxu0 0.0
      %1916 = vmatprep.subr.mxu0 0.0
      %1917 = vmatpush2.msra.mxu0 0.0
      %1918 = vmatprep.subr.mxu0 0.0
      %1919 = vmatpush2.msra.mxu0 0.0
      %1920 = vmatprep.subr.mxu0 0.0
      %1921 = vmatpush2.msra.mxu0 0.0
      %1922 = vmatprep.subr.mxu0 0.0
      %1923 = vmatpush2.msra.mxu0 0.0
      %1924 = vmatprep.subr.mxu0 0.0
      %1925 = vmatpush2.msra.mxu0 0.0
      %1926 = vmatprep.subr.mxu0 0.0
      %1927 = vmatpush2.msra.mxu0 0.0
      %1928 = vmatprep.subr.mxu0 0.0
      %1929 = vmatpush2.msra.mxu0 0.0
      %1930 = vmatprep.subr.mxu0 0.0
      %1931 = vmatpush2.msra.mxu0 0.0
      %1932 = vmatprep.subr.mxu0 0.0
      %1933 = vmatpush2.msra.mxu0 0.0
      %1934 = vmatprep.subr.mxu0 0.0
      %1935 = vmatpush2.msra.mxu0 0.0
      %1936 = vmatprep.subr.mxu0 0.0
      %1937 = vmatpush2.msra.mxu0 0.0
      %1938 = vmatprep.subr.mxu0 0.0
      %1939 = vmatpush2.msra.mxu0 0.0
      %1940 = vmatprep.mubr.f32.mxu0 0.0
      %1941 = vmatmul.mubr.f32.gmra.mxu0 %v1838
      %v1942 = vpop.f32.mrf.mxu0
      %v1943 = vadd.f32 0.0, %v1942
      %v1944 = vpop.f32.mrf.mxu0
      %1945 = vmatprep.mubr.f32.mxu0 0.0
      %1946 = vmatmul.mubr.f32.gmra.mxu0 %v1841
      %v1947 = vpop.f32.mrf.mxu0
      %v1948 = vadd.f32 0.0, %v1947
      %v1949 = vpop.f32.mrf.mxu0
      %1950 = vmatprep.mubr.f32.mxu0 0.0
      %1951 = vmatmul.mubr.f32.gmra.mxu0 %v1844
      %v1952 = vpop.f32.mrf.mxu0
      %v1953 = vadd.f32 0.0, %v1952
      %v1954 = vpop.f32.mrf.mxu0
      %1955 = vmatprep.mubr.f32.mxu0 0.0
      %1956 = vmatmul.mubr.f32.gmra.mxu0 %v1847
      %v1957 = vpop.f32.mrf.mxu0
      %v1958 = vadd.f32 0.0, %v1957
      %v1959 = vpop.f32.mrf.mxu0
      %1960 = vmatprep.mubr.f32.mxu0 0.0
      %1961 = vmatmul.mubr.f32.gmra.mxu0 %v1850
      %v1962 = vpop.f32.mrf.mxu0
      %v1963 = vadd.f32 0.0, %v1962
      %v1964 = vpop.f32.mrf.mxu0
      %1965 = vmatprep.mubr.f32.mxu0 0.0
      %1966 = vmatmul.mubr.f32.gmra.mxu0 %v1853
      %v1967 = vpop.f32.mrf.mxu0
      %v1968 = vadd.f32 0.0, %v1967
      %v1969 = vpop.f32.mrf.mxu0
      %1970 = vmatprep.mubr.f32.mxu0 0.0
      %1971 = vmatmul.mubr.f32.gmra.mxu0 %v1856
      %v1972 = vpop.f32.mrf.mxu0
      %v1973 = vadd.f32 0.0, %v1972
      %v1974 = vpop.f32.mrf.mxu0
      %1975 = vmatprep.mubr.f32.mxu0 0.0
      %1976 = vmatmul.mubr.f32.gmra.mxu0 %v1859
      %v1977 = vpop.f32.mrf.mxu0
      %v1978 = vadd.f32 0.0, %v1977
      %v1979 = vpop.f32.mrf.mxu0
      %1980 = vmatprep.mubr.f32.mxu0 0.0
      %1981 = vmatmul.mubr.f32.gmra.mxu0 %v1862
      %v1982 = vpop.f32.mrf.mxu0
      %v1983 = vadd.f32 0.0, %v1982
      %v1984 = vpop.f32.mrf.mxu0
      %1985 = vmatprep.mubr.f32.mxu0 0.0
      %1986 = vmatmul.mubr.f32.gmra.mxu0 %v1865
      %v1987 = vpop.f32.mrf.mxu0
      %v1988 = vadd.f32 0.0, %v1987
      %v1989 = vpop.f32.mrf.mxu0
      %1990 = vmatprep.mubr.f32.mxu0 0.0
      %1991 = vmatmul.mubr.f32.gmra.mxu0 %v1868
      %v1992 = vpop.f32.mrf.mxu0
      %v1993 = vadd.f32 0.0, %v1992
      %v1994 = vpop.f32.mrf.mxu0
      %1995 = vmatprep.mubr.f32.mxu0 0.0
      %1996 = vmatmul.mubr.f32.gmra.mxu0 %v1871
      %v1997 = vpop.f32.mrf.mxu0
      %v1998 = vadd.f32 0.0, %v1997
      %v1999 = vpop.f32.mrf.mxu0
      %2000 = vmatprep.mubr.f32.mxu0 0.0
      %2001 = vmatmul.mubr.f32.gmra.mxu0 %v1874
      %v2002 = vpop.f32.mrf.mxu0
      %v2003 = vadd.f32 0.0, %v2002
      %v2004 = vpop.f32.mrf.mxu0
      %2005 = vdwg.mxu0
      %v2006 = vadd.f32 %v1802, %v1943
      %v2007 = vadd.f32 %v1803, %v1948
      %v2008 = vadd.f32 %v1804, %v1953
      %v2009 = vadd.f32 %v1805, %v1958
      %v2010 = vadd.f32 %v1806, %v1963
      %v2011 = vadd.f32 %v1807, %v1968
      %v2012 = vadd.f32 %v1808, %v1973
      %v2013 = vadd.f32 %v1809, %v1978
      %v2014 = vadd.f32 %v1810, %v1983
      %v2015 = vadd.f32 %v1811, %v1988
      %v2016 = vadd.f32 %v1812, %v1993
      %v2017 = vadd.f32 %v1813, %v1998
      %v2018 = vadd.f32 %v1814, %v2003
      %2019 = vst.msk [vmem:[%s224] sm:$0xff] %vm1098, %v2006
      %2020 = vst.msk [vmem:[%s224 + $0x8] sm:$0xff] %vm1098, %v2007
      %2021 = vst.msk [vmem:[%s224 + $0x10] sm:$0xff] %vm1098, %v2008
      %2022 = vst.msk [vmem:[%s224 + $0x18] sm:$0xff] %vm1098, %v2009
      %2023 = vst.msk [vmem:[%s224 + $0x20] sm:$0xff] %vm1098, %v2010
      %2024 = vst.msk [vmem:[%s224 + $0x28] sm:$0xff] %vm1098, %v2011
      %2025 = vst.msk [vmem:[%s224 + $0x30] sm:$0xff] %vm1098, %v2012
      %2026 = vst.msk [vmem:[%s224 + $0x38] sm:$0xff] %vm1098, %v2013
      %2027 = vst.msk [vmem:[%s224 + $0x40] sm:$0xff] %vm1098, %v2014
      %2028 = vst.msk [vmem:[%s224 + $0x48] sm:$0xff] %vm1098, %v2015
      %2029 = vst.msk [vmem:[%s224 + $0x50] sm:$0xff] %vm1098, %v2016
      %2030 = vst.msk [vmem:[%s224 + $0x58] sm:$0xff] %vm1098, %v2017
      %2031 = vst.msk [vmem:[%s224 + $0x60] sm:$0xf] %vm1111, %v2018
      %v2032 = vld [vmem:[%s224] sm:$0xff]
      %v2033 = vld [vmem:[%s224 + $0x8] sm:$0xff]
      %v2034 = vld [vmem:[%s224 + $0x10] sm:$0xff]
      %v2035 = vld [vmem:[%s224 + $0x18] sm:$0xff]
      %v2036 = vld [vmem:[%s224 + $0x20] sm:$0xff]
      %v2037 = vld [vmem:[%s224 + $0x28] sm:$0xff]
      %v2038 = vld [vmem:[%s224 + $0x30] sm:$0xff]
      %v2039 = vld [vmem:[%s224 + $0x38] sm:$0xff]
      %v2040 = vld [vmem:[%s224 + $0x40] sm:$0xff]
      %v2041 = vld [vmem:[%s224 + $0x48] sm:$0xff]
      %v2042 = vld [vmem:[%s224 + $0x50] sm:$0xff]
      %v2043 = vld [vmem:[%s224 + $0x58] sm:$0xff]
      %v2044 = vld [vmem:[%s224 + $0x60] sm:$0xf]
      %v2045 = vld [vmem:[#allocation2 + $0xb] sm:$0xff]
      %v2046 = vld [vmem:[#allocation2 + $0x13] sm:$0xff]
      %v2047 = vld [vmem:[#allocation2 + $0x1b] sm:$0xff]
      %v2048 = vld [vmem:[#allocation2 + $0x23] sm:$0xff]
      %v2049 = vld [vmem:[#allocation2 + $0x2b] sm:$0xff]
      %v2050 = vld [vmem:[#allocation2 + $0x33] sm:$0xff]
      %v2051 = vld [vmem:[#allocation2 + $0x3b] sm:$0xff]
      %v2052 = vld [vmem:[#allocation2 + $0x43] sm:$0xff]
      %v2053 = vld [vmem:[#allocation2 + $0x4b] sm:$0xff]
      %v2054 = vld [vmem:[#allocation2 + $0x53] sm:$0xff]
      %v2055 = vld [vmem:[#allocation2 + $0x5b] sm:$0xff]
      %v2056 = vld [vmem:[#allocation2 + $0x63] sm:$0xff]
      %v2057 = vld [vmem:[#allocation2 + $0x6b] sm:$0xf]
      %s2058 = scalar_lea.vmem %s3, 256
      %v2059 = vld [vmem:[%s2058] sm:$0xff]
      %v2060 = vld [vmem:[%s2058 + $0x8] sm:$0xff]
      %v2061 = vld [vmem:[%s2058 + $0x10] sm:$0xff]
      %v2062 = vld [vmem:[%s2058 + $0x18] sm:$0xff]
      %v2063 = vld [vmem:[%s2058 + $0x20] sm:$0xff]
      %v2064 = vld [vmem:[%s2058 + $0x28] sm:$0xff]
      %v2065 = vld [vmem:[%s2058 + $0x30] sm:$0xff]
      %v2066 = vld [vmem:[%s2058 + $0x38] sm:$0xff]
      %v2068 = vsel %vm225, %v2045, 0
      %v2071 = vsel %vm225, %v2046, 0
      %v2074 = vsel %vm225, %v2047, 0
      %v2077 = vsel %vm225, %v2048, 0
      %v2080 = vsel %vm225, %v2049, 0
      %v2083 = vsel %vm225, %v2050, 0
      %v2086 = vsel %vm225, %v2051, 0
      %v2089 = vsel %vm225, %v2052, 0
      %v2092 = vsel %vm225, %v2053, 0
      %v2095 = vsel %vm225, %v2054, 0
      %v2098 = vsel %vm225, %v2055, 0
      %v2101 = vsel %vm225, %v2056, 0
      %v2104 = vsel %vm225, %v2057, 0
      %2106 = vmatprep.subr.mxu0 0.0
      %2107 = vmatpush1.msra.mxu0 0.0
      %2108 = vmatprep.subr.mxu0 0.0
      %2109 = vmatpush1.msra.mxu0 0.0
      %2110 = vmatprep.subr.mxu0 0.0
      %2111 = vmatpush1.msra.mxu0 0.0
      %2112 = vmatprep.subr.mxu0 0.0
      %2113 = vmatpush1.msra.mxu0 0.0
      %2114 = vmatprep.subr.mxu0 0.0
      %2115 = vmatpush1.msra.mxu0 0.0
      %2116 = vmatprep.subr.mxu0 0.0
      %2117 = vmatpush1.msra.mxu0 0.0
      %2118 = vmatprep.subr.mxu0 0.0
      %2119 = vmatpush1.msra.mxu0 0.0
      %2120 = vmatprep.subr.mxu0 0.0
      %2121 = vmatpush1.msra.mxu0 0.0
      %2122 = vmatprep.subr.mxu0 0.0
      %2123 = vmatpush1.msra.mxu0 %v2066
      %2124 = vmatprep.subr.mxu0 0.0
      %2125 = vmatpush1.msra.mxu0 %v2065
      %2126 = vmatprep.subr.mxu0 0.0
      %2127 = vmatpush1.msra.mxu0 %v2064
      %2128 = vmatprep.subr.mxu0 0.0
      %2129 = vmatpush1.msra.mxu0 %v2063
      %2130 = vmatprep.subr.mxu0 0.0
      %2131 = vmatpush1.msra.mxu0 %v2062
      %2132 = vmatprep.subr.mxu0 0.0
      %2133 = vmatpush1.msra.mxu0 %v2061
      %2134 = vmatprep.subr.mxu0 0.0
      %2135 = vmatpush1.msra.mxu0 %v2060
      %2136 = vmatprep.subr.mxu0 0.0
      %2137 = vmatpush1.msra.mxu0 %v2059
      %2138 = vmatprep.subr.mxu0 0.0
      %2139 = vmatpush2.msra.mxu0 0.0
      %2140 = vmatprep.subr.mxu0 0.0
      %2141 = vmatpush2.msra.mxu0 0.0
      %2142 = vmatprep.subr.mxu0 0.0
      %2143 = vmatpush2.msra.mxu0 0.0
      %2144 = vmatprep.subr.mxu0 0.0
      %2145 = vmatpush2.msra.mxu0 0.0
      %2146 = vmatprep.subr.mxu0 0.0
      %2147 = vmatpush2.msra.mxu0 0.0
      %2148 = vmatprep.subr.mxu0 0.0
      %2149 = vmatpush2.msra.mxu0 0.0
      %2150 = vmatprep.subr.mxu0 0.0
      %2151 = vmatpush2.msra.mxu0 0.0
      %2152 = vmatprep.subr.mxu0 0.0
      %2153 = vmatpush2.msra.mxu0 0.0
      %2154 = vmatprep.subr.mxu0 0.0
      %2155 = vmatpush2.msra.mxu0 0.0
      %2156 = vmatprep.subr.mxu0 0.0
      %2157 = vmatpush2.msra.mxu0 0.0
      %2158 = vmatprep.subr.mxu0 0.0
      %2159 = vmatpush2.msra.mxu0 0.0
      %2160 = vmatprep.subr.mxu0 0.0
      %2161 = vmatpush2.msra.mxu0 0.0
      %2162 = vmatprep.subr.mxu0 0.0
      %2163 = vmatpush2.msra.mxu0 0.0
      %2164 = vmatprep.subr.mxu0 0.0
      %2165 = vmatpush2.msra.mxu0 0.0
      %2166 = vmatprep.subr.mxu0 0.0
      %2167 = vmatpush2.msra.mxu0 0.0
      %2168 = vmatprep.subr.mxu0 0.0
      %2169 = vmatpush2.msra.mxu0 0.0
      %2170 = vmatprep.mubr.f32.mxu0 0.0
      %2171 = vmatmul.mubr.f32.gmra.mxu0 %v2068
      %v2172 = vpop.f32.mrf.mxu0
      %v2173 = vadd.f32 0.0, %v2172
      %v2174 = vpop.f32.mrf.mxu0
      %2175 = vmatprep.mubr.f32.mxu0 0.0
      %2176 = vmatmul.mubr.f32.gmra.mxu0 %v2071
      %v2177 = vpop.f32.mrf.mxu0
      %v2178 = vadd.f32 0.0, %v2177
      %v2179 = vpop.f32.mrf.mxu0
      %2180 = vmatprep.mubr.f32.mxu0 0.0
      %2181 = vmatmul.mubr.f32.gmra.mxu0 %v2074
      %v2182 = vpop.f32.mrf.mxu0
      %v2183 = vadd.f32 0.0, %v2182
      %v2184 = vpop.f32.mrf.mxu0
      %2185 = vmatprep.mubr.f32.mxu0 0.0
      %2186 = vmatmul.mubr.f32.gmra.mxu0 %v2077
      %v2187 = vpop.f32.mrf.mxu0
      %v2188 = vadd.f32 0.0, %v2187
      %v2189 = vpop.f32.mrf.mxu0
      %2190 = vmatprep.mubr.f32.mxu0 0.0
      %2191 = vmatmul.mubr.f32.gmra.mxu0 %v2080
      %v2192 = vpop.f32.mrf.mxu0
      %v2193 = vadd.f32 0.0, %v2192
      %v2194 = vpop.f32.mrf.mxu0
      %2195 = vmatprep.mubr.f32.mxu0 0.0
      %2196 = vmatmul.mubr.f32.gmra.mxu0 %v2083
      %v2197 = vpop.f32.mrf.mxu0
      %v2198 = vadd.f32 0.0, %v2197
      %v2199 = vpop.f32.mrf.mxu0
      %2200 = vmatprep.mubr.f32.mxu0 0.0
      %2201 = vmatmul.mubr.f32.gmra.mxu0 %v2086
      %v2202 = vpop.f32.mrf.mxu0
      %v2203 = vadd.f32 0.0, %v2202
      %v2204 = vpop.f32.mrf.mxu0
      %2205 = vmatprep.mubr.f32.mxu0 0.0
      %2206 = vmatmul.mubr.f32.gmra.mxu0 %v2089
      %v2207 = vpop.f32.mrf.mxu0
      %v2208 = vadd.f32 0.0, %v2207
      %v2209 = vpop.f32.mrf.mxu0
      %2210 = vmatprep.mubr.f32.mxu0 0.0
      %2211 = vmatmul.mubr.f32.gmra.mxu0 %v2092
      %v2212 = vpop.f32.mrf.mxu0
      %v2213 = vadd.f32 0.0, %v2212
      %v2214 = vpop.f32.mrf.mxu0
      %2215 = vmatprep.mubr.f32.mxu0 0.0
      %2216 = vmatmul.mubr.f32.gmra.mxu0 %v2095
      %v2217 = vpop.f32.mrf.mxu0
      %v2218 = vadd.f32 0.0, %v2217
      %v2219 = vpop.f32.mrf.mxu0
      %2220 = vmatprep.mubr.f32.mxu0 0.0
      %2221 = vmatmul.mubr.f32.gmra.mxu0 %v2098
      %v2222 = vpop.f32.mrf.mxu0
      %v2223 = vadd.f32 0.0, %v2222
      %v2224 = vpop.f32.mrf.mxu0
      %2225 = vmatprep.mubr.f32.mxu0 0.0
      %2226 = vmatmul.mubr.f32.gmra.mxu0 %v2101
      %v2227 = vpop.f32.mrf.mxu0
      %v2228 = vadd.f32 0.0, %v2227
      %v2229 = vpop.f32.mrf.mxu0
      %2230 = vmatprep.mubr.f32.mxu0 0.0
      %2231 = vmatmul.mubr.f32.gmra.mxu0 %v2104
      %v2232 = vpop.f32.mrf.mxu0
      %v2233 = vadd.f32 0.0, %v2232
      %v2234 = vpop.f32.mrf.mxu0
      %2235 = vdwg.mxu0
      %v2236 = vadd.f32 %v2032, %v2173
      %v2237 = vadd.f32 %v2033, %v2178
      %v2238 = vadd.f32 %v2034, %v2183
      %v2239 = vadd.f32 %v2035, %v2188
      %v2240 = vadd.f32 %v2036, %v2193
      %v2241 = vadd.f32 %v2037, %v2198
      %v2242 = vadd.f32 %v2038, %v2203
      %v2243 = vadd.f32 %v2039, %v2208
      %v2244 = vadd.f32 %v2040, %v2213
      %v2245 = vadd.f32 %v2041, %v2218
      %v2246 = vadd.f32 %v2042, %v2223
      %v2247 = vadd.f32 %v2043, %v2228
      %v2248 = vadd.f32 %v2044, %v2233
      %2249 = vst.msk [vmem:[%s224] sm:$0xff] %vm1098, %v2236
      %2250 = vst.msk [vmem:[%s224 + $0x8] sm:$0xff] %vm1098, %v2237
      %2251 = vst.msk [vmem:[%s224 + $0x10] sm:$0xff] %vm1098, %v2238
      %2252 = vst.msk [vmem:[%s224 + $0x18] sm:$0xff] %vm1098, %v2239
      %2253 = vst.msk [vmem:[%s224 + $0x20] sm:$0xff] %vm1098, %v2240
      %2254 = vst.msk [vmem:[%s224 + $0x28] sm:$0xff] %vm1098, %v2241
      %2255 = vst.msk [vmem:[%s224 + $0x30] sm:$0xff] %vm1098, %v2242
      %2256 = vst.msk [vmem:[%s224 + $0x38] sm:$0xff] %vm1098, %v2243
      %2257 = vst.msk [vmem:[%s224 + $0x40] sm:$0xff] %vm1098, %v2244
      %2258 = vst.msk [vmem:[%s224 + $0x48] sm:$0xff] %vm1098, %v2245
      %2259 = vst.msk [vmem:[%s224 + $0x50] sm:$0xff] %vm1098, %v2246
      %2260 = vst.msk [vmem:[%s224 + $0x58] sm:$0xff] %vm1098, %v2247
      %2261 = vst.msk [vmem:[%s224 + $0x60] sm:$0xf] %vm1111, %v2248
      %v2262 = vld [vmem:[%s224] sm:$0xff]
      %v2263 = vld [vmem:[%s224 + $0x8] sm:$0xff]
      %v2264 = vld [vmem:[%s224 + $0x10] sm:$0xff]
      %v2265 = vld [vmem:[%s224 + $0x18] sm:$0xff]
      %v2266 = vld [vmem:[%s224 + $0x20] sm:$0xff]
      %v2267 = vld [vmem:[%s224 + $0x28] sm:$0xff]
      %v2268 = vld [vmem:[%s224 + $0x30] sm:$0xff]
      %v2269 = vld [vmem:[%s224 + $0x38] sm:$0xff]
      %v2270 = vld [vmem:[%s224 + $0x40] sm:$0xff]
      %v2271 = vld [vmem:[%s224 + $0x48] sm:$0xff]
      %v2272 = vld [vmem:[%s224 + $0x50] sm:$0xff]
      %v2273 = vld [vmem:[%s224 + $0x58] sm:$0xff]
      %v2274 = vld [vmem:[%s224 + $0x60] sm:$0xf]
      %v2275 = vld [vmem:[#allocation2 + $0xc] sm:$0xff]
      %v2276 = vld [vmem:[#allocation2 + $0x14] sm:$0xff]
      %v2277 = vld [vmem:[#allocation2 + $0x1c] sm:$0xff]
      %v2278 = vld [vmem:[#allocation2 + $0x24] sm:$0xff]
      %v2279 = vld [vmem:[#allocation2 + $0x2c] sm:$0xff]
      %v2280 = vld [vmem:[#allocation2 + $0x34] sm:$0xff]
      %v2281 = vld [vmem:[#allocation2 + $0x3c] sm:$0xff]
      %v2282 = vld [vmem:[#allocation2 + $0x44] sm:$0xff]
      %v2283 = vld [vmem:[#allocation2 + $0x4c] sm:$0xff]
      %v2284 = vld [vmem:[#allocation2 + $0x54] sm:$0xff]
      %v2285 = vld [vmem:[#allocation2 + $0x5c] sm:$0xff]
      %v2286 = vld [vmem:[#allocation2 + $0x64] sm:$0xff]
      %v2287 = vld [vmem:[#allocation2 + $0x6c] sm:$0xf]
      %s2288 = scalar_lea.vmem %s3, 320
      %v2289 = vld [vmem:[%s2288] sm:$0xff]
      %v2290 = vld [vmem:[%s2288 + $0x8] sm:$0xff]
      %v2291 = vld [vmem:[%s2288 + $0x10] sm:$0xff]
      %v2292 = vld [vmem:[%s2288 + $0x18] sm:$0xff]
      %v2293 = vld [vmem:[%s2288 + $0x20] sm:$0xff]
      %v2294 = vld [vmem:[%s2288 + $0x28] sm:$0xff]
      %v2295 = vld [vmem:[%s2288 + $0x30] sm:$0xff]
      %v2296 = vld [vmem:[%s2288 + $0x38] sm:$0xff]
      %v2298 = vsel %vm225, %v2275, 0
      %v2301 = vsel %vm225, %v2276, 0
      %v2304 = vsel %vm225, %v2277, 0
      %v2307 = vsel %vm225, %v2278, 0
      %v2310 = vsel %vm225, %v2279, 0
      %v2313 = vsel %vm225, %v2280, 0
      %v2316 = vsel %vm225, %v2281, 0
      %v2319 = vsel %vm225, %v2282, 0
      %v2322 = vsel %vm225, %v2283, 0
      %v2325 = vsel %vm225, %v2284, 0
      %v2328 = vsel %vm225, %v2285, 0
      %v2331 = vsel %vm225, %v2286, 0
      %v2334 = vsel %vm225, %v2287, 0
      %2336 = vmatprep.subr.mxu0 0.0
      %2337 = vmatpush1.msra.mxu0 0.0
      %2338 = vmatprep.subr.mxu0 0.0
      %2339 = vmatpush1.msra.mxu0 0.0
      %2340 = vmatprep.subr.mxu0 0.0
      %2341 = vmatpush1.msra.mxu0 0.0
      %2342 = vmatprep.subr.mxu0 0.0
      %2343 = vmatpush1.msra.mxu0 0.0
      %2344 = vmatprep.subr.mxu0 0.0
      %2345 = vmatpush1.msra.mxu0 0.0
      %2346 = vmatprep.subr.mxu0 0.0
      %2347 = vmatpush1.msra.mxu0 0.0
      %2348 = vmatprep.subr.mxu0 0.0
      %2349 = vmatpush1.msra.mxu0 0.0
      %2350 = vmatprep.subr.mxu0 0.0
      %2351 = vmatpush1.msra.mxu0 0.0
      %2352 = vmatprep.subr.mxu0 0.0
      %2353 = vmatpush1.msra.mxu0 %v2296
      %2354 = vmatprep.subr.mxu0 0.0
      %2355 = vmatpush1.msra.mxu0 %v2295
      %2356 = vmatprep.subr.mxu0 0.0
      %2357 = vmatpush1.msra.mxu0 %v2294
      %2358 = vmatprep.subr.mxu0 0.0
      %2359 = vmatpush1.msra.mxu0 %v2293
      %2360 = vmatprep.subr.mxu0 0.0
      %2361 = vmatpush1.msra.mxu0 %v2292
      %2362 = vmatprep.subr.mxu0 0.0
      %2363 = vmatpush1.msra.mxu0 %v2291
      %2364 = vmatprep.subr.mxu0 0.0
      %2365 = vmatpush1.msra.mxu0 %v2290
      %2366 = vmatprep.subr.mxu0 0.0
      %2367 = vmatpush1.msra.mxu0 %v2289
      %2368 = vmatprep.subr.mxu0 0.0
      %2369 = vmatpush2.msra.mxu0 0.0
      %2370 = vmatprep.subr.mxu0 0.0
      %2371 = vmatpush2.msra.mxu0 0.0
      %2372 = vmatprep.subr.mxu0 0.0
      %2373 = vmatpush2.msra.mxu0 0.0
      %2374 = vmatprep.subr.mxu0 0.0
      %2375 = vmatpush2.msra.mxu0 0.0
      %2376 = vmatprep.subr.mxu0 0.0
      %2377 = vmatpush2.msra.mxu0 0.0
      %2378 = vmatprep.subr.mxu0 0.0
      %2379 = vmatpush2.msra.mxu0 0.0
      %2380 = vmatprep.subr.mxu0 0.0
      %2381 = vmatpush2.msra.mxu0 0.0
      %2382 = vmatprep.subr.mxu0 0.0
      %2383 = vmatpush2.msra.mxu0 0.0
      %2384 = vmatprep.subr.mxu0 0.0
      %2385 = vmatpush2.msra.mxu0 0.0
      %2386 = vmatprep.subr.mxu0 0.0
      %2387 = vmatpush2.msra.mxu0 0.0
      %2388 = vmatprep.subr.mxu0 0.0
      %2389 = vmatpush2.msra.mxu0 0.0
      %2390 = vmatprep.subr.mxu0 0.0
      %2391 = vmatpush2.msra.mxu0 0.0
      %2392 = vmatprep.subr.mxu0 0.0
      %2393 = vmatpush2.msra.mxu0 0.0
      %2394 = vmatprep.subr.mxu0 0.0
      %2395 = vmatpush2.msra.mxu0 0.0
      %2396 = vmatprep.subr.mxu0 0.0
      %2397 = vmatpush2.msra.mxu0 0.0
      %2398 = vmatprep.subr.mxu0 0.0
      %2399 = vmatpush2.msra.mxu0 0.0
      %2400 = vmatprep.mubr.f32.mxu0 0.0
      %2401 = vmatmul.mubr.f32.gmra.mxu0 %v2298
      %v2402 = vpop.f32.mrf.mxu0
      %v2403 = vadd.f32 0.0, %v2402
      %v2404 = vpop.f32.mrf.mxu0
      %2405 = vmatprep.mubr.f32.mxu0 0.0
      %2406 = vmatmul.mubr.f32.gmra.mxu0 %v2301
      %v2407 = vpop.f32.mrf.mxu0
      %v2408 = vadd.f32 0.0, %v2407
      %v2409 = vpop.f32.mrf.mxu0
      %2410 = vmatprep.mubr.f32.mxu0 0.0
      %2411 = vmatmul.mubr.f32.gmra.mxu0 %v2304
      %v2412 = vpop.f32.mrf.mxu0
      %v2413 = vadd.f32 0.0, %v2412
      %v2414 = vpop.f32.mrf.mxu0
      %2415 = vmatprep.mubr.f32.mxu0 0.0
      %2416 = vmatmul.mubr.f32.gmra.mxu0 %v2307
      %v2417 = vpop.f32.mrf.mxu0
      %v2418 = vadd.f32 0.0, %v2417
      %v2419 = vpop.f32.mrf.mxu0
      %2420 = vmatprep.mubr.f32.mxu0 0.0
      %2421 = vmatmul.mubr.f32.gmra.mxu0 %v2310
      %v2422 = vpop.f32.mrf.mxu0
      %v2423 = vadd.f32 0.0, %v2422
      %v2424 = vpop.f32.mrf.mxu0
      %2425 = vmatprep.mubr.f32.mxu0 0.0
      %2426 = vmatmul.mubr.f32.gmra.mxu0 %v2313
      %v2427 = vpop.f32.mrf.mxu0
      %v2428 = vadd.f32 0.0, %v2427
      %v2429 = vpop.f32.mrf.mxu0
      %2430 = vmatprep.mubr.f32.mxu0 0.0
      %2431 = vmatmul.mubr.f32.gmra.mxu0 %v2316
      %v2432 = vpop.f32.mrf.mxu0
      %v2433 = vadd.f32 0.0, %v2432
      %v2434 = vpop.f32.mrf.mxu0
      %2435 = vmatprep.mubr.f32.mxu0 0.0
      %2436 = vmatmul.mubr.f32.gmra.mxu0 %v2319
      %v2437 = vpop.f32.mrf.mxu0
      %v2438 = vadd.f32 0.0, %v2437
      %v2439 = vpop.f32.mrf.mxu0
      %2440 = vmatprep.mubr.f32.mxu0 0.0
      %2441 = vmatmul.mubr.f32.gmra.mxu0 %v2322
      %v2442 = vpop.f32.mrf.mxu0
      %v2443 = vadd.f32 0.0, %v2442
      %v2444 = vpop.f32.mrf.mxu0
      %2445 = vmatprep.mubr.f32.mxu0 0.0
      %2446 = vmatmul.mubr.f32.gmra.mxu0 %v2325
      %v2447 = vpop.f32.mrf.mxu0
      %v2448 = vadd.f32 0.0, %v2447
      %v2449 = vpop.f32.mrf.mxu0
      %2450 = vmatprep.mubr.f32.mxu0 0.0
      %2451 = vmatmul.mubr.f32.gmra.mxu0 %v2328
      %v2452 = vpop.f32.mrf.mxu0
      %v2453 = vadd.f32 0.0, %v2452
      %v2454 = vpop.f32.mrf.mxu0
      %2455 = vmatprep.mubr.f32.mxu0 0.0
      %2456 = vmatmul.mubr.f32.gmra.mxu0 %v2331
      %v2457 = vpop.f32.mrf.mxu0
      %v2458 = vadd.f32 0.0, %v2457
      %v2459 = vpop.f32.mrf.mxu0
      %2460 = vmatprep.mubr.f32.mxu0 0.0
      %2461 = vmatmul.mubr.f32.gmra.mxu0 %v2334
      %v2462 = vpop.f32.mrf.mxu0
      %v2463 = vadd.f32 0.0, %v2462
      %v2464 = vpop.f32.mrf.mxu0
      %2465 = vdwg.mxu0
      %v2466 = vadd.f32 %v2262, %v2403
      %v2467 = vadd.f32 %v2263, %v2408
      %v2468 = vadd.f32 %v2264, %v2413
      %v2469 = vadd.f32 %v2265, %v2418
      %v2470 = vadd.f32 %v2266, %v2423
      %v2471 = vadd.f32 %v2267, %v2428
      %v2472 = vadd.f32 %v2268, %v2433
      %v2473 = vadd.f32 %v2269, %v2438
      %v2474 = vadd.f32 %v2270, %v2443
      %v2475 = vadd.f32 %v2271, %v2448
      %v2476 = vadd.f32 %v2272, %v2453
      %v2477 = vadd.f32 %v2273, %v2458
      %v2478 = vadd.f32 %v2274, %v2463
      %2479 = vst.msk [vmem:[%s224] sm:$0xff] %vm1098, %v2466
      %2480 = vst.msk [vmem:[%s224 + $0x8] sm:$0xff] %vm1098, %v2467
      %2481 = vst.msk [vmem:[%s224 + $0x10] sm:$0xff] %vm1098, %v2468
      %2482 = vst.msk [vmem:[%s224 + $0x18] sm:$0xff] %vm1098, %v2469
      %2483 = vst.msk [vmem:[%s224 + $0x20] sm:$0xff] %vm1098, %v2470
      %2484 = vst.msk [vmem:[%s224 + $0x28] sm:$0xff] %vm1098, %v2471
      %2485 = vst.msk [vmem:[%s224 + $0x30] sm:$0xff] %vm1098, %v2472
      %2486 = vst.msk [vmem:[%s224 + $0x38] sm:$0xff] %vm1098, %v2473
      %2487 = vst.msk [vmem:[%s224 + $0x40] sm:$0xff] %vm1098, %v2474
      %2488 = vst.msk [vmem:[%s224 + $0x48] sm:$0xff] %vm1098, %v2475
      %2489 = vst.msk [vmem:[%s224 + $0x50] sm:$0xff] %vm1098, %v2476
      %2490 = vst.msk [vmem:[%s224 + $0x58] sm:$0xff] %vm1098, %v2477
      %2491 = vst.msk [vmem:[%s224 + $0x60] sm:$0xf] %vm1111, %v2478
      %v2492 = vld [vmem:[%s224] sm:$0xff]
      %v2493 = vld [vmem:[%s224 + $0x8] sm:$0xff]
      %v2494 = vld [vmem:[%s224 + $0x10] sm:$0xff]
      %v2495 = vld [vmem:[%s224 + $0x18] sm:$0xff]
      %v2496 = vld [vmem:[%s224 + $0x20] sm:$0xff]
      %v2497 = vld [vmem:[%s224 + $0x28] sm:$0xff]
      %v2498 = vld [vmem:[%s224 + $0x30] sm:$0xff]
      %v2499 = vld [vmem:[%s224 + $0x38] sm:$0xff]
      %v2500 = vld [vmem:[%s224 + $0x40] sm:$0xff]
      %v2501 = vld [vmem:[%s224 + $0x48] sm:$0xff]
      %v2502 = vld [vmem:[%s224 + $0x50] sm:$0xff]
      %v2503 = vld [vmem:[%s224 + $0x58] sm:$0xff]
      %v2504 = vld [vmem:[%s224 + $0x60] sm:$0xf]
      %v2505 = vld [vmem:[#allocation2 + $0x14] sm:$0xff]
      %v2506 = vld [vmem:[#allocation2 + $0x1c] sm:$0xff]
      %v2507 = vld [vmem:[#allocation2 + $0x24] sm:$0xff]
      %v2508 = vld [vmem:[#allocation2 + $0x2c] sm:$0xff]
      %v2509 = vld [vmem:[#allocation2 + $0x34] sm:$0xff]
      %v2510 = vld [vmem:[#allocation2 + $0x3c] sm:$0xff]
      %v2511 = vld [vmem:[#allocation2 + $0x44] sm:$0xff]
      %v2512 = vld [vmem:[#allocation2 + $0x4c] sm:$0xff]
      %v2513 = vld [vmem:[#allocation2 + $0x54] sm:$0xff]
      %v2514 = vld [vmem:[#allocation2 + $0x5c] sm:$0xff]
      %v2515 = vld [vmem:[#allocation2 + $0x64] sm:$0xff]
      %v2516 = vld [vmem:[#allocation2 + $0x6c] sm:$0xff]
      %v2517 = vld [vmem:[#allocation2 + $0x74] sm:$0xf]
      %s2518 = scalar_lea.vmem %s3, 384
      %v2519 = vld [vmem:[%s2518] sm:$0xff]
      %v2520 = vld [vmem:[%s2518 + $0x8] sm:$0xff]
      %v2521 = vld [vmem:[%s2518 + $0x10] sm:$0xff]
      %v2522 = vld [vmem:[%s2518 + $0x18] sm:$0xff]
      %v2523 = vld [vmem:[%s2518 + $0x20] sm:$0xff]
      %v2524 = vld [vmem:[%s2518 + $0x28] sm:$0xff]
      %v2525 = vld [vmem:[%s2518 + $0x30] sm:$0xff]
      %v2526 = vld [vmem:[%s2518 + $0x38] sm:$0xff]
      %v2528 = vsel %vm225, %v2505, 0
      %v2531 = vsel %vm225, %v2506, 0
      %v2534 = vsel %vm225, %v2507, 0
      %v2537 = vsel %vm225, %v2508, 0
      %v2540 = vsel %vm225, %v2509, 0
      %v2543 = vsel %vm225, %v2510, 0
      %v2546 = vsel %vm225, %v2511, 0
      %v2549 = vsel %vm225, %v2512, 0
      %v2552 = vsel %vm225, %v2513, 0
      %v2555 = vsel %vm225, %v2514, 0
      %v2558 = vsel %vm225, %v2515, 0
      %v2561 = vsel %vm225, %v2516, 0
      %v2564 = vsel %vm225, %v2517, 0
      %2566 = vmatprep.subr.mxu0 0.0
      %2567 = vmatpush1.msra.mxu0 0.0
      %2568 = vmatprep.subr.mxu0 0.0
      %2569 = vmatpush1.msra.mxu0 0.0
      %2570 = vmatprep.subr.mxu0 0.0
      %2571 = vmatpush1.msra.mxu0 0.0
      %2572 = vmatprep.subr.mxu0 0.0
      %2573 = vmatpush1.msra.mxu0 0.0
      %2574 = vmatprep.subr.mxu0 0.0
      %2575 = vmatpush1.msra.mxu0 0.0
      %2576 = vmatprep.subr.mxu0 0.0
      %2577 = vmatpush1.msra.mxu0 0.0
      %2578 = vmatprep.subr.mxu0 0.0
      %2579 = vmatpush1.msra.mxu0 0.0
      %2580 = vmatprep.subr.mxu0 0.0
      %2581 = vmatpush1.msra.mxu0 0.0
      %2582 = vmatprep.subr.mxu0 0.0
      %2583 = vmatpush1.msra.mxu0 %v2526
      %2584 = vmatprep.subr.mxu0 0.0
      %2585 = vmatpush1.msra.mxu0 %v2525
      %2586 = vmatprep.subr.mxu0 0.0
      %2587 = vmatpush1.msra.mxu0 %v2524
      %2588 = vmatprep.subr.mxu0 0.0
      %2589 = vmatpush1.msra.mxu0 %v2523
      %2590 = vmatprep.subr.mxu0 0.0
      %2591 = vmatpush1.msra.mxu0 %v2522
      %2592 = vmatprep.subr.mxu0 0.0
      %2593 = vmatpush1.msra.mxu0 %v2521
      %2594 = vmatprep.subr.mxu0 0.0
      %2595 = vmatpush1.msra.mxu0 %v2520
      %2596 = vmatprep.subr.mxu0 0.0
      %2597 = vmatpush1.msra.mxu0 %v2519
      %2598 = vmatprep.subr.mxu0 0.0
      %2599 = vmatpush2.msra.mxu0 0.0
      %2600 = vmatprep.subr.mxu0 0.0
      %2601 = vmatpush2.msra.mxu0 0.0
      %2602 = vmatprep.subr.mxu0 0.0
      %2603 = vmatpush2.msra.mxu0 0.0
      %2604 = vmatprep.subr.mxu0 0.0
      %2605 = vmatpush2.msra.mxu0 0.0
      %2606 = vmatprep.subr.mxu0 0.0
      %2607 = vmatpush2.msra.mxu0 0.0
      %2608 = vmatprep.subr.mxu0 0.0
      %2609 = vmatpush2.msra.mxu0 0.0
      %2610 = vmatprep.subr.mxu0 0.0
      %2611 = vmatpush2.msra.mxu0 0.0
      %2612 = vmatprep.subr.mxu0 0.0
      %2613 = vmatpush2.msra.mxu0 0.0
      %2614 = vmatprep.subr.mxu0 0.0
      %2615 = vmatpush2.msra.mxu0 0.0
      %2616 = vmatprep.subr.mxu0 0.0
      %2617 = vmatpush2.msra.mxu0 0.0
      %2618 = vmatprep.subr.mxu0 0.0
      %2619 = vmatpush2.msra.mxu0 0.0
      %2620 = vmatprep.subr.mxu0 0.0
      %2621 = vmatpush2.msra.mxu0 0.0
      %2622 = vmatprep.subr.mxu0 0.0
      %2623 = vmatpush2.msra.mxu0 0.0
      %2624 = vmatprep.subr.mxu0 0.0
      %2625 = vmatpush2.msra.mxu0 0.0
      %2626 = vmatprep.subr.mxu0 0.0
      %2627 = vmatpush2.msra.mxu0 0.0
      %2628 = vmatprep.subr.mxu0 0.0
      %2629 = vmatpush2.msra.mxu0 0.0
      %2630 = vmatprep.mubr.f32.mxu0 0.0
      %2631 = vmatmul.mubr.f32.gmra.mxu0 %v2528
      %v2632 = vpop.f32.mrf.mxu0
      %v2633 = vadd.f32 0.0, %v2632
      %v2634 = vpop.f32.mrf.mxu0
      %2635 = vmatprep.mubr.f32.mxu0 0.0
      %2636 = vmatmul.mubr.f32.gmra.mxu0 %v2531
      %v2637 = vpop.f32.mrf.mxu0
      %v2638 = vadd.f32 0.0, %v2637
      %v2639 = vpop.f32.mrf.mxu0
      %2640 = vmatprep.mubr.f32.mxu0 0.0
      %2641 = vmatmul.mubr.f32.gmra.mxu0 %v2534
      %v2642 = vpop.f32.mrf.mxu0
      %v2643 = vadd.f32 0.0, %v2642
      %v2644 = vpop.f32.mrf.mxu0
      %2645 = vmatprep.mubr.f32.mxu0 0.0
      %2646 = vmatmul.mubr.f32.gmra.mxu0 %v2537
      %v2647 = vpop.f32.mrf.mxu0
      %v2648 = vadd.f32 0.0, %v2647
      %v2649 = vpop.f32.mrf.mxu0
      %2650 = vmatprep.mubr.f32.mxu0 0.0
      %2651 = vmatmul.mubr.f32.gmra.mxu0 %v2540
      %v2652 = vpop.f32.mrf.mxu0
      %v2653 = vadd.f32 0.0, %v2652
      %v2654 = vpop.f32.mrf.mxu0
      %2655 = vmatprep.mubr.f32.mxu0 0.0
      %2656 = vmatmul.mubr.f32.gmra.mxu0 %v2543
      %v2657 = vpop.f32.mrf.mxu0
      %v2658 = vadd.f32 0.0, %v2657
      %v2659 = vpop.f32.mrf.mxu0
      %2660 = vmatprep.mubr.f32.mxu0 0.0
      %2661 = vmatmul.mubr.f32.gmra.mxu0 %v2546
      %v2662 = vpop.f32.mrf.mxu0
      %v2663 = vadd.f32 0.0, %v2662
      %v2664 = vpop.f32.mrf.mxu0
      %2665 = vmatprep.mubr.f32.mxu0 0.0
      %2666 = vmatmul.mubr.f32.gmra.mxu0 %v2549
      %v2667 = vpop.f32.mrf.mxu0
      %v2668 = vadd.f32 0.0, %v2667
      %v2669 = vpop.f32.mrf.mxu0
      %2670 = vmatprep.mubr.f32.mxu0 0.0
      %2671 = vmatmul.mubr.f32.gmra.mxu0 %v2552
      %v2672 = vpop.f32.mrf.mxu0
      %v2673 = vadd.f32 0.0, %v2672
      %v2674 = vpop.f32.mrf.mxu0
      %2675 = vmatprep.mubr.f32.mxu0 0.0
      %2676 = vmatmul.mubr.f32.gmra.mxu0 %v2555
      %v2677 = vpop.f32.mrf.mxu0
      %v2678 = vadd.f32 0.0, %v2677
      %v2679 = vpop.f32.mrf.mxu0
      %2680 = vmatprep.mubr.f32.mxu0 0.0
      %2681 = vmatmul.mubr.f32.gmra.mxu0 %v2558
      %v2682 = vpop.f32.mrf.mxu0
      %v2683 = vadd.f32 0.0, %v2682
      %v2684 = vpop.f32.mrf.mxu0
      %2685 = vmatprep.mubr.f32.mxu0 0.0
      %2686 = vmatmul.mubr.f32.gmra.mxu0 %v2561
      %v2687 = vpop.f32.mrf.mxu0
      %v2688 = vadd.f32 0.0, %v2687
      %v2689 = vpop.f32.mrf.mxu0
      %2690 = vmatprep.mubr.f32.mxu0 0.0
      %2691 = vmatmul.mubr.f32.gmra.mxu0 %v2564
      %v2692 = vpop.f32.mrf.mxu0
      %v2693 = vadd.f32 0.0, %v2692
      %v2694 = vpop.f32.mrf.mxu0
      %2695 = vdwg.mxu0
      %v2696 = vadd.f32 %v2492, %v2633
      %v2697 = vadd.f32 %v2493, %v2638
      %v2698 = vadd.f32 %v2494, %v2643
      %v2699 = vadd.f32 %v2495, %v2648
      %v2700 = vadd.f32 %v2496, %v2653
      %v2701 = vadd.f32 %v2497, %v2658
      %v2702 = vadd.f32 %v2498, %v2663
      %v2703 = vadd.f32 %v2499, %v2668
      %v2704 = vadd.f32 %v2500, %v2673
      %v2705 = vadd.f32 %v2501, %v2678
      %v2706 = vadd.f32 %v2502, %v2683
      %v2707 = vadd.f32 %v2503, %v2688
      %v2708 = vadd.f32 %v2504, %v2693
      %2709 = vst.msk [vmem:[%s224] sm:$0xff] %vm1098, %v2696
      %2710 = vst.msk [vmem:[%s224 + $0x8] sm:$0xff] %vm1098, %v2697
      %2711 = vst.msk [vmem:[%s224 + $0x10] sm:$0xff] %vm1098, %v2698
      %2712 = vst.msk [vmem:[%s224 + $0x18] sm:$0xff] %vm1098, %v2699
      %2713 = vst.msk [vmem:[%s224 + $0x20] sm:$0xff] %vm1098, %v2700
      %2714 = vst.msk [vmem:[%s224 + $0x28] sm:$0xff] %vm1098, %v2701
      %2715 = vst.msk [vmem:[%s224 + $0x30] sm:$0xff] %vm1098, %v2702
      %2716 = vst.msk [vmem:[%s224 + $0x38] sm:$0xff] %vm1098, %v2703
      %2717 = vst.msk [vmem:[%s224 + $0x40] sm:$0xff] %vm1098, %v2704
      %2718 = vst.msk [vmem:[%s224 + $0x48] sm:$0xff] %vm1098, %v2705
      %2719 = vst.msk [vmem:[%s224 + $0x50] sm:$0xff] %vm1098, %v2706
      %2720 = vst.msk [vmem:[%s224 + $0x58] sm:$0xff] %vm1098, %v2707
      %2721 = vst.msk [vmem:[%s224 + $0x60] sm:$0xf] %vm1111, %v2708
      %v2722 = vld [vmem:[%s224] sm:$0xff]
      %v2723 = vld [vmem:[%s224 + $0x8] sm:$0xff]
      %v2724 = vld [vmem:[%s224 + $0x10] sm:$0xff]
      %v2725 = vld [vmem:[%s224 + $0x18] sm:$0xff]
      %v2726 = vld [vmem:[%s224 + $0x20] sm:$0xff]
      %v2727 = vld [vmem:[%s224 + $0x28] sm:$0xff]
      %v2728 = vld [vmem:[%s224 + $0x30] sm:$0xff]
      %v2729 = vld [vmem:[%s224 + $0x38] sm:$0xff]
      %v2730 = vld [vmem:[%s224 + $0x40] sm:$0xff]
      %v2731 = vld [vmem:[%s224 + $0x48] sm:$0xff]
      %v2732 = vld [vmem:[%s224 + $0x50] sm:$0xff]
      %v2733 = vld [vmem:[%s224 + $0x58] sm:$0xff]
      %v2734 = vld [vmem:[%s224 + $0x60] sm:$0xf]
      %v2735 = vld [vmem:[#allocation2 + $0x15] sm:$0xff]
      %v2736 = vld [vmem:[#allocation2 + $0x1d] sm:$0xff]
      %v2737 = vld [vmem:[#allocation2 + $0x25] sm:$0xff]
      %v2738 = vld [vmem:[#allocation2 + $0x2d] sm:$0xff]
      %v2739 = vld [vmem:[#allocation2 + $0x35] sm:$0xff]
      %v2740 = vld [vmem:[#allocation2 + $0x3d] sm:$0xff]
      %v2741 = vld [vmem:[#allocation2 + $0x45] sm:$0xff]
      %v2742 = vld [vmem:[#allocation2 + $0x4d] sm:$0xff]
      %v2743 = vld [vmem:[#allocation2 + $0x55] sm:$0xff]
      %v2744 = vld [vmem:[#allocation2 + $0x5d] sm:$0xff]
      %v2745 = vld [vmem:[#allocation2 + $0x65] sm:$0xff]
      %v2746 = vld [vmem:[#allocation2 + $0x6d] sm:$0xff]
      %v2747 = vld [vmem:[#allocation2 + $0x75] sm:$0xf]
      %s2748 = scalar_lea.vmem %s3, 448
      %v2749 = vld [vmem:[%s2748] sm:$0xff]
      %v2750 = vld [vmem:[%s2748 + $0x8] sm:$0xff]
      %v2751 = vld [vmem:[%s2748 + $0x10] sm:$0xff]
      %v2752 = vld [vmem:[%s2748 + $0x18] sm:$0xff]
      %v2753 = vld [vmem:[%s2748 + $0x20] sm:$0xff]
      %v2754 = vld [vmem:[%s2748 + $0x28] sm:$0xff]
      %v2755 = vld [vmem:[%s2748 + $0x30] sm:$0xff]
      %v2756 = vld [vmem:[%s2748 + $0x38] sm:$0xff]
      %v2758 = vsel %vm225, %v2735, 0
      %v2761 = vsel %vm225, %v2736, 0
      %v2764 = vsel %vm225, %v2737, 0
      %v2767 = vsel %vm225, %v2738, 0
      %v2770 = vsel %vm225, %v2739, 0
      %v2773 = vsel %vm225, %v2740, 0
      %v2776 = vsel %vm225, %v2741, 0
      %v2779 = vsel %vm225, %v2742, 0
      %v2782 = vsel %vm225, %v2743, 0
      %v2785 = vsel %vm225, %v2744, 0
      %v2788 = vsel %vm225, %v2745, 0
      %v2791 = vsel %vm225, %v2746, 0
      %v2794 = vsel %vm225, %v2747, 0
      %2796 = vmatprep.subr.mxu0 0.0
      %2797 = vmatpush1.msra.mxu0 0.0
      %2798 = vmatprep.subr.mxu0 0.0
      %2799 = vmatpush1.msra.mxu0 0.0
      %2800 = vmatprep.subr.mxu0 0.0
      %2801 = vmatpush1.msra.mxu0 0.0
      %2802 = vmatprep.subr.mxu0 0.0
      %2803 = vmatpush1.msra.mxu0 0.0
      %2804 = vmatprep.subr.mxu0 0.0
      %2805 = vmatpush1.msra.mxu0 0.0
      %2806 = vmatprep.subr.mxu0 0.0
      %2807 = vmatpush1.msra.mxu0 0.0
      %2808 = vmatprep.subr.mxu0 0.0
      %2809 = vmatpush1.msra.mxu0 0.0
      %2810 = vmatprep.subr.mxu0 0.0
      %2811 = vmatpush1.msra.mxu0 0.0
      %2812 = vmatprep.subr.mxu0 0.0
      %2813 = vmatpush1.msra.mxu0 %v2756
      %2814 = vmatprep.subr.mxu0 0.0
      %2815 = vmatpush1.msra.mxu0 %v2755
      %2816 = vmatprep.subr.mxu0 0.0
      %2817 = vmatpush1.msra.mxu0 %v2754
      %2818 = vmatprep.subr.mxu0 0.0
      %2819 = vmatpush1.msra.mxu0 %v2753
      %2820 = vmatprep.subr.mxu0 0.0
      %2821 = vmatpush1.msra.mxu0 %v2752
      %2822 = vmatprep.subr.mxu0 0.0
      %2823 = vmatpush1.msra.mxu0 %v2751
      %2824 = vmatprep.subr.mxu0 0.0
      %2825 = vmatpush1.msra.mxu0 %v2750
      %2826 = vmatprep.subr.mxu0 0.0
      %2827 = vmatpush1.msra.mxu0 %v2749
      %2828 = vmatprep.subr.mxu0 0.0
      %2829 = vmatpush2.msra.mxu0 0.0
      %2830 = vmatprep.subr.mxu0 0.0
      %2831 = vmatpush2.msra.mxu0 0.0
      %2832 = vmatprep.subr.mxu0 0.0
      %2833 = vmatpush2.msra.mxu0 0.0
      %2834 = vmatprep.subr.mxu0 0.0
      %2835 = vmatpush2.msra.mxu0 0.0
      %2836 = vmatprep.subr.mxu0 0.0
      %2837 = vmatpush2.msra.mxu0 0.0
      %2838 = vmatprep.subr.mxu0 0.0
      %2839 = vmatpush2.msra.mxu0 0.0
      %2840 = vmatprep.subr.mxu0 0.0
      %2841 = vmatpush2.msra.mxu0 0.0
      %2842 = vmatprep.subr.mxu0 0.0
      %2843 = vmatpush2.msra.mxu0 0.0
      %2844 = vmatprep.subr.mxu0 0.0
      %2845 = vmatpush2.msra.mxu0 0.0
      %2846 = vmatprep.subr.mxu0 0.0
      %2847 = vmatpush2.msra.mxu0 0.0
      %2848 = vmatprep.subr.mxu0 0.0
      %2849 = vmatpush2.msra.mxu0 0.0
      %2850 = vmatprep.subr.mxu0 0.0
      %2851 = vmatpush2.msra.mxu0 0.0
      %2852 = vmatprep.subr.mxu0 0.0
      %2853 = vmatpush2.msra.mxu0 0.0
      %2854 = vmatprep.subr.mxu0 0.0
      %2855 = vmatpush2.msra.mxu0 0.0
      %2856 = vmatprep.subr.mxu0 0.0
      %2857 = vmatpush2.msra.mxu0 0.0
      %2858 = vmatprep.subr.mxu0 0.0
      %2859 = vmatpush2.msra.mxu0 0.0
      %2860 = vmatprep.mubr.f32.mxu0 0.0
      %2861 = vmatmul.mubr.f32.gmra.mxu0 %v2758
      %v2862 = vpop.f32.mrf.mxu0
      %v2863 = vadd.f32 0.0, %v2862
      %v2864 = vpop.f32.mrf.mxu0
      %2865 = vmatprep.mubr.f32.mxu0 0.0
      %2866 = vmatmul.mubr.f32.gmra.mxu0 %v2761
      %v2867 = vpop.f32.mrf.mxu0
      %v2868 = vadd.f32 0.0, %v2867
      %v2869 = vpop.f32.mrf.mxu0
      %2870 = vmatprep.mubr.f32.mxu0 0.0
      %2871 = vmatmul.mubr.f32.gmra.mxu0 %v2764
      %v2872 = vpop.f32.mrf.mxu0
      %v2873 = vadd.f32 0.0, %v2872
      %v2874 = vpop.f32.mrf.mxu0
      %2875 = vmatprep.mubr.f32.mxu0 0.0
      %2876 = vmatmul.mubr.f32.gmra.mxu0 %v2767
      %v2877 = vpop.f32.mrf.mxu0
      %v2878 = vadd.f32 0.0, %v2877
      %v2879 = vpop.f32.mrf.mxu0
      %2880 = vmatprep.mubr.f32.mxu0 0.0
      %2881 = vmatmul.mubr.f32.gmra.mxu0 %v2770
      %v2882 = vpop.f32.mrf.mxu0
      %v2883 = vadd.f32 0.0, %v2882
      %v2884 = vpop.f32.mrf.mxu0
      %2885 = vmatprep.mubr.f32.mxu0 0.0
      %2886 = vmatmul.mubr.f32.gmra.mxu0 %v2773
      %v2887 = vpop.f32.mrf.mxu0
      %v2888 = vadd.f32 0.0, %v2887
      %v2889 = vpop.f32.mrf.mxu0
      %2890 = vmatprep.mubr.f32.mxu0 0.0
      %2891 = vmatmul.mubr.f32.gmra.mxu0 %v2776
      %v2892 = vpop.f32.mrf.mxu0
      %v2893 = vadd.f32 0.0, %v2892
      %v2894 = vpop.f32.mrf.mxu0
      %2895 = vmatprep.mubr.f32.mxu0 0.0
      %2896 = vmatmul.mubr.f32.gmra.mxu0 %v2779
      %v2897 = vpop.f32.mrf.mxu0
      %v2898 = vadd.f32 0.0, %v2897
      %v2899 = vpop.f32.mrf.mxu0
      %2900 = vmatprep.mubr.f32.mxu0 0.0
      %2901 = vmatmul.mubr.f32.gmra.mxu0 %v2782
      %v2902 = vpop.f32.mrf.mxu0
      %v2903 = vadd.f32 0.0, %v2902
      %v2904 = vpop.f32.mrf.mxu0
      %2905 = vmatprep.mubr.f32.mxu0 0.0
      %2906 = vmatmul.mubr.f32.gmra.mxu0 %v2785
      %v2907 = vpop.f32.mrf.mxu0
      %v2908 = vadd.f32 0.0, %v2907
      %v2909 = vpop.f32.mrf.mxu0
      %2910 = vmatprep.mubr.f32.mxu0 0.0
      %2911 = vmatmul.mubr.f32.gmra.mxu0 %v2788
      %v2912 = vpop.f32.mrf.mxu0
      %v2913 = vadd.f32 0.0, %v2912
      %v2914 = vpop.f32.mrf.mxu0
      %2915 = vmatprep.mubr.f32.mxu0 0.0
      %2916 = vmatmul.mubr.f32.gmra.mxu0 %v2791
      %v2917 = vpop.f32.mrf.mxu0
      %v2918 = vadd.f32 0.0, %v2917
      %v2919 = vpop.f32.mrf.mxu0
      %2920 = vmatprep.mubr.f32.mxu0 0.0
      %2921 = vmatmul.mubr.f32.gmra.mxu0 %v2794
      %v2922 = vpop.f32.mrf.mxu0
      %v2923 = vadd.f32 0.0, %v2922
      %v2924 = vpop.f32.mrf.mxu0
      %2925 = vdwg.mxu0
      %v2926 = vadd.f32 %v2722, %v2863
      %v2927 = vadd.f32 %v2723, %v2868
      %v2928 = vadd.f32 %v2724, %v2873
      %v2929 = vadd.f32 %v2725, %v2878
      %v2930 = vadd.f32 %v2726, %v2883
      %v2931 = vadd.f32 %v2727, %v2888
      %v2932 = vadd.f32 %v2728, %v2893
      %v2933 = vadd.f32 %v2729, %v2898
      %v2934 = vadd.f32 %v2730, %v2903
      %v2935 = vadd.f32 %v2731, %v2908
      %v2936 = vadd.f32 %v2732, %v2913
      %v2937 = vadd.f32 %v2733, %v2918
      %v2938 = vadd.f32 %v2734, %v2923
      %2939 = vst.msk [vmem:[%s224] sm:$0xff] %vm1098, %v2926
      %2940 = vst.msk [vmem:[%s224 + $0x8] sm:$0xff] %vm1098, %v2927
      %2941 = vst.msk [vmem:[%s224 + $0x10] sm:$0xff] %vm1098, %v2928
      %2942 = vst.msk [vmem:[%s224 + $0x18] sm:$0xff] %vm1098, %v2929
      %2943 = vst.msk [vmem:[%s224 + $0x20] sm:$0xff] %vm1098, %v2930
      %2944 = vst.msk [vmem:[%s224 + $0x28] sm:$0xff] %vm1098, %v2931
      %2945 = vst.msk [vmem:[%s224 + $0x30] sm:$0xff] %vm1098, %v2932
      %2946 = vst.msk [vmem:[%s224 + $0x38] sm:$0xff] %vm1098, %v2933
      %2947 = vst.msk [vmem:[%s224 + $0x40] sm:$0xff] %vm1098, %v2934
      %2948 = vst.msk [vmem:[%s224 + $0x48] sm:$0xff] %vm1098, %v2935
      %2949 = vst.msk [vmem:[%s224 + $0x50] sm:$0xff] %vm1098, %v2936
      %2950 = vst.msk [vmem:[%s224 + $0x58] sm:$0xff] %vm1098, %v2937
      %2951 = vst.msk [vmem:[%s224 + $0x60] sm:$0xf] %vm1111, %v2938
      %v2952 = vld [vmem:[%s224] sm:$0xff]
      %v2953 = vld [vmem:[%s224 + $0x8] sm:$0xff]
      %v2954 = vld [vmem:[%s224 + $0x10] sm:$0xff]
      %v2955 = vld [vmem:[%s224 + $0x18] sm:$0xff]
      %v2956 = vld [vmem:[%s224 + $0x20] sm:$0xff]
      %v2957 = vld [vmem:[%s224 + $0x28] sm:$0xff]
      %v2958 = vld [vmem:[%s224 + $0x30] sm:$0xff]
      %v2959 = vld [vmem:[%s224 + $0x38] sm:$0xff]
      %v2960 = vld [vmem:[%s224 + $0x40] sm:$0xff]
      %v2961 = vld [vmem:[%s224 + $0x48] sm:$0xff]
      %v2962 = vld [vmem:[%s224 + $0x50] sm:$0xff]
      %v2963 = vld [vmem:[%s224 + $0x58] sm:$0xff]
      %v2964 = vld [vmem:[%s224 + $0x60] sm:$0xf]
      %v2965 = vld [vmem:[#allocation2 + $0x16] sm:$0xff]
      %v2966 = vld [vmem:[#allocation2 + $0x1e] sm:$0xff]
      %v2967 = vld [vmem:[#allocation2 + $0x26] sm:$0xff]
      %v2968 = vld [vmem:[#allocation2 + $0x2e] sm:$0xff]
      %v2969 = vld [vmem:[#allocation2 + $0x36] sm:$0xff]
      %v2970 = vld [vmem:[#allocation2 + $0x3e] sm:$0xff]
      %v2971 = vld [vmem:[#allocation2 + $0x46] sm:$0xff]
      %v2972 = vld [vmem:[#allocation2 + $0x4e] sm:$0xff]
      %v2973 = vld [vmem:[#allocation2 + $0x56] sm:$0xff]
      %v2974 = vld [vmem:[#allocation2 + $0x5e] sm:$0xff]
      %v2975 = vld [vmem:[#allocation2 + $0x66] sm:$0xff]
      %v2976 = vld [vmem:[#allocation2 + $0x6e] sm:$0xff]
      %v2977 = vld [vmem:[#allocation2 + $0x76] sm:$0xf]
      %s2978 = scalar_lea.vmem %s3, 512
      %v2979 = vld [vmem:[%s2978] sm:$0xff]
      %v2980 = vld [vmem:[%s2978 + $0x8] sm:$0xff]
      %v2981 = vld [vmem:[%s2978 + $0x10] sm:$0xff]
      %v2982 = vld [vmem:[%s2978 + $0x18] sm:$0xff]
      %v2983 = vld [vmem:[%s2978 + $0x20] sm:$0xff]
      %v2984 = vld [vmem:[%s2978 + $0x28] sm:$0xff]
      %v2985 = vld [vmem:[%s2978 + $0x30] sm:$0xff]
      %v2986 = vld [vmem:[%s2978 + $0x38] sm:$0xff]
      %v2988 = vsel %vm225, %v2965, 0
      %v2991 = vsel %vm225, %v2966, 0
      %v2994 = vsel %vm225, %v2967, 0
      %v2997 = vsel %vm225, %v2968, 0
      %v3000 = vsel %vm225, %v2969, 0
      %v3003 = vsel %vm225, %v2970, 0
      %v3006 = vsel %vm225, %v2971, 0
      %v3009 = vsel %vm225, %v2972, 0
      %v3012 = vsel %vm225, %v2973, 0
      %v3015 = vsel %vm225, %v2974, 0
      %v3018 = vsel %vm225, %v2975, 0
      %v3021 = vsel %vm225, %v2976, 0
      %v3024 = vsel %vm225, %v2977, 0
      %3026 = vmatprep.subr.mxu0 0.0
      %3027 = vmatpush1.msra.mxu0 0.0
      %3028 = vmatprep.subr.mxu0 0.0
      %3029 = vmatpush1.msra.mxu0 0.0
      %3030 = vmatprep.subr.mxu0 0.0
      %3031 = vmatpush1.msra.mxu0 0.0
      %3032 = vmatprep.subr.mxu0 0.0
      %3033 = vmatpush1.msra.mxu0 0.0
      %3034 = vmatprep.subr.mxu0 0.0
      %3035 = vmatpush1.msra.mxu0 0.0
      %3036 = vmatprep.subr.mxu0 0.0
      %3037 = vmatpush1.msra.mxu0 0.0
      %3038 = vmatprep.subr.mxu0 0.0
      %3039 = vmatpush1.msra.mxu0 0.0
      %3040 = vmatprep.subr.mxu0 0.0
      %3041 = vmatpush1.msra.mxu0 0.0
      %3042 = vmatprep.subr.mxu0 0.0
      %3043 = vmatpush1.msra.mxu0 %v2986
      %3044 = vmatprep.subr.mxu0 0.0
      %3045 = vmatpush1.msra.mxu0 %v2985
      %3046 = vmatprep.subr.mxu0 0.0
      %3047 = vmatpush1.msra.mxu0 %v2984
      %3048 = vmatprep.subr.mxu0 0.0
      %3049 = vmatpush1.msra.mxu0 %v2983
      %3050 = vmatprep.subr.mxu0 0.0
      %3051 = vmatpush1.msra.mxu0 %v2982
      %3052 = vmatprep.subr.mxu0 0.0
      %3053 = vmatpush1.msra.mxu0 %v2981
      %3054 = vmatprep.subr.mxu0 0.0
      %3055 = vmatpush1.msra.mxu0 %v2980
      %3056 = vmatprep.subr.mxu0 0.0
      %3057 = vmatpush1.msra.mxu0 %v2979
      %3058 = vmatprep.subr.mxu0 0.0
      %3059 = vmatpush2.msra.mxu0 0.0
      %3060 = vmatprep.subr.mxu0 0.0
      %3061 = vmatpush2.msra.mxu0 0.0
      %3062 = vmatprep.subr.mxu0 0.0
      %3063 = vmatpush2.msra.mxu0 0.0
      %3064 = vmatprep.subr.mxu0 0.0
      %3065 = vmatpush2.msra.mxu0 0.0
      %3066 = vmatprep.subr.mxu0 0.0
      %3067 = vmatpush2.msra.mxu0 0.0
      %3068 = vmatprep.subr.mxu0 0.0
      %3069 = vmatpush2.msra.mxu0 0.0
      %3070 = vmatprep.subr.mxu0 0.0
      %3071 = vmatpush2.msra.mxu0 0.0
      %3072 = vmatprep.subr.mxu0 0.0
      %3073 = vmatpush2.msra.mxu0 0.0
      %3074 = vmatprep.subr.mxu0 0.0
      %3075 = vmatpush2.msra.mxu0 0.0
      %3076 = vmatprep.subr.mxu0 0.0
      %3077 = vmatpush2.msra.mxu0 0.0
      %3078 = vmatprep.subr.mxu0 0.0
      %3079 = vmatpush2.msra.mxu0 0.0
      %3080 = vmatprep.subr.mxu0 0.0
      %3081 = vmatpush2.msra.mxu0 0.0
      %3082 = vmatprep.subr.mxu0 0.0
      %3083 = vmatpush2.msra.mxu0 0.0
      %3084 = vmatprep.subr.mxu0 0.0
      %3085 = vmatpush2.msra.mxu0 0.0
      %3086 = vmatprep.subr.mxu0 0.0
      %3087 = vmatpush2.msra.mxu0 0.0
      %3088 = vmatprep.subr.mxu0 0.0
      %3089 = vmatpush2.msra.mxu0 0.0
      %3090 = vmatprep.mubr.f32.mxu0 0.0
      %3091 = vmatmul.mubr.f32.gmra.mxu0 %v2988
      %v3092 = vpop.f32.mrf.mxu0
      %v3093 = vadd.f32 0.0, %v3092
      %v3094 = vpop.f32.mrf.mxu0
      %3095 = vmatprep.mubr.f32.mxu0 0.0
      %3096 = vmatmul.mubr.f32.gmra.mxu0 %v2991
      %v3097 = vpop.f32.mrf.mxu0
      %v3098 = vadd.f32 0.0, %v3097
      %v3099 = vpop.f32.mrf.mxu0
      %3100 = vmatprep.mubr.f32.mxu0 0.0
      %3101 = vmatmul.mubr.f32.gmra.mxu0 %v2994
      %v3102 = vpop.f32.mrf.mxu0
      %v3103 = vadd.f32 0.0, %v3102
      %v3104 = vpop.f32.mrf.mxu0
      %3105 = vmatprep.mubr.f32.mxu0 0.0
      %3106 = vmatmul.mubr.f32.gmra.mxu0 %v2997
      %v3107 = vpop.f32.mrf.mxu0
      %v3108 = vadd.f32 0.0, %v3107
      %v3109 = vpop.f32.mrf.mxu0
      %3110 = vmatprep.mubr.f32.mxu0 0.0
      %3111 = vmatmul.mubr.f32.gmra.mxu0 %v3000
      %v3112 = vpop.f32.mrf.mxu0
      %v3113 = vadd.f32 0.0, %v3112
      %v3114 = vpop.f32.mrf.mxu0
      %3115 = vmatprep.mubr.f32.mxu0 0.0
      %3116 = vmatmul.mubr.f32.gmra.mxu0 %v3003
      %v3117 = vpop.f32.mrf.mxu0
      %v3118 = vadd.f32 0.0, %v3117
      %v3119 = vpop.f32.mrf.mxu0
      %3120 = vmatprep.mubr.f32.mxu0 0.0
      %3121 = vmatmul.mubr.f32.gmra.mxu0 %v3006
      %v3122 = vpop.f32.mrf.mxu0
      %v3123 = vadd.f32 0.0, %v3122
      %v3124 = vpop.f32.mrf.mxu0
      %3125 = vmatprep.mubr.f32.mxu0 0.0
      %3126 = vmatmul.mubr.f32.gmra.mxu0 %v3009
      %v3127 = vpop.f32.mrf.mxu0
      %v3128 = vadd.f32 0.0, %v3127
      %v3129 = vpop.f32.mrf.mxu0
      %3130 = vmatprep.mubr.f32.mxu0 0.0
      %3131 = vmatmul.mubr.f32.gmra.mxu0 %v3012
      %v3132 = vpop.f32.mrf.mxu0
      %v3133 = vadd.f32 0.0, %v3132
      %v3134 = vpop.f32.mrf.mxu0
      %3135 = vmatprep.mubr.f32.mxu0 0.0
      %3136 = vmatmul.mubr.f32.gmra.mxu0 %v3015
      %v3137 = vpop.f32.mrf.mxu0
      %v3138 = vadd.f32 0.0, %v3137
      %v3139 = vpop.f32.mrf.mxu0
      %3140 = vmatprep.mubr.f32.mxu0 0.0
      %3141 = vmatmul.mubr.f32.gmra.mxu0 %v3018
      %v3142 = vpop.f32.mrf.mxu0
      %v3143 = vadd.f32 0.0, %v3142
      %v3144 = vpop.f32.mrf.mxu0
      %3145 = vmatprep.mubr.f32.mxu0 0.0
      %3146 = vmatmul.mubr.f32.gmra.mxu0 %v3021
      %v3147 = vpop.f32.mrf.mxu0
      %v3148 = vadd.f32 0.0, %v3147
      %v3149 = vpop.f32.mrf.mxu0
      %3150 = vmatprep.mubr.f32.mxu0 0.0
      %3151 = vmatmul.mubr.f32.gmra.mxu0 %v3024
      %v3152 = vpop.f32.mrf.mxu0
      %v3153 = vadd.f32 0.0, %v3152
      %v3154 = vpop.f32.mrf.mxu0
      %3155 = vdwg.mxu0
      %v3156 = vadd.f32 %v2952, %v3093
      %v3157 = vadd.f32 %v2953, %v3098
      %v3158 = vadd.f32 %v2954, %v3103
      %v3159 = vadd.f32 %v2955, %v3108
      %v3160 = vadd.f32 %v2956, %v3113
      %v3161 = vadd.f32 %v2957, %v3118
      %v3162 = vadd.f32 %v2958, %v3123
      %v3163 = vadd.f32 %v2959, %v3128
      %v3164 = vadd.f32 %v2960, %v3133
      %v3165 = vadd.f32 %v2961, %v3138
      %v3166 = vadd.f32 %v2962, %v3143
      %v3167 = vadd.f32 %v2963, %v3148
      %v3168 = vadd.f32 %v2964, %v3153
      %3169 = vst.msk [vmem:[%s224] sm:$0xff] %vm1098, %v3156
      %3170 = vst.msk [vmem:[%s224 + $0x8] sm:$0xff] %vm1098, %v3157
      %3171 = vst.msk [vmem:[%s224 + $0x10] sm:$0xff] %vm1098, %v3158
      %3172 = vst.msk [vmem:[%s224 + $0x18] sm:$0xff] %vm1098, %v3159
      %3173 = vst.msk [vmem:[%s224 + $0x20] sm:$0xff] %vm1098, %v3160
      %3174 = vst.msk [vmem:[%s224 + $0x28] sm:$0xff] %vm1098, %v3161
      %3175 = vst.msk [vmem:[%s224 + $0x30] sm:$0xff] %vm1098, %v3162
      %3176 = vst.msk [vmem:[%s224 + $0x38] sm:$0xff] %vm1098, %v3163
      %3177 = vst.msk [vmem:[%s224 + $0x40] sm:$0xff] %vm1098, %v3164
      %3178 = vst.msk [vmem:[%s224 + $0x48] sm:$0xff] %vm1098, %v3165
      %3179 = vst.msk [vmem:[%s224 + $0x50] sm:$0xff] %vm1098, %v3166
      %3180 = vst.msk [vmem:[%s224 + $0x58] sm:$0xff] %vm1098, %v3167
      %3181 = vst.msk [vmem:[%s224 + $0x60] sm:$0xf] %vm1111, %v3168
      %v3182 = vld [vmem:[%s224] sm:$0xff]
      %v3183 = vld [vmem:[%s224 + $0x8] sm:$0xff]
      %v3184 = vld [vmem:[%s224 + $0x10] sm:$0xff]
      %v3185 = vld [vmem:[%s224 + $0x18] sm:$0xff]
      %v3186 = vld [vmem:[%s224 + $0x20] sm:$0xff]
      %v3187 = vld [vmem:[%s224 + $0x28] sm:$0xff]
      %v3188 = vld [vmem:[%s224 + $0x30] sm:$0xff]
      %v3189 = vld [vmem:[%s224 + $0x38] sm:$0xff]
      %v3190 = vld [vmem:[%s224 + $0x40] sm:$0xff]
      %v3191 = vld [vmem:[%s224 + $0x48] sm:$0xff]
      %v3192 = vld [vmem:[%s224 + $0x50] sm:$0xff]
      %v3193 = vld [vmem:[%s224 + $0x58] sm:$0xff]
      %v3194 = vld [vmem:[%s224 + $0x60] sm:$0xf]
      %v3195 = vld [vmem:[%s4] sm:$0x1]
      %v3197 = vlaneseq
      %v3198 = vshrl.u32 %v3197, 7
      %v3199 = vsub.s32 0, %v3198
      %v3200 = vrot.slane %v3195, %v3199
      %v3202 = vadd.f32 %v3182, %v3200
      %v3203 = vadd.f32 %v3183, %v3200
      %v3204 = vadd.f32 %v3184, %v3200
      %v3205 = vadd.f32 %v3185, %v3200
      %v3206 = vadd.f32 %v3186, %v3200
      %v3207 = vadd.f32 %v3187, %v3200
      %v3208 = vadd.f32 %v3188, %v3200
      %v3209 = vadd.f32 %v3189, %v3200
      %v3210 = vadd.f32 %v3190, %v3200
      %v3211 = vadd.f32 %v3191, %v3200
      %v3212 = vadd.f32 %v3192, %v3200
      %v3213 = vadd.f32 %v3193, %v3200
      %v3214 = vadd.f32 %v3194, %v3200
      %v3215 = vmax.f32 %v3202, 0.0
      %v3216 = vmax.f32 %v3203, 0.0
      %v3217 = vmax.f32 %v3204, 0.0
      %v3218 = vmax.f32 %v3205, 0.0
      %v3219 = vmax.f32 %v3206, 0.0
      %v3220 = vmax.f32 %v3207, 0.0
      %v3221 = vmax.f32 %v3208, 0.0
      %v3222 = vmax.f32 %v3209, 0.0
      %v3223 = vmax.f32 %v3210, 0.0
      %v3224 = vmax.f32 %v3211, 0.0
      %v3225 = vmax.f32 %v3212, 0.0
      %v3226 = vmax.f32 %v3213, 0.0
      %v3227 = vmax.f32 %v3214, 0.0
      %3228 = vst.msk [vmem:[%s224] sm:$0xff] %vm1098, %v3215
      %3229 = vst.msk [vmem:[%s224 + $0x8] sm:$0xff] %vm1098, %v3216
      %3230 = vst.msk [vmem:[%s224 + $0x10] sm:$0xff] %vm1098, %v3217
      %3231 = vst.msk [vmem:[%s224 + $0x18] sm:$0xff] %vm1098, %v3218
      %3232 = vst.msk [vmem:[%s224 + $0x20] sm:$0xff] %vm1098, %v3219
      %3233 = vst.msk [vmem:[%s224 + $0x28] sm:$0xff] %vm1098, %v3220
      %3234 = vst.msk [vmem:[%s224 + $0x30] sm:$0xff] %vm1098, %v3221
      %3235 = vst.msk [vmem:[%s224 + $0x38] sm:$0xff] %vm1098, %v3222
      %3236 = vst.msk [vmem:[%s224 + $0x40] sm:$0xff] %vm1098, %v3223
      %3237 = vst.msk [vmem:[%s224 + $0x48] sm:$0xff] %vm1098, %v3224
      %3238 = vst.msk [vmem:[%s224 + $0x50] sm:$0xff] %vm1098, %v3225
      %3239 = vst.msk [vmem:[%s224 + $0x58] sm:$0xff] %vm1098, %v3226
      %3240 = vst.msk [vmem:[%s224 + $0x60] sm:$0xf] %vm1111, %v3227
      %p3241 = scmp.lt.s32.totalorder %s16, 1
      %s3242 = scalar_select %p3241, %s16, 1
      %s3243 = smul.addr %s3242, 13
      %s3244 = smul.addr %s3243, 8
      %s3245 = scalar_lea.vmem %s5, %s3244
      // Predicated region
      $region41: #{cnnbase_forward.4} parent=39 // pred_check
        %p3246 = pneg %p144
      $region42: #{cnnbase_forward.4} parent=39 // pred_check_branch
        %3248 = sbr.rel (%p3246) target = $region44
      $region43: #{cnnbase_forward.4} parent=39 // pred_region
        _
      $region44: #{cnnbase_forward.4} parent=39 // pred_fallthru
        _
    $region40: #{cnnbase_forward.4} parent=5 // pred_fallthru
      _
    %p3249 = scmp.le.s32.totalorder 2, %s11
    // Predicated region
    $region45: #{cnnbase_forward.4} parent=5 // pred_check
      %p3250 = pneg %p3249
    $region46: #{cnnbase_forward.4} parent=5 // pred_check_branch
      %3252 = sbr.rel (%p3250) target = $region48
    $region47: #{cnnbase_forward.4} parent=5 // pred_region
      %s3253 = ssub.s32 %s11, 2
      // Predicated region
      $region49: #{cnnbase_forward.4} parent=47 // pred_check
        %p3254 = pneg %p150
      $region50: #{cnnbase_forward.4} parent=47 // pred_check_branch
        %3256 = sbr.rel (%p3254) target = $region52
      $region51: #{cnnbase_forward.4} parent=47 // pred_region
        %p3257 = scmp.lt.s32.totalorder %s17, 1
        %s3258 = scalar_select %p3257, %s17, 1
        %s3259 = smul.addr %s3258, 13
        %s3260 = smul.addr %s3259, 8
        %s3261 = scalar_lea.vmem %s5, %s3260
      $region52: #{cnnbase_forward.4} parent=47 // pred_fallthru
        _
    $region48: #{cnnbase_forward.4} parent=5 // pred_fallthru
      _
  $region6: #{cnnbase_forward.4} parent=0 // loop_footer
    %s15 = sadd.s32 1, %s11
  $region7: #{cnnbase_forward.4} parent=0 // loop_footer_branch
    %10 = sbr.rel target = $region3
  $region8: #{cnnbase_forward.4} parent=0 // loop_exit
    _

</llo_original>
